<compile_context>
chip_gen: v7x
topology: tpu7x:2x2x1
jax: 0.10.0
libtpu: 0.0.40
codegen_flags: <defaults>
</compile_context>

<pallas_src>
import functools

import jax
import jax.numpy as jnp
import numpy as np
from jax.experimental import pallas as pl
from jax.experimental.pallas import tpu as pltpu

LRELU_SLOPE = 0.2
IN_EPS = 1e-5


# ---------------------------------------------------------------------------
# Fused Pallas kernel: implicit-GEMM conv + (bias | InstanceNorm) + LeakyReLU
# ---------------------------------------------------------------------------
def _conv_kernel(*refs, taps, iwp, ow, use_norm, use_lrelu):
    """One (batch, cout-tile) grid step.

    refs:
      x_ref: [1, R, Ck]      bf16 flattened, spatially padded activation
      w_ref: [T, Ck, TC]     bf16 per-tap weight slabs
      b_ref: [1, TC]         f32 bias (only present when not use_norm)
      o_ref: [1, M_full, TC] bf16 (hidden layers) or f32 (final layer)
    """
    if use_norm:
        x_ref, w_ref, o_ref = refs
        b_ref = None
    else:
        x_ref, w_ref, b_ref, o_ref = refs

    m_full = o_ref.shape[1]
    tc = o_ref.shape[2]

    acc = jnp.zeros((m_full, tc), jnp.float32)
    for t, (di, dj) in enumerate(taps):
        off = di * iwp + dj                          # static row shift per tap
        patch = x_ref[0, pl.ds(off, m_full), :]      # [M_full, Ck] bf16
        acc = acc + jnp.dot(patch, w_ref[t],
                            preferred_element_type=jnp.float32)

    if use_norm:
        # Mask junk padded-width columns (ow >= OW) out of the per-(n, c)
        # InstanceNorm statistics; two-pass mean/var for stability.
        row = jax.lax.broadcasted_iota(jnp.int32, (m_full, 1), 0)
        valid = (row % iwp) < ow
        count = float((m_full // iwp) * ow)          # = OH * OW
        xm = jnp.where(valid, acc, 0.0)
        mean = jnp.sum(xm, axis=0, keepdims=True) * (1.0 / count)
        diff = jnp.where(valid, acc - mean, 0.0)
        var = jnp.sum(diff * diff, axis=0, keepdims=True) * (1.0 / count)
        acc = (acc - mean) * jax.lax.rsqrt(var + IN_EPS)
    else:
        acc = acc + b_ref[...]
    if use_lrelu:
        acc = jnp.where(acc >= 0.0, acc, LRELU_SLOPE * acc)
    o_ref[0] = acc.astype(o_ref.dtype)


# ---------------------------------------------------------------------------
# One conv layer: Conv2d(k=4, pad=1) + optional InstanceNorm2d + LeakyReLU
# ---------------------------------------------------------------------------
def conv_layer(x_nhwc, w, b, *, stride, use_norm, use_lrelu, out_dtype):
    """x_nhwc: [N, H, W, Cin]; w: [Cout, Cin, 4, 4] (OIHW); b: [Cout]."""
    N, H, W, cin = x_nhwc.shape
    cout = w.shape[0]

    xp = jnp.pad(x_nhwc, ((0, 0), (1, 1), (1, 1), (0, 0)))     # conv pad=1
    if stride == 2:
        assert H % 2 == 0 and W % 2 == 0
        oh, ow = H // 2, W // 2
        kh = kw = 2
        ck = 4 * cin
        # space-to-depth(2): stride-2 4x4 conv == stride-1 2x2 conv on 4*Cin.
        y = xp.reshape(N, (H + 2) // 2, 2, (W + 2) // 2, 2, cin)
        y = jnp.transpose(y, (0, 1, 3, 2, 4, 5)).reshape(
            N, (H + 2) // 2, (W + 2) // 2, ck)
        wt = jnp.transpose(w, (2, 3, 1, 0)).reshape(2, 2, 2, 2, cin, cout)
        wt = jnp.transpose(wt, (0, 2, 1, 3, 4, 5)).reshape(4, ck, cout)
    else:
        oh, ow = H - 1, W - 1
        kh = kw = 4
        ck = cin
        y = xp
        wt = jnp.transpose(w, (2, 3, 1, 0)).reshape(16, ck, cout)

    ih, iw = y.shape[1], y.shape[2]        # = oh + kh - 1, ow + kw - 1
    # One extra zero row so the largest tap shift stays in bounds after
    # flattening (max row read = (oh-1+kh-1)*iw + iw-1 + kw-1 < (ih+1)*iw).
    y = jnp.pad(y, ((0, 0), (0, 1), (0, 0), (0, 0)))
    R = (ih + 1) * iw
    x_flat = y.reshape(N, R, ck).astype(jnp.bfloat16)
    m_full = oh * iw
    taps = tuple((i, j) for i in range(kh) for j in range(kw))
    w_bf = wt.astype(jnp.bfloat16)

    # Cout tiling only when cout is a big multiple of 256 (production sizes):
    # feeds the 2nd v7x TensorCore; always legal since IN reduces over M only.
    tc = 256 if (cout > 256 and cout % 256 == 0) else cout
    n_ct = cout // tc

    kernel = functools.partial(_conv_kernel, taps=taps, iwp=iw, ow=ow,
                               use_norm=use_norm, use_lrelu=use_lrelu)

    in_specs = [
        pl.BlockSpec((1, R, ck), lambda n, c: (n, 0, 0)),
        # Constant block index -> DMA'd once and kept resident.
        # TODO(synk): pipeline_mode=pl.Buffered(1) to drop the idle 2nd buffer.
        pl.BlockSpec((kh * kw, ck, tc), lambda n, c: (0, 0, c)),
    ]
    args = [x_flat, w_bf]
    if not use_norm:
        in_specs.append(pl.BlockSpec((1, tc), lambda n, c: (0, c)))
        args.append(b.astype(jnp.float32).reshape(1, cout))

    out = pl.pallas_call(
        kernel,
        out_shape=jax.ShapeDtypeStruct((N, m_full, cout), out_dtype),
        grid=(N, n_ct),
        in_specs=in_specs,
        out_specs=pl.BlockSpec((1, m_full, tc), lambda n, c: (n, 0, c)),
        compiler_params=pltpu.CompilerParams(
            dimension_semantics=("parallel", "parallel")),
    )(*args)

    # Drop the junk padded-width columns (ow >= OW).
    # TODO(synk): fold this slice into the next layer's spatial padding.
    return out.reshape(N, oh, iw, cout)[:, :, :ow, :]


def discriminator_forward(x_nchw, params, layer_defs):
    """PatchGAN forward. x_nchw: [N, C, H, W] -> [N, 1, H', W'] (NCHW, f32)."""
    x = jnp.transpose(x_nchw, (0, 2, 3, 1))                     # NHWC
    n_layers = len(layer_defs)
    for idx, ((w, b), (cin, cout, stride, use_norm, use_lrelu)) in enumerate(
            zip(params, layer_defs)):
        is_last = idx == n_layers - 1
        x = conv_layer(x, w, b, stride=stride, use_norm=use_norm,
                       use_lrelu=use_lrelu,
                       out_dtype=jnp.float32 if is_last else jnp.bfloat16)
    return jnp.transpose(x, (0, 3, 1, 2))                       # back to NCHW


# ---------------------------------------------------------------------------
# Pure-JAX f32 reference (semantics of the PyTorch module)
# ---------------------------------------------------------------------------
def reference_forward(x_nchw, params, layer_defs):
    x = x_nchw.astype(jnp.float32)
    for (w, b), (cin, cout, stride, use_norm, use_lrelu) in zip(params,
                                                                layer_defs):
        x = jax.lax.conv_general_dilated(
            x, w, window_strides=(stride, stride), padding=[(1, 1), (1, 1)],
            dimension_numbers=("NCHW", "OIHW", "NCHW"))
        x = x + b[None, :, None, None]
        if use_norm:  # InstanceNorm2d: affine=False, biased variance, eps=1e-5
            m = jnp.mean(x, axis=(2, 3), keepdims=True)
            v = jnp.mean((x - m) ** 2, axis=(2, 3), keepdims=True)
            x = (x - m) / jnp.sqrt(v + IN_EPS)
        if use_lrelu:
            x = jnp.where(x >= 0.0, x, LRELU_SLOPE * x)
    return x


if __name__ == "__main__":
    # Small config consistent with the module: input_nc=1, ndf=8, n_layers=3.
    input_nc, ndf = 1, 8
    # (cin, cout, stride, use_instance_norm, use_leaky_relu)
    layer_defs = [
        (input_nc, ndf, 2, False, True),
        (ndf, ndf * 2, 2, True, True),
        (ndf * 2, ndf * 4, 2, True, True),
        (ndf * 4, ndf * 8, 1, True, True),
        (ndf * 8, 1, 1, False, False),
    ]

    key = jax.random.PRNGKey(0)
    params = []
    for (cin, cout, *_rest) in layer_defs:
        key, wk = jax.random.split(key)
        w = 0.02 * jax.random.normal(wk, (cout, cin, 4, 4), jnp.float32)
        b = 0.01 * jnp.arange(cout, dtype=jnp.float32)
        params.append((w, b))

    key, xk = jax.random.split(key)
    x = jax.random.normal(xk, (2, input_nc, 32, 32), jnp.float32)

    fwd = jax.jit(lambda xx, pp: discriminator_forward(xx, pp, layer_defs))
    out = jax.block_until_ready(fwd(x, params))
    ref = jax.block_until_ready(reference_forward(x, params, layer_defs))

    assert out.shape == ref.shape == (2, 1, 2, 2), out.shape
    out_np = np.asarray(out, dtype=np.float32)
    ref_np = np.asarray(ref, dtype=np.float32)
    err = float(np.max(np.abs(out_np - ref_np)))
    # bf16 MXU operands / bf16 intermediates across 5 layers: allow a few e-2.
    assert np.allclose(out_np, ref_np, rtol=5e-2, atol=5e-2), err
    print("KERNEL_OK")
</pallas_src>

<mosaic_0001>
module attributes {stable_mosaic.version = 11 : i64} {
  func.func @_conv_kernel(%arg0: i32, %arg1: i32, %arg2: memref<1x306x4xbf16, #tpu.memory_space<vmem>>, %arg3: memref<4x4x8xbf16, #tpu.memory_space<vmem>>, %arg4: memref<1x8xf32, #tpu.memory_space<vmem>>, %arg5: memref<1x272x8xbf16, #tpu.memory_space<vmem>>) attributes {dimension_semantics = [#tpu.dimension_semantics<parallel>, #tpu.dimension_semantics<parallel>], iteration_bounds = array<i64: 2, 1>, scalar_prefetch = 0 : i64, scratch_operands = 0 : i64, tpu.core_type = #tpu.core_type<tc>, window_params = [{transform_indices = @transform_0, window_bounds = array<i64: 1, 306, 4>}, {transform_indices = @transform_1, window_bounds = array<i64: 4, 4, 8>}, {transform_indices = @transform_2, window_bounds = array<i64: 1, 8>}, {transform_indices = @transform_3, window_bounds = array<i64: 1, 272, 8>}]} {
    %cst = arith.constant 0.000000e+00 : f32
    %0 = vector.broadcast %cst : f32 to vector<272x8xf32>
    %c0 = arith.constant 0 : index
    %c0_0 = arith.constant 0 : index
    %c0_1 = arith.constant 0 : index
    %1 = vector.load %arg2[%c0, %c0_0, %c0_1] : memref<1x306x4xbf16, #tpu.memory_space<vmem>>, vector<1x272x4xbf16>
    %2 = vector.shape_cast %1 : vector<1x272x4xbf16> to vector<272x4xbf16>
    %c0_2 = arith.constant 0 : index
    %c0_3 = arith.constant 0 : index
    %c0_4 = arith.constant 0 : index
    %3 = vector.load %arg3[%c0_2, %c0_3, %c0_4] : memref<4x4x8xbf16, #tpu.memory_space<vmem>>, vector<1x4x8xbf16>
    %4 = vector.shape_cast %3 : vector<1x4x8xbf16> to vector<4x8xbf16>
    %cst_5 = arith.constant dense<0.000000e+00> : vector<272x8xf32>
    %5 = tpu.matmul %2, %4, %cst_5 {dimension_numbers = #tpu.dot_dimension_numbers<[1], [0], [0], [1], [0, 0, 1, 1], [], []>} : vector<272x4xbf16>, vector<4x8xbf16>, vector<272x8xf32> -> vector<272x8xf32>
    %6 = arith.addf %0, %5 : vector<272x8xf32>
    %c0_6 = arith.constant 0 : index
    %c1 = arith.constant 1 : index
    %c0_7 = arith.constant 0 : index
    %7 = vector.load %arg2[%c0_6, %c1, %c0_7] : memref<1x306x4xbf16, #tpu.memory_space<vmem>>, vector<1x272x4xbf16>
    %8 = vector.shape_cast %7 : vector<1x272x4xbf16> to vector<272x4xbf16>
    %c1_8 = arith.constant 1 : index
    %c0_9 = arith.constant 0 : index
    %c0_10 = arith.constant 0 : index
    %9 = vector.load %arg3[%c1_8, %c0_9, %c0_10] : memref<4x4x8xbf16, #tpu.memory_space<vmem>>, vector<1x4x8xbf16>
    %10 = vector.shape_cast %9 : vector<1x4x8xbf16> to vector<4x8xbf16>
    %cst_11 = arith.constant dense<0.000000e+00> : vector<272x8xf32>
    %11 = tpu.matmul %8, %10, %cst_11 {dimension_numbers = #tpu.dot_dimension_numbers<[1], [0], [0], [1], [0, 0, 1, 1], [], []>} : vector<272x4xbf16>, vector<4x8xbf16>, vector<272x8xf32> -> vector<272x8xf32>
    %12 = arith.addf %6, %11 : vector<272x8xf32>
    %c0_12 = arith.constant 0 : index
    %c17 = arith.constant 17 : index
    %c0_13 = arith.constant 0 : index
    %13 = vector.load %arg2[%c0_12, %c17, %c0_13] : memref<1x306x4xbf16, #tpu.memory_space<vmem>>, vector<1x272x4xbf16>
    %14 = vector.shape_cast %13 : vector<1x272x4xbf16> to vector<272x4xbf16>
    %c2 = arith.constant 2 : index
    %c0_14 = arith.constant 0 : index
    %c0_15 = arith.constant 0 : index
    %15 = vector.load %arg3[%c2, %c0_14, %c0_15] : memref<4x4x8xbf16, #tpu.memory_space<vmem>>, vector<1x4x8xbf16>
    %16 = vector.shape_cast %15 : vector<1x4x8xbf16> to vector<4x8xbf16>
    %cst_16 = arith.constant dense<0.000000e+00> : vector<272x8xf32>
    %17 = tpu.matmul %14, %16, %cst_16 {dimension_numbers = #tpu.dot_dimension_numbers<[1], [0], [0], [1], [0, 0, 1, 1], [], []>} : vector<272x4xbf16>, vector<4x8xbf16>, vector<272x8xf32> -> vector<272x8xf32>
    %18 = arith.addf %12, %17 : vector<272x8xf32>
    %c0_17 = arith.constant 0 : index
    %c18 = arith.constant 18 : index
    %c0_18 = arith.constant 0 : index
    %19 = vector.load %arg2[%c0_17, %c18, %c0_18] : memref<1x306x4xbf16, #tpu.memory_space<vmem>>, vector<1x272x4xbf16>
    %20 = vector.shape_cast %19 : vector<1x272x4xbf16> to vector<272x4xbf16>
    %c3 = arith.constant 3 : index
    %c0_19 = arith.constant 0 : index
    %c0_20 = arith.constant 0 : index
    %21 = vector.load %arg3[%c3, %c0_19, %c0_20] : memref<4x4x8xbf16, #tpu.memory_space<vmem>>, vector<1x4x8xbf16>
    %22 = vector.shape_cast %21 : vector<1x4x8xbf16> to vector<4x8xbf16>
    %cst_21 = arith.constant dense<0.000000e+00> : vector<272x8xf32>
    %23 = tpu.matmul %20, %22, %cst_21 {dimension_numbers = #tpu.dot_dimension_numbers<[1], [0], [0], [1], [0, 0, 1, 1], [], []>} : vector<272x4xbf16>, vector<4x8xbf16>, vector<272x8xf32> -> vector<272x8xf32>
    %24 = arith.addf %18, %23 : vector<272x8xf32>
    %c0_22 = arith.constant 0 : index
    %c0_23 = arith.constant 0 : index
    %25 = vector.load %arg4[%c0_22, %c0_23] : memref<1x8xf32, #tpu.memory_space<vmem>>, vector<1x8xf32>
    %26 = vector.broadcast %25 : vector<1x8xf32> to vector<272x8xf32>
    %27 = arith.addf %24, %26 : vector<272x8xf32>
    %cst_24 = arith.constant 0.000000e+00 : f32
    %28 = vector.broadcast %cst_24 : f32 to vector<272x8xf32>
    %29 = arith.cmpf oge, %27, %28 : vector<272x8xf32>
    %cst_25 = arith.constant 2.000000e-01 : f32
    %30 = vector.broadcast %cst_25 : f32 to vector<272x8xf32>
    %31 = arith.mulf %30, %27 : vector<272x8xf32>
    %32 = arith.select %29, %27, %31 : vector<272x8xi1>, vector<272x8xf32>
    %33 = arith.truncf %32 : vector<272x8xf32> to vector<272x8xbf16>
    %c0_26 = arith.constant 0 : index
    %c0_27 = arith.constant 0 : index
    %c0_28 = arith.constant 0 : index
    %34 = vector.load %arg5[%c0_26, %c0_27, %c0_28] : memref<1x272x8xbf16, #tpu.memory_space<vmem>>, vector<1x272x8xbf16>
    %35 = vector.shape_cast %34 : vector<1x272x8xbf16> to vector<272x8xbf16>
    %36 = vector.shape_cast %33 : vector<272x8xbf16> to vector<1x272x8xbf16>
    tpu.vector_store %arg5[%c0_26, %c0_27, %c0_28], %36 {strides = array<i32>} : memref<1x272x8xbf16, #tpu.memory_space<vmem>>, vector<1x272x8xbf16>,
    return
  }
  func.func @transform_0(%arg0: i32, %arg1: i32) -> (i32, i32, i32) {
    %c0_i32 = arith.constant 0 : i32
    %c0_i32_0 = arith.constant 0 : i32
    %c0_i32_1 = arith.constant 0 : i32
    return %arg0, %c0_i32, %c0_i32_0 : i32, i32, i32
  }
  func.func @transform_1(%arg0: i32, %arg1: i32) -> (i32, i32, i32) {
    %c0_i32 = arith.constant 0 : i32
    %c0_i32_0 = arith.constant 0 : i32
    %c0_i32_1 = arith.constant 0 : i32
    return %c0_i32, %c0_i32_0, %arg1 : i32, i32, i32
  }
  func.func @transform_2(%arg0: i32, %arg1: i32) -> (i32, i32) {
    %c0_i32 = arith.constant 0 : i32
    %c0_i32_0 = arith.constant 0 : i32
    return %c0_i32, %arg1 : i32, i32
  }
  func.func @transform_3(%arg0: i32, %arg1: i32) -> (i32, i32, i32) {
    %c0_i32 = arith.constant 0 : i32
    %c0_i32_0 = arith.constant 0 : i32
    return %arg0, %c0_i32, %arg1 : i32, i32, i32
  }
}

module attributes {stable_mosaic.version = 11 : i64} {
  func.func @_conv_kernel(%arg0: i32, %arg1: i32, %arg2: memref<1x90x32xbf16, #tpu.memory_space<vmem>>, %arg3: memref<4x32x16xbf16, #tpu.memory_space<vmem>>, %arg4: memref<1x72x16xbf16, #tpu.memory_space<vmem>>) attributes {dimension_semantics = [#tpu.dimension_semantics<parallel>, #tpu.dimension_semantics<parallel>], iteration_bounds = array<i64: 2, 1>, scalar_prefetch = 0 : i64, scratch_operands = 0 : i64, tpu.core_type = #tpu.core_type<tc>, window_params = [{transform_indices = @transform_0, window_bounds = array<i64: 1, 90, 32>}, {transform_indices = @transform_1, window_bounds = array<i64: 4, 32, 16>}, {transform_indices = @transform_2, window_bounds = array<i64: 1, 72, 16>}]} {
    %cst = arith.constant 0.000000e+00 : f32
    %0 = vector.broadcast %cst : f32 to vector<72x16xf32>
    %c0 = arith.constant 0 : index
    %c0_0 = arith.constant 0 : index
    %c0_1 = arith.constant 0 : index
    %1 = vector.load %arg2[%c0, %c0_0, %c0_1] : memref<1x90x32xbf16, #tpu.memory_space<vmem>>, vector<1x72x32xbf16>
    %2 = vector.shape_cast %1 : vector<1x72x32xbf16> to vector<72x32xbf16>
    %c0_2 = arith.constant 0 : index
    %c0_3 = arith.constant 0 : index
    %c0_4 = arith.constant 0 : index
    %3 = vector.load %arg3[%c0_2, %c0_3, %c0_4] : memref<4x32x16xbf16, #tpu.memory_space<vmem>>, vector<1x32x16xbf16>
    %4 = vector.shape_cast %3 : vector<1x32x16xbf16> to vector<32x16xbf16>
    %cst_5 = arith.constant dense<0.000000e+00> : vector<72x16xf32>
    %5 = tpu.matmul %2, %4, %cst_5 {dimension_numbers = #tpu.dot_dimension_numbers<[1], [0], [0], [1], [0, 0, 1, 1], [], []>} : vector<72x32xbf16>, vector<32x16xbf16>, vector<72x16xf32> -> vector<72x16xf32>
    %6 = arith.addf %0, %5 : vector<72x16xf32>
    %c0_6 = arith.constant 0 : index
    %c1 = arith.constant 1 : index
    %c0_7 = arith.constant 0 : index
    %7 = vector.load %arg2[%c0_6, %c1, %c0_7] : memref<1x90x32xbf16, #tpu.memory_space<vmem>>, vector<1x72x32xbf16>
    %8 = vector.shape_cast %7 : vector<1x72x32xbf16> to vector<72x32xbf16>
    %c1_8 = arith.constant 1 : index
    %c0_9 = arith.constant 0 : index
    %c0_10 = arith.constant 0 : index
    %9 = vector.load %arg3[%c1_8, %c0_9, %c0_10] : memref<4x32x16xbf16, #tpu.memory_space<vmem>>, vector<1x32x16xbf16>
    %10 = vector.shape_cast %9 : vector<1x32x16xbf16> to vector<32x16xbf16>
    %cst_11 = arith.constant dense<0.000000e+00> : vector<72x16xf32>
    %11 = tpu.matmul %8, %10, %cst_11 {dimension_numbers = #tpu.dot_dimension_numbers<[1], [0], [0], [1], [0, 0, 1, 1], [], []>} : vector<72x32xbf16>, vector<32x16xbf16>, vector<72x16xf32> -> vector<72x16xf32>
    %12 = arith.addf %6, %11 : vector<72x16xf32>
    %c0_12 = arith.constant 0 : index
    %c9 = arith.constant 9 : index
    %c0_13 = arith.constant 0 : index
    %13 = vector.load %arg2[%c0_12, %c9, %c0_13] : memref<1x90x32xbf16, #tpu.memory_space<vmem>>, vector<1x72x32xbf16>
    %14 = vector.shape_cast %13 : vector<1x72x32xbf16> to vector<72x32xbf16>
    %c2 = arith.constant 2 : index
    %c0_14 = arith.constant 0 : index
    %c0_15 = arith.constant 0 : index
    %15 = vector.load %arg3[%c2, %c0_14, %c0_15] : memref<4x32x16xbf16, #tpu.memory_space<vmem>>, vector<1x32x16xbf16>
    %16 = vector.shape_cast %15 : vector<1x32x16xbf16> to vector<32x16xbf16>
    %cst_16 = arith.constant dense<0.000000e+00> : vector<72x16xf32>
    %17 = tpu.matmul %14, %16, %cst_16 {dimension_numbers = #tpu.dot_dimension_numbers<[1], [0], [0], [1], [0, 0, 1, 1], [], []>} : vector<72x32xbf16>, vector<32x16xbf16>, vector<72x16xf32> -> vector<72x16xf32>
    %18 = arith.addf %12, %17 : vector<72x16xf32>
    %c0_17 = arith.constant 0 : index
    %c10 = arith.constant 10 : index
    %c0_18 = arith.constant 0 : index
    %19 = vector.load %arg2[%c0_17, %c10, %c0_18] : memref<1x90x32xbf16, #tpu.memory_space<vmem>>, vector<1x72x32xbf16>
    %20 = vector.shape_cast %19 : vector<1x72x32xbf16> to vector<72x32xbf16>
    %c3 = arith.constant 3 : index
    %c0_19 = arith.constant 0 : index
    %c0_20 = arith.constant 0 : index
    %21 = vector.load %arg3[%c3, %c0_19, %c0_20] : memref<4x32x16xbf16, #tpu.memory_space<vmem>>, vector<1x32x16xbf16>
    %22 = vector.shape_cast %21 : vector<1x32x16xbf16> to vector<32x16xbf16>
    %cst_21 = arith.constant dense<0.000000e+00> : vector<72x16xf32>
    %23 = tpu.matmul %20, %22, %cst_21 {dimension_numbers = #tpu.dot_dimension_numbers<[1], [0], [0], [1], [0, 0, 1, 1], [], []>} : vector<72x32xbf16>, vector<32x16xbf16>, vector<72x16xf32> -> vector<72x16xf32>
    %24 = arith.addf %18, %23 : vector<72x16xf32>
    %25 = tpu.iota {dimensions = array<i32: 0>} : vector<72x1xi32>
    %c9_i32 = arith.constant 9 : i32
    %c0_i32 = arith.constant 0 : i32
    %26 = arith.cmpi eq, %c9_i32, %c0_i32 : i32
    %c1_i32 = arith.constant 1 : i32
    %27 = arith.select %26, %c1_i32, %c9_i32 : i32
    %28 = vector.broadcast %27 : i32 to vector<72x1xi32>
    %29 = arith.remsi %25, %28 : vector<72x1xi32>
    %c0_i32_22 = arith.constant 0 : i32
    %30 = vector.broadcast %c0_i32_22 : i32 to vector<72x1xi32>
    %31 = arith.cmpi ne, %29, %30 : vector<72x1xi32>
    %c0_i32_23 = arith.constant 0 : i32
    %32 = vector.broadcast %c0_i32_23 : i32 to vector<72x1xi32>
    %33 = arith.cmpi slt, %29, %32 : vector<72x1xi32>
    %c0_i32_24 = arith.constant 0 : i32
    %34 = arith.cmpi slt, %27, %c0_i32_24 : i32
    %35 = vector.broadcast %34 : i1 to vector<72x1xi1>
    %36 = vector.broadcast %35 : vector<72x1xi1> to vector<72x1xi1>
    %37 = arith.xori %33, %36 : vector<72x1xi1>
    %38 = arith.andi %37, %31 : vector<72x1xi1>
    %39 = vector.broadcast %27 : i32 to vector<72x1xi32>
    %40 = arith.addi %29, %39 : vector<72x1xi32>
    %41 = arith.select %38, %40, %29 : vector<72x1xi1>, vector<72x1xi32>
    %c8_i32 = arith.constant 8 : i32
    %42 = vector.broadcast %c8_i32 : i32 to vector<72x1xi32>
    %43 = arith.cmpi slt, %41, %42 : vector<72x1xi32>
    %cst_25 = arith.constant 0.000000e+00 : f32
    %44 = vector.shape_cast %43 : vector<72x1xi1> to vector<72x1xi1>
    %45 = vector.broadcast %44 : vector<72x1xi1> to vector<72x16xi1>
    %46 = vector.broadcast %cst_25 : f32 to vector<72x16xf32>
    %47 = arith.select %45, %24, %46 : vector<72x16xi1>, vector<72x16xf32>
    %cst_26 = arith.constant dense<0.000000e+00> : vector<16xf32>
    %48 = vector.multi_reduction <add>, %47, %cst_26 [0] : vector<72x16xf32> to vector<16xf32>
    %49 = vector.shape_cast %48 : vector<16xf32> to vector<1x16xf32>
    %cst_27 = arith.constant 1.562500e-02 : f32
    %50 = vector.broadcast %cst_27 : f32 to vector<1x16xf32>
    %51 = arith.mulf %49, %50 : vector<1x16xf32>
    %52 = vector.broadcast %51 : vector<1x16xf32> to vector<72x16xf32>
    %53 = arith.subf %24, %52 : vector<72x16xf32>
    %cst_28 = arith.constant 0.000000e+00 : f32
    %54 = vector.shape_cast %43 : vector<72x1xi1> to vector<72x1xi1>
    %55 = vector.broadcast %54 : vector<72x1xi1> to vector<72x16xi1>
    %56 = vector.broadcast %cst_28 : f32 to vector<72x16xf32>
    %57 = arith.select %55, %53, %56 : vector<72x16xi1>, vector<72x16xf32>
    %58 = arith.mulf %57, %57 : vector<72x16xf32>
    %cst_29 = arith.constant dense<0.000000e+00> : vector<16xf32>
    %59 = vector.multi_reduction <add>, %58, %cst_29 [0] : vector<72x16xf32> to vector<16xf32>
    %60 = vector.shape_cast %59 : vector<16xf32> to vector<1x16xf32>
    %cst_30 = arith.constant 1.562500e-02 : f32
    %61 = vector.broadcast %cst_30 : f32 to vector<1x16xf32>
    %62 = arith.mulf %60, %61 : vector<1x16xf32>
    %63 = vector.broadcast %51 : vector<1x16xf32> to vector<72x16xf32>
    %64 = arith.subf %24, %63 : vector<72x16xf32>
    %cst_31 = arith.constant 9.99999974E-6 : f32
    %65 = vector.broadcast %cst_31 : f32 to vector<1x16xf32>
    %66 = arith.addf %62, %65 : vector<1x16xf32>
    %67 = math.rsqrt %66 : vector<1x16xf32>
    %68 = vector.broadcast %67 : vector<1x16xf32> to vector<72x16xf32>
    %69 = arith.mulf %64, %68 : vector<72x16xf32>
    %cst_32 = arith.constant 0.000000e+00 : f32
    %70 = vector.broadcast %cst_32 : f32 to vector<72x16xf32>
    %71 = arith.cmpf oge, %69, %70 : vector<72x16xf32>
    %cst_33 = arith.constant 2.000000e-01 : f32
    %72 = vector.broadcast %cst_33 : f32 to vector<72x16xf32>
    %73 = arith.mulf %72, %69 : vector<72x16xf32>
    %74 = arith.select %71, %69, %73 : vector<72x16xi1>, vector<72x16xf32>
    %75 = arith.truncf %74 : vector<72x16xf32> to vector<72x16xbf16>
    %c0_34 = arith.constant 0 : index
    %c0_35 = arith.constant 0 : index
    %c0_36 = arith.constant 0 : index
    %76 = vector.load %arg4[%c0_34, %c0_35, %c0_36] : memref<1x72x16xbf16, #tpu.memory_space<vmem>>, vector<1x72x16xbf16>
    %77 = vector.shape_cast %76 : vector<1x72x16xbf16> to vector<72x16xbf16>
    %78 = vector.shape_cast %75 : vector<72x16xbf16> to vector<1x72x16xbf16>
    tpu.vector_store %arg4[%c0_34, %c0_35, %c0_36], %78 {strides = array<i32>} : memref<1x72x16xbf16, #tpu.memory_space<vmem>>, vector<1x72x16xbf16>,
    return
  }
  func.func @transform_0(%arg0: i32, %arg1: i32) -> (i32, i32, i32) {
    %c0_i32 = arith.constant 0 : i32
    %c0_i32_0 = arith.constant 0 : i32
    %c0_i32_1 = arith.constant 0 : i32
    return %arg0, %c0_i32, %c0_i32_0 : i32, i32, i32
  }
  func.func @transform_1(%arg0: i32, %arg1: i32) -> (i32, i32, i32) {
    %c0_i32 = arith.constant 0 : i32
    %c0_i32_0 = arith.constant 0 : i32
    %c0_i32_1 = arith.constant 0 : i32
    return %c0_i32, %c0_i32_0, %arg1 : i32, i32, i32
  }
  func.func @transform_2(%arg0: i32, %arg1: i32) -> (i32, i32, i32) {
    %c0_i32 = arith.constant 0 : i32
    %c0_i32_0 = arith.constant 0 : i32
    return %arg0, %c0_i32, %arg1 : i32, i32, i32
  }
}

module attributes {stable_mosaic.version = 11 : i64} {
  func.func @_conv_kernel(%arg0: i32, %arg1: i32, %arg2: memref<1x30x64xbf16, #tpu.memory_space<vmem>>, %arg3: memref<4x64x32xbf16, #tpu.memory_space<vmem>>, %arg4: memref<1x20x32xbf16, #tpu.memory_space<vmem>>) attributes {dimension_semantics = [#tpu.dimension_semantics<parallel>, #tpu.dimension_semantics<parallel>], iteration_bounds = array<i64: 2, 1>, scalar_prefetch = 0 : i64, scratch_operands = 0 : i64, tpu.core_type = #tpu.core_type<tc>, window_params = [{transform_indices = @transform_0, window_bounds = array<i64: 1, 30, 64>}, {transform_indices = @transform_1, window_bounds = array<i64: 4, 64, 32>}, {transform_indices = @transform_2, window_bounds = array<i64: 1, 20, 32>}]} {
    %cst = arith.constant 0.000000e+00 : f32
    %0 = vector.broadcast %cst : f32 to vector<20x32xf32>
    %c0 = arith.constant 0 : index
    %c0_0 = arith.constant 0 : index
    %c0_1 = arith.constant 0 : index
    %1 = vector.load %arg2[%c0, %c0_0, %c0_1] : memref<1x30x64xbf16, #tpu.memory_space<vmem>>, vector<1x20x64xbf16>
    %2 = vector.shape_cast %1 : vector<1x20x64xbf16> to vector<20x64xbf16>
    %c0_2 = arith.constant 0 : index
    %c0_3 = arith.constant 0 : index
    %c0_4 = arith.constant 0 : index
    %3 = vector.load %arg3[%c0_2, %c0_3, %c0_4] : memref<4x64x32xbf16, #tpu.memory_space<vmem>>, vector<1x64x32xbf16>
    %4 = vector.shape_cast %3 : vector<1x64x32xbf16> to vector<64x32xbf16>
    %cst_5 = arith.constant dense<0.000000e+00> : vector<20x32xf32>
    %5 = tpu.matmul %2, %4, %cst_5 {dimension_numbers = #tpu.dot_dimension_numbers<[1], [0], [0], [1], [0, 0, 1, 1], [], []>} : vector<20x64xbf16>, vector<64x32xbf16>, vector<20x32xf32> -> vector<20x32xf32>
    %6 = arith.addf %0, %5 : vector<20x32xf32>
    %c0_6 = arith.constant 0 : index
    %c1 = arith.constant 1 : index
    %c0_7 = arith.constant 0 : index
    %7 = vector.load %arg2[%c0_6, %c1, %c0_7] : memref<1x30x64xbf16, #tpu.memory_space<vmem>>, vector<1x20x64xbf16>
    %8 = vector.shape_cast %7 : vector<1x20x64xbf16> to vector<20x64xbf16>
    %c1_8 = arith.constant 1 : index
    %c0_9 = arith.constant 0 : index
    %c0_10 = arith.constant 0 : index
    %9 = vector.load %arg3[%c1_8, %c0_9, %c0_10] : memref<4x64x32xbf16, #tpu.memory_space<vmem>>, vector<1x64x32xbf16>
    %10 = vector.shape_cast %9 : vector<1x64x32xbf16> to vector<64x32xbf16>
    %cst_11 = arith.constant dense<0.000000e+00> : vector<20x32xf32>
    %11 = tpu.matmul %8, %10, %cst_11 {dimension_numbers = #tpu.dot_dimension_numbers<[1], [0], [0], [1], [0, 0, 1, 1], [], []>} : vector<20x64xbf16>, vector<64x32xbf16>, vector<20x32xf32> -> vector<20x32xf32>
    %12 = arith.addf %6, %11 : vector<20x32xf32>
    %c0_12 = arith.constant 0 : index
    %c5 = arith.constant 5 : index
    %c0_13 = arith.constant 0 : index
    %13 = vector.load %arg2[%c0_12, %c5, %c0_13] : memref<1x30x64xbf16, #tpu.memory_space<vmem>>, vector<1x20x64xbf16>
    %14 = vector.shape_cast %13 : vector<1x20x64xbf16> to vector<20x64xbf16>
    %c2 = arith.constant 2 : index
    %c0_14 = arith.constant 0 : index
    %c0_15 = arith.constant 0 : index
    %15 = vector.load %arg3[%c2, %c0_14, %c0_15] : memref<4x64x32xbf16, #tpu.memory_space<vmem>>, vector<1x64x32xbf16>
    %16 = vector.shape_cast %15 : vector<1x64x32xbf16> to vector<64x32xbf16>
    %cst_16 = arith.constant dense<0.000000e+00> : vector<20x32xf32>
    %17 = tpu.matmul %14, %16, %cst_16 {dimension_numbers = #tpu.dot_dimension_numbers<[1], [0], [0], [1], [0, 0, 1, 1], [], []>} : vector<20x64xbf16>, vector<64x32xbf16>, vector<20x32xf32> -> vector<20x32xf32>
    %18 = arith.addf %12, %17 : vector<20x32xf32>
    %c0_17 = arith.constant 0 : index
    %c6 = arith.constant 6 : index
    %c0_18 = arith.constant 0 : index
    %19 = vector.load %arg2[%c0_17, %c6, %c0_18] : memref<1x30x64xbf16, #tpu.memory_space<vmem>>, vector<1x20x64xbf16>
    %20 = vector.shape_cast %19 : vector<1x20x64xbf16> to vector<20x64xbf16>
    %c3 = arith.constant 3 : index
    %c0_19 = arith.constant 0 : index
    %c0_20 = arith.constant 0 : index
    %21 = vector.load %arg3[%c3, %c0_19, %c0_20] : memref<4x64x32xbf16, #tpu.memory_space<vmem>>, vector<1x64x32xbf16>
    %22 = vector.shape_cast %21 : vector<1x64x32xbf16> to vector<64x32xbf16>
    %cst_21 = arith.constant dense<0.000000e+00> : vector<20x32xf32>
    %23 = tpu.matmul %20, %22, %cst_21 {dimension_numbers = #tpu.dot_dimension_numbers<[1], [0], [0], [1], [0, 0, 1, 1], [], []>} : vector<20x64xbf16>, vector<64x32xbf16>, vector<20x32xf32> -> vector<20x32xf32>
    %24 = arith.addf %18, %23 : vector<20x32xf32>
    %25 = tpu.iota {dimensions = array<i32: 0>} : vector<20x1xi32>
    %c5_i32 = arith.constant 5 : i32
    %c0_i32 = arith.constant 0 : i32
    %26 = arith.cmpi eq, %c5_i32, %c0_i32 : i32
    %c1_i32 = arith.constant 1 : i32
    %27 = arith.select %26, %c1_i32, %c5_i32 : i32
    %28 = vector.broadcast %27 : i32 to vector<20x1xi32>
    %29 = arith.remsi %25, %28 : vector<20x1xi32>
    %c0_i32_22 = arith.constant 0 : i32
    %30 = vector.broadcast %c0_i32_22 : i32 to vector<20x1xi32>
    %31 = arith.cmpi ne, %29, %30 : vector<20x1xi32>
    %c0_i32_23 = arith.constant 0 : i32
    %32 = vector.broadcast %c0_i32_23 : i32 to vector<20x1xi32>
    %33 = arith.cmpi slt, %29, %32 : vector<20x1xi32>
    %c0_i32_24 = arith.constant 0 : i32
    %34 = arith.cmpi slt, %27, %c0_i32_24 : i32
    %35 = vector.broadcast %34 : i1 to vector<20x1xi1>
    %36 = vector.broadcast %35 : vector<20x1xi1> to vector<20x1xi1>
    %37 = arith.xori %33, %36 : vector<20x1xi1>
    %38 = arith.andi %37, %31 : vector<20x1xi1>
    %39 = vector.broadcast %27 : i32 to vector<20x1xi32>
    %40 = arith.addi %29, %39 : vector<20x1xi32>
    %41 = arith.select %38, %40, %29 : vector<20x1xi1>, vector<20x1xi32>
    %c4_i32 = arith.constant 4 : i32
    %42 = vector.broadcast %c4_i32 : i32 to vector<20x1xi32>
    %43 = arith.cmpi slt, %41, %42 : vector<20x1xi32>
    %cst_25 = arith.constant 0.000000e+00 : f32
    %44 = vector.shape_cast %43 : vector<20x1xi1> to vector<20x1xi1>
    %45 = vector.broadcast %44 : vector<20x1xi1> to vector<20x32xi1>
    %46 = vector.broadcast %cst_25 : f32 to vector<20x32xf32>
    %47 = arith.select %45, %24, %46 : vector<20x32xi1>, vector<20x32xf32>
    %cst_26 = arith.constant dense<0.000000e+00> : vector<32xf32>
    %48 = vector.multi_reduction <add>, %47, %cst_26 [0] : vector<20x32xf32> to vector<32xf32>
    %49 = vector.shape_cast %48 : vector<32xf32> to vector<1x32xf32>
    %cst_27 = arith.constant 6.250000e-02 : f32
    %50 = vector.broadcast %cst_27 : f32 to vector<1x32xf32>
    %51 = arith.mulf %49, %50 : vector<1x32xf32>
    %52 = vector.broadcast %51 : vector<1x32xf32> to vector<20x32xf32>
    %53 = arith.subf %24, %52 : vector<20x32xf32>
    %cst_28 = arith.constant 0.000000e+00 : f32
    %54 = vector.shape_cast %43 : vector<20x1xi1> to vector<20x1xi1>
    %55 = vector.broadcast %54 : vector<20x1xi1> to vector<20x32xi1>
    %56 = vector.broadcast %cst_28 : f32 to vector<20x32xf32>
    %57 = arith.select %55, %53, %56 : vector<20x32xi1>, vector<20x32xf32>
    %58 = arith.mulf %57, %57 : vector<20x32xf32>
    %cst_29 = arith.constant dense<0.000000e+00> : vector<32xf32>
    %59 = vector.multi_reduction <add>, %58, %cst_29 [0] : vector<20x32xf32> to vector<32xf32>
    %60 = vector.shape_cast %59 : vector<32xf32> to vector<1x32xf32>
    %cst_30 = arith.constant 6.250000e-02 : f32
    %61 = vector.broadcast %cst_30 : f32 to vector<1x32xf32>
    %62 = arith.mulf %60, %61 : vector<1x32xf32>
    %63 = vector.broadcast %51 : vector<1x32xf32> to vector<20x32xf32>
    %64 = arith.subf %24, %63 : vector<20x32xf32>
    %cst_31 = arith.constant 9.99999974E-6 : f32
    %65 = vector.broadcast %cst_31 : f32 to vector<1x32xf32>
    %66 = arith.addf %62, %65 : vector<1x32xf32>
    %67 = math.rsqrt %66 : vector<1x32xf32>
    %68 = vector.broadcast %67 : vector<1x32xf32> to vector<20x32xf32>
    %69 = arith.mulf %64, %68 : vector<20x32xf32>
    %cst_32 = arith.constant 0.000000e+00 : f32
    %70 = vector.broadcast %cst_32 : f32 to vector<20x32xf32>
    %71 = arith.cmpf oge, %69, %70 : vector<20x32xf32>
    %cst_33 = arith.constant 2.000000e-01 : f32
    %72 = vector.broadcast %cst_33 : f32 to vector<20x32xf32>
    %73 = arith.mulf %72, %69 : vector<20x32xf32>
    %74 = arith.select %71, %69, %73 : vector<20x32xi1>, vector<20x32xf32>
    %75 = arith.truncf %74 : vector<20x32xf32> to vector<20x32xbf16>
    %c0_34 = arith.constant 0 : index
    %c0_35 = arith.constant 0 : index
    %c0_36 = arith.constant 0 : index
    %76 = vector.load %arg4[%c0_34, %c0_35, %c0_36] : memref<1x20x32xbf16, #tpu.memory_space<vmem>>, vector<1x20x32xbf16>
    %77 = vector.shape_cast %76 : vector<1x20x32xbf16> to vector<20x32xbf16>
    %78 = vector.shape_cast %75 : vector<20x32xbf16> to vector<1x20x32xbf16>
    tpu.vector_store %arg4[%c0_34, %c0_35, %c0_36], %78 {strides = array<i32>} : memref<1x20x32xbf16, #tpu.memory_space<vmem>>, vector<1x20x32xbf16>,
    return
  }
  func.func @transform_0(%arg0: i32, %arg1: i32) -> (i32, i32, i32) {
    %c0_i32 = arith.constant 0 : i32
    %c0_i32_0 = arith.constant 0 : i32
    %c0_i32_1 = arith.constant 0 : i32
    return %arg0, %c0_i32, %c0_i32_0 : i32, i32, i32
  }
  func.func @transform_1(%arg0: i32, %arg1: i32) -> (i32, i32, i32) {
    %c0_i32 = arith.constant 0 : i32
    %c0_i32_0 = arith.constant 0 : i32
    %c0_i32_1 = arith.constant 0 : i32
    return %c0_i32, %c0_i32_0, %arg1 : i32, i32, i32
  }
  func.func @transform_2(%arg0: i32, %arg1: i32) -> (i32, i32, i32) {
    %c0_i32 = arith.constant 0 : i32
    %c0_i32_0 = arith.constant 0 : i32
    return %arg0, %c0_i32, %arg1 : i32, i32, i32
  }
}

module attributes {stable_mosaic.version = 11 : i64} {
  func.func @_conv_kernel(%arg0: i32, %arg1: i32, %arg2: memref<1x42x32xbf16, #tpu.memory_space<vmem>>, %arg3: memref<16x32x64xbf16, #tpu.memory_space<vmem>>, %arg4: memref<1x18x64xbf16, #tpu.memory_space<vmem>>) attributes {dimension_semantics = [#tpu.dimension_semantics<parallel>, #tpu.dimension_semantics<parallel>], iteration_bounds = array<i64: 2, 1>, scalar_prefetch = 0 : i64, scratch_operands = 0 : i64, tpu.core_type = #tpu.core_type<tc>, window_params = [{transform_indices = @transform_0, window_bounds = array<i64: 1, 42, 32>}, {transform_indices = @transform_1, window_bounds = array<i64: 16, 32, 64>}, {transform_indices = @transform_2, window_bounds = array<i64: 1, 18, 64>}]} {
    %cst = arith.constant 0.000000e+00 : f32
    %0 = vector.broadcast %cst : f32 to vector<18x64xf32>
    %c0 = arith.constant 0 : index
    %c0_0 = arith.constant 0 : index
    %c0_1 = arith.constant 0 : index
    %1 = vector.load %arg2[%c0, %c0_0, %c0_1] : memref<1x42x32xbf16, #tpu.memory_space<vmem>>, vector<1x18x32xbf16>
    %2 = vector.shape_cast %1 : vector<1x18x32xbf16> to vector<18x32xbf16>
    %c0_2 = arith.constant 0 : index
    %c0_3 = arith.constant 0 : index
    %c0_4 = arith.constant 0 : index
    %3 = vector.load %arg3[%c0_2, %c0_3, %c0_4] : memref<16x32x64xbf16, #tpu.memory_space<vmem>>, vector<1x32x64xbf16>
    %4 = vector.shape_cast %3 : vector<1x32x64xbf16> to vector<32x64xbf16>
    %cst_5 = arith.constant dense<0.000000e+00> : vector<18x64xf32>
    %5 = tpu.matmul %2, %4, %cst_5 {dimension_numbers = #tpu.dot_dimension_numbers<[1], [0], [0], [1], [0, 0, 1, 1], [], []>} : vector<18x32xbf16>, vector<32x64xbf16>, vector<18x64xf32> -> vector<18x64xf32>
    %6 = arith.addf %0, %5 : vector<18x64xf32>
    %c0_6 = arith.constant 0 : index
    %c1 = arith.constant 1 : index
    %c0_7 = arith.constant 0 : index
    %7 = vector.load %arg2[%c0_6, %c1, %c0_7] : memref<1x42x32xbf16, #tpu.memory_space<vmem>>, vector<1x18x32xbf16>
    %8 = vector.shape_cast %7 : vector<1x18x32xbf16> to vector<18x32xbf16>
    %c1_8 = arith.constant 1 : index
    %c0_9 = arith.constant 0 : index
    %c0_10 = arith.constant 0 : index
    %9 = vector.load %arg3[%c1_8, %c0_9, %c0_10] : memref<16x32x64xbf16, #tpu.memory_space<vmem>>, vector<1x32x64xbf16>
    %10 = vector.shape_cast %9 : vector<1x32x64xbf16> to vector<32x64xbf16>
    %cst_11 = arith.constant dense<0.000000e+00> : vector<18x64xf32>
    %11 = tpu.matmul %8, %10, %cst_11 {dimension_numbers = #tpu.dot_dimension_numbers<[1], [0], [0], [1], [0, 0, 1, 1], [], []>} : vector<18x32xbf16>, vector<32x64xbf16>, vector<18x64xf32> -> vector<18x64xf32>
    %12 = arith.addf %6, %11 : vector<18x64xf32>
    %c0_12 = arith.constant 0 : index
    %c2 = arith.constant 2 : index
    %c0_13 = arith.constant 0 : index
    %13 = vector.load %arg2[%c0_12, %c2, %c0_13] : memref<1x42x32xbf16, #tpu.memory_space<vmem>>, vector<1x18x32xbf16>
    %14 = vector.shape_cast %13 : vector<1x18x32xbf16> to vector<18x32xbf16>
    %c2_14 = arith.constant 2 : index
    %c0_15 = arith.constant 0 : index
    %c0_16 = arith.constant 0 : index
    %15 = vector.load %arg3[%c2_14, %c0_15, %c0_16] : memref<16x32x64xbf16, #tpu.memory_space<vmem>>, vector<1x32x64xbf16>
    %16 = vector.shape_cast %15 : vector<1x32x64xbf16> to vector<32x64xbf16>
    %cst_17 = arith.constant dense<0.000000e+00> : vector<18x64xf32>
    %17 = tpu.matmul %14, %16, %cst_17 {dimension_numbers = #tpu.dot_dimension_numbers<[1], [0], [0], [1], [0, 0, 1, 1], [], []>} : vector<18x32xbf16>, vector<32x64xbf16>, vector<18x64xf32> -> vector<18x64xf32>
    %18 = arith.addf %12, %17 : vector<18x64xf32>
    %c0_18 = arith.constant 0 : index
    %c3 = arith.constant 3 : index
    %c0_19 = arith.constant 0 : index
    %19 = vector.load %arg2[%c0_18, %c3, %c0_19] : memref<1x42x32xbf16, #tpu.memory_space<vmem>>, vector<1x18x32xbf16>
    %20 = vector.shape_cast %19 : vector<1x18x32xbf16> to vector<18x32xbf16>
    %c3_20 = arith.constant 3 : index
    %c0_21 = arith.constant 0 : index
    %c0_22 = arith.constant 0 : index
    %21 = vector.load %arg3[%c3_20, %c0_21, %c0_22] : memref<16x32x64xbf16, #tpu.memory_space<vmem>>, vector<1x32x64xbf16>
    %22 = vector.shape_cast %21 : vector<1x32x64xbf16> to vector<32x64xbf16>
    %cst_23 = arith.constant dense<0.000000e+00> : vector<18x64xf32>
    %23 = tpu.matmul %20, %22, %cst_23 {dimension_numbers = #tpu.dot_dimension_numbers<[1], [0], [0], [1], [0, 0, 1, 1], [], []>} : vector<18x32xbf16>, vector<32x64xbf16>, vector<18x64xf32> -> vector<18x64xf32>
    %24 = arith.addf %18, %23 : vector<18x64xf32>
    %c0_24 = arith.constant 0 : index
    %c6 = arith.constant 6 : index
    %c0_25 = arith.constant 0 : index
    %25 = vector.load %arg2[%c0_24, %c6, %c0_25] : memref<1x42x32xbf16, #tpu.memory_space<vmem>>, vector<1x18x32xbf16>
    %26 = vector.shape_cast %25 : vector<1x18x32xbf16> to vector<18x32xbf16>
    %c4 = arith.constant 4 : index
    %c0_26 = arith.constant 0 : index
    %c0_27 = arith.constant 0 : index
    %27 = vector.load %arg3[%c4, %c0_26, %c0_27] : memref<16x32x64xbf16, #tpu.memory_space<vmem>>, vector<1x32x64xbf16>
    %28 = vector.shape_cast %27 : vector<1x32x64xbf16> to vector<32x64xbf16>
    %cst_28 = arith.constant dense<0.000000e+00> : vector<18x64xf32>
    %29 = tpu.matmul %26, %28, %cst_28 {dimension_numbers = #tpu.dot_dimension_numbers<[1], [0], [0], [1], [0, 0, 1, 1], [], []>} : vector<18x32xbf16>, vector<32x64xbf16>, vector<18x64xf32> -> vector<18x64xf32>
    %30 = arith.addf %24, %29 : vector<18x64xf32>
    %c0_29 = arith.constant 0 : index
    %c7 = arith.constant 7 : index
    %c0_30 = arith.constant 0 : index
    %31 = vector.load %arg2[%c0_29, %c7, %c0_30] : memref<1x42x32xbf16, #tpu.memory_space<vmem>>, vector<1x18x32xbf16>
    %32 = vector.shape_cast %31 : vector<1x18x32xbf16> to vector<18x32xbf16>
    %c5 = arith.constant 5 : index
    %c0_31 = arith.constant 0 : index
    %c0_32 = arith.constant 0 : index
    %33 = vector.load %arg3[%c5, %c0_31, %c0_32] : memref<16x32x64xbf16, #tpu.memory_space<vmem>>, vector<1x32x64xbf16>
    %34 = vector.shape_cast %33 : vector<1x32x64xbf16> to vector<32x64xbf16>
    %cst_33 = arith.constant dense<0.000000e+00> : vector<18x64xf32>
    %35 = tpu.matmul %32, %34, %cst_33 {dimension_numbers = #tpu.dot_dimension_numbers<[1], [0], [0], [1], [0, 0, 1, 1], [], []>} : vector<18x32xbf16>, vector<32x64xbf16>, vector<18x64xf32> -> vector<18x64xf32>
    %36 = arith.addf %30, %35 : vector<18x64xf32>
    %c0_34 = arith.constant 0 : index
    %c8 = arith.constant 8 : index
    %c0_35 = arith.constant 0 : index
    %37 = vector.load %arg2[%c0_34, %c8, %c0_35] : memref<1x42x32xbf16, #tpu.memory_space<vmem>>, vector<1x18x32xbf16>
    %38 = vector.shape_cast %37 : vector<1x18x32xbf16> to vector<18x32xbf16>
    %c6_36 = arith.constant 6 : index
    %c0_37 = arith.constant 0 : index
    %c0_38 = arith.constant 0 : index
    %39 = vector.load %arg3[%c6_36, %c0_37, %c0_38] : memref<16x32x64xbf16, #tpu.memory_space<vmem>>, vector<1x32x64xbf16>
    %40 = vector.shape_cast %39 : vector<1x32x64xbf16> to vector<32x64xbf16>
    %cst_39 = arith.constant dense<0.000000e+00> : vector<18x64xf32>
    %41 = tpu.matmul %38, %40, %cst_39 {dimension_numbers = #tpu.dot_dimension_numbers<[1], [0], [0], [1], [0, 0, 1, 1], [], []>} : vector<18x32xbf16>, vector<32x64xbf16>, vector<18x64xf32> -> vector<18x64xf32>
    %42 = arith.addf %36, %41 : vector<18x64xf32>
    %c0_40 = arith.constant 0 : index
    %c9 = arith.constant 9 : index
    %c0_41 = arith.constant 0 : index
    %43 = vector.load %arg2[%c0_40, %c9, %c0_41] : memref<1x42x32xbf16, #tpu.memory_space<vmem>>, vector<1x18x32xbf16>
    %44 = vector.shape_cast %43 : vector<1x18x32xbf16> to vector<18x32xbf16>
    %c7_42 = arith.constant 7 : index
    %c0_43 = arith.constant 0 : index
    %c0_44 = arith.constant 0 : index
    %45 = vector.load %arg3[%c7_42, %c0_43, %c0_44] : memref<16x32x64xbf16, #tpu.memory_space<vmem>>, vector<1x32x64xbf16>
    %46 = vector.shape_cast %45 : vector<1x32x64xbf16> to vector<32x64xbf16>
    %cst_45 = arith.constant dense<0.000000e+00> : vector<18x64xf32>
    %47 = tpu.matmul %44, %46, %cst_45 {dimension_numbers = #tpu.dot_dimension_numbers<[1], [0], [0], [1], [0, 0, 1, 1], [], []>} : vector<18x32xbf16>, vector<32x64xbf16>, vector<18x64xf32> -> vector<18x64xf32>
    %48 = arith.addf %42, %47 : vector<18x64xf32>
    %c0_46 = arith.constant 0 : index
    %c12 = arith.constant 12 : index
    %c0_47 = arith.constant 0 : index
    %49 = vector.load %arg2[%c0_46, %c12, %c0_47] : memref<1x42x32xbf16, #tpu.memory_space<vmem>>, vector<1x18x32xbf16>
    %50 = vector.shape_cast %49 : vector<1x18x32xbf16> to vector<18x32xbf16>
    %c8_48 = arith.constant 8 : index
    %c0_49 = arith.constant 0 : index
    %c0_50 = arith.constant 0 : index
    %51 = vector.load %arg3[%c8_48, %c0_49, %c0_50] : memref<16x32x64xbf16, #tpu.memory_space<vmem>>, vector<1x32x64xbf16>
    %52 = vector.shape_cast %51 : vector<1x32x64xbf16> to vector<32x64xbf16>
    %cst_51 = arith.constant dense<0.000000e+00> : vector<18x64xf32>
    %53 = tpu.matmul %50, %52, %cst_51 {dimension_numbers = #tpu.dot_dimension_numbers<[1], [0], [0], [1], [0, 0, 1, 1], [], []>} : vector<18x32xbf16>, vector<32x64xbf16>, vector<18x64xf32> -> vector<18x64xf32>
    %54 = arith.addf %48, %53 : vector<18x64xf32>
    %c0_52 = arith.constant 0 : index
    %c13 = arith.constant 13 : index
    %c0_53 = arith.constant 0 : index
    %55 = vector.load %arg2[%c0_52, %c13, %c0_53] : memref<1x42x32xbf16, #tpu.memory_space<vmem>>, vector<1x18x32xbf16>
    %56 = vector.shape_cast %55 : vector<1x18x32xbf16> to vector<18x32xbf16>
    %c9_54 = arith.constant 9 : index
    %c0_55 = arith.constant 0 : index
    %c0_56 = arith.constant 0 : index
    %57 = vector.load %arg3[%c9_54, %c0_55, %c0_56] : memref<16x32x64xbf16, #tpu.memory_space<vmem>>, vector<1x32x64xbf16>
    %58 = vector.shape_cast %57 : vector<1x32x64xbf16> to vector<32x64xbf16>
    %cst_57 = arith.constant dense<0.000000e+00> : vector<18x64xf32>
    %59 = tpu.matmul %56, %58, %cst_57 {dimension_numbers = #tpu.dot_dimension_numbers<[1], [0], [0], [1], [0, 0, 1, 1], [], []>} : vector<18x32xbf16>, vector<32x64xbf16>, vector<18x64xf32> -> vector<18x64xf32>
    %60 = arith.addf %54, %59 : vector<18x64xf32>
    %c0_58 = arith.constant 0 : index
    %c14 = arith.constant 14 : index
    %c0_59 = arith.constant 0 : index
    %61 = vector.load %arg2[%c0_58, %c14, %c0_59] : memref<1x42x32xbf16, #tpu.memory_space<vmem>>, vector<1x18x32xbf16>
    %62 = vector.shape_cast %61 : vector<1x18x32xbf16> to vector<18x32xbf16>
    %c10 = arith.constant 10 : index
    %c0_60 = arith.constant 0 : index
    %c0_61 = arith.constant 0 : index
    %63 = vector.load %arg3[%c10, %c0_60, %c0_61] : memref<16x32x64xbf16, #tpu.memory_space<vmem>>, vector<1x32x64xbf16>
    %64 = vector.shape_cast %63 : vector<1x32x64xbf16> to vector<32x64xbf16>
    %cst_62 = arith.constant dense<0.000000e+00> : vector<18x64xf32>
    %65 = tpu.matmul %62, %64, %cst_62 {dimension_numbers = #tpu.dot_dimension_numbers<[1], [0], [0], [1], [0, 0, 1, 1], [], []>} : vector<18x32xbf16>, vector<32x64xbf16>, vector<18x64xf32> -> vector<18x64xf32>
    %66 = arith.addf %60, %65 : vector<18x64xf32>
    %c0_63 = arith.constant 0 : index
    %c15 = arith.constant 15 : index
    %c0_64 = arith.constant 0 : index
    %67 = vector.load %arg2[%c0_63, %c15, %c0_64] : memref<1x42x32xbf16, #tpu.memory_space<vmem>>, vector<1x18x32xbf16>
    %68 = vector.shape_cast %67 : vector<1x18x32xbf16> to vector<18x32xbf16>
    %c11 = arith.constant 11 : index
    %c0_65 = arith.constant 0 : index
    %c0_66 = arith.constant 0 : index
    %69 = vector.load %arg3[%c11, %c0_65, %c0_66] : memref<16x32x64xbf16, #tpu.memory_space<vmem>>, vector<1x32x64xbf16>
    %70 = vector.shape_cast %69 : vector<1x32x64xbf16> to vector<32x64xbf16>
    %cst_67 = arith.constant dense<0.000000e+00> : vector<18x64xf32>
    %71 = tpu.matmul %68, %70, %cst_67 {dimension_numbers = #tpu.dot_dimension_numbers<[1], [0], [0], [1], [0, 0, 1, 1], [], []>} : vector<18x32xbf16>, vector<32x64xbf16>, vector<18x64xf32> -> vector<18x64xf32>
    %72 = arith.addf %66, %71 : vector<18x64xf32>
    %c0_68 = arith.constant 0 : index
    %c18 = arith.constant 18 : index
    %c0_69 = arith.constant 0 : index
    %73 = vector.load %arg2[%c0_68, %c18, %c0_69] : memref<1x42x32xbf16, #tpu.memory_space<vmem>>, vector<1x18x32xbf16>
    %74 = vector.shape_cast %73 : vector<1x18x32xbf16> to vector<18x32xbf16>
    %c12_70 = arith.constant 12 : index
    %c0_71 = arith.constant 0 : index
    %c0_72 = arith.constant 0 : index
    %75 = vector.load %arg3[%c12_70, %c0_71, %c0_72] : memref<16x32x64xbf16, #tpu.memory_space<vmem>>, vector<1x32x64xbf16>
    %76 = vector.shape_cast %75 : vector<1x32x64xbf16> to vector<32x64xbf16>
    %cst_73 = arith.constant dense<0.000000e+00> : vector<18x64xf32>
    %77 = tpu.matmul %74, %76, %cst_73 {dimension_numbers = #tpu.dot_dimension_numbers<[1], [0], [0], [1], [0, 0, 1, 1], [], []>} : vector<18x32xbf16>, vector<32x64xbf16>, vector<18x64xf32> -> vector<18x64xf32>
    %78 = arith.addf %72, %77 : vector<18x64xf32>
    %c0_74 = arith.constant 0 : index
    %c19 = arith.constant 19 : index
    %c0_75 = arith.constant 0 : index
    %79 = vector.load %arg2[%c0_74, %c19, %c0_75] : memref<1x42x32xbf16, #tpu.memory_space<vmem>>, vector<1x18x32xbf16>
    %80 = vector.shape_cast %79 : vector<1x18x32xbf16> to vector<18x32xbf16>
    %c13_76 = arith.constant 13 : index
    %c0_77 = arith.constant 0 : index
    %c0_78 = arith.constant 0 : index
    %81 = vector.load %arg3[%c13_76, %c0_77, %c0_78] : memref<16x32x64xbf16, #tpu.memory_space<vmem>>, vector<1x32x64xbf16>
    %82 = vector.shape_cast %81 : vector<1x32x64xbf16> to vector<32x64xbf16>
    %cst_79 = arith.constant dense<0.000000e+00> : vector<18x64xf32>
    %83 = tpu.matmul %80, %82, %cst_79 {dimension_numbers = #tpu.dot_dimension_numbers<[1], [0], [0], [1], [0, 0, 1, 1], [], []>} : vector<18x32xbf16>, vector<32x64xbf16>, vector<18x64xf32> -> vector<18x64xf32>
    %84 = arith.addf %78, %83 : vector<18x64xf32>
    %c0_80 = arith.constant 0 : index
    %c20 = arith.constant 20 : index
    %c0_81 = arith.constant 0 : index
    %85 = vector.load %arg2[%c0_80, %c20, %c0_81] : memref<1x42x32xbf16, #tpu.memory_space<vmem>>, vector<1x18x32xbf16>
    %86 = vector.shape_cast %85 : vector<1x18x32xbf16> to vector<18x32xbf16>
    %c14_82 = arith.constant 14 : index
    %c0_83 = arith.constant 0 : index
    %c0_84 = arith.constant 0 : index
    %87 = vector.load %arg3[%c14_82, %c0_83, %c0_84] : memref<16x32x64xbf16, #tpu.memory_space<vmem>>, vector<1x32x64xbf16>
    %88 = vector.shape_cast %87 : vector<1x32x64xbf16> to vector<32x64xbf16>
    %cst_85 = arith.constant dense<0.000000e+00> : vector<18x64xf32>
    %89 = tpu.matmul %86, %88, %cst_85 {dimension_numbers = #tpu.dot_dimension_numbers<[1], [0], [0], [1], [0, 0, 1, 1], [], []>} : vector<18x32xbf16>, vector<32x64xbf16>, vector<18x64xf32> -> vector<18x64xf32>
    %90 = arith.addf %84, %89 : vector<18x64xf32>
    %c0_86 = arith.constant 0 : index
    %c21 = arith.constant 21 : index
    %c0_87 = arith.constant 0 : index
    %91 = vector.load %arg2[%c0_86, %c21, %c0_87] : memref<1x42x32xbf16, #tpu.memory_space<vmem>>, vector<1x18x32xbf16>
    %92 = vector.shape_cast %91 : vector<1x18x32xbf16> to vector<18x32xbf16>
    %c15_88 = arith.constant 15 : index
    %c0_89 = arith.constant 0 : index
    %c0_90 = arith.constant 0 : index
    %93 = vector.load %arg3[%c15_88, %c0_89, %c0_90] : memref<16x32x64xbf16, #tpu.memory_space<vmem>>, vector<1x32x64xbf16>
    %94 = vector.shape_cast %93 : vector<1x32x64xbf16> to vector<32x64xbf16>
    %cst_91 = arith.constant dense<0.000000e+00> : vector<18x64xf32>
    %95 = tpu.matmul %92, %94, %cst_91 {dimension_numbers = #tpu.dot_dimension_numbers<[1], [0], [0], [1], [0, 0, 1, 1], [], []>} : vector<18x32xbf16>, vector<32x64xbf16>, vector<18x64xf32> -> vector<18x64xf32>
    %96 = arith.addf %90, %95 : vector<18x64xf32>
    %97 = tpu.iota {dimensions = array<i32: 0>} : vector<18x1xi32>
    %c6_i32 = arith.constant 6 : i32
    %c0_i32 = arith.constant 0 : i32
    %98 = arith.cmpi eq, %c6_i32, %c0_i32 : i32
    %c1_i32 = arith.constant 1 : i32
    %99 = arith.select %98, %c1_i32, %c6_i32 : i32
    %100 = vector.broadcast %99 : i32 to vector<18x1xi32>
    %101 = arith.remsi %97, %100 : vector<18x1xi32>
    %c0_i32_92 = arith.constant 0 : i32
    %102 = vector.broadcast %c0_i32_92 : i32 to vector<18x1xi32>
    %103 = arith.cmpi ne, %101, %102 : vector<18x1xi32>
    %c0_i32_93 = arith.constant 0 : i32
    %104 = vector.broadcast %c0_i32_93 : i32 to vector<18x1xi32>
    %105 = arith.cmpi slt, %101, %104 : vector<18x1xi32>
    %c0_i32_94 = arith.constant 0 : i32
    %106 = arith.cmpi slt, %99, %c0_i32_94 : i32
    %107 = vector.broadcast %106 : i1 to vector<18x1xi1>
    %108 = vector.broadcast %107 : vector<18x1xi1> to vector<18x1xi1>
    %109 = arith.xori %105, %108 : vector<18x1xi1>
    %110 = arith.andi %109, %103 : vector<18x1xi1>
    %111 = vector.broadcast %99 : i32 to vector<18x1xi32>
    %112 = arith.addi %101, %111 : vector<18x1xi32>
    %113 = arith.select %110, %112, %101 : vector<18x1xi1>, vector<18x1xi32>
    %c3_i32 = arith.constant 3 : i32
    %114 = vector.broadcast %c3_i32 : i32 to vector<18x1xi32>
    %115 = arith.cmpi slt, %113, %114 : vector<18x1xi32>
    %cst_95 = arith.constant 0.000000e+00 : f32
    %116 = vector.shape_cast %115 : vector<18x1xi1> to vector<18x1xi1>
    %117 = vector.broadcast %116 : vector<18x1xi1> to vector<18x64xi1>
    %118 = vector.broadcast %cst_95 : f32 to vector<18x64xf32>
    %119 = arith.select %117, %96, %118 : vector<18x64xi1>, vector<18x64xf32>
    %cst_96 = arith.constant dense<0.000000e+00> : vector<64xf32>
    %120 = vector.multi_reduction <add>, %119, %cst_96 [0] : vector<18x64xf32> to vector<64xf32>
    %121 = vector.shape_cast %120 : vector<64xf32> to vector<1x64xf32>
    %cst_97 = arith.constant 0.111111112 : f32
    %122 = vector.broadcast %cst_97 : f32 to vector<1x64xf32>
    %123 = arith.mulf %121, %122 : vector<1x64xf32>
    %124 = vector.broadcast %123 : vector<1x64xf32> to vector<18x64xf32>
    %125 = arith.subf %96, %124 : vector<18x64xf32>
    %cst_98 = arith.constant 0.000000e+00 : f32
    %126 = vector.shape_cast %115 : vector<18x1xi1> to vector<18x1xi1>
    %127 = vector.broadcast %126 : vector<18x1xi1> to vector<18x64xi1>
    %128 = vector.broadcast %cst_98 : f32 to vector<18x64xf32>
    %129 = arith.select %127, %125, %128 : vector<18x64xi1>, vector<18x64xf32>
    %130 = arith.mulf %129, %129 : vector<18x64xf32>
    %cst_99 = arith.constant dense<0.000000e+00> : vector<64xf32>
    %131 = vector.multi_reduction <add>, %130, %cst_99 [0] : vector<18x64xf32> to vector<64xf32>
    %132 = vector.shape_cast %131 : vector<64xf32> to vector<1x64xf32>
    %cst_100 = arith.constant 0.111111112 : f32
    %133 = vector.broadcast %cst_100 : f32 to vector<1x64xf32>
    %134 = arith.mulf %132, %133 : vector<1x64xf32>
    %135 = vector.broadcast %123 : vector<1x64xf32> to vector<18x64xf32>
    %136 = arith.subf %96, %135 : vector<18x64xf32>
    %cst_101 = arith.constant 9.99999974E-6 : f32
    %137 = vector.broadcast %cst_101 : f32 to vector<1x64xf32>
    %138 = arith.addf %134, %137 : vector<1x64xf32>
    %139 = math.rsqrt %138 : vector<1x64xf32>
    %140 = vector.broadcast %139 : vector<1x64xf32> to vector<18x64xf32>
    %141 = arith.mulf %136, %140 : vector<18x64xf32>
    %cst_102 = arith.constant 0.000000e+00 : f32
    %142 = vector.broadcast %cst_102 : f32 to vector<18x64xf32>
    %143 = arith.cmpf oge, %141, %142 : vector<18x64xf32>
    %cst_103 = arith.constant 2.000000e-01 : f32
    %144 = vector.broadcast %cst_103 : f32 to vector<18x64xf32>
    %145 = arith.mulf %144, %141 : vector<18x64xf32>
    %146 = arith.select %143, %141, %145 : vector<18x64xi1>, vector<18x64xf32>
    %147 = arith.truncf %146 : vector<18x64xf32> to vector<18x64xbf16>
    %c0_104 = arith.constant 0 : index
    %c0_105 = arith.constant 0 : index
    %c0_106 = arith.constant 0 : index
    %148 = vector.load %arg4[%c0_104, %c0_105, %c0_106] : memref<1x18x64xbf16, #tpu.memory_space<vmem>>, vector<1x18x64xbf16>
    %149 = vector.shape_cast %148 : vector<1x18x64xbf16> to vector<18x64xbf16>
    %150 = vector.shape_cast %147 : vector<18x64xbf16> to vector<1x18x64xbf16>
    tpu.vector_store %arg4[%c0_104, %c0_105, %c0_106], %150 {strides = array<i32>} : memref<1x18x64xbf16, #tpu.memory_space<vmem>>, vector<1x18x64xbf16>,
    return
  }
  func.func @transform_0(%arg0: i32, %arg1: i32) -> (i32, i32, i32) {
    %c0_i32 = arith.constant 0 : i32
    %c0_i32_0 = arith.constant 0 : i32
    %c0_i32_1 = arith.constant 0 : i32
    return %arg0, %c0_i32, %c0_i32_0 : i32, i32, i32
  }
  func.func @transform_1(%arg0: i32, %arg1: i32) -> (i32, i32, i32) {
    %c0_i32 = arith.constant 0 : i32
    %c0_i32_0 = arith.constant 0 : i32
    %c0_i32_1 = arith.constant 0 : i32
    return %c0_i32, %c0_i32_0, %arg1 : i32, i32, i32
  }
  func.func @transform_2(%arg0: i32, %arg1: i32) -> (i32, i32, i32) {
    %c0_i32 = arith.constant 0 : i32
    %c0_i32_0 = arith.constant 0 : i32
    return %arg0, %c0_i32, %arg1 : i32, i32, i32
  }
}

module attributes {stable_mosaic.version = 11 : i64} {
  func.func @_conv_kernel(%arg0: i32, %arg1: i32, %arg2: memref<1x30x64xbf16, #tpu.memory_space<vmem>>, %arg3: memref<16x64x1xbf16, #tpu.memory_space<vmem>>, %arg4: memref<1x1xf32, #tpu.memory_space<vmem>>, %arg5: memref<1x10x1xf32, #tpu.memory_space<vmem>>) attributes {dimension_semantics = [#tpu.dimension_semantics<parallel>, #tpu.dimension_semantics<parallel>], iteration_bounds = array<i64: 2, 1>, scalar_prefetch = 0 : i64, scratch_operands = 0 : i64, tpu.core_type = #tpu.core_type<tc>, window_params = [{transform_indices = @transform_0, window_bounds = array<i64: 1, 30, 64>}, {transform_indices = @transform_1, window_bounds = array<i64: 16, 64, 1>}, {transform_indices = @transform_2, window_bounds = array<i64: 1, 1>}, {transform_indices = @transform_3, window_bounds = array<i64: 1, 10, 1>}]} {
    %cst = arith.constant 0.000000e+00 : f32
    %0 = vector.broadcast %cst : f32 to vector<10x1xf32>
    %c0 = arith.constant 0 : index
    %c0_0 = arith.constant 0 : index
    %c0_1 = arith.constant 0 : index
    %1 = vector.load %arg2[%c0, %c0_0, %c0_1] : memref<1x30x64xbf16, #tpu.memory_space<vmem>>, vector<1x10x64xbf16>
    %2 = vector.shape_cast %1 : vector<1x10x64xbf16> to vector<10x64xbf16>
    %c0_2 = arith.constant 0 : index
    %c0_3 = arith.constant 0 : index
    %c0_4 = arith.constant 0 : index
    %3 = vector.load %arg3[%c0_2, %c0_3, %c0_4] : memref<16x64x1xbf16, #tpu.memory_space<vmem>>, vector<1x64x1xbf16>
    %4 = vector.shape_cast %3 : vector<1x64x1xbf16> to vector<64x1xbf16>
    %cst_5 = arith.constant dense<0.000000e+00> : vector<10x1xf32>
    %5 = tpu.matmul %2, %4, %cst_5 {dimension_numbers = #tpu.dot_dimension_numbers<[1], [0], [0], [1], [0, 0, 1, 1], [], []>} : vector<10x64xbf16>, vector<64x1xbf16>, vector<10x1xf32> -> vector<10x1xf32>
    %6 = arith.addf %0, %5 : vector<10x1xf32>
    %c0_6 = arith.constant 0 : index
    %c1 = arith.constant 1 : index
    %c0_7 = arith.constant 0 : index
    %7 = vector.load %arg2[%c0_6, %c1, %c0_7] : memref<1x30x64xbf16, #tpu.memory_space<vmem>>, vector<1x10x64xbf16>
    %8 = vector.shape_cast %7 : vector<1x10x64xbf16> to vector<10x64xbf16>
    %c1_8 = arith.constant 1 : index
    %c0_9 = arith.constant 0 : index
    %c0_10 = arith.constant 0 : index
    %9 = vector.load %arg3[%c1_8, %c0_9, %c0_10] : memref<16x64x1xbf16, #tpu.memory_space<vmem>>, vector<1x64x1xbf16>
    %10 = vector.shape_cast %9 : vector<1x64x1xbf16> to vector<64x1xbf16>
    %cst_11 = arith.constant dense<0.000000e+00> : vector<10x1xf32>
    %11 = tpu.matmul %8, %10, %cst_11 {dimension_numbers = #tpu.dot_dimension_numbers<[1], [0], [0], [1], [0, 0, 1, 1], [], []>} : vector<10x64xbf16>, vector<64x1xbf16>, vector<10x1xf32> -> vector<10x1xf32>
    %12 = arith.addf %6, %11 : vector<10x1xf32>
    %c0_12 = arith.constant 0 : index
    %c2 = arith.constant 2 : index
    %c0_13 = arith.constant 0 : index
    %13 = vector.load %arg2[%c0_12, %c2, %c0_13] : memref<1x30x64xbf16, #tpu.memory_space<vmem>>, vector<1x10x64xbf16>
    %14 = vector.shape_cast %13 : vector<1x10x64xbf16> to vector<10x64xbf16>
    %c2_14 = arith.constant 2 : index
    %c0_15 = arith.constant 0 : index
    %c0_16 = arith.constant 0 : index
    %15 = vector.load %arg3[%c2_14, %c0_15, %c0_16] : memref<16x64x1xbf16, #tpu.memory_space<vmem>>, vector<1x64x1xbf16>
    %16 = vector.shape_cast %15 : vector<1x64x1xbf16> to vector<64x1xbf16>
    %cst_17 = arith.constant dense<0.000000e+00> : vector<10x1xf32>
    %17 = tpu.matmul %14, %16, %cst_17 {dimension_numbers = #tpu.dot_dimension_numbers<[1], [0], [0], [1], [0, 0, 1, 1], [], []>} : vector<10x64xbf16>, vector<64x1xbf16>, vector<10x1xf32> -> vector<10x1xf32>
    %18 = arith.addf %12, %17 : vector<10x1xf32>
    %c0_18 = arith.constant 0 : index
    %c3 = arith.constant 3 : index
    %c0_19 = arith.constant 0 : index
    %19 = vector.load %arg2[%c0_18, %c3, %c0_19] : memref<1x30x64xbf16, #tpu.memory_space<vmem>>, vector<1x10x64xbf16>
    %20 = vector.shape_cast %19 : vector<1x10x64xbf16> to vector<10x64xbf16>
    %c3_20 = arith.constant 3 : index
    %c0_21 = arith.constant 0 : index
    %c0_22 = arith.constant 0 : index
    %21 = vector.load %arg3[%c3_20, %c0_21, %c0_22] : memref<16x64x1xbf16, #tpu.memory_space<vmem>>, vector<1x64x1xbf16>
    %22 = vector.shape_cast %21 : vector<1x64x1xbf16> to vector<64x1xbf16>
    %cst_23 = arith.constant dense<0.000000e+00> : vector<10x1xf32>
    %23 = tpu.matmul %20, %22, %cst_23 {dimension_numbers = #tpu.dot_dimension_numbers<[1], [0], [0], [1], [0, 0, 1, 1], [], []>} : vector<10x64xbf16>, vector<64x1xbf16>, vector<10x1xf32> -> vector<10x1xf32>
    %24 = arith.addf %18, %23 : vector<10x1xf32>
    %c0_24 = arith.constant 0 : index
    %c5 = arith.constant 5 : index
    %c0_25 = arith.constant 0 : index
    %25 = vector.load %arg2[%c0_24, %c5, %c0_25] : memref<1x30x64xbf16, #tpu.memory_space<vmem>>, vector<1x10x64xbf16>
    %26 = vector.shape_cast %25 : vector<1x10x64xbf16> to vector<10x64xbf16>
    %c4 = arith.constant 4 : index
    %c0_26 = arith.constant 0 : index
    %c0_27 = arith.constant 0 : index
    %27 = vector.load %arg3[%c4, %c0_26, %c0_27] : memref<16x64x1xbf16, #tpu.memory_space<vmem>>, vector<1x64x1xbf16>
    %28 = vector.shape_cast %27 : vector<1x64x1xbf16> to vector<64x1xbf16>
    %cst_28 = arith.constant dense<0.000000e+00> : vector<10x1xf32>
    %29 = tpu.matmul %26, %28, %cst_28 {dimension_numbers = #tpu.dot_dimension_numbers<[1], [0], [0], [1], [0, 0, 1, 1], [], []>} : vector<10x64xbf16>, vector<64x1xbf16>, vector<10x1xf32> -> vector<10x1xf32>
    %30 = arith.addf %24, %29 : vector<10x1xf32>
    %c0_29 = arith.constant 0 : index
    %c6 = arith.constant 6 : index
    %c0_30 = arith.constant 0 : index
    %31 = vector.load %arg2[%c0_29, %c6, %c0_30] : memref<1x30x64xbf16, #tpu.memory_space<vmem>>, vector<1x10x64xbf16>
    %32 = vector.shape_cast %31 : vector<1x10x64xbf16> to vector<10x64xbf16>
    %c5_31 = arith.constant 5 : index
    %c0_32 = arith.constant 0 : index
    %c0_33 = arith.constant 0 : index
    %33 = vector.load %arg3[%c5_31, %c0_32, %c0_33] : memref<16x64x1xbf16, #tpu.memory_space<vmem>>, vector<1x64x1xbf16>
    %34 = vector.shape_cast %33 : vector<1x64x1xbf16> to vector<64x1xbf16>
    %cst_34 = arith.constant dense<0.000000e+00> : vector<10x1xf32>
    %35 = tpu.matmul %32, %34, %cst_34 {dimension_numbers = #tpu.dot_dimension_numbers<[1], [0], [0], [1], [0, 0, 1, 1], [], []>} : vector<10x64xbf16>, vector<64x1xbf16>, vector<10x1xf32> -> vector<10x1xf32>
    %36 = arith.addf %30, %35 : vector<10x1xf32>
    %c0_35 = arith.constant 0 : index
    %c7 = arith.constant 7 : index
    %c0_36 = arith.constant 0 : index
    %37 = vector.load %arg2[%c0_35, %c7, %c0_36] : memref<1x30x64xbf16, #tpu.memory_space<vmem>>, vector<1x10x64xbf16>
    %38 = vector.shape_cast %37 : vector<1x10x64xbf16> to vector<10x64xbf16>
    %c6_37 = arith.constant 6 : index
    %c0_38 = arith.constant 0 : index
    %c0_39 = arith.constant 0 : index
    %39 = vector.load %arg3[%c6_37, %c0_38, %c0_39] : memref<16x64x1xbf16, #tpu.memory_space<vmem>>, vector<1x64x1xbf16>
    %40 = vector.shape_cast %39 : vector<1x64x1xbf16> to vector<64x1xbf16>
    %cst_40 = arith.constant dense<0.000000e+00> : vector<10x1xf32>
    %41 = tpu.matmul %38, %40, %cst_40 {dimension_numbers = #tpu.dot_dimension_numbers<[1], [0], [0], [1], [0, 0, 1, 1], [], []>} : vector<10x64xbf16>, vector<64x1xbf16>, vector<10x1xf32> -> vector<10x1xf32>
    %42 = arith.addf %36, %41 : vector<10x1xf32>
    %c0_41 = arith.constant 0 : index
    %c8 = arith.constant 8 : index
    %c0_42 = arith.constant 0 : index
    %43 = vector.load %arg2[%c0_41, %c8, %c0_42] : memref<1x30x64xbf16, #tpu.memory_space<vmem>>, vector<1x10x64xbf16>
    %44 = vector.shape_cast %43 : vector<1x10x64xbf16> to vector<10x64xbf16>
    %c7_43 = arith.constant 7 : index
    %c0_44 = arith.constant 0 : index
    %c0_45 = arith.constant 0 : index
    %45 = vector.load %arg3[%c7_43, %c0_44, %c0_45] : memref<16x64x1xbf16, #tpu.memory_space<vmem>>, vector<1x64x1xbf16>
    %46 = vector.shape_cast %45 : vector<1x64x1xbf16> to vector<64x1xbf16>
    %cst_46 = arith.constant dense<0.000000e+00> : vector<10x1xf32>
    %47 = tpu.matmul %44, %46, %cst_46 {dimension_numbers = #tpu.dot_dimension_numbers<[1], [0], [0], [1], [0, 0, 1, 1], [], []>} : vector<10x64xbf16>, vector<64x1xbf16>, vector<10x1xf32> -> vector<10x1xf32>
    %48 = arith.addf %42, %47 : vector<10x1xf32>
    %c0_47 = arith.constant 0 : index
    %c10 = arith.constant 10 : index
    %c0_48 = arith.constant 0 : index
    %49 = vector.load %arg2[%c0_47, %c10, %c0_48] : memref<1x30x64xbf16, #tpu.memory_space<vmem>>, vector<1x10x64xbf16>
    %50 = vector.shape_cast %49 : vector<1x10x64xbf16> to vector<10x64xbf16>
    %c8_49 = arith.constant 8 : index
    %c0_50 = arith.constant 0 : index
    %c0_51 = arith.constant 0 : index
    %51 = vector.load %arg3[%c8_49, %c0_50, %c0_51] : memref<16x64x1xbf16, #tpu.memory_space<vmem>>, vector<1x64x1xbf16>
    %52 = vector.shape_cast %51 : vector<1x64x1xbf16> to vector<64x1xbf16>
    %cst_52 = arith.constant dense<0.000000e+00> : vector<10x1xf32>
    %53 = tpu.matmul %50, %52, %cst_52 {dimension_numbers = #tpu.dot_dimension_numbers<[1], [0], [0], [1], [0, 0, 1, 1], [], []>} : vector<10x64xbf16>, vector<64x1xbf16>, vector<10x1xf32> -> vector<10x1xf32>
    %54 = arith.addf %48, %53 : vector<10x1xf32>
    %c0_53 = arith.constant 0 : index
    %c11 = arith.constant 11 : index
    %c0_54 = arith.constant 0 : index
    %55 = vector.load %arg2[%c0_53, %c11, %c0_54] : memref<1x30x64xbf16, #tpu.memory_space<vmem>>, vector<1x10x64xbf16>
    %56 = vector.shape_cast %55 : vector<1x10x64xbf16> to vector<10x64xbf16>
    %c9 = arith.constant 9 : index
    %c0_55 = arith.constant 0 : index
    %c0_56 = arith.constant 0 : index
    %57 = vector.load %arg3[%c9, %c0_55, %c0_56] : memref<16x64x1xbf16, #tpu.memory_space<vmem>>, vector<1x64x1xbf16>
    %58 = vector.shape_cast %57 : vector<1x64x1xbf16> to vector<64x1xbf16>
    %cst_57 = arith.constant dense<0.000000e+00> : vector<10x1xf32>
    %59 = tpu.matmul %56, %58, %cst_57 {dimension_numbers = #tpu.dot_dimension_numbers<[1], [0], [0], [1], [0, 0, 1, 1], [], []>} : vector<10x64xbf16>, vector<64x1xbf16>, vector<10x1xf32> -> vector<10x1xf32>
    %60 = arith.addf %54, %59 : vector<10x1xf32>
    %c0_58 = arith.constant 0 : index
    %c12 = arith.constant 12 : index
    %c0_59 = arith.constant 0 : index
    %61 = vector.load %arg2[%c0_58, %c12, %c0_59] : memref<1x30x64xbf16, #tpu.memory_space<vmem>>, vector<1x10x64xbf16>
    %62 = vector.shape_cast %61 : vector<1x10x64xbf16> to vector<10x64xbf16>
    %c10_60 = arith.constant 10 : index
    %c0_61 = arith.constant 0 : index
    %c0_62 = arith.constant 0 : index
    %63 = vector.load %arg3[%c10_60, %c0_61, %c0_62] : memref<16x64x1xbf16, #tpu.memory_space<vmem>>, vector<1x64x1xbf16>
    %64 = vector.shape_cast %63 : vector<1x64x1xbf16> to vector<64x1xbf16>
    %cst_63 = arith.constant dense<0.000000e+00> : vector<10x1xf32>
    %65 = tpu.matmul %62, %64, %cst_63 {dimension_numbers = #tpu.dot_dimension_numbers<[1], [0], [0], [1], [0, 0, 1, 1], [], []>} : vector<10x64xbf16>, vector<64x1xbf16>, vector<10x1xf32> -> vector<10x1xf32>
    %66 = arith.addf %60, %65 : vector<10x1xf32>
    %c0_64 = arith.constant 0 : index
    %c13 = arith.constant 13 : index
    %c0_65 = arith.constant 0 : index
    %67 = vector.load %arg2[%c0_64, %c13, %c0_65] : memref<1x30x64xbf16, #tpu.memory_space<vmem>>, vector<1x10x64xbf16>
    %68 = vector.shape_cast %67 : vector<1x10x64xbf16> to vector<10x64xbf16>
    %c11_66 = arith.constant 11 : index
    %c0_67 = arith.constant 0 : index
    %c0_68 = arith.constant 0 : index
    %69 = vector.load %arg3[%c11_66, %c0_67, %c0_68] : memref<16x64x1xbf16, #tpu.memory_space<vmem>>, vector<1x64x1xbf16>
    %70 = vector.shape_cast %69 : vector<1x64x1xbf16> to vector<64x1xbf16>
    %cst_69 = arith.constant dense<0.000000e+00> : vector<10x1xf32>
    %71 = tpu.matmul %68, %70, %cst_69 {dimension_numbers = #tpu.dot_dimension_numbers<[1], [0], [0], [1], [0, 0, 1, 1], [], []>} : vector<10x64xbf16>, vector<64x1xbf16>, vector<10x1xf32> -> vector<10x1xf32>
    %72 = arith.addf %66, %71 : vector<10x1xf32>
    %c0_70 = arith.constant 0 : index
    %c15 = arith.constant 15 : index
    %c0_71 = arith.constant 0 : index
    %73 = vector.load %arg2[%c0_70, %c15, %c0_71] : memref<1x30x64xbf16, #tpu.memory_space<vmem>>, vector<1x10x64xbf16>
    %74 = vector.shape_cast %73 : vector<1x10x64xbf16> to vector<10x64xbf16>
    %c12_72 = arith.constant 12 : index
    %c0_73 = arith.constant 0 : index
    %c0_74 = arith.constant 0 : index
    %75 = vector.load %arg3[%c12_72, %c0_73, %c0_74] : memref<16x64x1xbf16, #tpu.memory_space<vmem>>, vector<1x64x1xbf16>
    %76 = vector.shape_cast %75 : vector<1x64x1xbf16> to vector<64x1xbf16>
    %cst_75 = arith.constant dense<0.000000e+00> : vector<10x1xf32>
    %77 = tpu.matmul %74, %76, %cst_75 {dimension_numbers = #tpu.dot_dimension_numbers<[1], [0], [0], [1], [0, 0, 1, 1], [], []>} : vector<10x64xbf16>, vector<64x1xbf16>, vector<10x1xf32> -> vector<10x1xf32>
    %78 = arith.addf %72, %77 : vector<10x1xf32>
    %c0_76 = arith.constant 0 : index
    %c16 = arith.constant 16 : index
    %c0_77 = arith.constant 0 : index
    %79 = vector.load %arg2[%c0_76, %c16, %c0_77] : memref<1x30x64xbf16, #tpu.memory_space<vmem>>, vector<1x10x64xbf16>
    %80 = vector.shape_cast %79 : vector<1x10x64xbf16> to vector<10x64xbf16>
    %c13_78 = arith.constant 13 : index
    %c0_79 = arith.constant 0 : index
    %c0_80 = arith.constant 0 : index
    %81 = vector.load %arg3[%c13_78, %c0_79, %c0_80] : memref<16x64x1xbf16, #tpu.memory_space<vmem>>, vector<1x64x1xbf16>
    %82 = vector.shape_cast %81 : vector<1x64x1xbf16> to vector<64x1xbf16>
    %cst_81 = arith.constant dense<0.000000e+00> : vector<10x1xf32>
    %83 = tpu.matmul %80, %82, %cst_81 {dimension_numbers = #tpu.dot_dimension_numbers<[1], [0], [0], [1], [0, 0, 1, 1], [], []>} : vector<10x64xbf16>, vector<64x1xbf16>, vector<10x1xf32> -> vector<10x1xf32>
    %84 = arith.addf %78, %83 : vector<10x1xf32>
    %c0_82 = arith.constant 0 : index
    %c17 = arith.constant 17 : index
    %c0_83 = arith.constant 0 : index
    %85 = vector.load %arg2[%c0_82, %c17, %c0_83] : memref<1x30x64xbf16, #tpu.memory_space<vmem>>, vector<1x10x64xbf16>
    %86 = vector.shape_cast %85 : vector<1x10x64xbf16> to vector<10x64xbf16>
    %c14 = arith.constant 14 : index
    %c0_84 = arith.constant 0 : index
    %c0_85 = arith.constant 0 : index
    %87 = vector.load %arg3[%c14, %c0_84, %c0_85] : memref<16x64x1xbf16, #tpu.memory_space<vmem>>, vector<1x64x1xbf16>
    %88 = vector.shape_cast %87 : vector<1x64x1xbf16> to vector<64x1xbf16>
    %cst_86 = arith.constant dense<0.000000e+00> : vector<10x1xf32>
    %89 = tpu.matmul %86, %88, %cst_86 {dimension_numbers = #tpu.dot_dimension_numbers<[1], [0], [0], [1], [0, 0, 1, 1], [], []>} : vector<10x64xbf16>, vector<64x1xbf16>, vector<10x1xf32> -> vector<10x1xf32>
    %90 = arith.addf %84, %89 : vector<10x1xf32>
    %c0_87 = arith.constant 0 : index
    %c18 = arith.constant 18 : index
    %c0_88 = arith.constant 0 : index
    %91 = vector.load %arg2[%c0_87, %c18, %c0_88] : memref<1x30x64xbf16, #tpu.memory_space<vmem>>, vector<1x10x64xbf16>
    %92 = vector.shape_cast %91 : vector<1x10x64xbf16> to vector<10x64xbf16>
    %c15_89 = arith.constant 15 : index
    %c0_90 = arith.constant 0 : index
    %c0_91 = arith.constant 0 : index
    %93 = vector.load %arg3[%c15_89, %c0_90, %c0_91] : memref<16x64x1xbf16, #tpu.memory_space<vmem>>, vector<1x64x1xbf16>
    %94 = vector.shape_cast %93 : vector<1x64x1xbf16> to vector<64x1xbf16>
    %cst_92 = arith.constant dense<0.000000e+00> : vector<10x1xf32>
    %95 = tpu.matmul %92, %94, %cst_92 {dimension_numbers = #tpu.dot_dimension_numbers<[1], [0], [0], [1], [0, 0, 1, 1], [], []>} : vector<10x64xbf16>, vector<64x1xbf16>, vector<10x1xf32> -> vector<10x1xf32>
    %96 = arith.addf %90, %95 : vector<10x1xf32>
    %c0_93 = arith.constant 0 : index
    %c0_94 = arith.constant 0 : index
    %97 = vector.load %arg4[%c0_93, %c0_94] : memref<1x1xf32, #tpu.memory_space<vmem>>, vector<1x1xf32>
    %98 = vector.broadcast %97 : vector<1x1xf32> to vector<10x1xf32>
    %99 = arith.addf %96, %98 : vector<10x1xf32>
    %c0_95 = arith.constant 0 : index
    %c0_96 = arith.constant 0 : index
    %c0_97 = arith.constant 0 : index
    %100 = vector.load %arg5[%c0_95, %c0_96, %c0_97] : memref<1x10x1xf32, #tpu.memory_space<vmem>>, vector<1x10x1xf32>
    %101 = vector.shape_cast %100 : vector<1x10x1xf32> to vector<10x1xf32>
    %102 = vector.shape_cast %99 : vector<10x1xf32> to vector<1x10x1xf32>
    tpu.vector_store %arg5[%c0_95, %c0_96, %c0_97], %102 {strides = array<i32>} : memref<1x10x1xf32, #tpu.memory_space<vmem>>, vector<1x10x1xf32>,
    return
  }
  func.func @transform_0(%arg0: i32, %arg1: i32) -> (i32, i32, i32) {
    %c0_i32 = arith.constant 0 : i32
    %c0_i32_0 = arith.constant 0 : i32
    %c0_i32_1 = arith.constant 0 : i32
    return %arg0, %c0_i32, %c0_i32_0 : i32, i32, i32
  }
  func.func @transform_1(%arg0: i32, %arg1: i32) -> (i32, i32, i32) {
    %c0_i32 = arith.constant 0 : i32
    %c0_i32_0 = arith.constant 0 : i32
    %c0_i32_1 = arith.constant 0 : i32
    return %c0_i32, %c0_i32_0, %arg1 : i32, i32, i32
  }
  func.func @transform_2(%arg0: i32, %arg1: i32) -> (i32, i32) {
    %c0_i32 = arith.constant 0 : i32
    %c0_i32_0 = arith.constant 0 : i32
    return %c0_i32, %arg1 : i32, i32
  }
  func.func @transform_3(%arg0: i32, %arg1: i32) -> (i32, i32, i32) {
    %c0_i32 = arith.constant 0 : i32
    %c0_i32_0 = arith.constant 0 : i32
    return %arg0, %c0_i32, %arg1 : i32, i32, i32
  }
}

</mosaic_0001>

<llo_original>
// kernel: _lambda_.5
$region0: #{_lambda_.5}
  #allocation0 [shape = 'u32[]', space=smem, size = 0x4, offset = 0x4, fixed_abs, tag = 'smem constant byte address 0x4 - core index']
  #allocation1 [shape = 'u32[144,128]{1,0:T(1,128)}', space=vmem, size = 0x12000, scoped, tag = 'internal scratch']
  %s0 = inlined_call_operand.vmem [shape: bf16[2,306,4], index: 0, kind: input, shape index: {}]
  %s1 = inlined_call_operand.vmem [shape: bf16[4,4,8], index: 1, kind: input, shape index: {}]
  %s2 = inlined_call_operand.vmem [shape: f32[1,8], index: 2, kind: input, shape index: {}]
  %s3 = inlined_call_operand.vmem [shape: bf16[2,272,8], index: 3, kind: output, shape index: {}]
  %s4 = sld [smem:[#allocation0]]
  $region45: #{_lambda_.5} parent=0
    _
  %s6 = ssub.s32 1, %s4
  %s7 = scalar_select 0, %s6, %s4
  loop: start=0, step=1, limit=4
  $region2: #{_lambda_.5} parent=0 // loop_pre_header
    _
  $region3: #{_lambda_.5} parent=0 // loop_header
    %s9 = sphi 0, %s13
    %p10 = scmp.ge.s32.totalorder %s9, 4
    %s16 = sphi 0, %s28
    %s17 = sphi 0, %s24
    %s18 = sphi 0, %s16
    %s19 = sphi 0, %s17
    %s20 = sphi 0, %s18
    %s21 = sphi 0, %s19
    %s31 = sphi 0, %s33
    %s34 = sphi 0, %s31
    %s35 = sphi 0, %s34
    %s51 = sphi 0, %s35
    %s57 = sphi 0, %s59
    %s60 = sphi 0, %s57
    %s61 = sphi 0, %s60
    %s77 = sphi 0, %s61
    %s83 = sphi 0, %s85
    %s86 = sphi 0, %s83
    %s87 = sphi 0, %s86
    %s103 = sphi 0, %s87
    %s111 = sphi 0, %s113
    %s114 = sphi 0, %s111
    %s115 = sphi 0, %s114
    %s131 = sphi 0, %s115
  $region4: #{_lambda_.5} parent=0 // loop_header_branch
    %12 = sbr.rel (%p10) target = $region8
  $region5: #{_lambda_.5} parent=0 // loop_body
    %s14 = ssub.s32 %s9, 1
    %s15 = ssub.s32 %s9, 2
    %s22 = sadd.s32 1, %s17
    %p23 = scmp.ge.s32.totalorder %s22, 1
    %s24 = scalar_select %p23, 0, %s22
    %s25 = sadd.s32 1, %s16
    %s26 = scalar_select %p23, %s25, %s16
    %p27 = scmp.ge.s32.totalorder %s26, 2
    %s28 = scalar_select %p27, 0, %s26
    %s29 = ssub.s32 %s16, %s28
    %p30 = scmp.eq.s32.totalorder %s29, 0
    %s32 = sadd.s32 %s31, 1
    %s33 = scalar_select %p30, %s31, %s32
    %p36 = pneg %p30
    %p37 = scmp.eq.s32.totalorder %s9, 1
    %p38 = por %p36, %p37
    %p39 = scmp.ne.s32.totalorder %s31, %s34
    %p40 = scmp.eq.s32.totalorder %s9, 0
    %p41 = por %p39, %p40
    %p42 = scmp.ne.s32.totalorder %s31, %s34
    %p43 = scmp.eq.s32.totalorder %s14, 1
    %p44 = por %p42, %p43
    %p45 = scmp.ne.s32.totalorder %s34, %s35
    %p46 = scmp.eq.s32.totalorder %s14, 0
    %p47 = por %p45, %p46
    %p48 = scmp.ne.s32.totalorder %s34, %s35
    %p49 = scmp.eq.s32.totalorder %s15, 1
    %p50 = por %p48, %p49
    %p52 = scmp.ne.s32.totalorder %s35, %s51
    %p53 = scmp.eq.s32.totalorder %s15, 0
    %p54 = por %p52, %p53
    %s55 = ssub.s32 %s17, %s24
    %p56 = scmp.eq.s32.totalorder %s55, 0
    %s58 = sadd.s32 %s57, 1
    %s59 = scalar_select %p56, %s57, %s58
    %p62 = pneg %p56
    %p63 = scmp.eq.s32.totalorder %s9, 1
    %p64 = por %p62, %p63
    %p65 = scmp.ne.s32.totalorder %s57, %s60
    %p66 = scmp.eq.s32.totalorder %s9, 0
    %p67 = por %p65, %p66
    %p68 = scmp.ne.s32.totalorder %s57, %s60
    %p69 = scmp.eq.s32.totalorder %s14, 1
    %p70 = por %p68, %p69
    %p71 = scmp.ne.s32.totalorder %s60, %s61
    %p72 = scmp.eq.s32.totalorder %s14, 0
    %p73 = por %p71, %p72
    %p74 = scmp.ne.s32.totalorder %s60, %s61
    %p75 = scmp.eq.s32.totalorder %s15, 1
    %p76 = por %p74, %p75
    %p78 = scmp.ne.s32.totalorder %s61, %s77
    %p79 = scmp.eq.s32.totalorder %s15, 0
    %p80 = por %p78, %p79
    %s81 = ssub.s32 %s17, %s24
    %p82 = scmp.eq.s32.totalorder %s81, 0
    %s84 = sadd.s32 %s83, 1
    %s85 = scalar_select %p82, %s83, %s84
    %p88 = pneg %p82
    %p89 = scmp.eq.s32.totalorder %s9, 1
    %p90 = por %p88, %p89
    %p91 = scmp.ne.s32.totalorder %s83, %s86
    %p92 = scmp.eq.s32.totalorder %s9, 0
    %p93 = por %p91, %p92
    %p94 = scmp.ne.s32.totalorder %s83, %s86
    %p95 = scmp.eq.s32.totalorder %s14, 1
    %p96 = por %p94, %p95
    %p97 = scmp.ne.s32.totalorder %s86, %s87
    %p98 = scmp.eq.s32.totalorder %s14, 0
    %p99 = por %p97, %p98
    %p100 = scmp.ne.s32.totalorder %s86, %s87
    %p101 = scmp.eq.s32.totalorder %s15, 1
    %p102 = por %p100, %p101
    %p104 = scmp.ne.s32.totalorder %s87, %s103
    %p105 = scmp.eq.s32.totalorder %s15, 0
    %p106 = por %p104, %p105
    %s107 = ssub.s32 %s16, %s28
    %s108 = ssub.s32 %s17, %s24
    %s109 = sor.u32 %s107, %s108
    %p110 = scmp.eq.s32.totalorder %s109, 0
    %s112 = sadd.s32 %s111, 1
    %s113 = scalar_select %p110, %s111, %s112
    %p116 = pneg %p110
    %p117 = scmp.eq.s32.totalorder %s9, 1
    %p118 = por %p116, %p117
    %p119 = scmp.ne.s32.totalorder %s111, %s114
    %p120 = scmp.eq.s32.totalorder %s9, 0
    %p121 = por %p119, %p120
    %p122 = scmp.ne.s32.totalorder %s111, %s114
    %p123 = scmp.eq.s32.totalorder %s14, 1
    %p124 = por %p122, %p123
    %p125 = scmp.ne.s32.totalorder %s114, %s115
    %p126 = scmp.eq.s32.totalorder %s14, 0
    %p127 = por %p125, %p126
    %p128 = scmp.ne.s32.totalorder %s114, %s115
    %p129 = scmp.eq.s32.totalorder %s15, 1
    %p130 = por %p128, %p129
    %p132 = scmp.ne.s32.totalorder %s115, %s131
    %p133 = scmp.eq.s32.totalorder %s15, 0
    %p134 = por %p132, %p133
    %p135 = scmp.le.s32.totalorder 1, %s9
    %p136 = scmp.lt.s32.totalorder %s9, 3
    %p137 = pnand %p135, %p136
    %p138 = pneg %p137
    // Predicated region
    $region9: #{_lambda_.5} parent=5 // pred_check
      _
    $region10: #{_lambda_.5} parent=5 // pred_check_branch
      %140 = sbr.rel (%p137) target = $region12
    $region11: #{_lambda_.5} parent=5 // pred_region
      %s141 = ssub.s32 %s9, 1
      // Predicated region
      $region13: #{_lambda_.5} parent=11 // pred_check
        %p142 = pneg %p73
      $region14: #{_lambda_.5} parent=11 // pred_check_branch
        %144 = sbr.rel (%p142) target = $region16
      $region15: #{_lambda_.5} parent=11 // pred_region
        %p145 = scmp.lt.s32.totalorder %s19, 0
        %s146 = scalar_select %p145, %s19, 0
        %s147 = smul.addr %s146, 2
        %s148 = scalar_lea.vmem %s1, %s147
      $region16: #{_lambda_.5} parent=11 // pred_fallthru
        _
      // Predicated region
      $region17: #{_lambda_.5} parent=11 // pred_check
        %p149 = pneg %p99
      $region18: #{_lambda_.5} parent=11 // pred_check_branch
        %151 = sbr.rel (%p149) target = $region20
      $region19: #{_lambda_.5} parent=11 // pred_region
        %p152 = scmp.lt.s32.totalorder %s19, 0
        %s153 = scalar_select %p152, %s19, 0
        %s154 = scalar_lea.vmem %s2, %s153
      $region20: #{_lambda_.5} parent=11 // pred_fallthru
        _
    $region12: #{_lambda_.5} parent=5 // pred_fallthru
      _
    %p155 = scmp.lt.s32.totalorder %s9, 2
    // Predicated region
    $region21: #{_lambda_.5} parent=5 // pred_check
      %p156 = pneg %p155
    $region22: #{_lambda_.5} parent=5 // pred_check_branch
      %158 = sbr.rel (%p156) target = $region24
    $region23: #{_lambda_.5} parent=5 // pred_region
      // Predicated region
      $region25: #{_lambda_.5} parent=23 // pred_check
        %p159 = pneg %p41
      $region26: #{_lambda_.5} parent=23 // pred_check_branch
        %161 = sbr.rel (%p159) target = $region28
      $region27: #{_lambda_.5} parent=23 // pred_region
        %p162 = scmp.lt.s32.totalorder %s16, 1
        %s163 = scalar_select %p162, %s16, 1
        %s164 = smul.addr %s163, 39
        %s165 = smul.addr %s164, 4
        %s166 = scalar_lea.vmem %s0, %s165
      $region28: #{_lambda_.5} parent=23 // pred_fallthru
        _
    $region24: #{_lambda_.5} parent=5 // pred_fallthru
      _
    %p167 = scmp.le.s32.totalorder 1, %s9
    %p168 = scmp.lt.s32.totalorder %s9, 3
    %p169 = pnand %p167, %p168
    %p170 = pneg %p169
    // Predicated region
    $region29: #{_lambda_.5} parent=5 // pred_check
      _
    $region30: #{_lambda_.5} parent=5 // pred_check_branch
      %172 = sbr.rel (%p169) target = $region32
    $region31: #{_lambda_.5} parent=5 // pred_region
      %s173 = ssub.s32 %s9, 1
      %p174 = scmp.lt.s32.totalorder %s18, 1
      %s175 = scalar_select %p174, %s18, 1
      %s176 = smul.addr %s175, 39
      %s177 = smul.addr %s176, 4
      %s178 = scalar_lea.vmem %s0, %s177
      %p179 = pneg %p47
      %p180 = pneg %p44
      %p181 = scmp.lt.s32.totalorder %s19, 0
      %s182 = scalar_select %p181, %s19, 0
      %s183 = smul.addr %s182, 2
      %s184 = scalar_lea.vmem %s1, %s183
      %p185 = pneg %p73
      %p186 = pneg %p70
      %p187 = scmp.lt.s32.totalorder %s19, 0
      %s188 = scalar_select %p187, %s19, 0
      %s189 = scalar_lea.vmem %s2, %s188
      %p190 = pneg %p99
      %p191 = pneg %p96
      %p192 = pneg %p127
      %p193 = pneg %p124
      %p194 = scmp.lt.s32.totalorder %s18, 1
      %s195 = scalar_select %p194, %s18, 1
      %p196 = scmp.lt.s32.totalorder %s19, 0
      %s197 = scalar_select %p196, %s19, 0
      %s198 = smul.addr %s195, 34
      %s199 = sadd.s32 %s197, %s198
      %s200 = smul.addr %s199, 4
      %s201 = scalar_lea.vmem %s3, %s200
      %p202 = scmp.lt.s32.totalorder %s18, 1
      %s203 = scalar_select %p202, %s18, 1
      %s204 = smul.addr %s203, 39
      %s205 = smul.addr %s204, 4
      %s206 = scalar_lea.vmem %s0, %s205
      %p207 = scmp.lt.s32.totalorder %s19, 0
      %s208 = scalar_select %p207, %s19, 0
      %s209 = smul.addr %s208, 2
      %s210 = scalar_lea.vmem %s1, %s209
      %p211 = scmp.lt.s32.totalorder %s19, 0
      %s212 = scalar_select %p211, %s19, 0
      %s213 = scalar_lea.vmem %s2, %s212
      %p214 = scmp.lt.s32.totalorder %s18, 1
      %s215 = scalar_select %p214, %s18, 1
      %p216 = scmp.lt.s32.totalorder %s19, 0
      %s217 = scalar_select %p216, %s19, 0
      %s218 = smul.addr %s215, 34
      %s219 = sadd.s32 %s217, %s218
      %s220 = smul.addr %s219, 4
      %s221 = scalar_lea.vmem %s3, %s220
      %v223 = vld [vmem:[%s206] sm:$0xf]
      %v224 = vld [vmem:[%s206 + $0x4] sm:$0xf]
      %v225 = vld [vmem:[%s206 + $0x8] sm:$0xf]
      %v226 = vld [vmem:[%s206 + $0xc] sm:$0xf]
      %v227 = vld [vmem:[%s206 + $0x10] sm:$0xf]
      %v228 = vld [vmem:[%s206 + $0x14] sm:$0xf]
      %v229 = vld [vmem:[%s206 + $0x18] sm:$0xf]
      %v230 = vld [vmem:[%s206 + $0x1c] sm:$0xf]
      %v231 = vld [vmem:[%s206 + $0x20] sm:$0xf]
      %v232 = vld [vmem:[%s206 + $0x24] sm:$0xf]
      %v233 = vld [vmem:[%s206 + $0x28] sm:$0xf]
      %v234 = vld [vmem:[%s206 + $0x2c] sm:$0xf]
      %v235 = vld [vmem:[%s206 + $0x30] sm:$0xf]
      %v236 = vld [vmem:[%s206 + $0x34] sm:$0xf]
      %v237 = vld [vmem:[%s206 + $0x38] sm:$0xf]
      %v238 = vld [vmem:[%s206 + $0x3c] sm:$0xf]
      %v239 = vld [vmem:[%s206 + $0x40] sm:$0xf]
      %v240 = vld [vmem:[%s206 + $0x44] sm:$0xf]
      %v241 = vld [vmem:[%s206 + $0x48] sm:$0xf]
      %v242 = vld [vmem:[%s206 + $0x4c] sm:$0xf]
      %v243 = vld [vmem:[%s206 + $0x50] sm:$0xf]
      %v244 = vld [vmem:[%s206 + $0x54] sm:$0xf]
      %v245 = vld [vmem:[%s206 + $0x58] sm:$0xf]
      %v246 = vld [vmem:[%s206 + $0x5c] sm:$0xf]
      %v247 = vld [vmem:[%s206 + $0x60] sm:$0xf]
      %v248 = vld [vmem:[%s206 + $0x64] sm:$0xf]
      %v249 = vld [vmem:[%s206 + $0x68] sm:$0xf]
      %v250 = vld [vmem:[%s206 + $0x6c] sm:$0xf]
      %v251 = vld [vmem:[%s206 + $0x70] sm:$0xf]
      %v252 = vld [vmem:[%s206 + $0x74] sm:$0xf]
      %v253 = vld [vmem:[%s206 + $0x78] sm:$0xf]
      %v254 = vld [vmem:[%s206 + $0x7c] sm:$0xf]
      %v255 = vld [vmem:[%s206 + $0x80] sm:$0xf]
      %v256 = vld [vmem:[%s206 + $0x84] sm:$0xf]
      %v257 = vld [vmem:[%s210] sm:$0x3]
      %v258 = vld [vmem:[%s206 + $0x88] sm:$0x1]
      %s259 = scalar_lea.vmem %s210, 2
      %v260 = vld [vmem:[%s259] sm:$0x3]
      %v296 = vunpack.c.l.b16 %v223
      %v297 = vunpack.c.l.b16 %v224
      %v298 = vunpack.c.l.b16 %v225
      %v299 = vunpack.c.l.b16 %v226
      %v300 = vunpack.c.l.b16 %v227
      %v301 = vunpack.c.l.b16 %v228
      %v302 = vunpack.c.l.b16 %v229
      %v303 = vunpack.c.l.b16 %v230
      %v304 = vunpack.c.l.b16 %v231
      %v305 = vunpack.c.l.b16 %v232
      %v306 = vunpack.c.l.b16 %v233
      %v307 = vunpack.c.l.b16 %v234
      %v308 = vunpack.c.l.b16 %v235
      %v309 = vunpack.c.l.b16 %v236
      %v310 = vunpack.c.l.b16 %v237
      %v311 = vunpack.c.l.b16 %v238
      %v312 = vunpack.c.l.b16 %v239
      %v313 = vunpack.c.l.b16 %v240
      %v314 = vunpack.c.l.b16 %v241
      %v315 = vunpack.c.l.b16 %v242
      %v316 = vunpack.c.l.b16 %v243
      %v317 = vunpack.c.l.b16 %v244
      %v318 = vunpack.c.l.b16 %v245
      %v319 = vunpack.c.l.b16 %v246
      %v320 = vunpack.c.l.b16 %v247
      %v321 = vunpack.c.l.b16 %v248
      %v322 = vunpack.c.l.b16 %v249
      %v323 = vunpack.c.l.b16 %v250
      %v324 = vunpack.c.l.b16 %v251
      %v325 = vunpack.c.l.b16 %v252
      %v326 = vunpack.c.l.b16 %v253
      %v327 = vunpack.c.l.b16 %v254
      %v328 = vunpack.c.l.b16 %v255
      %v329 = vunpack.c.l.b16 %v256
      %v330 = vunpack.c.l.b16 %v258
      %v331 = vpack.c.b16 %v297, %v296
      %v332 = vpack.c.b16 %v299, %v298
      %v333 = vpack.c.b16 %v301, %v300
      %v334 = vpack.c.b16 %v303, %v302
      %v335 = vpack.c.b16 %v305, %v304
      %v336 = vpack.c.b16 %v307, %v306
      %v337 = vpack.c.b16 %v309, %v308
      %v338 = vpack.c.b16 %v311, %v310
      %v339 = vpack.c.b16 %v313, %v312
      %v340 = vpack.c.b16 %v315, %v314
      %v341 = vpack.c.b16 %v317, %v316
      %v342 = vpack.c.b16 %v319, %v318
      %v343 = vpack.c.b16 %v321, %v320
      %v344 = vpack.c.b16 %v323, %v322
      %v345 = vpack.c.b16 %v325, %v324
      %v346 = vpack.c.b16 %v327, %v326
      %v347 = vpack.c.b16 %v329, %v328
      %v348 = vpack.c.b16 %v330, %v330
      %vm349 = vsmask.f32 7424
      %v351 = vshrl.u32 %v331, 16
      %v353 = vshll.u32 %v331, 16
      %v355 = vrot.slane %v353, 1
      %v356 = vor.u32 %v351, %v355
      %v358 = vshll.u32 %v332, 16
      %v360 = vrot.slane %v358, 1
      %v361 = vsel %vm349, %v356, %v360
      %v362 = vshrl.u32 %v332, 16
      %v364 = vor.u32 %v362, %v360
      %v366 = vshll.u32 %v333, 16
      %v368 = vrot.slane %v366, 1
      %v369 = vsel %vm349, %v364, %v368
      %v370 = vshrl.u32 %v333, 16
      %v372 = vor.u32 %v370, %v368
      %v374 = vshll.u32 %v334, 16
      %v376 = vrot.slane %v374, 1
      %v377 = vsel %vm349, %v372, %v376
      %v378 = vshrl.u32 %v334, 16
      %v380 = vor.u32 %v378, %v376
      %v382 = vshll.u32 %v335, 16
      %v384 = vrot.slane %v382, 1
      %v385 = vsel %vm349, %v380, %v384
      %v386 = vshrl.u32 %v335, 16
      %v388 = vor.u32 %v386, %v384
      %v390 = vshll.u32 %v336, 16
      %v392 = vrot.slane %v390, 1
      %v393 = vsel %vm349, %v388, %v392
      %v394 = vshrl.u32 %v336, 16
      %v396 = vor.u32 %v394, %v392
      %v398 = vshll.u32 %v337, 16
      %v400 = vrot.slane %v398, 1
      %v401 = vsel %vm349, %v396, %v400
      %v402 = vshrl.u32 %v337, 16
      %v404 = vor.u32 %v402, %v400
      %v406 = vshll.u32 %v338, 16
      %v408 = vrot.slane %v406, 1
      %v409 = vsel %vm349, %v404, %v408
      %v410 = vshrl.u32 %v338, 16
      %v412 = vor.u32 %v410, %v408
      %v414 = vshll.u32 %v339, 16
      %v416 = vrot.slane %v414, 1
      %v417 = vsel %vm349, %v412, %v416
      %v418 = vshrl.u32 %v339, 16
      %v420 = vor.u32 %v418, %v416
      %v422 = vshll.u32 %v340, 16
      %v424 = vrot.slane %v422, 1
      %v425 = vsel %vm349, %v420, %v424
      %v426 = vshrl.u32 %v340, 16
      %v428 = vor.u32 %v426, %v424
      %v430 = vshll.u32 %v341, 16
      %v432 = vrot.slane %v430, 1
      %v433 = vsel %vm349, %v428, %v432
      %v434 = vshrl.u32 %v341, 16
      %v436 = vor.u32 %v434, %v432
      %v438 = vshll.u32 %v342, 16
      %v440 = vrot.slane %v438, 1
      %v441 = vsel %vm349, %v436, %v440
      %v442 = vshrl.u32 %v342, 16
      %v444 = vor.u32 %v442, %v440
      %v446 = vshll.u32 %v343, 16
      %v448 = vrot.slane %v446, 1
      %v449 = vsel %vm349, %v444, %v448
      %v450 = vshrl.u32 %v343, 16
      %v452 = vor.u32 %v450, %v448
      %v454 = vshll.u32 %v344, 16
      %v456 = vrot.slane %v454, 1
      %v457 = vsel %vm349, %v452, %v456
      %v458 = vshrl.u32 %v344, 16
      %v460 = vor.u32 %v458, %v456
      %v462 = vshll.u32 %v345, 16
      %v464 = vrot.slane %v462, 1
      %v465 = vsel %vm349, %v460, %v464
      %v466 = vshrl.u32 %v345, 16
      %v468 = vor.u32 %v466, %v464
      %v470 = vshll.u32 %v346, 16
      %v472 = vrot.slane %v470, 1
      %v473 = vsel %vm349, %v468, %v472
      %v474 = vshrl.u32 %v346, 16
      %v476 = vor.u32 %v474, %v472
      %v478 = vshll.u32 %v347, 16
      %v480 = vrot.slane %v478, 1
      %v481 = vsel %vm349, %v476, %v480
      %v482 = vshrl.u32 %v347, 16
      %v484 = vor.u32 %v482, %v480
      %v486 = vshll.u32 %v348, 16
      %v488 = vrot.slane %v486, 1
      %v489 = vsel %vm349, %v484, %v488
      %vm490 = vcmask 31744
      %v492 = vsel %vm490, %v361, 0
      %v495 = vsel %vm490, %v369, 0
      %v498 = vsel %vm490, %v377, 0
      %v501 = vsel %vm490, %v385, 0
      %v504 = vsel %vm490, %v393, 0
      %v507 = vsel %vm490, %v401, 0
      %v510 = vsel %vm490, %v409, 0
      %v513 = vsel %vm490, %v417, 0
      %v516 = vsel %vm490, %v425, 0
      %v519 = vsel %vm490, %v433, 0
      %v522 = vsel %vm490, %v441, 0
      %v525 = vsel %vm490, %v449, 0
      %v528 = vsel %vm490, %v457, 0
      %v531 = vsel %vm490, %v465, 0
      %v534 = vsel %vm490, %v473, 0
      %v537 = vsel %vm490, %v481, 0
      %v540 = vsel %vm490, %v489, 0
      %vm542 = vcmask 1041408
      %v544 = vsel %vm542, %v260, 0
      %546 = vmatprep.subr.bf16.mxu0 0
      %547 = vmatpush1.bf16.msra.mxu0 %v544
      %548 = vmatprep.subr.bf16.mxu0 0
      %549 = vmatpush1.bf16.msra.mxu0 0
      %550 = vmatprep.subr.bf16.mxu0 0
      %551 = vmatpush1.bf16.msra.mxu0 0
      %552 = vmatprep.subr.bf16.mxu0 0
      %553 = vmatpush1.bf16.msra.mxu0 0
      %554 = vmatprep.subr.bf16.mxu0 0
      %555 = vmatpush1.bf16.msra.mxu0 0
      %556 = vmatprep.subr.bf16.mxu0 0
      %557 = vmatpush1.bf16.msra.mxu0 0
      %558 = vmatprep.subr.bf16.mxu0 0
      %559 = vmatpush1.bf16.msra.mxu0 0
      %560 = vmatprep.subr.bf16.mxu0 0
      %561 = vmatpush1.bf16.msra.mxu0 0
      %562 = vmatprep.subr.bf16.mxu0 0
      %563 = vmatpush1.bf16.msra.mxu0 0
      %564 = vmatprep.subr.bf16.mxu0 0
      %565 = vmatpush1.bf16.msra.mxu0 0
      %566 = vmatprep.subr.bf16.mxu0 0
      %567 = vmatpush1.bf16.msra.mxu0 0
      %568 = vmatprep.subr.bf16.mxu0 0
      %569 = vmatpush1.bf16.msra.mxu0 0
      %570 = vmatprep.subr.bf16.mxu0 0
      %571 = vmatpush1.bf16.msra.mxu0 0
      %572 = vmatprep.subr.bf16.mxu0 0
      %573 = vmatpush1.bf16.msra.mxu0 0
      %574 = vmatprep.subr.bf16.mxu0 0
      %575 = vmatpush1.bf16.msra.mxu0 0
      %576 = vmatprep.subr.bf16.mxu0 0
      %577 = vmatpush1.bf16.msra.mxu0 0
      %578 = vmatprep.mubr.bf16.mxu0 0
      %579 = vmatmul.mubr.bf16.gmra.mrb[0].mxu0 %v492
      %v580 = vpop.f32.mrb[0].mxu0
      %v581 = vadd.f32 0.0, %v580
      %v582 = vpop.f32.mrb[0].mxu0
      %v583 = vpop.f32.mrb[0].mxu0
      %v584 = vadd.f32 0.0, %v583
      %v585 = vpop.f32.mrb[0].mxu0
      %586 = vmatprep.mubr.bf16.mxu0 0
      %587 = vmatmul.mubr.bf16.gmra.mrb[0].mxu0 %v495
      %v588 = vpop.f32.mrb[0].mxu0
      %v589 = vadd.f32 0.0, %v588
      %v590 = vpop.f32.mrb[0].mxu0
      %v591 = vpop.f32.mrb[0].mxu0
      %v592 = vadd.f32 0.0, %v591
      %v593 = vpop.f32.mrb[0].mxu0
      %594 = vmatprep.mubr.bf16.mxu0 0
      %595 = vmatmul.mubr.bf16.gmra.mrb[0].mxu0 %v498
      %v596 = vpop.f32.mrb[0].mxu0
      %v597 = vadd.f32 0.0, %v596
      %v598 = vpop.f32.mrb[0].mxu0
      %v599 = vpop.f32.mrb[0].mxu0
      %v600 = vadd.f32 0.0, %v599
      %v601 = vpop.f32.mrb[0].mxu0
      %602 = vmatprep.mubr.bf16.mxu0 0
      %603 = vmatmul.mubr.bf16.gmra.mrb[0].mxu0 %v501
      %v604 = vpop.f32.mrb[0].mxu0
      %v605 = vadd.f32 0.0, %v604
      %v606 = vpop.f32.mrb[0].mxu0
      %v607 = vpop.f32.mrb[0].mxu0
      %v608 = vadd.f32 0.0, %v607
      %v609 = vpop.f32.mrb[0].mxu0
      %610 = vmatprep.mubr.bf16.mxu0 0
      %611 = vmatmul.mubr.bf16.gmra.mrb[0].mxu0 %v504
      %v612 = vpop.f32.mrb[0].mxu0
      %v613 = vadd.f32 0.0, %v612
      %v614 = vpop.f32.mrb[0].mxu0
      %v615 = vpop.f32.mrb[0].mxu0
      %v616 = vadd.f32 0.0, %v615
      %v617 = vpop.f32.mrb[0].mxu0
      %618 = vmatprep.mubr.bf16.mxu0 0
      %619 = vmatmul.mubr.bf16.gmra.mrb[0].mxu0 %v507
      %v620 = vpop.f32.mrb[0].mxu0
      %v621 = vadd.f32 0.0, %v620
      %v622 = vpop.f32.mrb[0].mxu0
      %v623 = vpop.f32.mrb[0].mxu0
      %v624 = vadd.f32 0.0, %v623
      %v625 = vpop.f32.mrb[0].mxu0
      %626 = vmatprep.mubr.bf16.mxu0 0
      %627 = vmatmul.mubr.bf16.gmra.mrb[0].mxu0 %v510
      %v628 = vpop.f32.mrb[0].mxu0
      %v629 = vadd.f32 0.0, %v628
      %v630 = vpop.f32.mrb[0].mxu0
      %v631 = vpop.f32.mrb[0].mxu0
      %v632 = vadd.f32 0.0, %v631
      %v633 = vpop.f32.mrb[0].mxu0
      %634 = vmatprep.mubr.bf16.mxu0 0
      %635 = vmatmul.mubr.bf16.gmra.mrb[0].mxu0 %v513
      %v636 = vpop.f32.mrb[0].mxu0
      %v637 = vadd.f32 0.0, %v636
      %v638 = vpop.f32.mrb[0].mxu0
      %v639 = vpop.f32.mrb[0].mxu0
      %v640 = vadd.f32 0.0, %v639
      %v641 = vpop.f32.mrb[0].mxu0
      %642 = vmatprep.mubr.bf16.mxu0 0
      %643 = vmatmul.mubr.bf16.gmra.mrb[0].mxu0 %v516
      %v644 = vpop.f32.mrb[0].mxu0
      %v645 = vadd.f32 0.0, %v644
      %v646 = vpop.f32.mrb[0].mxu0
      %v647 = vpop.f32.mrb[0].mxu0
      %v648 = vadd.f32 0.0, %v647
      %v649 = vpop.f32.mrb[0].mxu0
      %650 = vmatprep.mubr.bf16.mxu0 0
      %651 = vmatmul.mubr.bf16.gmra.mrb[0].mxu0 %v519
      %v652 = vpop.f32.mrb[0].mxu0
      %v653 = vadd.f32 0.0, %v652
      %v654 = vpop.f32.mrb[0].mxu0
      %v655 = vpop.f32.mrb[0].mxu0
      %v656 = vadd.f32 0.0, %v655
      %v657 = vpop.f32.mrb[0].mxu0
      %658 = vmatprep.mubr.bf16.mxu0 0
      %659 = vmatmul.mubr.bf16.gmra.mrb[0].mxu0 %v522
      %v660 = vpop.f32.mrb[0].mxu0
      %v661 = vadd.f32 0.0, %v660
      %v662 = vpop.f32.mrb[0].mxu0
      %v663 = vpop.f32.mrb[0].mxu0
      %v664 = vadd.f32 0.0, %v663
      %v665 = vpop.f32.mrb[0].mxu0
      %666 = vmatprep.mubr.bf16.mxu0 0
      %667 = vmatmul.mubr.bf16.gmra.mrb[0].mxu0 %v525
      %v668 = vpop.f32.mrb[0].mxu0
      %v669 = vadd.f32 0.0, %v668
      %v670 = vpop.f32.mrb[0].mxu0
      %v671 = vpop.f32.mrb[0].mxu0
      %v672 = vadd.f32 0.0, %v671
      %v673 = vpop.f32.mrb[0].mxu0
      %674 = vmatprep.mubr.bf16.mxu0 0
      %675 = vmatmul.mubr.bf16.gmra.mrb[0].mxu0 %v528
      %v676 = vpop.f32.mrb[0].mxu0
      %v677 = vadd.f32 0.0, %v676
      %v678 = vpop.f32.mrb[0].mxu0
      %v679 = vpop.f32.mrb[0].mxu0
      %v680 = vadd.f32 0.0, %v679
      %v681 = vpop.f32.mrb[0].mxu0
      %682 = vmatprep.mubr.bf16.mxu0 0
      %683 = vmatmul.mubr.bf16.gmra.mrb[0].mxu0 %v531
      %v684 = vpop.f32.mrb[0].mxu0
      %v685 = vadd.f32 0.0, %v684
      %v686 = vpop.f32.mrb[0].mxu0
      %v687 = vpop.f32.mrb[0].mxu0
      %v688 = vadd.f32 0.0, %v687
      %v689 = vpop.f32.mrb[0].mxu0
      %690 = vmatprep.mubr.bf16.mxu0 0
      %691 = vmatmul.mubr.bf16.gmra.mrb[0].mxu0 %v534
      %v692 = vpop.f32.mrb[0].mxu0
      %v693 = vadd.f32 0.0, %v692
      %v694 = vpop.f32.mrb[0].mxu0
      %v695 = vpop.f32.mrb[0].mxu0
      %v696 = vadd.f32 0.0, %v695
      %v697 = vpop.f32.mrb[0].mxu0
      %698 = vmatprep.mubr.bf16.mxu0 0
      %699 = vmatmul.mubr.bf16.gmra.mrb[0].mxu0 %v537
      %v700 = vpop.f32.mrb[0].mxu0
      %v701 = vadd.f32 0.0, %v700
      %v702 = vpop.f32.mrb[0].mxu0
      %v703 = vpop.f32.mrb[0].mxu0
      %v704 = vadd.f32 0.0, %v703
      %v705 = vpop.f32.mrb[0].mxu0
      %706 = vmatprep.mubr.bf16.mxu0 0
      %707 = vmatmul.mubr.bf16.gmra.mrb[0].mxu0 %v540
      %v708 = vpop.f32.mrb[0].mxu0
      %v709 = vadd.f32 0.0, %v708
      %v710 = vpop.f32.mrb[0].mxu0
      %v711 = vpop.f32.mrb[0].mxu0
      %v712 = vadd.f32 0.0, %v711
      %v713 = vpop.f32.mrb[0].mxu0
      %714 = vdwg.mxu0
      %v715 = vsel %vm490, %v331, 0
      %v717 = vsel %vm490, %v332, 0
      %v719 = vsel %vm490, %v333, 0
      %v721 = vsel %vm490, %v334, 0
      %v723 = vsel %vm490, %v335, 0
      %v725 = vsel %vm490, %v336, 0
      %v727 = vsel %vm490, %v337, 0
      %v729 = vsel %vm490, %v338, 0
      %v731 = vsel %vm490, %v339, 0
      %v733 = vsel %vm490, %v340, 0
      %v735 = vsel %vm490, %v341, 0
      %v737 = vsel %vm490, %v342, 0
      %v739 = vsel %vm490, %v343, 0
      %v741 = vsel %vm490, %v344, 0
      %v743 = vsel %vm490, %v345, 0
      %v745 = vsel %vm490, %v346, 0
      %v747 = vsel %vm490, %v347, 0
      %v750 = vsel %vm542, %v257, 0
      %752 = vmatprep.subr.bf16.mxu0 0
      %753 = vmatpush1.bf16.msra.mxu0 %v750
      %754 = vmatprep.subr.bf16.mxu0 0
      %755 = vmatpush1.bf16.msra.mxu0 0
      %756 = vmatprep.subr.bf16.mxu0 0
      %757 = vmatpush1.bf16.msra.mxu0 0
      %758 = vmatprep.subr.bf16.mxu0 0
      %759 = vmatpush1.bf16.msra.mxu0 0
      %760 = vmatprep.subr.bf16.mxu0 0
      %761 = vmatpush1.bf16.msra.mxu0 0
      %762 = vmatprep.subr.bf16.mxu0 0
      %763 = vmatpush1.bf16.msra.mxu0 0
      %764 = vmatprep.subr.bf16.mxu0 0
      %765 = vmatpush1.bf16.msra.mxu0 0
      %766 = vmatprep.subr.bf16.mxu0 0
      %767 = vmatpush1.bf16.msra.mxu0 0
      %768 = vmatprep.subr.bf16.mxu0 0
      %769 = vmatpush1.bf16.msra.mxu0 0
      %770 = vmatprep.subr.bf16.mxu0 0
      %771 = vmatpush1.bf16.msra.mxu0 0
      %772 = vmatprep.subr.bf16.mxu0 0
      %773 = vmatpush1.bf16.msra.mxu0 0
      %774 = vmatprep.subr.bf16.mxu0 0
      %775 = vmatpush1.bf16.msra.mxu0 0
      %776 = vmatprep.subr.bf16.mxu0 0
      %777 = vmatpush1.bf16.msra.mxu0 0
      %778 = vmatprep.subr.bf16.mxu0 0
      %779 = vmatpush1.bf16.msra.mxu0 0
      %780 = vmatprep.subr.bf16.mxu0 0
      %781 = vmatpush1.bf16.msra.mxu0 0
      %782 = vmatprep.subr.bf16.mxu0 0
      %783 = vmatpush1.bf16.msra.mxu0 0
      %784 = vmatprep.mubr.bf16.mxu0 0
      %785 = vmatmul.mubr.bf16.gmra.mrb[0].mxu0 %v715
      %v786 = vpop.f32.mrb[0].mxu0
      %v787 = vadd.f32 %v581, %v786
      %v788 = vpop.f32.mrb[0].mxu0
      %v789 = vpop.f32.mrb[0].mxu0
      %v790 = vadd.f32 %v584, %v789
      %v791 = vpop.f32.mrb[0].mxu0
      %792 = vmatprep.mubr.bf16.mxu0 0
      %793 = vmatmul.mubr.bf16.gmra.mrb[0].mxu0 %v717
      %v794 = vpop.f32.mrb[0].mxu0
      %v795 = vadd.f32 %v589, %v794
      %v796 = vpop.f32.mrb[0].mxu0
      %v797 = vpop.f32.mrb[0].mxu0
      %v798 = vadd.f32 %v592, %v797
      %v799 = vpop.f32.mrb[0].mxu0
      %800 = vmatprep.mubr.bf16.mxu0 0
      %801 = vmatmul.mubr.bf16.gmra.mrb[0].mxu0 %v719
      %v802 = vpop.f32.mrb[0].mxu0
      %v803 = vadd.f32 %v597, %v802
      %v804 = vpop.f32.mrb[0].mxu0
      %v805 = vpop.f32.mrb[0].mxu0
      %v806 = vadd.f32 %v600, %v805
      %v807 = vpop.f32.mrb[0].mxu0
      %808 = vmatprep.mubr.bf16.mxu0 0
      %809 = vmatmul.mubr.bf16.gmra.mrb[0].mxu0 %v721
      %v810 = vpop.f32.mrb[0].mxu0
      %v811 = vadd.f32 %v605, %v810
      %v812 = vpop.f32.mrb[0].mxu0
      %v813 = vpop.f32.mrb[0].mxu0
      %v814 = vadd.f32 %v608, %v813
      %v815 = vpop.f32.mrb[0].mxu0
      %816 = vmatprep.mubr.bf16.mxu0 0
      %817 = vmatmul.mubr.bf16.gmra.mrb[0].mxu0 %v723
      %v818 = vpop.f32.mrb[0].mxu0
      %v819 = vadd.f32 %v613, %v818
      %v820 = vpop.f32.mrb[0].mxu0
      %v821 = vpop.f32.mrb[0].mxu0
      %v822 = vadd.f32 %v616, %v821
      %v823 = vpop.f32.mrb[0].mxu0
      %824 = vmatprep.mubr.bf16.mxu0 0
      %825 = vmatmul.mubr.bf16.gmra.mrb[0].mxu0 %v725
      %v826 = vpop.f32.mrb[0].mxu0
      %v827 = vadd.f32 %v621, %v826
      %v828 = vpop.f32.mrb[0].mxu0
      %v829 = vpop.f32.mrb[0].mxu0
      %v830 = vadd.f32 %v624, %v829
      %v831 = vpop.f32.mrb[0].mxu0
      %832 = vmatprep.mubr.bf16.mxu0 0
      %833 = vmatmul.mubr.bf16.gmra.mrb[0].mxu0 %v727
      %v834 = vpop.f32.mrb[0].mxu0
      %v835 = vadd.f32 %v629, %v834
      %v836 = vpop.f32.mrb[0].mxu0
      %v837 = vpop.f32.mrb[0].mxu0
      %v838 = vadd.f32 %v632, %v837
      %v839 = vpop.f32.mrb[0].mxu0
      %840 = vmatprep.mubr.bf16.mxu0 0
      %841 = vmatmul.mubr.bf16.gmra.mrb[0].mxu0 %v729
      %v842 = vpop.f32.mrb[0].mxu0
      %v843 = vadd.f32 %v637, %v842
      %v844 = vpop.f32.mrb[0].mxu0
      %v845 = vpop.f32.mrb[0].mxu0
      %v846 = vadd.f32 %v640, %v845
      %v847 = vpop.f32.mrb[0].mxu0
      %848 = vmatprep.mubr.bf16.mxu0 0
      %849 = vmatmul.mubr.bf16.gmra.mrb[0].mxu0 %v731
      %v850 = vpop.f32.mrb[0].mxu0
      %v851 = vadd.f32 %v645, %v850
      %v852 = vpop.f32.mrb[0].mxu0
      %v853 = vpop.f32.mrb[0].mxu0
      %v854 = vadd.f32 %v648, %v853
      %v855 = vpop.f32.mrb[0].mxu0
      %856 = vmatprep.mubr.bf16.mxu0 0
      %857 = vmatmul.mubr.bf16.gmra.mrb[0].mxu0 %v733
      %v858 = vpop.f32.mrb[0].mxu0
      %v859 = vadd.f32 %v653, %v858
      %v860 = vpop.f32.mrb[0].mxu0
      %v861 = vpop.f32.mrb[0].mxu0
      %v862 = vadd.f32 %v656, %v861
      %v863 = vpop.f32.mrb[0].mxu0
      %864 = vmatprep.mubr.bf16.mxu0 0
      %865 = vmatmul.mubr.bf16.gmra.mrb[0].mxu0 %v735
      %v866 = vpop.f32.mrb[0].mxu0
      %v867 = vadd.f32 %v661, %v866
      %v868 = vpop.f32.mrb[0].mxu0
      %v869 = vpop.f32.mrb[0].mxu0
      %v870 = vadd.f32 %v664, %v869
      %v871 = vpop.f32.mrb[0].mxu0
      %872 = vmatprep.mubr.bf16.mxu0 0
      %873 = vmatmul.mubr.bf16.gmra.mrb[0].mxu0 %v737
      %v874 = vpop.f32.mrb[0].mxu0
      %v875 = vadd.f32 %v669, %v874
      %v876 = vpop.f32.mrb[0].mxu0
      %v877 = vpop.f32.mrb[0].mxu0
      %v878 = vadd.f32 %v672, %v877
      %v879 = vpop.f32.mrb[0].mxu0
      %880 = vmatprep.mubr.bf16.mxu0 0
      %881 = vmatmul.mubr.bf16.gmra.mrb[0].mxu0 %v739
      %v882 = vpop.f32.mrb[0].mxu0
      %v883 = vadd.f32 %v677, %v882
      %v884 = vpop.f32.mrb[0].mxu0
      %v885 = vpop.f32.mrb[0].mxu0
      %v886 = vadd.f32 %v680, %v885
      %v887 = vpop.f32.mrb[0].mxu0
      %888 = vmatprep.mubr.bf16.mxu0 0
      %889 = vmatmul.mubr.bf16.gmra.mrb[0].mxu0 %v741
      %v890 = vpop.f32.mrb[0].mxu0
      %v891 = vadd.f32 %v685, %v890
      %v892 = vpop.f32.mrb[0].mxu0
      %v893 = vpop.f32.mrb[0].mxu0
      %v894 = vadd.f32 %v688, %v893
      %v895 = vpop.f32.mrb[0].mxu0
      %896 = vmatprep.mubr.bf16.mxu0 0
      %897 = vmatmul.mubr.bf16.gmra.mrb[0].mxu0 %v743
      %v898 = vpop.f32.mrb[0].mxu0
      %v899 = vadd.f32 %v693, %v898
      %v900 = vpop.f32.mrb[0].mxu0
      %v901 = vpop.f32.mrb[0].mxu0
      %v902 = vadd.f32 %v696, %v901
      %v903 = vpop.f32.mrb[0].mxu0
      %904 = vmatprep.mubr.bf16.mxu0 0
      %905 = vmatmul.mubr.bf16.gmra.mrb[0].mxu0 %v745
      %v906 = vpop.f32.mrb[0].mxu0
      %v907 = vadd.f32 %v701, %v906
      %v908 = vpop.f32.mrb[0].mxu0
      %v909 = vpop.f32.mrb[0].mxu0
      %v910 = vadd.f32 %v704, %v909
      %v911 = vpop.f32.mrb[0].mxu0
      %912 = vmatprep.mubr.bf16.mxu0 0
      %913 = vmatmul.mubr.bf16.gmra.mrb[0].mxu0 %v747
      %v914 = vpop.f32.mrb[0].mxu0
      %v915 = vadd.f32 %v709, %v914
      %v916 = vpop.f32.mrb[0].mxu0
      %v917 = vpop.f32.mrb[0].mxu0
      %v918 = vadd.f32 %v712, %v917
      %v919 = vpop.f32.mrb[0].mxu0
      %920 = vdwg.mxu0
      %v921 = vld [vmem:[%s206 + $0x8] sm:$0xf]
      %v922 = vld [vmem:[%s206 + $0xc] sm:$0xf]
      %v923 = vld [vmem:[%s206 + $0x10] sm:$0xf]
      %v924 = vld [vmem:[%s206 + $0x14] sm:$0xf]
      %v925 = vld [vmem:[%s206 + $0x18] sm:$0xf]
      %v926 = vld [vmem:[%s206 + $0x1c] sm:$0xf]
      %v927 = vld [vmem:[%s206 + $0x20] sm:$0xf]
      %v928 = vld [vmem:[%s206 + $0x24] sm:$0xf]
      %v929 = vld [vmem:[%s206 + $0x28] sm:$0xf]
      %v930 = vld [vmem:[%s206 + $0x2c] sm:$0xf]
      %v931 = vld [vmem:[%s206 + $0x30] sm:$0xf]
      %v932 = vld [vmem:[%s206 + $0x34] sm:$0xf]
      %v933 = vld [vmem:[%s206 + $0x38] sm:$0xf]
      %v934 = vld [vmem:[%s206 + $0x3c] sm:$0xf]
      %v935 = vld [vmem:[%s206 + $0x40] sm:$0xf]
      %v936 = vld [vmem:[%s206 + $0x44] sm:$0xf]
      %v937 = vld [vmem:[%s206 + $0x48] sm:$0xf]
      %v938 = vld [vmem:[%s206 + $0x4c] sm:$0xf]
      %v939 = vld [vmem:[%s206 + $0x50] sm:$0xf]
      %v940 = vld [vmem:[%s206 + $0x54] sm:$0xf]
      %v941 = vld [vmem:[%s206 + $0x58] sm:$0xf]
      %v942 = vld [vmem:[%s206 + $0x5c] sm:$0xf]
      %v943 = vld [vmem:[%s206 + $0x60] sm:$0xf]
      %v944 = vld [vmem:[%s206 + $0x64] sm:$0xf]
      %v945 = vld [vmem:[%s206 + $0x68] sm:$0xf]
      %v946 = vld [vmem:[%s206 + $0x6c] sm:$0xf]
      %v947 = vld [vmem:[%s206 + $0x70] sm:$0xf]
      %v948 = vld [vmem:[%s206 + $0x74] sm:$0xf]
      %v949 = vld [vmem:[%s206 + $0x78] sm:$0xf]
      %v950 = vld [vmem:[%s206 + $0x7c] sm:$0xf]
      %v951 = vld [vmem:[%s206 + $0x80] sm:$0xf]
      %v952 = vld [vmem:[%s206 + $0x84] sm:$0xf]
      %v953 = vld [vmem:[%s206 + $0x88] sm:$0xf]
      %v954 = vld [vmem:[%s206 + $0x8c] sm:$0xf]
      %v955 = vld [vmem:[%s206 + $0x90] sm:$0x1]
      %s956 = scalar_lea.vmem %s210, 4
      %v957 = vld [vmem:[%s956] sm:$0x3]
      %v993 = vunpack.c.l.b16 %v921
      %v994 = vunpack.c.l.b16 %v922
      %v995 = vunpack.c.l.b16 %v923
      %v996 = vunpack.c.l.b16 %v924
      %v997 = vunpack.c.l.b16 %v925
      %v998 = vunpack.c.l.b16 %v926
      %v999 = vunpack.c.l.b16 %v927
      %v1000 = vunpack.c.l.b16 %v928
      %v1001 = vunpack.c.l.b16 %v929
      %v1002 = vunpack.c.l.b16 %v930
      %v1003 = vunpack.c.l.b16 %v931
      %v1004 = vunpack.c.l.b16 %v932
      %v1005 = vunpack.c.l.b16 %v933
      %v1006 = vunpack.c.l.b16 %v934
      %v1007 = vunpack.c.l.b16 %v935
      %v1008 = vunpack.c.l.b16 %v936
      %v1009 = vunpack.c.l.b16 %v937
      %v1010 = vunpack.c.l.b16 %v938
      %v1011 = vunpack.c.l.b16 %v939
      %v1012 = vunpack.c.l.b16 %v940
      %v1013 = vunpack.c.l.b16 %v941
      %v1014 = vunpack.c.l.b16 %v942
      %v1015 = vunpack.c.l.b16 %v943
      %v1016 = vunpack.c.l.b16 %v944
      %v1017 = vunpack.c.l.b16 %v945
      %v1018 = vunpack.c.l.b16 %v946
      %v1019 = vunpack.c.l.b16 %v947
      %v1020 = vunpack.c.l.b16 %v948
      %v1021 = vunpack.c.l.b16 %v949
      %v1022 = vunpack.c.l.b16 %v950
      %v1023 = vunpack.c.l.b16 %v951
      %v1024 = vunpack.c.l.b16 %v952
      %v1025 = vunpack.c.l.b16 %v953
      %v1026 = vunpack.c.l.b16 %v954
      %v1027 = vunpack.c.l.b16 %v955
      %v1028 = vpack.c.b16 %v994, %v993
      %v1029 = vpack.c.b16 %v996, %v995
      %v1030 = vpack.c.b16 %v998, %v997
      %v1031 = vpack.c.b16 %v1000, %v999
      %v1032 = vpack.c.b16 %v1002, %v1001
      %v1033 = vpack.c.b16 %v1004, %v1003
      %v1034 = vpack.c.b16 %v1006, %v1005
      %v1035 = vpack.c.b16 %v1008, %v1007
      %v1036 = vpack.c.b16 %v1010, %v1009
      %v1037 = vpack.c.b16 %v1012, %v1011
      %v1038 = vpack.c.b16 %v1014, %v1013
      %v1039 = vpack.c.b16 %v1016, %v1015
      %v1040 = vpack.c.b16 %v1018, %v1017
      %v1041 = vpack.c.b16 %v1020, %v1019
      %v1042 = vpack.c.b16 %v1022, %v1021
      %v1043 = vpack.c.b16 %v1024, %v1023
      %v1044 = vpack.c.b16 %v1026, %v1025
      %v1045 = vpack.c.b16 %v1027, %v1027
      %v1047 = vshrl.u32 %v1028, 16
      %v1049 = vshll.u32 %v1028, 16
      %v1051 = vrot.slane %v1049, 1
      %v1052 = vor.u32 %v1047, %v1051
      %v1054 = vshll.u32 %v1029, 16
      %v1056 = vrot.slane %v1054, 1
      %v1057 = vsel %vm349, %v1052, %v1056
      %v1058 = vshrl.u32 %v1029, 16
      %v1060 = vor.u32 %v1058, %v1056
      %v1062 = vshll.u32 %v1030, 16
      %v1064 = vrot.slane %v1062, 1
      %v1065 = vsel %vm349, %v1060, %v1064
      %v1066 = vshrl.u32 %v1030, 16
      %v1068 = vor.u32 %v1066, %v1064
      %v1070 = vshll.u32 %v1031, 16
      %v1072 = vrot.slane %v1070, 1
      %v1073 = vsel %vm349, %v1068, %v1072
      %v1074 = vshrl.u32 %v1031, 16
      %v1076 = vor.u32 %v1074, %v1072
      %v1078 = vshll.u32 %v1032, 16
      %v1080 = vrot.slane %v1078, 1
      %v1081 = vsel %vm349, %v1076, %v1080
      %v1082 = vshrl.u32 %v1032, 16
      %v1084 = vor.u32 %v1082, %v1080
      %v1086 = vshll.u32 %v1033, 16
      %v1088 = vrot.slane %v1086, 1
      %v1089 = vsel %vm349, %v1084, %v1088
      %v1090 = vshrl.u32 %v1033, 16
      %v1092 = vor.u32 %v1090, %v1088
      %v1094 = vshll.u32 %v1034, 16
      %v1096 = vrot.slane %v1094, 1
      %v1097 = vsel %vm349, %v1092, %v1096
      %v1098 = vshrl.u32 %v1034, 16
      %v1100 = vor.u32 %v1098, %v1096
      %v1102 = vshll.u32 %v1035, 16
      %v1104 = vrot.slane %v1102, 1
      %v1105 = vsel %vm349, %v1100, %v1104
      %v1106 = vshrl.u32 %v1035, 16
      %v1108 = vor.u32 %v1106, %v1104
      %v1110 = vshll.u32 %v1036, 16
      %v1112 = vrot.slane %v1110, 1
      %v1113 = vsel %vm349, %v1108, %v1112
      %v1114 = vshrl.u32 %v1036, 16
      %v1116 = vor.u32 %v1114, %v1112
      %v1118 = vshll.u32 %v1037, 16
      %v1120 = vrot.slane %v1118, 1
      %v1121 = vsel %vm349, %v1116, %v1120
      %v1122 = vshrl.u32 %v1037, 16
      %v1124 = vor.u32 %v1122, %v1120
      %v1126 = vshll.u32 %v1038, 16
      %v1128 = vrot.slane %v1126, 1
      %v1129 = vsel %vm349, %v1124, %v1128
      %v1130 = vshrl.u32 %v1038, 16
      %v1132 = vor.u32 %v1130, %v1128
      %v1134 = vshll.u32 %v1039, 16
      %v1136 = vrot.slane %v1134, 1
      %v1137 = vsel %vm349, %v1132, %v1136
      %v1138 = vshrl.u32 %v1039, 16
      %v1140 = vor.u32 %v1138, %v1136
      %v1142 = vshll.u32 %v1040, 16
      %v1144 = vrot.slane %v1142, 1
      %v1145 = vsel %vm349, %v1140, %v1144
      %v1146 = vshrl.u32 %v1040, 16
      %v1148 = vor.u32 %v1146, %v1144
      %v1150 = vshll.u32 %v1041, 16
      %v1152 = vrot.slane %v1150, 1
      %v1153 = vsel %vm349, %v1148, %v1152
      %v1154 = vshrl.u32 %v1041, 16
      %v1156 = vor.u32 %v1154, %v1152
      %v1158 = vshll.u32 %v1042, 16
      %v1160 = vrot.slane %v1158, 1
      %v1161 = vsel %vm349, %v1156, %v1160
      %v1162 = vshrl.u32 %v1042, 16
      %v1164 = vor.u32 %v1162, %v1160
      %v1166 = vshll.u32 %v1043, 16
      %v1168 = vrot.slane %v1166, 1
      %v1169 = vsel %vm349, %v1164, %v1168
      %v1170 = vshrl.u32 %v1043, 16
      %v1172 = vor.u32 %v1170, %v1168
      %v1174 = vshll.u32 %v1044, 16
      %v1176 = vrot.slane %v1174, 1
      %v1177 = vsel %vm349, %v1172, %v1176
      %v1178 = vshrl.u32 %v1044, 16
      %v1180 = vor.u32 %v1178, %v1176
      %v1182 = vshll.u32 %v1045, 16
      %v1184 = vrot.slane %v1182, 1
      %v1185 = vsel %vm349, %v1180, %v1184
      %v1187 = vsel %vm490, %v1057, 0
      %v1190 = vsel %vm490, %v1065, 0
      %v1193 = vsel %vm490, %v1073, 0
      %v1196 = vsel %vm490, %v1081, 0
      %v1199 = vsel %vm490, %v1089, 0
      %v1202 = vsel %vm490, %v1097, 0
      %v1205 = vsel %vm490, %v1105, 0
      %v1208 = vsel %vm490, %v1113, 0
      %v1211 = vsel %vm490, %v1121, 0
      %v1214 = vsel %vm490, %v1129, 0
      %v1217 = vsel %vm490, %v1137, 0
      %v1220 = vsel %vm490, %v1145, 0
      %v1223 = vsel %vm490, %v1153, 0
      %v1226 = vsel %vm490, %v1161, 0
      %v1229 = vsel %vm490, %v1169, 0
      %v1232 = vsel %vm490, %v1177, 0
      %v1235 = vsel %vm490, %v1185, 0
      %v1238 = vsel %vm542, %v957, 0
      %1240 = vmatprep.subr.bf16.mxu0 0
      %1241 = vmatpush1.bf16.msra.mxu0 %v1238
      %1242 = vmatprep.subr.bf16.mxu0 0
      %1243 = vmatpush1.bf16.msra.mxu0 0
      %1244 = vmatprep.subr.bf16.mxu0 0
      %1245 = vmatpush1.bf16.msra.mxu0 0
      %1246 = vmatprep.subr.bf16.mxu0 0
      %1247 = vmatpush1.bf16.msra.mxu0 0
      %1248 = vmatprep.subr.bf16.mxu0 0
      %1249 = vmatpush1.bf16.msra.mxu0 0
      %1250 = vmatprep.subr.bf16.mxu0 0
      %1251 = vmatpush1.bf16.msra.mxu0 0
      %1252 = vmatprep.subr.bf16.mxu0 0
      %1253 = vmatpush1.bf16.msra.mxu0 0
      %1254 = vmatprep.subr.bf16.mxu0 0
      %1255 = vmatpush1.bf16.msra.mxu0 0
      %1256 = vmatprep.subr.bf16.mxu0 0
      %1257 = vmatpush1.bf16.msra.mxu0 0
      %1258 = vmatprep.subr.bf16.mxu0 0
      %1259 = vmatpush1.bf16.msra.mxu0 0
      %1260 = vmatprep.subr.bf16.mxu0 0
      %1261 = vmatpush1.bf16.msra.mxu0 0
      %1262 = vmatprep.subr.bf16.mxu0 0
      %1263 = vmatpush1.bf16.msra.mxu0 0
      %1264 = vmatprep.subr.bf16.mxu0 0
      %1265 = vmatpush1.bf16.msra.mxu0 0
      %1266 = vmatprep.subr.bf16.mxu0 0
      %1267 = vmatpush1.bf16.msra.mxu0 0
      %1268 = vmatprep.subr.bf16.mxu0 0
      %1269 = vmatpush1.bf16.msra.mxu0 0
      %1270 = vmatprep.subr.bf16.mxu0 0
      %1271 = vmatpush1.bf16.msra.mxu0 0
      %1272 = vmatprep.mubr.bf16.mxu0 0
      %1273 = vmatmul.mubr.bf16.gmra.mrb[0].mxu0 %v1187
      %v1274 = vpop.f32.mrb[0].mxu0
      %v1275 = vadd.f32 0.0, %v1274
      %v1276 = vpop.f32.mrb[0].mxu0
      %v1277 = vpop.f32.mrb[0].mxu0
      %v1278 = vadd.f32 0.0, %v1277
      %v1279 = vpop.f32.mrb[0].mxu0
      %1280 = vmatprep.mubr.bf16.mxu0 0
      %1281 = vmatmul.mubr.bf16.gmra.mrb[0].mxu0 %v1190
      %v1282 = vpop.f32.mrb[0].mxu0
      %v1283 = vadd.f32 0.0, %v1282
      %v1284 = vpop.f32.mrb[0].mxu0
      %v1285 = vpop.f32.mrb[0].mxu0
      %v1286 = vadd.f32 0.0, %v1285
      %v1287 = vpop.f32.mrb[0].mxu0
      %1288 = vmatprep.mubr.bf16.mxu0 0
      %1289 = vmatmul.mubr.bf16.gmra.mrb[0].mxu0 %v1193
      %v1290 = vpop.f32.mrb[0].mxu0
      %v1291 = vadd.f32 0.0, %v1290
      %v1292 = vpop.f32.mrb[0].mxu0
      %v1293 = vpop.f32.mrb[0].mxu0
      %v1294 = vadd.f32 0.0, %v1293
      %v1295 = vpop.f32.mrb[0].mxu0
      %1296 = vmatprep.mubr.bf16.mxu0 0
      %1297 = vmatmul.mubr.bf16.gmra.mrb[0].mxu0 %v1196
      %v1298 = vpop.f32.mrb[0].mxu0
      %v1299 = vadd.f32 0.0, %v1298
      %v1300 = vpop.f32.mrb[0].mxu0
      %v1301 = vpop.f32.mrb[0].mxu0
      %v1302 = vadd.f32 0.0, %v1301
      %v1303 = vpop.f32.mrb[0].mxu0
      %1304 = vmatprep.mubr.bf16.mxu0 0
      %1305 = vmatmul.mubr.bf16.gmra.mrb[0].mxu0 %v1199
      %v1306 = vpop.f32.mrb[0].mxu0
      %v1307 = vadd.f32 0.0, %v1306
      %v1308 = vpop.f32.mrb[0].mxu0
      %v1309 = vpop.f32.mrb[0].mxu0
      %v1310 = vadd.f32 0.0, %v1309
      %v1311 = vpop.f32.mrb[0].mxu0
      %1312 = vmatprep.mubr.bf16.mxu0 0
      %1313 = vmatmul.mubr.bf16.gmra.mrb[0].mxu0 %v1202
      %v1314 = vpop.f32.mrb[0].mxu0
      %v1315 = vadd.f32 0.0, %v1314
      %v1316 = vpop.f32.mrb[0].mxu0
      %v1317 = vpop.f32.mrb[0].mxu0
      %v1318 = vadd.f32 0.0, %v1317
      %v1319 = vpop.f32.mrb[0].mxu0
      %1320 = vmatprep.mubr.bf16.mxu0 0
      %1321 = vmatmul.mubr.bf16.gmra.mrb[0].mxu0 %v1205
      %v1322 = vpop.f32.mrb[0].mxu0
      %v1323 = vadd.f32 0.0, %v1322
      %v1324 = vpop.f32.mrb[0].mxu0
      %v1325 = vpop.f32.mrb[0].mxu0
      %v1326 = vadd.f32 0.0, %v1325
      %v1327 = vpop.f32.mrb[0].mxu0
      %1328 = vmatprep.mubr.bf16.mxu0 0
      %1329 = vmatmul.mubr.bf16.gmra.mrb[0].mxu0 %v1208
      %v1330 = vpop.f32.mrb[0].mxu0
      %v1331 = vadd.f32 0.0, %v1330
      %v1332 = vpop.f32.mrb[0].mxu0
      %v1333 = vpop.f32.mrb[0].mxu0
      %v1334 = vadd.f32 0.0, %v1333
      %v1335 = vpop.f32.mrb[0].mxu0
      %1336 = vmatprep.mubr.bf16.mxu0 0
      %1337 = vmatmul.mubr.bf16.gmra.mrb[0].mxu0 %v1211
      %v1338 = vpop.f32.mrb[0].mxu0
      %v1339 = vadd.f32 0.0, %v1338
      %v1340 = vpop.f32.mrb[0].mxu0
      %v1341 = vpop.f32.mrb[0].mxu0
      %v1342 = vadd.f32 0.0, %v1341
      %v1343 = vpop.f32.mrb[0].mxu0
      %1344 = vmatprep.mubr.bf16.mxu0 0
      %1345 = vmatmul.mubr.bf16.gmra.mrb[0].mxu0 %v1214
      %v1346 = vpop.f32.mrb[0].mxu0
      %v1347 = vadd.f32 0.0, %v1346
      %v1348 = vpop.f32.mrb[0].mxu0
      %v1349 = vpop.f32.mrb[0].mxu0
      %v1350 = vadd.f32 0.0, %v1349
      %v1351 = vpop.f32.mrb[0].mxu0
      %1352 = vmatprep.mubr.bf16.mxu0 0
      %1353 = vmatmul.mubr.bf16.gmra.mrb[0].mxu0 %v1217
      %v1354 = vpop.f32.mrb[0].mxu0
      %v1355 = vadd.f32 0.0, %v1354
      %v1356 = vpop.f32.mrb[0].mxu0
      %v1357 = vpop.f32.mrb[0].mxu0
      %v1358 = vadd.f32 0.0, %v1357
      %v1359 = vpop.f32.mrb[0].mxu0
      %1360 = vmatprep.mubr.bf16.mxu0 0
      %1361 = vmatmul.mubr.bf16.gmra.mrb[0].mxu0 %v1220
      %v1362 = vpop.f32.mrb[0].mxu0
      %v1363 = vadd.f32 0.0, %v1362
      %v1364 = vpop.f32.mrb[0].mxu0
      %v1365 = vpop.f32.mrb[0].mxu0
      %v1366 = vadd.f32 0.0, %v1365
      %v1367 = vpop.f32.mrb[0].mxu0
      %1368 = vmatprep.mubr.bf16.mxu0 0
      %1369 = vmatmul.mubr.bf16.gmra.mrb[0].mxu0 %v1223
      %v1370 = vpop.f32.mrb[0].mxu0
      %v1371 = vadd.f32 0.0, %v1370
      %v1372 = vpop.f32.mrb[0].mxu0
      %v1373 = vpop.f32.mrb[0].mxu0
      %v1374 = vadd.f32 0.0, %v1373
      %v1375 = vpop.f32.mrb[0].mxu0
      %1376 = vmatprep.mubr.bf16.mxu0 0
      %1377 = vmatmul.mubr.bf16.gmra.mrb[0].mxu0 %v1226
      %v1378 = vpop.f32.mrb[0].mxu0
      %v1379 = vadd.f32 0.0, %v1378
      %v1380 = vpop.f32.mrb[0].mxu0
      %v1381 = vpop.f32.mrb[0].mxu0
      %v1382 = vadd.f32 0.0, %v1381
      %v1383 = vpop.f32.mrb[0].mxu0
      %1384 = vmatprep.mubr.bf16.mxu0 0
      %1385 = vmatmul.mubr.bf16.gmra.mrb[0].mxu0 %v1229
      %v1386 = vpop.f32.mrb[0].mxu0
      %v1387 = vadd.f32 0.0, %v1386
      %v1388 = vpop.f32.mrb[0].mxu0
      %v1389 = vpop.f32.mrb[0].mxu0
      %v1390 = vadd.f32 0.0, %v1389
      %v1391 = vpop.f32.mrb[0].mxu0
      %1392 = vmatprep.mubr.bf16.mxu0 0
      %1393 = vmatmul.mubr.bf16.gmra.mrb[0].mxu0 %v1232
      %v1394 = vpop.f32.mrb[0].mxu0
      %v1395 = vadd.f32 0.0, %v1394
      %v1396 = vpop.f32.mrb[0].mxu0
      %v1397 = vpop.f32.mrb[0].mxu0
      %v1398 = vadd.f32 0.0, %v1397
      %v1399 = vpop.f32.mrb[0].mxu0
      %1400 = vmatprep.mubr.bf16.mxu0 0
      %1401 = vmatmul.mubr.bf16.gmra.mrb[0].mxu0 %v1235
      %v1402 = vpop.f32.mrb[0].mxu0
      %v1403 = vadd.f32 0.0, %v1402
      %v1404 = vpop.f32.mrb[0].mxu0
      %v1405 = vpop.f32.mrb[0].mxu0
      %v1406 = vadd.f32 0.0, %v1405
      %v1407 = vpop.f32.mrb[0].mxu0
      %1408 = vdwg.mxu0
      %v1409 = vadd.f32 %v787, %v1275
      %v1410 = vadd.f32 %v790, %v1278
      %v1411 = vadd.f32 %v795, %v1283
      %v1412 = vadd.f32 %v798, %v1286
      %v1413 = vadd.f32 %v803, %v1291
      %v1414 = vadd.f32 %v806, %v1294
      %v1415 = vadd.f32 %v811, %v1299
      %v1416 = vadd.f32 %v814, %v1302
      %v1417 = vadd.f32 %v819, %v1307
      %v1418 = vadd.f32 %v822, %v1310
      %v1419 = vadd.f32 %v827, %v1315
      %v1420 = vadd.f32 %v830, %v1318
      %v1421 = vadd.f32 %v835, %v1323
      %v1422 = vadd.f32 %v838, %v1326
      %v1423 = vadd.f32 %v843, %v1331
      %v1424 = vadd.f32 %v846, %v1334
      %v1425 = vadd.f32 %v851, %v1339
      %v1426 = vadd.f32 %v854, %v1342
      %v1427 = vadd.f32 %v859, %v1347
      %v1428 = vadd.f32 %v862, %v1350
      %v1429 = vadd.f32 %v867, %v1355
      %v1430 = vadd.f32 %v870, %v1358
      %v1431 = vadd.f32 %v875, %v1363
      %v1432 = vadd.f32 %v878, %v1366
      %v1433 = vadd.f32 %v883, %v1371
      %v1434 = vadd.f32 %v886, %v1374
      %v1435 = vadd.f32 %v891, %v1379
      %v1436 = vadd.f32 %v894, %v1382
      %v1437 = vadd.f32 %v899, %v1387
      %v1438 = vadd.f32 %v902, %v1390
      %v1439 = vadd.f32 %v907, %v1395
      %v1440 = vadd.f32 %v910, %v1398
      %v1441 = vadd.f32 %v915, %v1403
      %v1442 = vadd.f32 %v918, %v1406
      %v1443 = vld [vmem:[%s206 + $0x8] sm:$0xe]
      %s1444 = scalar_lea.vmem %s210, 6
      %v1445 = vld [vmem:[%s1444] sm:$0x3]
      %v1447 = vunpack.c.l.b16 %v1443
      %v1448 = vpack.c.b16 %v994, %v1447
      %vm1449 = vcmask 1046528
      %v1450 = vrot.slane %v1448, 1
      %v1451 = vrot.slane %v1029, 1
      %v1452 = vsel %vm1449, %v1450, %v1451
      %v1453 = vrot.slane %v1030, 1
      %v1454 = vsel %vm1449, %v1451, %v1453
      %v1455 = vrot.slane %v1031, 1
      %v1456 = vsel %vm1449, %v1453, %v1455
      %v1457 = vrot.slane %v1032, 1
      %v1458 = vsel %vm1449, %v1455, %v1457
      %v1459 = vrot.slane %v1033, 1
      %v1460 = vsel %vm1449, %v1457, %v1459
      %v1461 = vrot.slane %v1034, 1
      %v1462 = vsel %vm1449, %v1459, %v1461
      %v1463 = vrot.slane %v1035, 1
      %v1464 = vsel %vm1449, %v1461, %v1463
      %v1465 = vrot.slane %v1036, 1
      %v1466 = vsel %vm1449, %v1463, %v1465
      %v1467 = vrot.slane %v1037, 1
      %v1468 = vsel %vm1449, %v1465, %v1467
      %v1469 = vrot.slane %v1038, 1
      %v1470 = vsel %vm1449, %v1467, %v1469
      %v1471 = vrot.slane %v1039, 1
      %v1472 = vsel %vm1449, %v1469, %v1471
      %v1473 = vrot.slane %v1040, 1
      %v1474 = vsel %vm1449, %v1471, %v1473
      %v1475 = vrot.slane %v1041, 1
      %v1476 = vsel %vm1449, %v1473, %v1475
      %v1477 = vrot.slane %v1042, 1
      %v1478 = vsel %vm1449, %v1475, %v1477
      %v1479 = vrot.slane %v1043, 1
      %v1480 = vsel %vm1449, %v1477, %v1479
      %v1481 = vrot.slane %v1044, 1
      %v1482 = vsel %vm1449, %v1479, %v1481
      %v1483 = vrot.slane %v1045, 1
      %v1484 = vsel %vm1449, %v1481, %v1483
      %v1486 = vsel %vm490, %v1452, 0
      %v1489 = vsel %vm490, %v1454, 0
      %v1492 = vsel %vm490, %v1456, 0
      %v1495 = vsel %vm490, %v1458, 0
      %v1498 = vsel %vm490, %v1460, 0
      %v1501 = vsel %vm490, %v1462, 0
      %v1504 = vsel %vm490, %v1464, 0
      %v1507 = vsel %vm490, %v1466, 0
      %v1510 = vsel %vm490, %v1468, 0
      %v1513 = vsel %vm490, %v1470, 0
      %v1516 = vsel %vm490, %v1472, 0
      %v1519 = vsel %vm490, %v1474, 0
      %v1522 = vsel %vm490, %v1476, 0
      %v1525 = vsel %vm490, %v1478, 0
      %v1528 = vsel %vm490, %v1480, 0
      %v1531 = vsel %vm490, %v1482, 0
      %v1534 = vsel %vm490, %v1484, 0
      %v1537 = vsel %vm542, %v1445, 0
      %1539 = vmatprep.subr.bf16.mxu0 0
      %1540 = vmatpush1.bf16.msra.mxu0 %v1537
      %1541 = vmatprep.subr.bf16.mxu0 0
      %1542 = vmatpush1.bf16.msra.mxu0 0
      %1543 = vmatprep.subr.bf16.mxu0 0
      %1544 = vmatpush1.bf16.msra.mxu0 0
      %1545 = vmatprep.subr.bf16.mxu0 0
      %1546 = vmatpush1.bf16.msra.mxu0 0
      %1547 = vmatprep.subr.bf16.mxu0 0
      %1548 = vmatpush1.bf16.msra.mxu0 0
      %1549 = vmatprep.subr.bf16.mxu0 0
      %1550 = vmatpush1.bf16.msra.mxu0 0
      %1551 = vmatprep.subr.bf16.mxu0 0
      %1552 = vmatpush1.bf16.msra.mxu0 0
      %1553 = vmatprep.subr.bf16.mxu0 0
      %1554 = vmatpush1.bf16.msra.mxu0 0
      %1555 = vmatprep.subr.bf16.mxu0 0
      %1556 = vmatpush1.bf16.msra.mxu0 0
      %1557 = vmatprep.subr.bf16.mxu0 0
      %1558 = vmatpush1.bf16.msra.mxu0 0
      %1559 = vmatprep.subr.bf16.mxu0 0
      %1560 = vmatpush1.bf16.msra.mxu0 0
      %1561 = vmatprep.subr.bf16.mxu0 0
      %1562 = vmatpush1.bf16.msra.mxu0 0
      %1563 = vmatprep.subr.bf16.mxu0 0
      %1564 = vmatpush1.bf16.msra.mxu0 0
      %1565 = vmatprep.subr.bf16.mxu0 0
      %1566 = vmatpush1.bf16.msra.mxu0 0
      %1567 = vmatprep.subr.bf16.mxu0 0
      %1568 = vmatpush1.bf16.msra.mxu0 0
      %1569 = vmatprep.subr.bf16.mxu0 0
      %1570 = vmatpush1.bf16.msra.mxu0 0
      %1571 = vmatprep.mubr.bf16.mxu0 0
      %1572 = vmatmul.mubr.bf16.gmra.mrb[0].mxu0 %v1486
      %v1573 = vpop.f32.mrb[0].mxu0
      %v1574 = vadd.f32 0.0, %v1573
      %v1575 = vpop.f32.mrb[0].mxu0
      %v1576 = vpop.f32.mrb[0].mxu0
      %v1577 = vadd.f32 0.0, %v1576
      %v1578 = vpop.f32.mrb[0].mxu0
      %1579 = vmatprep.mubr.bf16.mxu0 0
      %1580 = vmatmul.mubr.bf16.gmra.mrb[0].mxu0 %v1489
      %v1581 = vpop.f32.mrb[0].mxu0
      %v1582 = vadd.f32 0.0, %v1581
      %v1583 = vpop.f32.mrb[0].mxu0
      %v1584 = vpop.f32.mrb[0].mxu0
      %v1585 = vadd.f32 0.0, %v1584
      %v1586 = vpop.f32.mrb[0].mxu0
      %1587 = vmatprep.mubr.bf16.mxu0 0
      %1588 = vmatmul.mubr.bf16.gmra.mrb[0].mxu0 %v1492
      %v1589 = vpop.f32.mrb[0].mxu0
      %v1590 = vadd.f32 0.0, %v1589
      %v1591 = vpop.f32.mrb[0].mxu0
      %v1592 = vpop.f32.mrb[0].mxu0
      %v1593 = vadd.f32 0.0, %v1592
      %v1594 = vpop.f32.mrb[0].mxu0
      %1595 = vmatprep.mubr.bf16.mxu0 0
      %1596 = vmatmul.mubr.bf16.gmra.mrb[0].mxu0 %v1495
      %v1597 = vpop.f32.mrb[0].mxu0
      %v1598 = vadd.f32 0.0, %v1597
      %v1599 = vpop.f32.mrb[0].mxu0
      %v1600 = vpop.f32.mrb[0].mxu0
      %v1601 = vadd.f32 0.0, %v1600
      %v1602 = vpop.f32.mrb[0].mxu0
      %1603 = vmatprep.mubr.bf16.mxu0 0
      %1604 = vmatmul.mubr.bf16.gmra.mrb[0].mxu0 %v1498
      %v1605 = vpop.f32.mrb[0].mxu0
      %v1606 = vadd.f32 0.0, %v1605
      %v1607 = vpop.f32.mrb[0].mxu0
      %v1608 = vpop.f32.mrb[0].mxu0
      %v1609 = vadd.f32 0.0, %v1608
      %v1610 = vpop.f32.mrb[0].mxu0
      %1611 = vmatprep.mubr.bf16.mxu0 0
      %1612 = vmatmul.mubr.bf16.gmra.mrb[0].mxu0 %v1501
      %v1613 = vpop.f32.mrb[0].mxu0
      %v1614 = vadd.f32 0.0, %v1613
      %v1615 = vpop.f32.mrb[0].mxu0
      %v1616 = vpop.f32.mrb[0].mxu0
      %v1617 = vadd.f32 0.0, %v1616
      %v1618 = vpop.f32.mrb[0].mxu0
      %1619 = vmatprep.mubr.bf16.mxu0 0
      %1620 = vmatmul.mubr.bf16.gmra.mrb[0].mxu0 %v1504
      %v1621 = vpop.f32.mrb[0].mxu0
      %v1622 = vadd.f32 0.0, %v1621
      %v1623 = vpop.f32.mrb[0].mxu0
      %v1624 = vpop.f32.mrb[0].mxu0
      %v1625 = vadd.f32 0.0, %v1624
      %v1626 = vpop.f32.mrb[0].mxu0
      %1627 = vmatprep.mubr.bf16.mxu0 0
      %1628 = vmatmul.mubr.bf16.gmra.mrb[0].mxu0 %v1507
      %v1629 = vpop.f32.mrb[0].mxu0
      %v1630 = vadd.f32 0.0, %v1629
      %v1631 = vpop.f32.mrb[0].mxu0
      %v1632 = vpop.f32.mrb[0].mxu0
      %v1633 = vadd.f32 0.0, %v1632
      %v1634 = vpop.f32.mrb[0].mxu0
      %1635 = vmatprep.mubr.bf16.mxu0 0
      %1636 = vmatmul.mubr.bf16.gmra.mrb[0].mxu0 %v1510
      %v1637 = vpop.f32.mrb[0].mxu0
      %v1638 = vadd.f32 0.0, %v1637
      %v1639 = vpop.f32.mrb[0].mxu0
      %v1640 = vpop.f32.mrb[0].mxu0
      %v1641 = vadd.f32 0.0, %v1640
      %v1642 = vpop.f32.mrb[0].mxu0
      %1643 = vmatprep.mubr.bf16.mxu0 0
      %1644 = vmatmul.mubr.bf16.gmra.mrb[0].mxu0 %v1513
      %v1645 = vpop.f32.mrb[0].mxu0
      %v1646 = vadd.f32 0.0, %v1645
      %v1647 = vpop.f32.mrb[0].mxu0
      %v1648 = vpop.f32.mrb[0].mxu0
      %v1649 = vadd.f32 0.0, %v1648
      %v1650 = vpop.f32.mrb[0].mxu0
      %1651 = vmatprep.mubr.bf16.mxu0 0
      %1652 = vmatmul.mubr.bf16.gmra.mrb[0].mxu0 %v1516
      %v1653 = vpop.f32.mrb[0].mxu0
      %v1654 = vadd.f32 0.0, %v1653
      %v1655 = vpop.f32.mrb[0].mxu0
      %v1656 = vpop.f32.mrb[0].mxu0
      %v1657 = vadd.f32 0.0, %v1656
      %v1658 = vpop.f32.mrb[0].mxu0
      %1659 = vmatprep.mubr.bf16.mxu0 0
      %1660 = vmatmul.mubr.bf16.gmra.mrb[0].mxu0 %v1519
      %v1661 = vpop.f32.mrb[0].mxu0
      %v1662 = vadd.f32 0.0, %v1661
      %v1663 = vpop.f32.mrb[0].mxu0
      %v1664 = vpop.f32.mrb[0].mxu0
      %v1665 = vadd.f32 0.0, %v1664
      %v1666 = vpop.f32.mrb[0].mxu0
      %1667 = vmatprep.mubr.bf16.mxu0 0
      %1668 = vmatmul.mubr.bf16.gmra.mrb[0].mxu0 %v1522
      %v1669 = vpop.f32.mrb[0].mxu0
      %v1670 = vadd.f32 0.0, %v1669
      %v1671 = vpop.f32.mrb[0].mxu0
      %v1672 = vpop.f32.mrb[0].mxu0
      %v1673 = vadd.f32 0.0, %v1672
      %v1674 = vpop.f32.mrb[0].mxu0
      %1675 = vmatprep.mubr.bf16.mxu0 0
      %1676 = vmatmul.mubr.bf16.gmra.mrb[0].mxu0 %v1525
      %v1677 = vpop.f32.mrb[0].mxu0
      %v1678 = vadd.f32 0.0, %v1677
      %v1679 = vpop.f32.mrb[0].mxu0
      %v1680 = vpop.f32.mrb[0].mxu0
      %v1681 = vadd.f32 0.0, %v1680
      %v1682 = vpop.f32.mrb[0].mxu0
      %1683 = vmatprep.mubr.bf16.mxu0 0
      %1684 = vmatmul.mubr.bf16.gmra.mrb[0].mxu0 %v1528
      %v1685 = vpop.f32.mrb[0].mxu0
      %v1686 = vadd.f32 0.0, %v1685
      %v1687 = vpop.f32.mrb[0].mxu0
      %v1688 = vpop.f32.mrb[0].mxu0
      %v1689 = vadd.f32 0.0, %v1688
      %v1690 = vpop.f32.mrb[0].mxu0
      %1691 = vmatprep.mubr.bf16.mxu0 0
      %1692 = vmatmul.mubr.bf16.gmra.mrb[0].mxu0 %v1531
      %v1693 = vpop.f32.mrb[0].mxu0
      %v1694 = vadd.f32 0.0, %v1693
      %v1695 = vpop.f32.mrb[0].mxu0
      %v1696 = vpop.f32.mrb[0].mxu0
      %v1697 = vadd.f32 0.0, %v1696
      %v1698 = vpop.f32.mrb[0].mxu0
      %1699 = vmatprep.mubr.bf16.mxu0 0
      %1700 = vmatmul.mubr.bf16.gmra.mrb[0].mxu0 %v1534
      %v1701 = vpop.f32.mrb[0].mxu0
      %v1702 = vadd.f32 0.0, %v1701
      %v1703 = vpop.f32.mrb[0].mxu0
      %v1704 = vpop.f32.mrb[0].mxu0
      %v1705 = vadd.f32 0.0, %v1704
      %v1706 = vpop.f32.mrb[0].mxu0
      %1707 = vdwg.mxu0
      %v1708 = vadd.f32 %v1409, %v1574
      %v1709 = vadd.f32 %v1410, %v1577
      %v1710 = vadd.f32 %v1411, %v1582
      %v1711 = vadd.f32 %v1412, %v1585
      %v1712 = vadd.f32 %v1413, %v1590
      %v1713 = vadd.f32 %v1414, %v1593
      %v1714 = vadd.f32 %v1415, %v1598
      %v1715 = vadd.f32 %v1416, %v1601
      %v1716 = vadd.f32 %v1417, %v1606
      %v1717 = vadd.f32 %v1418, %v1609
      %v1718 = vadd.f32 %v1419, %v1614
      %v1719 = vadd.f32 %v1420, %v1617
      %v1720 = vadd.f32 %v1421, %v1622
      %v1721 = vadd.f32 %v1422, %v1625
      %v1722 = vadd.f32 %v1423, %v1630
      %v1723 = vadd.f32 %v1424, %v1633
      %v1724 = vadd.f32 %v1425, %v1638
      %v1725 = vadd.f32 %v1426, %v1641
      %v1726 = vadd.f32 %v1427, %v1646
      %v1727 = vadd.f32 %v1428, %v1649
      %v1728 = vadd.f32 %v1429, %v1654
      %v1729 = vadd.f32 %v1430, %v1657
      %v1730 = vadd.f32 %v1431, %v1662
      %v1731 = vadd.f32 %v1432, %v1665
      %v1732 = vadd.f32 %v1433, %v1670
      %v1733 = vadd.f32 %v1434, %v1673
      %v1734 = vadd.f32 %v1435, %v1678
      %v1735 = vadd.f32 %v1436, %v1681
      %v1736 = vadd.f32 %v1437, %v1686
      %v1737 = vadd.f32 %v1438, %v1689
      %v1738 = vadd.f32 %v1439, %v1694
      %v1739 = vadd.f32 %v1440, %v1697
      %v1740 = vadd.f32 %v1441, %v1702
      %v1741 = vadd.f32 %v1442, %v1705
      %v1742 = vld [vmem:[%s213] sm:$0x1]
      %v1744 = vlaneseq
      %v1745 = vshrl.u32 %v1744, 7
      %v1746 = vsub.s32 0, %v1745
      %v1747 = vrot.slane %v1742, %v1746
      %v1749 = vadd.f32 %v1708, %v1747
      %v1750 = vadd.f32 %v1709, %v1747
      %v1751 = vadd.f32 %v1710, %v1747
      %v1752 = vadd.f32 %v1711, %v1747
      %v1753 = vadd.f32 %v1712, %v1747
      %v1754 = vadd.f32 %v1713, %v1747
      %v1755 = vadd.f32 %v1714, %v1747
      %v1756 = vadd.f32 %v1715, %v1747
      %v1757 = vadd.f32 %v1716, %v1747
      %v1758 = vadd.f32 %v1717, %v1747
      %v1759 = vadd.f32 %v1718, %v1747
      %v1760 = vadd.f32 %v1719, %v1747
      %v1761 = vadd.f32 %v1720, %v1747
      %v1762 = vadd.f32 %v1721, %v1747
      %v1763 = vadd.f32 %v1722, %v1747
      %v1764 = vadd.f32 %v1723, %v1747
      %v1765 = vadd.f32 %v1724, %v1747
      %v1766 = vadd.f32 %v1725, %v1747
      %v1767 = vadd.f32 %v1726, %v1747
      %v1768 = vadd.f32 %v1727, %v1747
      %v1769 = vadd.f32 %v1728, %v1747
      %v1770 = vadd.f32 %v1729, %v1747
      %v1771 = vadd.f32 %v1730, %v1747
      %v1772 = vadd.f32 %v1731, %v1747
      %v1773 = vadd.f32 %v1732, %v1747
      %v1774 = vadd.f32 %v1733, %v1747
      %v1775 = vadd.f32 %v1734, %v1747
      %v1776 = vadd.f32 %v1735, %v1747
      %v1777 = vadd.f32 %v1736, %v1747
      %v1778 = vadd.f32 %v1737, %v1747
      %v1779 = vadd.f32 %v1738, %v1747
      %v1780 = vadd.f32 %v1739, %v1747
      %v1781 = vadd.f32 %v1740, %v1747
      %v1782 = vadd.f32 %v1741, %v1747
      %vm1783 = vcmp.ge.f32.partialorder %v1749, 0.0
      %vm1784 = vcmp.ge.f32.partialorder %v1750, 0.0
      %vm1785 = vcmp.ge.f32.partialorder %v1751, 0.0
      %vm1786 = vcmp.ge.f32.partialorder %v1752, 0.0
      %vm1787 = vcmp.ge.f32.partialorder %v1753, 0.0
      %vm1788 = vcmp.ge.f32.partialorder %v1754, 0.0
      %vm1789 = vcmp.ge.f32.partialorder %v1755, 0.0
      %vm1790 = vcmp.ge.f32.partialorder %v1756, 0.0
      %vm1791 = vcmp.ge.f32.partialorder %v1757, 0.0
      %vm1792 = vcmp.ge.f32.partialorder %v1758, 0.0
      %vm1793 = vcmp.ge.f32.partialorder %v1759, 0.0
      %vm1794 = vcmp.ge.f32.partialorder %v1760, 0.0
      %vm1795 = vcmp.ge.f32.partialorder %v1761, 0.0
      %vm1796 = vcmp.ge.f32.partialorder %v1762, 0.0
      %vm1797 = vcmp.ge.f32.partialorder %v1763, 0.0
      %vm1798 = vcmp.ge.f32.partialorder %v1764, 0.0
      %vm1799 = vcmp.ge.f32.partialorder %v1765, 0.0
      %vm1800 = vcmp.ge.f32.partialorder %v1766, 0.0
      %vm1801 = vcmp.ge.f32.partialorder %v1767, 0.0
      %vm1802 = vcmp.ge.f32.partialorder %v1768, 0.0
      %vm1803 = vcmp.ge.f32.partialorder %v1769, 0.0
      %vm1804 = vcmp.ge.f32.partialorder %v1770, 0.0
      %vm1805 = vcmp.ge.f32.partialorder %v1771, 0.0
      %vm1806 = vcmp.ge.f32.partialorder %v1772, 0.0
      %vm1807 = vcmp.ge.f32.partialorder %v1773, 0.0
      %vm1808 = vcmp.ge.f32.partialorder %v1774, 0.0
      %vm1809 = vcmp.ge.f32.partialorder %v1775, 0.0
      %vm1810 = vcmp.ge.f32.partialorder %v1776, 0.0
      %vm1811 = vcmp.ge.f32.partialorder %v1777, 0.0
      %vm1812 = vcmp.ge.f32.partialorder %v1778, 0.0
      %vm1813 = vcmp.ge.f32.partialorder %v1779, 0.0
      %vm1814 = vcmp.ge.f32.partialorder %v1780, 0.0
      %vm1815 = vcmp.ge.f32.partialorder %v1781, 0.0
      %vm1816 = vcmp.ge.f32.partialorder %v1782, 0.0
      %v1817 = vmul.f32 %v1749, 0.2
      %v1818 = vmul.f32 %v1750, 0.2
      %v1819 = vmul.f32 %v1751, 0.2
      %v1820 = vmul.f32 %v1752, 0.2
      %v1821 = vmul.f32 %v1753, 0.2
      %v1822 = vmul.f32 %v1754, 0.2
      %v1823 = vmul.f32 %v1755, 0.2
      %v1824 = vmul.f32 %v1756, 0.2
      %v1825 = vmul.f32 %v1757, 0.2
      %v1826 = vmul.f32 %v1758, 0.2
      %v1827 = vmul.f32 %v1759, 0.2
      %v1828 = vmul.f32 %v1760, 0.2
      %v1829 = vmul.f32 %v1761, 0.2
      %v1830 = vmul.f32 %v1762, 0.2
      %v1831 = vmul.f32 %v1763, 0.2
      %v1832 = vmul.f32 %v1764, 0.2
      %v1833 = vmul.f32 %v1765, 0.2
      %v1834 = vmul.f32 %v1766, 0.2
      %v1835 = vmul.f32 %v1767, 0.2
      %v1836 = vmul.f32 %v1768, 0.2
      %v1837 = vmul.f32 %v1769, 0.2
      %v1838 = vmul.f32 %v1770, 0.2
      %v1839 = vmul.f32 %v1771, 0.2
      %v1840 = vmul.f32 %v1772, 0.2
      %v1841 = vmul.f32 %v1773, 0.2
      %v1842 = vmul.f32 %v1774, 0.2
      %v1843 = vmul.f32 %v1775, 0.2
      %v1844 = vmul.f32 %v1776, 0.2
      %v1845 = vmul.f32 %v1777, 0.2
      %v1846 = vmul.f32 %v1778, 0.2
      %v1847 = vmul.f32 %v1779, 0.2
      %v1848 = vmul.f32 %v1780, 0.2
      %v1849 = vmul.f32 %v1781, 0.2
      %v1850 = vmul.f32 %v1782, 0.2
      %v1851 = vsel %vm1783, %v1749, %v1817
      %v1852 = vsel %vm1784, %v1750, %v1818
      %v1853 = vsel %vm1785, %v1751, %v1819
      %v1854 = vsel %vm1786, %v1752, %v1820
      %v1855 = vsel %vm1787, %v1753, %v1821
      %v1856 = vsel %vm1788, %v1754, %v1822
      %v1857 = vsel %vm1789, %v1755, %v1823
      %v1858 = vsel %vm1790, %v1756, %v1824
      %v1859 = vsel %vm1791, %v1757, %v1825
      %v1860 = vsel %vm1792, %v1758, %v1826
      %v1861 = vsel %vm1793, %v1759, %v1827
      %v1862 = vsel %vm1794, %v1760, %v1828
      %v1863 = vsel %vm1795, %v1761, %v1829
      %v1864 = vsel %vm1796, %v1762, %v1830
      %v1865 = vsel %vm1797, %v1763, %v1831
      %v1866 = vsel %vm1798, %v1764, %v1832
      %v1867 = vsel %vm1799, %v1765, %v1833
      %v1868 = vsel %vm1800, %v1766, %v1834
      %v1869 = vsel %vm1801, %v1767, %v1835
      %v1870 = vsel %vm1802, %v1768, %v1836
      %v1871 = vsel %vm1803, %v1769, %v1837
      %v1872 = vsel %vm1804, %v1770, %v1838
      %v1873 = vsel %vm1805, %v1771, %v1839
      %v1874 = vsel %vm1806, %v1772, %v1840
      %v1875 = vsel %vm1807, %v1773, %v1841
      %v1876 = vsel %vm1808, %v1774, %v1842
      %v1877 = vsel %vm1809, %v1775, %v1843
      %v1878 = vsel %vm1810, %v1776, %v1844
      %v1879 = vsel %vm1811, %v1777, %v1845
      %v1880 = vsel %vm1812, %v1778, %v1846
      %v1881 = vsel %vm1813, %v1779, %v1847
      %v1882 = vsel %vm1814, %v1780, %v1848
      %v1883 = vsel %vm1815, %v1781, %v1849
      %v1884 = vsel %vm1816, %v1782, %v1850
      %v1885 = vpack.c.bf16 %v1852, %v1851
      %v1886 = vpack.c.bf16 %v1854, %v1853
      %v1887 = vpack.c.bf16 %v1856, %v1855
      %v1888 = vpack.c.bf16 %v1858, %v1857
      %v1889 = vpack.c.bf16 %v1860, %v1859
      %v1890 = vpack.c.bf16 %v1862, %v1861
      %v1891 = vpack.c.bf16 %v1864, %v1863
      %v1892 = vpack.c.bf16 %v1866, %v1865
      %v1893 = vpack.c.bf16 %v1868, %v1867
      %v1894 = vpack.c.bf16 %v1870, %v1869
      %v1895 = vpack.c.bf16 %v1872, %v1871
      %v1896 = vpack.c.bf16 %v1874, %v1873
      %v1897 = vpack.c.bf16 %v1876, %v1875
      %v1898 = vpack.c.bf16 %v1878, %v1877
      %v1899 = vpack.c.bf16 %v1880, %v1879
      %v1900 = vpack.c.bf16 %v1882, %v1881
      %v1901 = vpack.c.bf16 %v1884, %v1883
      %v1919 = vunpack.c.l.b16 %v1885
      %v1920 = vunpack.c.h.b16 %v1885
      %v1921 = vunpack.c.l.b16 %v1886
      %v1922 = vunpack.c.h.b16 %v1886
      %v1923 = vunpack.c.l.b16 %v1887
      %v1924 = vunpack.c.h.b16 %v1887
      %v1925 = vunpack.c.l.b16 %v1888
      %v1926 = vunpack.c.h.b16 %v1888
      %v1927 = vunpack.c.l.b16 %v1889
      %v1928 = vunpack.c.h.b16 %v1889
      %v1929 = vunpack.c.l.b16 %v1890
      %v1930 = vunpack.c.h.b16 %v1890
      %v1931 = vunpack.c.l.b16 %v1891
      %v1932 = vunpack.c.h.b16 %v1891
      %v1933 = vunpack.c.l.b16 %v1892
      %v1934 = vunpack.c.h.b16 %v1892
      %v1935 = vunpack.c.l.b16 %v1893
      %v1936 = vunpack.c.h.b16 %v1893
      %v1937 = vunpack.c.l.b16 %v1894
      %v1938 = vunpack.c.h.b16 %v1894
      %v1939 = vunpack.c.l.b16 %v1895
      %v1940 = vunpack.c.h.b16 %v1895
      %v1941 = vunpack.c.l.b16 %v1896
      %v1942 = vunpack.c.h.b16 %v1896
      %v1943 = vunpack.c.l.b16 %v1897
      %v1944 = vunpack.c.h.b16 %v1897
      %v1945 = vunpack.c.l.b16 %v1898
      %v1946 = vunpack.c.h.b16 %v1898
      %v1947 = vunpack.c.l.b16 %v1899
      %v1948 = vunpack.c.h.b16 %v1899
      %v1949 = vunpack.c.l.b16 %v1900
      %v1950 = vunpack.c.h.b16 %v1900
      %v1951 = vunpack.c.l.b16 %v1901
      %v1952 = vunpack.c.h.b16 %v1901
      %v1953 = vpack.c.b16 %v1919, %v1919
      %v1954 = vpack.c.b16 %v1920, %v1920
      %v1955 = vpack.c.b16 %v1921, %v1921
      %v1956 = vpack.c.b16 %v1922, %v1922
      %v1957 = vpack.c.b16 %v1923, %v1923
      %v1958 = vpack.c.b16 %v1924, %v1924
      %v1959 = vpack.c.b16 %v1925, %v1925
      %v1960 = vpack.c.b16 %v1926, %v1926
      %v1961 = vpack.c.b16 %v1927, %v1927
      %v1962 = vpack.c.b16 %v1928, %v1928
      %v1963 = vpack.c.b16 %v1929, %v1929
      %v1964 = vpack.c.b16 %v1930, %v1930
      %v1965 = vpack.c.b16 %v1931, %v1931
      %v1966 = vpack.c.b16 %v1932, %v1932
      %v1967 = vpack.c.b16 %v1933, %v1933
      %v1968 = vpack.c.b16 %v1934, %v1934
      %v1969 = vpack.c.b16 %v1935, %v1935
      %v1970 = vpack.c.b16 %v1936, %v1936
      %v1971 = vpack.c.b16 %v1937, %v1937
      %v1972 = vpack.c.b16 %v1938, %v1938
      %v1973 = vpack.c.b16 %v1939, %v1939
      %v1974 = vpack.c.b16 %v1940, %v1940
      %v1975 = vpack.c.b16 %v1941, %v1941
      %v1976 = vpack.c.b16 %v1942, %v1942
      %v1977 = vpack.c.b16 %v1943, %v1943
      %v1978 = vpack.c.b16 %v1944, %v1944
      %v1979 = vpack.c.b16 %v1945, %v1945
      %v1980 = vpack.c.b16 %v1946, %v1946
      %v1981 = vpack.c.b16 %v1947, %v1947
      %v1982 = vpack.c.b16 %v1948, %v1948
      %v1983 = vpack.c.b16 %v1949, %v1949
      %v1984 = vpack.c.b16 %v1950, %v1950
      %v1985 = vpack.c.b16 %v1951, %v1951
      %v1986 = vpack.c.b16 %v1952, %v1952
      %vm2021 = vcmask 60416
      %2022 = vst.msk [vmem:[%s221] sm:$0xf] %vm2021, %v1953
      %2023 = vst.msk [vmem:[%s221 + $0x4] sm:$0xf] %vm2021, %v1954
      %2024 = vst.msk [vmem:[%s221 + $0x8] sm:$0xf] %vm2021, %v1955
      %2025 = vst.msk [vmem:[%s221 + $0xc] sm:$0xf] %vm2021, %v1956
      %2026 = vst.msk [vmem:[%s221 + $0x10] sm:$0xf] %vm2021, %v1957
      %2027 = vst.msk [vmem:[%s221 + $0x14] sm:$0xf] %vm2021, %v1958
      %2028 = vst.msk [vmem:[%s221 + $0x18] sm:$0xf] %vm2021, %v1959
      %2029 = vst.msk [vmem:[%s221 + $0x1c] sm:$0xf] %vm2021, %v1960
      %2030 = vst.msk [vmem:[%s221 + $0x20] sm:$0xf] %vm2021, %v1961
      %2031 = vst.msk [vmem:[%s221 + $0x24] sm:$0xf] %vm2021, %v1962
      %2032 = vst.msk [vmem:[%s221 + $0x28] sm:$0xf] %vm2021, %v1963
      %2033 = vst.msk [vmem:[%s221 + $0x2c] sm:$0xf] %vm2021, %v1964
      %2034 = vst.msk [vmem:[%s221 + $0x30] sm:$0xf] %vm2021, %v1965
      %2035 = vst.msk [vmem:[%s221 + $0x34] sm:$0xf] %vm2021, %v1966
      %2036 = vst.msk [vmem:[%s221 + $0x38] sm:$0xf] %vm2021, %v1967
      %2037 = vst.msk [vmem:[%s221 + $0x3c] sm:$0xf] %vm2021, %v1968
      %2038 = vst.msk [vmem:[%s221 + $0x40] sm:$0xf] %vm2021, %v1969
      %2039 = vst.msk [vmem:[%s221 + $0x44] sm:$0xf] %vm2021, %v1970
      %2040 = vst.msk [vmem:[%s221 + $0x48] sm:$0xf] %vm2021, %v1971
      %2041 = vst.msk [vmem:[%s221 + $0x4c] sm:$0xf] %vm2021, %v1972
      %2042 = vst.msk [vmem:[%s221 + $0x50] sm:$0xf] %vm2021, %v1973
      %2043 = vst.msk [vmem:[%s221 + $0x54] sm:$0xf] %vm2021, %v1974
      %2044 = vst.msk [vmem:[%s221 + $0x58] sm:$0xf] %vm2021, %v1975
      %2045 = vst.msk [vmem:[%s221 + $0x5c] sm:$0xf] %vm2021, %v1976
      %2046 = vst.msk [vmem:[%s221 + $0x60] sm:$0xf] %vm2021, %v1977
      %2047 = vst.msk [vmem:[%s221 + $0x64] sm:$0xf] %vm2021, %v1978
      %2048 = vst.msk [vmem:[%s221 + $0x68] sm:$0xf] %vm2021, %v1979
      %2049 = vst.msk [vmem:[%s221 + $0x6c] sm:$0xf] %vm2021, %v1980
      %2050 = vst.msk [vmem:[%s221 + $0x70] sm:$0xf] %vm2021, %v1981
      %2051 = vst.msk [vmem:[%s221 + $0x74] sm:$0xf] %vm2021, %v1982
      %2052 = vst.msk [vmem:[%s221 + $0x78] sm:$0xf] %vm2021, %v1983
      %2053 = vst.msk [vmem:[%s221 + $0x7c] sm:$0xf] %vm2021, %v1984
      %2054 = vst.msk [vmem:[%s221 + $0x80] sm:$0xf] %vm2021, %v1985
      %2055 = vst.msk [vmem:[%s221 + $0x84] sm:$0xf] %vm2021, %v1986
      %p2056 = scmp.lt.s32.totalorder %s18, 1
      %s2057 = scalar_select %p2056, %s18, 1
      %p2058 = scmp.lt.s32.totalorder %s19, 0
      %s2059 = scalar_select %p2058, %s19, 0
      %s2060 = smul.addr %s2057, 34
      %s2061 = sadd.s32 %s2059, %s2060
      %s2062 = smul.addr %s2061, 4
      %s2063 = scalar_lea.vmem %s3, %s2062
      // Predicated region
      $region33: #{_lambda_.5} parent=31 // pred_check
        %p2064 = pneg %p124
      $region34: #{_lambda_.5} parent=31 // pred_check_branch
        %2066 = sbr.rel (%p2064) target = $region36
      $region35: #{_lambda_.5} parent=31 // pred_region
        _
      $region36: #{_lambda_.5} parent=31 // pred_fallthru
        _
    $region32: #{_lambda_.5} parent=5 // pred_fallthru
      _
    %p2067 = scmp.le.s32.totalorder 2, %s9
    // Predicated region
    $region37: #{_lambda_.5} parent=5 // pred_check
      %p2068 = pneg %p2067
    $region38: #{_lambda_.5} parent=5 // pred_check_branch
      %2070 = sbr.rel (%p2068) target = $region40
    $region39: #{_lambda_.5} parent=5 // pred_region
      %s2071 = ssub.s32 %s9, 2
      // Predicated region
      $region41: #{_lambda_.5} parent=39 // pred_check
        %p2072 = pneg %p130
      $region42: #{_lambda_.5} parent=39 // pred_check_branch
        %2074 = sbr.rel (%p2072) target = $region44
      $region43: #{_lambda_.5} parent=39 // pred_region
        %p2075 = scmp.lt.s32.totalorder %s20, 1
        %s2076 = scalar_select %p2075, %s20, 1
        %p2077 = scmp.lt.s32.totalorder %s21, 0
        %s2078 = scalar_select %p2077, %s21, 0
        %s2079 = smul.addr %s2076, 34
        %s2080 = sadd.s32 %s2078, %s2079
        %s2081 = smul.addr %s2080, 4
        %s2082 = scalar_lea.vmem %s3, %s2081
      $region44: #{_lambda_.5} parent=39 // pred_fallthru
        _
    $region40: #{_lambda_.5} parent=5 // pred_fallthru
      _
  $region6: #{_lambda_.5} parent=0 // loop_footer
    %s13 = sadd.s32 1, %s9
  $region7: #{_lambda_.5} parent=0 // loop_footer_branch
    %8 = sbr.rel target = $region3
  $region8: #{_lambda_.5} parent=0 // loop_exit
    _

// kernel: _lambda_.6
$region0: #{_lambda_.6}
  #allocation0 [shape = 'u32[]', space=smem, size = 0x4, offset = 0x4, fixed_abs, tag = 'smem constant byte address 0x4 - core index']
  #allocation1 [shape = 'u32[144,128]{1,0:T(1,128)}', space=vmem, size = 0x12000, scoped, tag = 'internal scratch']
  %s0 = inlined_call_operand.vmem [shape: bf16[2,90,32], index: 0, kind: input, shape index: {}]
  %s1 = inlined_call_operand.vmem [shape: bf16[4,32,16], index: 1, kind: input, shape index: {}]
  %s2 = inlined_call_operand.vmem [shape: bf16[2,72,16], index: 2, kind: output, shape index: {}]
  %s3 = sld [smem:[#allocation0]]
  $region41: #{_lambda_.6} parent=0
    _
  %s5 = ssub.s32 1, %s3
  %s6 = scalar_select 0, %s5, %s3
  loop: start=0, step=1, limit=4
  $region2: #{_lambda_.6} parent=0 // loop_pre_header
    _
  $region3: #{_lambda_.6} parent=0 // loop_header
    %s8 = sphi 0, %s12
    %p9 = scmp.ge.s32.totalorder %s8, 4
    %s15 = sphi 0, %s27
    %s16 = sphi 0, %s23
    %s17 = sphi 0, %s15
    %s18 = sphi 0, %s16
    %s19 = sphi 0, %s17
    %s20 = sphi 0, %s18
    %s30 = sphi 0, %s32
    %s33 = sphi 0, %s30
    %s34 = sphi 0, %s33
    %s50 = sphi 0, %s34
    %s56 = sphi 0, %s58
    %s59 = sphi 0, %s56
    %s60 = sphi 0, %s59
    %s76 = sphi 0, %s60
    %s84 = sphi 0, %s86
    %s87 = sphi 0, %s84
    %s88 = sphi 0, %s87
    %s104 = sphi 0, %s88
  $region4: #{_lambda_.6} parent=0 // loop_header_branch
    %11 = sbr.rel (%p9) target = $region8
  $region5: #{_lambda_.6} parent=0 // loop_body
    %s13 = ssub.s32 %s8, 1
    %s14 = ssub.s32 %s8, 2
    %s21 = sadd.s32 1, %s16
    %p22 = scmp.ge.s32.totalorder %s21, 1
    %s23 = scalar_select %p22, 0, %s21
    %s24 = sadd.s32 1, %s15
    %s25 = scalar_select %p22, %s24, %s15
    %p26 = scmp.ge.s32.totalorder %s25, 2
    %s27 = scalar_select %p26, 0, %s25
    %s28 = ssub.s32 %s15, %s27
    %p29 = scmp.eq.s32.totalorder %s28, 0
    %s31 = sadd.s32 %s30, 1
    %s32 = scalar_select %p29, %s30, %s31
    %p35 = pneg %p29
    %p36 = scmp.eq.s32.totalorder %s8, 1
    %p37 = por %p35, %p36
    %p38 = scmp.ne.s32.totalorder %s30, %s33
    %p39 = scmp.eq.s32.totalorder %s8, 0
    %p40 = por %p38, %p39
    %p41 = scmp.ne.s32.totalorder %s30, %s33
    %p42 = scmp.eq.s32.totalorder %s13, 1
    %p43 = por %p41, %p42
    %p44 = scmp.ne.s32.totalorder %s33, %s34
    %p45 = scmp.eq.s32.totalorder %s13, 0
    %p46 = por %p44, %p45
    %p47 = scmp.ne.s32.totalorder %s33, %s34
    %p48 = scmp.eq.s32.totalorder %s14, 1
    %p49 = por %p47, %p48
    %p51 = scmp.ne.s32.totalorder %s34, %s50
    %p52 = scmp.eq.s32.totalorder %s14, 0
    %p53 = por %p51, %p52
    %s54 = ssub.s32 %s16, %s23
    %p55 = scmp.eq.s32.totalorder %s54, 0
    %s57 = sadd.s32 %s56, 1
    %s58 = scalar_select %p55, %s56, %s57
    %p61 = pneg %p55
    %p62 = scmp.eq.s32.totalorder %s8, 1
    %p63 = por %p61, %p62
    %p64 = scmp.ne.s32.totalorder %s56, %s59
    %p65 = scmp.eq.s32.totalorder %s8, 0
    %p66 = por %p64, %p65
    %p67 = scmp.ne.s32.totalorder %s56, %s59
    %p68 = scmp.eq.s32.totalorder %s13, 1
    %p69 = por %p67, %p68
    %p70 = scmp.ne.s32.totalorder %s59, %s60
    %p71 = scmp.eq.s32.totalorder %s13, 0
    %p72 = por %p70, %p71
    %p73 = scmp.ne.s32.totalorder %s59, %s60
    %p74 = scmp.eq.s32.totalorder %s14, 1
    %p75 = por %p73, %p74
    %p77 = scmp.ne.s32.totalorder %s60, %s76
    %p78 = scmp.eq.s32.totalorder %s14, 0
    %p79 = por %p77, %p78
    %s80 = ssub.s32 %s15, %s27
    %s81 = ssub.s32 %s16, %s23
    %s82 = sor.u32 %s80, %s81
    %p83 = scmp.eq.s32.totalorder %s82, 0
    %s85 = sadd.s32 %s84, 1
    %s86 = scalar_select %p83, %s84, %s85
    %p89 = pneg %p83
    %p90 = scmp.eq.s32.totalorder %s8, 1
    %p91 = por %p89, %p90
    %p92 = scmp.ne.s32.totalorder %s84, %s87
    %p93 = scmp.eq.s32.totalorder %s8, 0
    %p94 = por %p92, %p93
    %p95 = scmp.ne.s32.totalorder %s84, %s87
    %p96 = scmp.eq.s32.totalorder %s13, 1
    %p97 = por %p95, %p96
    %p98 = scmp.ne.s32.totalorder %s87, %s88
    %p99 = scmp.eq.s32.totalorder %s13, 0
    %p100 = por %p98, %p99
    %p101 = scmp.ne.s32.totalorder %s87, %s88
    %p102 = scmp.eq.s32.totalorder %s14, 1
    %p103 = por %p101, %p102
    %p105 = scmp.ne.s32.totalorder %s88, %s104
    %p106 = scmp.eq.s32.totalorder %s14, 0
    %p107 = por %p105, %p106
    %p108 = scmp.le.s32.totalorder 1, %s8
    %p109 = scmp.lt.s32.totalorder %s8, 3
    %p110 = pnand %p108, %p109
    %p111 = pneg %p110
    // Predicated region
    $region9: #{_lambda_.6} parent=5 // pred_check
      _
    $region10: #{_lambda_.6} parent=5 // pred_check_branch
      %113 = sbr.rel (%p110) target = $region12
    $region11: #{_lambda_.6} parent=5 // pred_region
      %s114 = ssub.s32 %s8, 1
      // Predicated region
      $region13: #{_lambda_.6} parent=11 // pred_check
        %p115 = pneg %p72
      $region14: #{_lambda_.6} parent=11 // pred_check_branch
        %117 = sbr.rel (%p115) target = $region16
      $region15: #{_lambda_.6} parent=11 // pred_region
        %p118 = scmp.lt.s32.totalorder %s18, 0
        %s119 = scalar_select %p118, %s18, 0
        %s120 = smul.addr %s119, 4
        %s121 = scalar_lea.vmem %s1, %s120
      $region16: #{_lambda_.6} parent=11 // pred_fallthru
        _
    $region12: #{_lambda_.6} parent=5 // pred_fallthru
      _
    %p122 = scmp.lt.s32.totalorder %s8, 2
    // Predicated region
    $region17: #{_lambda_.6} parent=5 // pred_check
      %p123 = pneg %p122
    $region18: #{_lambda_.6} parent=5 // pred_check_branch
      %125 = sbr.rel (%p123) target = $region20
    $region19: #{_lambda_.6} parent=5 // pred_region
      // Predicated region
      $region21: #{_lambda_.6} parent=19 // pred_check
        %p126 = pneg %p40
      $region22: #{_lambda_.6} parent=19 // pred_check_branch
        %128 = sbr.rel (%p126) target = $region24
      $region23: #{_lambda_.6} parent=19 // pred_region
        %p129 = scmp.lt.s32.totalorder %s15, 1
        %s130 = scalar_select %p129, %s15, 1
        %s131 = smul.addr %s130, 12
        %s132 = smul.addr %s131, 4
        %s133 = scalar_lea.vmem %s0, %s132
      $region24: #{_lambda_.6} parent=19 // pred_fallthru
        _
    $region20: #{_lambda_.6} parent=5 // pred_fallthru
      _
    %p134 = scmp.le.s32.totalorder 1, %s8
    %p135 = scmp.lt.s32.totalorder %s8, 3
    %p136 = pnand %p134, %p135
    %p137 = pneg %p136
    // Predicated region
    $region25: #{_lambda_.6} parent=5 // pred_check
      _
    $region26: #{_lambda_.6} parent=5 // pred_check_branch
      %139 = sbr.rel (%p136) target = $region28
    $region27: #{_lambda_.6} parent=5 // pred_region
      %s140 = ssub.s32 %s8, 1
      %p141 = scmp.lt.s32.totalorder %s17, 1
      %s142 = scalar_select %p141, %s17, 1
      %s143 = smul.addr %s142, 12
      %s144 = smul.addr %s143, 4
      %s145 = scalar_lea.vmem %s0, %s144
      %p146 = pneg %p46
      %p147 = pneg %p43
      %p148 = scmp.lt.s32.totalorder %s18, 0
      %s149 = scalar_select %p148, %s18, 0
      %s150 = smul.addr %s149, 4
      %s151 = scalar_lea.vmem %s1, %s150
      %p152 = pneg %p72
      %p153 = pneg %p69
      %p154 = pneg %p100
      %p155 = pneg %p97
      %p156 = scmp.lt.s32.totalorder %s17, 1
      %s157 = scalar_select %p156, %s17, 1
      %p158 = scmp.lt.s32.totalorder %s18, 0
      %s159 = scalar_select %p158, %s18, 0
      %s160 = smul.addr %s157, 9
      %s161 = sadd.s32 %s159, %s160
      %s162 = smul.addr %s161, 4
      %s163 = scalar_lea.vmem %s2, %s162
      %p164 = scmp.lt.s32.totalorder %s17, 1
      %s165 = scalar_select %p164, %s17, 1
      %s166 = smul.addr %s165, 12
      %s167 = smul.addr %s166, 4
      %s168 = scalar_lea.vmem %s0, %s167
      %p169 = scmp.lt.s32.totalorder %s18, 0
      %s170 = scalar_select %p169, %s18, 0
      %s171 = smul.addr %s170, 4
      %s172 = scalar_lea.vmem %s1, %s171
      %p173 = scmp.lt.s32.totalorder %s17, 1
      %s174 = scalar_select %p173, %s17, 1
      %p175 = scmp.lt.s32.totalorder %s18, 0
      %s176 = scalar_select %p175, %s18, 0
      %s177 = smul.addr %s174, 9
      %s178 = sadd.s32 %s176, %s177
      %s179 = smul.addr %s178, 4
      %s180 = scalar_lea.vmem %s2, %s179
      %v182 = vld [vmem:[%s168] sm:$0xf]
      %v183 = vld [vmem:[%s168 + $0x4] sm:$0xf]
      %v184 = vld [vmem:[%s168 + $0x8] sm:$0xf]
      %v185 = vld [vmem:[%s168 + $0xc] sm:$0xf]
      %v186 = vld [vmem:[%s168 + $0x10] sm:$0xf]
      %v187 = vld [vmem:[%s168 + $0x14] sm:$0xf]
      %v188 = vld [vmem:[%s168 + $0x18] sm:$0xf]
      %v189 = vld [vmem:[%s168 + $0x1c] sm:$0xf]
      %v190 = vld [vmem:[%s168 + $0x20] sm:$0xf]
      %v191 = vld [vmem:[%s172] sm:$0xf]
      %v192 = vld [vmem:[%s172 + $0x4] sm:$0xf]
      %v193 = vld [vmem:[%s172 + $0x8] sm:$0xf]
      %v194 = vld [vmem:[%s172 + $0xc] sm:$0xf]
      %v195 = vld [vmem:[%s168 + $0x24] sm:$0x1]
      %s196 = scalar_lea.vmem %s172, 16
      %v197 = vld [vmem:[%s196] sm:$0xf]
      %v198 = vld [vmem:[%s196 + $0x4] sm:$0xf]
      %v199 = vld [vmem:[%s196 + $0x8] sm:$0xf]
      %v200 = vld [vmem:[%s196 + $0xc] sm:$0xf]
      %v211 = vunpack.c.l.b16 %v182
      %v212 = vunpack.c.l.b16 %v183
      %v213 = vunpack.c.l.b16 %v184
      %v214 = vunpack.c.l.b16 %v185
      %v215 = vunpack.c.l.b16 %v186
      %v216 = vunpack.c.l.b16 %v187
      %v217 = vunpack.c.l.b16 %v188
      %v218 = vunpack.c.l.b16 %v189
      %v219 = vunpack.c.l.b16 %v190
      %v220 = vunpack.c.l.b16 %v195
      %v221 = vpack.c.b16 %v212, %v211
      %v222 = vpack.c.b16 %v214, %v213
      %v223 = vpack.c.b16 %v216, %v215
      %v224 = vpack.c.b16 %v218, %v217
      %v225 = vpack.c.b16 %v220, %v219
      %vm226 = vsmask.f32 7424
      %v228 = vshrl.u32 %v221, 16
      %v230 = vshll.u32 %v221, 16
      %v232 = vrot.slane %v230, 1
      %v233 = vor.u32 %v228, %v232
      %v235 = vshll.u32 %v222, 16
      %v237 = vrot.slane %v235, 1
      %v238 = vsel %vm226, %v233, %v237
      %v239 = vshrl.u32 %v222, 16
      %v241 = vor.u32 %v239, %v237
      %v243 = vshll.u32 %v223, 16
      %v245 = vrot.slane %v243, 1
      %v246 = vsel %vm226, %v241, %v245
      %v247 = vshrl.u32 %v223, 16
      %v249 = vor.u32 %v247, %v245
      %v251 = vshll.u32 %v224, 16
      %v253 = vrot.slane %v251, 1
      %v254 = vsel %vm226, %v249, %v253
      %v255 = vshrl.u32 %v224, 16
      %v257 = vor.u32 %v255, %v253
      %v259 = vshll.u32 %v225, 16
      %v261 = vrot.slane %v259, 1
      %v262 = vsel %vm226, %v257, %v261
      %v263 = vshrl.u32 %v225, 16
      %v265 = vor.u32 %v263, %v261
      %v270 = vunpack.c.l.b16 %v197
      %v271 = vunpack.c.l.b16 %v198
      %v272 = vunpack.c.l.b16 %v199
      %v273 = vunpack.c.l.b16 %v200
      %v274 = vpack.c.b16 %v271, %v270
      %v275 = vpack.c.b16 %v273, %v272
      %vm278 = vcmask 261120
      %v280 = vsel %vm278, %v238, 0
      %v283 = vsel %vm278, %v246, 0
      %v286 = vsel %vm278, %v254, 0
      %v289 = vsel %vm278, %v262, 0
      %v292 = vsel %vm278, %v265, 0
      %294 = vmatprep.subr.bf16.mxu0 0
      %295 = vmatpush1.bf16.msra.mxu0 %v274
      %296 = vmatprep.subr.bf16.mxu0 0
      %297 = vmatpush1.bf16.msra.mxu0 %v275
      %298 = vmatprep.subr.bf16.mxu0 0
      %299 = vmatpush1.bf16.msra.mxu0 0
      %300 = vmatprep.subr.bf16.mxu0 0
      %301 = vmatpush1.bf16.msra.mxu0 0
      %302 = vmatprep.subr.bf16.mxu0 0
      %303 = vmatpush1.bf16.msra.mxu0 0
      %304 = vmatprep.subr.bf16.mxu0 0
      %305 = vmatpush1.bf16.msra.mxu0 0
      %306 = vmatprep.subr.bf16.mxu0 0
      %307 = vmatpush1.bf16.msra.mxu0 0
      %308 = vmatprep.subr.bf16.mxu0 0
      %309 = vmatpush1.bf16.msra.mxu0 0
      %310 = vmatprep.subr.bf16.mxu0 0
      %311 = vmatpush1.bf16.msra.mxu0 0
      %312 = vmatprep.subr.bf16.mxu0 0
      %313 = vmatpush1.bf16.msra.mxu0 0
      %314 = vmatprep.subr.bf16.mxu0 0
      %315 = vmatpush1.bf16.msra.mxu0 0
      %316 = vmatprep.subr.bf16.mxu0 0
      %317 = vmatpush1.bf16.msra.mxu0 0
      %318 = vmatprep.subr.bf16.mxu0 0
      %319 = vmatpush1.bf16.msra.mxu0 0
      %320 = vmatprep.subr.bf16.mxu0 0
      %321 = vmatpush1.bf16.msra.mxu0 0
      %322 = vmatprep.subr.bf16.mxu0 0
      %323 = vmatpush1.bf16.msra.mxu0 0
      %324 = vmatprep.subr.bf16.mxu0 0
      %325 = vmatpush1.bf16.msra.mxu0 0
      %326 = vmatprep.mubr.bf16.mxu0 0
      %327 = vmatmul.mubr.bf16.gmra.mrb[0].mxu0 %v280
      %v328 = vpop.f32.mrb[0].mxu0
      %v329 = vadd.f32 0.0, %v328
      %v330 = vpop.f32.mrb[0].mxu0
      %v331 = vpop.f32.mrb[0].mxu0
      %v332 = vadd.f32 0.0, %v331
      %v333 = vpop.f32.mrb[0].mxu0
      %334 = vmatprep.mubr.bf16.mxu0 0
      %335 = vmatmul.mubr.bf16.gmra.mrb[0].mxu0 %v283
      %v336 = vpop.f32.mrb[0].mxu0
      %v337 = vadd.f32 0.0, %v336
      %v338 = vpop.f32.mrb[0].mxu0
      %v339 = vpop.f32.mrb[0].mxu0
      %v340 = vadd.f32 0.0, %v339
      %v341 = vpop.f32.mrb[0].mxu0
      %342 = vmatprep.mubr.bf16.mxu0 0
      %343 = vmatmul.mubr.bf16.gmra.mrb[0].mxu0 %v286
      %v344 = vpop.f32.mrb[0].mxu0
      %v345 = vadd.f32 0.0, %v344
      %v346 = vpop.f32.mrb[0].mxu0
      %v347 = vpop.f32.mrb[0].mxu0
      %v348 = vadd.f32 0.0, %v347
      %v349 = vpop.f32.mrb[0].mxu0
      %350 = vmatprep.mubr.bf16.mxu0 0
      %351 = vmatmul.mubr.bf16.gmra.mrb[0].mxu0 %v289
      %v352 = vpop.f32.mrb[0].mxu0
      %v353 = vadd.f32 0.0, %v352
      %v354 = vpop.f32.mrb[0].mxu0
      %v355 = vpop.f32.mrb[0].mxu0
      %v356 = vadd.f32 0.0, %v355
      %v357 = vpop.f32.mrb[0].mxu0
      %358 = vmatprep.mubr.bf16.mxu0 0
      %359 = vmatmul.mubr.bf16.gmra.mrb[0].mxu0 %v292
      %v360 = vpop.f32.mrb[0].mxu0
      %v361 = vadd.f32 0.0, %v360
      %v362 = vpop.f32.mrb[0].mxu0
      %v363 = vpop.f32.mrb[0].mxu0
      %v364 = vpop.f32.mrb[0].mxu0
      %365 = vdwg.mxu0
      %v366 = vpack.c.b16 %v219, %v219
      %v371 = vunpack.c.l.b16 %v191
      %v372 = vunpack.c.l.b16 %v192
      %v373 = vunpack.c.l.b16 %v193
      %v374 = vunpack.c.l.b16 %v194
      %v375 = vpack.c.b16 %v372, %v371
      %v376 = vpack.c.b16 %v374, %v373
      %v379 = vsel %vm278, %v221, 0
      %v381 = vsel %vm278, %v222, 0
      %v383 = vsel %vm278, %v223, 0
      %v385 = vsel %vm278, %v224, 0
      %v388 = vsel %vm278, %v366, 0
      %390 = vmatprep.subr.bf16.mxu0 0
      %391 = vmatpush1.bf16.msra.mxu0 %v375
      %392 = vmatprep.subr.bf16.mxu0 0
      %393 = vmatpush1.bf16.msra.mxu0 %v376
      %394 = vmatprep.subr.bf16.mxu0 0
      %395 = vmatpush1.bf16.msra.mxu0 0
      %396 = vmatprep.subr.bf16.mxu0 0
      %397 = vmatpush1.bf16.msra.mxu0 0
      %398 = vmatprep.subr.bf16.mxu0 0
      %399 = vmatpush1.bf16.msra.mxu0 0
      %400 = vmatprep.subr.bf16.mxu0 0
      %401 = vmatpush1.bf16.msra.mxu0 0
      %402 = vmatprep.subr.bf16.mxu0 0
      %403 = vmatpush1.bf16.msra.mxu0 0
      %404 = vmatprep.subr.bf16.mxu0 0
      %405 = vmatpush1.bf16.msra.mxu0 0
      %406 = vmatprep.subr.bf16.mxu0 0
      %407 = vmatpush1.bf16.msra.mxu0 0
      %408 = vmatprep.subr.bf16.mxu0 0
      %409 = vmatpush1.bf16.msra.mxu0 0
      %410 = vmatprep.subr.bf16.mxu0 0
      %411 = vmatpush1.bf16.msra.mxu0 0
      %412 = vmatprep.subr.bf16.mxu0 0
      %413 = vmatpush1.bf16.msra.mxu0 0
      %414 = vmatprep.subr.bf16.mxu0 0
      %415 = vmatpush1.bf16.msra.mxu0 0
      %416 = vmatprep.subr.bf16.mxu0 0
      %417 = vmatpush1.bf16.msra.mxu0 0
      %418 = vmatprep.subr.bf16.mxu0 0
      %419 = vmatpush1.bf16.msra.mxu0 0
      %420 = vmatprep.subr.bf16.mxu0 0
      %421 = vmatpush1.bf16.msra.mxu0 0
      %422 = vmatprep.mubr.bf16.mxu0 0
      %423 = vmatmul.mubr.bf16.gmra.mrb[0].mxu0 %v379
      %v424 = vpop.f32.mrb[0].mxu0
      %v425 = vadd.f32 %v329, %v424
      %v426 = vpop.f32.mrb[0].mxu0
      %v427 = vpop.f32.mrb[0].mxu0
      %v428 = vadd.f32 %v332, %v427
      %v429 = vpop.f32.mrb[0].mxu0
      %430 = vmatprep.mubr.bf16.mxu0 0
      %431 = vmatmul.mubr.bf16.gmra.mrb[0].mxu0 %v381
      %v432 = vpop.f32.mrb[0].mxu0
      %v433 = vadd.f32 %v337, %v432
      %v434 = vpop.f32.mrb[0].mxu0
      %v435 = vpop.f32.mrb[0].mxu0
      %v436 = vadd.f32 %v340, %v435
      %v437 = vpop.f32.mrb[0].mxu0
      %438 = vmatprep.mubr.bf16.mxu0 0
      %439 = vmatmul.mubr.bf16.gmra.mrb[0].mxu0 %v383
      %v440 = vpop.f32.mrb[0].mxu0
      %v441 = vadd.f32 %v345, %v440
      %v442 = vpop.f32.mrb[0].mxu0
      %v443 = vpop.f32.mrb[0].mxu0
      %v444 = vadd.f32 %v348, %v443
      %v445 = vpop.f32.mrb[0].mxu0
      %446 = vmatprep.mubr.bf16.mxu0 0
      %447 = vmatmul.mubr.bf16.gmra.mrb[0].mxu0 %v385
      %v448 = vpop.f32.mrb[0].mxu0
      %v449 = vadd.f32 %v353, %v448
      %v450 = vpop.f32.mrb[0].mxu0
      %v451 = vpop.f32.mrb[0].mxu0
      %v452 = vadd.f32 %v356, %v451
      %v453 = vpop.f32.mrb[0].mxu0
      %454 = vmatprep.mubr.bf16.mxu0 0
      %455 = vmatmul.mubr.bf16.gmra.mrb[0].mxu0 %v388
      %v456 = vpop.f32.mrb[0].mxu0
      %v457 = vadd.f32 %v361, %v456
      %v458 = vpop.f32.mrb[0].mxu0
      %v459 = vpop.f32.mrb[0].mxu0
      %v460 = vpop.f32.mrb[0].mxu0
      %461 = vdwg.mxu0
      %v462 = vld [vmem:[%s168 + $0x4] sm:$0xf]
      %v463 = vld [vmem:[%s168 + $0x8] sm:$0xf]
      %v464 = vld [vmem:[%s168 + $0xc] sm:$0xf]
      %v465 = vld [vmem:[%s168 + $0x10] sm:$0xf]
      %v466 = vld [vmem:[%s168 + $0x14] sm:$0xf]
      %v467 = vld [vmem:[%s168 + $0x18] sm:$0xf]
      %v468 = vld [vmem:[%s168 + $0x1c] sm:$0xf]
      %v469 = vld [vmem:[%s168 + $0x20] sm:$0xf]
      %v470 = vld [vmem:[%s168 + $0x24] sm:$0xf]
      %v471 = vld [vmem:[%s168 + $0x28] sm:$0x1]
      %s472 = scalar_lea.vmem %s172, 32
      %v473 = vld [vmem:[%s472] sm:$0xf]
      %v474 = vld [vmem:[%s472 + $0x4] sm:$0xf]
      %v475 = vld [vmem:[%s472 + $0x8] sm:$0xf]
      %v476 = vld [vmem:[%s472 + $0xc] sm:$0xf]
      %v487 = vunpack.c.l.b16 %v462
      %v488 = vunpack.c.l.b16 %v463
      %v489 = vunpack.c.l.b16 %v464
      %v490 = vunpack.c.l.b16 %v465
      %v491 = vunpack.c.l.b16 %v466
      %v492 = vunpack.c.l.b16 %v467
      %v493 = vunpack.c.l.b16 %v468
      %v494 = vunpack.c.l.b16 %v469
      %v495 = vunpack.c.l.b16 %v470
      %v496 = vunpack.c.l.b16 %v471
      %v497 = vpack.c.b16 %v488, %v487
      %v498 = vpack.c.b16 %v490, %v489
      %v499 = vpack.c.b16 %v492, %v491
      %v500 = vpack.c.b16 %v494, %v493
      %v501 = vpack.c.b16 %v496, %v495
      %v503 = vshrl.u32 %v497, 16
      %v505 = vshll.u32 %v497, 16
      %v507 = vrot.slane %v505, 1
      %v508 = vor.u32 %v503, %v507
      %v510 = vshll.u32 %v498, 16
      %v512 = vrot.slane %v510, 1
      %v513 = vsel %vm226, %v508, %v512
      %v514 = vshrl.u32 %v498, 16
      %v516 = vor.u32 %v514, %v512
      %v518 = vshll.u32 %v499, 16
      %v520 = vrot.slane %v518, 1
      %v521 = vsel %vm226, %v516, %v520
      %v522 = vshrl.u32 %v499, 16
      %v524 = vor.u32 %v522, %v520
      %v526 = vshll.u32 %v500, 16
      %v528 = vrot.slane %v526, 1
      %v529 = vsel %vm226, %v524, %v528
      %v530 = vshrl.u32 %v500, 16
      %v532 = vor.u32 %v530, %v528
      %v534 = vshll.u32 %v501, 16
      %v536 = vrot.slane %v534, 1
      %v537 = vsel %vm226, %v532, %v536
      %v538 = vshrl.u32 %v501, 16
      %v540 = vor.u32 %v538, %v536
      %v545 = vunpack.c.l.b16 %v473
      %v546 = vunpack.c.l.b16 %v474
      %v547 = vunpack.c.l.b16 %v475
      %v548 = vunpack.c.l.b16 %v476
      %v549 = vpack.c.b16 %v546, %v545
      %v550 = vpack.c.b16 %v548, %v547
      %v554 = vsel %vm278, %v513, 0
      %v557 = vsel %vm278, %v521, 0
      %v560 = vsel %vm278, %v529, 0
      %v563 = vsel %vm278, %v537, 0
      %v566 = vsel %vm278, %v540, 0
      %568 = vmatprep.subr.bf16.mxu0 0
      %569 = vmatpush1.bf16.msra.mxu0 %v549
      %570 = vmatprep.subr.bf16.mxu0 0
      %571 = vmatpush1.bf16.msra.mxu0 %v550
      %572 = vmatprep.subr.bf16.mxu0 0
      %573 = vmatpush1.bf16.msra.mxu0 0
      %574 = vmatprep.subr.bf16.mxu0 0
      %575 = vmatpush1.bf16.msra.mxu0 0
      %576 = vmatprep.subr.bf16.mxu0 0
      %577 = vmatpush1.bf16.msra.mxu0 0
      %578 = vmatprep.subr.bf16.mxu0 0
      %579 = vmatpush1.bf16.msra.mxu0 0
      %580 = vmatprep.subr.bf16.mxu0 0
      %581 = vmatpush1.bf16.msra.mxu0 0
      %582 = vmatprep.subr.bf16.mxu0 0
      %583 = vmatpush1.bf16.msra.mxu0 0
      %584 = vmatprep.subr.bf16.mxu0 0
      %585 = vmatpush1.bf16.msra.mxu0 0
      %586 = vmatprep.subr.bf16.mxu0 0
      %587 = vmatpush1.bf16.msra.mxu0 0
      %588 = vmatprep.subr.bf16.mxu0 0
      %589 = vmatpush1.bf16.msra.mxu0 0
      %590 = vmatprep.subr.bf16.mxu0 0
      %591 = vmatpush1.bf16.msra.mxu0 0
      %592 = vmatprep.subr.bf16.mxu0 0
      %593 = vmatpush1.bf16.msra.mxu0 0
      %594 = vmatprep.subr.bf16.mxu0 0
      %595 = vmatpush1.bf16.msra.mxu0 0
      %596 = vmatprep.subr.bf16.mxu0 0
      %597 = vmatpush1.bf16.msra.mxu0 0
      %598 = vmatprep.subr.bf16.mxu0 0
      %599 = vmatpush1.bf16.msra.mxu0 0
      %600 = vmatprep.mubr.bf16.mxu0 0
      %601 = vmatmul.mubr.bf16.gmra.mrb[0].mxu0 %v554
      %v602 = vpop.f32.mrb[0].mxu0
      %v603 = vadd.f32 0.0, %v602
      %v604 = vpop.f32.mrb[0].mxu0
      %v605 = vpop.f32.mrb[0].mxu0
      %v606 = vadd.f32 0.0, %v605
      %v607 = vpop.f32.mrb[0].mxu0
      %608 = vmatprep.mubr.bf16.mxu0 0
      %609 = vmatmul.mubr.bf16.gmra.mrb[0].mxu0 %v557
      %v610 = vpop.f32.mrb[0].mxu0
      %v611 = vadd.f32 0.0, %v610
      %v612 = vpop.f32.mrb[0].mxu0
      %v613 = vpop.f32.mrb[0].mxu0
      %v614 = vadd.f32 0.0, %v613
      %v615 = vpop.f32.mrb[0].mxu0
      %616 = vmatprep.mubr.bf16.mxu0 0
      %617 = vmatmul.mubr.bf16.gmra.mrb[0].mxu0 %v560
      %v618 = vpop.f32.mrb[0].mxu0
      %v619 = vadd.f32 0.0, %v618
      %v620 = vpop.f32.mrb[0].mxu0
      %v621 = vpop.f32.mrb[0].mxu0
      %v622 = vadd.f32 0.0, %v621
      %v623 = vpop.f32.mrb[0].mxu0
      %624 = vmatprep.mubr.bf16.mxu0 0
      %625 = vmatmul.mubr.bf16.gmra.mrb[0].mxu0 %v563
      %v626 = vpop.f32.mrb[0].mxu0
      %v627 = vadd.f32 0.0, %v626
      %v628 = vpop.f32.mrb[0].mxu0
      %v629 = vpop.f32.mrb[0].mxu0
      %v630 = vadd.f32 0.0, %v629
      %v631 = vpop.f32.mrb[0].mxu0
      %632 = vmatprep.mubr.bf16.mxu0 0
      %633 = vmatmul.mubr.bf16.gmra.mrb[0].mxu0 %v566
      %v634 = vpop.f32.mrb[0].mxu0
      %v635 = vadd.f32 0.0, %v634
      %v636 = vpop.f32.mrb[0].mxu0
      %v637 = vpop.f32.mrb[0].mxu0
      %v638 = vpop.f32.mrb[0].mxu0
      %639 = vdwg.mxu0
      %v640 = vadd.f32 %v425, %v603
      %v641 = vadd.f32 %v428, %v606
      %v642 = vadd.f32 %v433, %v611
      %v643 = vadd.f32 %v436, %v614
      %v644 = vadd.f32 %v441, %v619
      %v645 = vadd.f32 %v444, %v622
      %v646 = vadd.f32 %v449, %v627
      %v647 = vadd.f32 %v452, %v630
      %v648 = vadd.f32 %v457, %v635
      %v649 = vld [vmem:[%s168 + $0x4] sm:$0xe]
      %s650 = scalar_lea.vmem %s172, 48
      %v651 = vld [vmem:[%s650] sm:$0xf]
      %v652 = vld [vmem:[%s650 + $0x4] sm:$0xf]
      %v653 = vld [vmem:[%s650 + $0x8] sm:$0xf]
      %v654 = vld [vmem:[%s650 + $0xc] sm:$0xf]
      %v656 = vunpack.c.l.b16 %v649
      %v657 = vpack.c.b16 %v488, %v656
      %vm658 = vcmask 1046528
      %v659 = vrot.slane %v657, 1
      %v660 = vrot.slane %v498, 1
      %v661 = vsel %vm658, %v659, %v660
      %v662 = vrot.slane %v499, 1
      %v663 = vsel %vm658, %v660, %v662
      %v664 = vrot.slane %v500, 1
      %v665 = vsel %vm658, %v662, %v664
      %v666 = vrot.slane %v501, 1
      %v667 = vsel %vm658, %v664, %v666
      %v672 = vunpack.c.l.b16 %v651
      %v673 = vunpack.c.l.b16 %v652
      %v674 = vunpack.c.l.b16 %v653
      %v675 = vunpack.c.l.b16 %v654
      %v676 = vpack.c.b16 %v673, %v672
      %v677 = vpack.c.b16 %v675, %v674
      %v681 = vsel %vm278, %v661, 0
      %v684 = vsel %vm278, %v663, 0
      %v687 = vsel %vm278, %v665, 0
      %v690 = vsel %vm278, %v667, 0
      %v693 = vsel %vm278, %v666, 0
      %695 = vmatprep.subr.bf16.mxu0 0
      %696 = vmatpush1.bf16.msra.mxu0 %v676
      %697 = vmatprep.subr.bf16.mxu0 0
      %698 = vmatpush1.bf16.msra.mxu0 %v677
      %699 = vmatprep.subr.bf16.mxu0 0
      %700 = vmatpush1.bf16.msra.mxu0 0
      %701 = vmatprep.subr.bf16.mxu0 0
      %702 = vmatpush1.bf16.msra.mxu0 0
      %703 = vmatprep.subr.bf16.mxu0 0
      %704 = vmatpush1.bf16.msra.mxu0 0
      %705 = vmatprep.subr.bf16.mxu0 0
      %706 = vmatpush1.bf16.msra.mxu0 0
      %707 = vmatprep.subr.bf16.mxu0 0
      %708 = vmatpush1.bf16.msra.mxu0 0
      %709 = vmatprep.subr.bf16.mxu0 0
      %710 = vmatpush1.bf16.msra.mxu0 0
      %711 = vmatprep.subr.bf16.mxu0 0
      %712 = vmatpush1.bf16.msra.mxu0 0
      %713 = vmatprep.subr.bf16.mxu0 0
      %714 = vmatpush1.bf16.msra.mxu0 0
      %715 = vmatprep.subr.bf16.mxu0 0
      %716 = vmatpush1.bf16.msra.mxu0 0
      %717 = vmatprep.subr.bf16.mxu0 0
      %718 = vmatpush1.bf16.msra.mxu0 0
      %719 = vmatprep.subr.bf16.mxu0 0
      %720 = vmatpush1.bf16.msra.mxu0 0
      %721 = vmatprep.subr.bf16.mxu0 0
      %722 = vmatpush1.bf16.msra.mxu0 0
      %723 = vmatprep.subr.bf16.mxu0 0
      %724 = vmatpush1.bf16.msra.mxu0 0
      %725 = vmatprep.subr.bf16.mxu0 0
      %726 = vmatpush1.bf16.msra.mxu0 0
      %727 = vmatprep.mubr.bf16.mxu0 0
      %728 = vmatmul.mubr.bf16.gmra.mrb[0].mxu0 %v681
      %v729 = vpop.f32.mrb[0].mxu0
      %v730 = vadd.f32 0.0, %v729
      %v731 = vpop.f32.mrb[0].mxu0
      %v732 = vpop.f32.mrb[0].mxu0
      %v733 = vadd.f32 0.0, %v732
      %v734 = vpop.f32.mrb[0].mxu0
      %735 = vmatprep.mubr.bf16.mxu0 0
      %736 = vmatmul.mubr.bf16.gmra.mrb[0].mxu0 %v684
      %v737 = vpop.f32.mrb[0].mxu0
      %v738 = vadd.f32 0.0, %v737
      %v739 = vpop.f32.mrb[0].mxu0
      %v740 = vpop.f32.mrb[0].mxu0
      %v741 = vadd.f32 0.0, %v740
      %v742 = vpop.f32.mrb[0].mxu0
      %743 = vmatprep.mubr.bf16.mxu0 0
      %744 = vmatmul.mubr.bf16.gmra.mrb[0].mxu0 %v687
      %v745 = vpop.f32.mrb[0].mxu0
      %v746 = vadd.f32 0.0, %v745
      %v747 = vpop.f32.mrb[0].mxu0
      %v748 = vpop.f32.mrb[0].mxu0
      %v749 = vadd.f32 0.0, %v748
      %v750 = vpop.f32.mrb[0].mxu0
      %751 = vmatprep.mubr.bf16.mxu0 0
      %752 = vmatmul.mubr.bf16.gmra.mrb[0].mxu0 %v690
      %v753 = vpop.f32.mrb[0].mxu0
      %v754 = vadd.f32 0.0, %v753
      %v755 = vpop.f32.mrb[0].mxu0
      %v756 = vpop.f32.mrb[0].mxu0
      %v757 = vadd.f32 0.0, %v756
      %v758 = vpop.f32.mrb[0].mxu0
      %759 = vmatprep.mubr.bf16.mxu0 0
      %760 = vmatmul.mubr.bf16.gmra.mrb[0].mxu0 %v693
      %v761 = vpop.f32.mrb[0].mxu0
      %v762 = vadd.f32 0.0, %v761
      %v763 = vpop.f32.mrb[0].mxu0
      %v764 = vpop.f32.mrb[0].mxu0
      %v765 = vpop.f32.mrb[0].mxu0
      %766 = vdwg.mxu0
      %v767 = vadd.f32 %v640, %v730
      %v768 = vadd.f32 %v641, %v733
      %v769 = vadd.f32 %v642, %v738
      %v770 = vadd.f32 %v643, %v741
      %v771 = vadd.f32 %v644, %v746
      %v772 = vadd.f32 %v645, %v749
      %v773 = vadd.f32 %v646, %v754
      %v774 = vadd.f32 %v647, %v757
      %v775 = vadd.f32 %v648, %v762
      %v776 = vlaneseq
      %v777 = vshrl.u32 %v776, 7
      %v778 = vadd.s32 %v777, 8
      %v779 = vadd.s32 %v777, 16
      %v780 = vadd.s32 %v777, 24
      %v781 = vadd.s32 %v777, 32
      %v782 = vadd.s32 %v777, 40
      %v783 = vadd.s32 %v777, 48
      %v784 = vadd.s32 %v777, 56
      %v785 = vadd.s32 %v777, 64
      %vm786 = vcmp.lt.s32.totalorder %v777, 0
      %v787 = vsub.s32 0, %v777
      %v788 = vsel %vm786, %v787, %v777
      %v789 = vmul.u32.u64.compose %v788, 3817748708
      %v790 = vextract.low.u32 %v789
      %v791 = vextract.high.u32 %v789
      %v792 = vshrl.u32 %v791, 3
      %v793 = vmul.u32 %v792, 9
      %v794 = vsub.s32 %v788, %v793
      %v795 = vsub.s32 0, %v794
      %v796 = vsel %vm786, %v795, %v794
      %vm797 = vcmp.lt.s32.totalorder %v778, 0
      %v798 = vsub.s32 0, %v778
      %v799 = vsel %vm797, %v798, %v778
      %v800 = vmul.u32.u64.compose %v799, 3817748708
      %v801 = vextract.low.u32 %v800
      %v802 = vextract.high.u32 %v800
      %v803 = vshrl.u32 %v802, 3
      %v804 = vmul.u32 %v803, 9
      %v805 = vsub.s32 %v799, %v804
      %v806 = vsub.s32 0, %v805
      %v807 = vsel %vm797, %v806, %v805
      %vm808 = vcmp.lt.s32.totalorder %v779, 0
      %v809 = vsub.s32 0, %v779
      %v810 = vsel %vm808, %v809, %v779
      %v811 = vmul.u32.u64.compose %v810, 3817748708
      %v812 = vextract.low.u32 %v811
      %v813 = vextract.high.u32 %v811
      %v814 = vshrl.u32 %v813, 3
      %v815 = vmul.u32 %v814, 9
      %v816 = vsub.s32 %v810, %v815
      %v817 = vsub.s32 0, %v816
      %v818 = vsel %vm808, %v817, %v816
      %vm819 = vcmp.lt.s32.totalorder %v780, 0
      %v820 = vsub.s32 0, %v780
      %v821 = vsel %vm819, %v820, %v780
      %v822 = vmul.u32.u64.compose %v821, 3817748708
      %v823 = vextract.low.u32 %v822
      %v824 = vextract.high.u32 %v822
      %v825 = vshrl.u32 %v824, 3
      %v826 = vmul.u32 %v825, 9
      %v827 = vsub.s32 %v821, %v826
      %v828 = vsub.s32 0, %v827
      %v829 = vsel %vm819, %v828, %v827
      %vm830 = vcmp.lt.s32.totalorder %v781, 0
      %v831 = vsub.s32 0, %v781
      %v832 = vsel %vm830, %v831, %v781
      %v833 = vmul.u32.u64.compose %v832, 3817748708
      %v834 = vextract.low.u32 %v833
      %v835 = vextract.high.u32 %v833
      %v836 = vshrl.u32 %v835, 3
      %v837 = vmul.u32 %v836, 9
      %v838 = vsub.s32 %v832, %v837
      %v839 = vsub.s32 0, %v838
      %v840 = vsel %vm830, %v839, %v838
      %vm841 = vcmp.lt.s32.totalorder %v782, 0
      %v842 = vsub.s32 0, %v782
      %v843 = vsel %vm841, %v842, %v782
      %v844 = vmul.u32.u64.compose %v843, 3817748708
      %v845 = vextract.low.u32 %v844
      %v846 = vextract.high.u32 %v844
      %v847 = vshrl.u32 %v846, 3
      %v848 = vmul.u32 %v847, 9
      %v849 = vsub.s32 %v843, %v848
      %v850 = vsub.s32 0, %v849
      %v851 = vsel %vm841, %v850, %v849
      %vm852 = vcmp.lt.s32.totalorder %v783, 0
      %v853 = vsub.s32 0, %v783
      %v854 = vsel %vm852, %v853, %v783
      %v855 = vmul.u32.u64.compose %v854, 3817748708
      %v856 = vextract.low.u32 %v855
      %v857 = vextract.high.u32 %v855
      %v858 = vshrl.u32 %v857, 3
      %v859 = vmul.u32 %v858, 9
      %v860 = vsub.s32 %v854, %v859
      %v861 = vsub.s32 0, %v860
      %v862 = vsel %vm852, %v861, %v860
      %vm863 = vcmp.lt.s32.totalorder %v784, 0
      %v864 = vsub.s32 0, %v784
      %v865 = vsel %vm863, %v864, %v784
      %v866 = vmul.u32.u64.compose %v865, 3817748708
      %v867 = vextract.low.u32 %v866
      %v868 = vextract.high.u32 %v866
      %v869 = vshrl.u32 %v868, 3
      %v870 = vmul.u32 %v869, 9
      %v871 = vsub.s32 %v865, %v870
      %v872 = vsub.s32 0, %v871
      %v873 = vsel %vm863, %v872, %v871
      %vm874 = vcmp.lt.s32.totalorder %v785, 0
      %v875 = vsub.s32 0, %v785
      %v876 = vsel %vm874, %v875, %v785
      %v877 = vmul.u32.u64.compose %v876, 3817748708
      %v878 = vextract.low.u32 %v877
      %v879 = vextract.high.u32 %v877
      %v880 = vshrl.u32 %v879, 3
      %v881 = vmul.u32 %v880, 9
      %v882 = vsub.s32 %v876, %v881
      %v883 = vsub.s32 0, %v882
      %v884 = vsel %vm874, %v883, %v882
      %vm885 = vcmp.ne.s32.totalorder %v796, 0
      %vm886 = vcmp.ne.s32.totalorder %v807, 0
      %vm887 = vcmp.ne.s32.totalorder %v818, 0
      %vm888 = vcmp.ne.s32.totalorder %v829, 0
      %vm889 = vcmp.ne.s32.totalorder %v840, 0
      %vm890 = vcmp.ne.s32.totalorder %v851, 0
      %vm891 = vcmp.ne.s32.totalorder %v862, 0
      %vm892 = vcmp.ne.s32.totalorder %v873, 0
      %vm893 = vcmp.ne.s32.totalorder %v884, 0
      %vm894 = vcmp.lt.s32.totalorder %v796, 0
      %vm895 = vcmp.lt.s32.totalorder %v807, 0
      %vm896 = vcmp.lt.s32.totalorder %v818, 0
      %vm897 = vcmp.lt.s32.totalorder %v829, 0
      %vm898 = vcmp.lt.s32.totalorder %v840, 0
      %vm899 = vcmp.lt.s32.totalorder %v851, 0
      %vm900 = vcmp.lt.s32.totalorder %v862, 0
      %vm901 = vcmp.lt.s32.totalorder %v873, 0
      %vm902 = vcmp.lt.s32.totalorder %v884, 0
      %vm903 = vmand %vm894, %vm885
      %vm904 = vmand %vm895, %vm886
      %vm905 = vmand %vm896, %vm887
      %vm906 = vmand %vm897, %vm888
      %vm907 = vmand %vm898, %vm889
      %vm908 = vmand %vm899, %vm890
      %vm909 = vmand %vm900, %vm891
      %vm910 = vmand %vm901, %vm892
      %vm911 = vmand %vm902, %vm893
      %v912 = vadd.s32 %v796, 9
      %v913 = vadd.s32 %v807, 9
      %v914 = vadd.s32 %v818, 9
      %v915 = vadd.s32 %v829, 9
      %v916 = vadd.s32 %v840, 9
      %v917 = vadd.s32 %v851, 9
      %v918 = vadd.s32 %v862, 9
      %v919 = vadd.s32 %v873, 9
      %v920 = vadd.s32 %v884, 9
      %v921 = vsel %vm903, %v912, %v796
      %v922 = vsel %vm904, %v913, %v807
      %v923 = vsel %vm905, %v914, %v818
      %v924 = vsel %vm906, %v915, %v829
      %v925 = vsel %vm907, %v916, %v840
      %v926 = vsel %vm908, %v917, %v851
      %v927 = vsel %vm909, %v918, %v862
      %v928 = vsel %vm910, %v919, %v873
      %v929 = vsel %vm911, %v920, %v884
      %vm930 = vcmp.lt.s32.totalorder %v921, 8
      %vm931 = vcmp.lt.s32.totalorder %v922, 8
      %vm932 = vcmp.lt.s32.totalorder %v923, 8
      %vm933 = vcmp.lt.s32.totalorder %v924, 8
      %vm934 = vcmp.lt.s32.totalorder %v925, 8
      %vm935 = vcmp.lt.s32.totalorder %v926, 8
      %vm936 = vcmp.lt.s32.totalorder %v927, 8
      %vm937 = vcmp.lt.s32.totalorder %v928, 8
      %vm938 = vcmp.lt.s32.totalorder %v929, 8
      %v939 = vsel %vm930, 1, 0
      %v940 = vsel %vm931, 1, 0
      %v941 = vsel %vm932, 1, 0
      %v942 = vsel %vm933, 1, 0
      %v943 = vsel %vm934, 1, 0
      %v944 = vsel %vm935, 1, 0
      %v945 = vsel %vm936, 1, 0
      %v946 = vsel %vm937, 1, 0
      %v947 = vsel %vm938, 1, 0
      %vm948 = vcmp.eq.s32.totalorder %v939, 1
      %vm949 = vcmp.eq.s32.totalorder %v940, 1
      %vm950 = vcmp.eq.s32.totalorder %v941, 1
      %vm951 = vcmp.eq.s32.totalorder %v942, 1
      %vm952 = vcmp.eq.s32.totalorder %v943, 1
      %vm953 = vcmp.eq.s32.totalorder %v944, 1
      %vm954 = vcmp.eq.s32.totalorder %v945, 1
      %vm955 = vcmp.eq.s32.totalorder %v946, 1
      %vm956 = vcmp.eq.s32.totalorder %v947, 1
      %v957 = vsel %vm948, %v767, 0.0
      %v958 = vsel %vm949, %v768, 0.0
      %v959 = vsel %vm950, %v769, 0.0
      %v960 = vsel %vm951, %v770, 0.0
      %v961 = vsel %vm952, %v771, 0.0
      %v962 = vsel %vm953, %v772, 0.0
      %v963 = vsel %vm954, %v773, 0.0
      %v964 = vsel %vm955, %v774, 0.0
      %v965 = vsel %vm956, %v775, 0.0
      %vm966 = vcmask 130048
      %v967 = vsel %vm966, %v957, 0.0
      %v968 = vsel %vm966, %v958, 0.0
      %v969 = vadd.f32 %v967, %v968
      %v970 = vsel %vm966, %v959, 0.0
      %v971 = vadd.f32 %v969, %v970
      %v972 = vsel %vm966, %v960, 0.0
      %v973 = vadd.f32 %v971, %v972
      %v974 = vsel %vm966, %v961, 0.0
      %v975 = vadd.f32 %v973, %v974
      %v976 = vsel %vm966, %v962, 0.0
      %v977 = vadd.f32 %v975, %v976
      %v978 = vsel %vm966, %v963, 0.0
      %v979 = vadd.f32 %v977, %v978
      %v980 = vsel %vm966, %v964, 0.0
      %v981 = vadd.f32 %v979, %v980
      %v982 = vsel %vm966, %v965, 0.0
      %v983 = vadd.f32 %v981, %v982
      %v984 = vrot.slane %v983, 4
      %v985 = vadd.f32 %v983, %v984
      %v986 = vrot.slane %v985, 2
      %v987 = vadd.f32 %v985, %v986
      %v988 = vrot.slane %v987, 1
      %v989 = vadd.f32 %v987, %v988
      %v990 = vmul.f32 %v989, 0.015625
      %v991 = vsub.f32 %v767, %v990
      %v992 = vsub.f32 %v768, %v990
      %v993 = vsub.f32 %v769, %v990
      %v994 = vsub.f32 %v770, %v990
      %v995 = vsub.f32 %v771, %v990
      %v996 = vsub.f32 %v772, %v990
      %v997 = vsub.f32 %v773, %v990
      %v998 = vsub.f32 %v774, %v990
      %v999 = vsub.f32 %v775, %v990
      %v1000 = vsel %vm948, %v991, 0.0
      %v1001 = vsel %vm949, %v992, 0.0
      %v1002 = vsel %vm950, %v993, 0.0
      %v1003 = vsel %vm951, %v994, 0.0
      %v1004 = vsel %vm952, %v995, 0.0
      %v1005 = vsel %vm953, %v996, 0.0
      %v1006 = vsel %vm954, %v997, 0.0
      %v1007 = vsel %vm955, %v998, 0.0
      %v1008 = vsel %vm956, %v999, 0.0
      %v1009 = vmul.f32 %v1000, %v1000
      %v1010 = vmul.f32 %v1001, %v1001
      %v1011 = vmul.f32 %v1002, %v1002
      %v1012 = vmul.f32 %v1003, %v1003
      %v1013 = vmul.f32 %v1004, %v1004
      %v1014 = vmul.f32 %v1005, %v1005
      %v1015 = vmul.f32 %v1006, %v1006
      %v1016 = vmul.f32 %v1007, %v1007
      %v1017 = vmul.f32 %v1008, %v1008
      %v1018 = vsel %vm966, %v1009, 0.0
      %v1019 = vsel %vm966, %v1010, 0.0
      %v1020 = vadd.f32 %v1018, %v1019
      %v1021 = vsel %vm966, %v1011, 0.0
      %v1022 = vadd.f32 %v1020, %v1021
      %v1023 = vsel %vm966, %v1012, 0.0
      %v1024 = vadd.f32 %v1022, %v1023
      %v1025 = vsel %vm966, %v1013, 0.0
      %v1026 = vadd.f32 %v1024, %v1025
      %v1027 = vsel %vm966, %v1014, 0.0
      %v1028 = vadd.f32 %v1026, %v1027
      %v1029 = vsel %vm966, %v1015, 0.0
      %v1030 = vadd.f32 %v1028, %v1029
      %v1031 = vsel %vm966, %v1016, 0.0
      %v1032 = vadd.f32 %v1030, %v1031
      %v1033 = vsel %vm966, %v1017, 0.0
      %v1034 = vadd.f32 %v1032, %v1033
      %v1035 = vrot.slane %v1034, 4
      %v1036 = vadd.f32 %v1034, %v1035
      %v1037 = vrot.slane %v1036, 2
      %v1038 = vadd.f32 %v1036, %v1037
      %v1039 = vrot.slane %v1038, 1
      %v1040 = vadd.f32 %v1038, %v1039
      %v1041 = vmul.f32 %v1040, 0.015625
      %v1042 = vadd.f32 %v1041, 1e-05
      %v1043 = vrsqrt.pop %v1042
      %v1044 = vmul.f32 %v991, %v1043
      %v1045 = vmul.f32 %v992, %v1043
      %v1046 = vmul.f32 %v993, %v1043
      %v1047 = vmul.f32 %v994, %v1043
      %v1048 = vmul.f32 %v995, %v1043
      %v1049 = vmul.f32 %v996, %v1043
      %v1050 = vmul.f32 %v997, %v1043
      %v1051 = vmul.f32 %v998, %v1043
      %v1052 = vmul.f32 %v999, %v1043
      %vm1053 = vcmp.ge.f32.partialorder %v1044, 0.0
      %vm1054 = vcmp.ge.f32.partialorder %v1045, 0.0
      %vm1055 = vcmp.ge.f32.partialorder %v1046, 0.0
      %vm1056 = vcmp.ge.f32.partialorder %v1047, 0.0
      %vm1057 = vcmp.ge.f32.partialorder %v1048, 0.0
      %vm1058 = vcmp.ge.f32.partialorder %v1049, 0.0
      %vm1059 = vcmp.ge.f32.partialorder %v1050, 0.0
      %vm1060 = vcmp.ge.f32.partialorder %v1051, 0.0
      %vm1061 = vcmp.ge.f32.partialorder %v1052, 0.0
      %v1062 = vmul.f32 %v1044, 0.2
      %v1063 = vmul.f32 %v1045, 0.2
      %v1064 = vmul.f32 %v1046, 0.2
      %v1065 = vmul.f32 %v1047, 0.2
      %v1066 = vmul.f32 %v1048, 0.2
      %v1067 = vmul.f32 %v1049, 0.2
      %v1068 = vmul.f32 %v1050, 0.2
      %v1069 = vmul.f32 %v1051, 0.2
      %v1070 = vmul.f32 %v1052, 0.2
      %v1071 = vsel %vm1053, %v1044, %v1062
      %v1072 = vsel %vm1054, %v1045, %v1063
      %v1073 = vsel %vm1055, %v1046, %v1064
      %v1074 = vsel %vm1056, %v1047, %v1065
      %v1075 = vsel %vm1057, %v1048, %v1066
      %v1076 = vsel %vm1058, %v1049, %v1067
      %v1077 = vsel %vm1059, %v1050, %v1068
      %v1078 = vsel %vm1060, %v1051, %v1069
      %v1079 = vsel %vm1061, %v1052, %v1070
      %v1080 = vpack.c.bf16 %v1072, %v1071
      %v1081 = vpack.c.bf16 %v1074, %v1073
      %v1082 = vpack.c.bf16 %v1076, %v1075
      %v1083 = vpack.c.bf16 %v1078, %v1077
      %v1084 = vpack.c.bf16 %v1079, %v1079
      %v1090 = vunpack.c.l.b16 %v1080
      %v1091 = vunpack.c.h.b16 %v1080
      %v1092 = vunpack.c.l.b16 %v1081
      %v1093 = vunpack.c.h.b16 %v1081
      %v1094 = vunpack.c.l.b16 %v1082
      %v1095 = vunpack.c.h.b16 %v1082
      %v1096 = vunpack.c.l.b16 %v1083
      %v1097 = vunpack.c.h.b16 %v1083
      %v1098 = vunpack.c.l.b16 %v1084
      %v1099 = vpack.c.b16 %v1090, %v1090
      %v1100 = vpack.c.b16 %v1091, %v1091
      %v1101 = vpack.c.b16 %v1092, %v1092
      %v1102 = vpack.c.b16 %v1093, %v1093
      %v1103 = vpack.c.b16 %v1094, %v1094
      %v1104 = vpack.c.b16 %v1095, %v1095
      %v1105 = vpack.c.b16 %v1096, %v1096
      %v1106 = vpack.c.b16 %v1097, %v1097
      %v1107 = vpack.c.b16 %v1098, %v1098
      %vm1117 = vcmask 125952
      %1118 = vst.msk [vmem:[%s180] sm:$0xf] %vm1117, %v1099
      %1119 = vst.msk [vmem:[%s180 + $0x4] sm:$0xf] %vm1117, %v1100
      %1120 = vst.msk [vmem:[%s180 + $0x8] sm:$0xf] %vm1117, %v1101
      %1121 = vst.msk [vmem:[%s180 + $0xc] sm:$0xf] %vm1117, %v1102
      %1122 = vst.msk [vmem:[%s180 + $0x10] sm:$0xf] %vm1117, %v1103
      %1123 = vst.msk [vmem:[%s180 + $0x14] sm:$0xf] %vm1117, %v1104
      %1124 = vst.msk [vmem:[%s180 + $0x18] sm:$0xf] %vm1117, %v1105
      %1125 = vst.msk [vmem:[%s180 + $0x1c] sm:$0xf] %vm1117, %v1106
      %1126 = vst.msk [vmem:[%s180 + $0x20] sm:$0xf] %vm1117, %v1107
      %p1127 = scmp.lt.s32.totalorder %s17, 1
      %s1128 = scalar_select %p1127, %s17, 1
      %p1129 = scmp.lt.s32.totalorder %s18, 0
      %s1130 = scalar_select %p1129, %s18, 0
      %s1131 = smul.addr %s1128, 9
      %s1132 = sadd.s32 %s1130, %s1131
      %s1133 = smul.addr %s1132, 4
      %s1134 = scalar_lea.vmem %s2, %s1133
      // Predicated region
      $region29: #{_lambda_.6} parent=27 // pred_check
        %p1135 = pneg %p97
      $region30: #{_lambda_.6} parent=27 // pred_check_branch
        %1137 = sbr.rel (%p1135) target = $region32
      $region31: #{_lambda_.6} parent=27 // pred_region
        _
      $region32: #{_lambda_.6} parent=27 // pred_fallthru
        _
    $region28: #{_lambda_.6} parent=5 // pred_fallthru
      _
    %p1138 = scmp.le.s32.totalorder 2, %s8
    // Predicated region
    $region33: #{_lambda_.6} parent=5 // pred_check
      %p1139 = pneg %p1138
    $region34: #{_lambda_.6} parent=5 // pred_check_branch
      %1141 = sbr.rel (%p1139) target = $region36
    $region35: #{_lambda_.6} parent=5 // pred_region
      %s1142 = ssub.s32 %s8, 2
      // Predicated region
      $region37: #{_lambda_.6} parent=35 // pred_check
        %p1143 = pneg %p103
      $region38: #{_lambda_.6} parent=35 // pred_check_branch
        %1145 = sbr.rel (%p1143) target = $region40
      $region39: #{_lambda_.6} parent=35 // pred_region
        %p1146 = scmp.lt.s32.totalorder %s19, 1
        %s1147 = scalar_select %p1146, %s19, 1
        %p1148 = scmp.lt.s32.totalorder %s20, 0
        %s1149 = scalar_select %p1148, %s20, 0
        %s1150 = smul.addr %s1147, 9
        %s1151 = sadd.s32 %s1149, %s1150
        %s1152 = smul.addr %s1151, 4
        %s1153 = scalar_lea.vmem %s2, %s1152
      $region40: #{_lambda_.6} parent=35 // pred_fallthru
        _
    $region36: #{_lambda_.6} parent=5 // pred_fallthru
      _
  $region6: #{_lambda_.6} parent=0 // loop_footer
    %s12 = sadd.s32 1, %s8
  $region7: #{_lambda_.6} parent=0 // loop_footer_branch
    %7 = sbr.rel target = $region3
  $region8: #{_lambda_.6} parent=0 // loop_exit
    _

// kernel: _lambda_.7
$region0: #{_lambda_.7}
  #allocation0 [shape = 'u32[]', space=smem, size = 0x4, offset = 0x4, fixed_abs, tag = 'smem constant byte address 0x4 - core index']
  #allocation1 [shape = 'u32[144,128]{1,0:T(1,128)}', space=vmem, size = 0x12000, scoped, tag = 'internal scratch']
  %s0 = inlined_call_operand.vmem [shape: bf16[2,30,64], index: 0, kind: input, shape index: {}]
  %s1 = inlined_call_operand.vmem [shape: bf16[4,64,32], index: 1, kind: input, shape index: {}]
  %s2 = inlined_call_operand.vmem [shape: bf16[2,20,32], index: 2, kind: output, shape index: {}]
  %s3 = sld [smem:[#allocation0]]
  $region41: #{_lambda_.7} parent=0
    _
  %s5 = ssub.s32 1, %s3
  %s6 = scalar_select 0, %s5, %s3
  loop: start=0, step=1, limit=4
  $region2: #{_lambda_.7} parent=0 // loop_pre_header
    _
  $region3: #{_lambda_.7} parent=0 // loop_header
    %s8 = sphi 0, %s12
    %p9 = scmp.ge.s32.totalorder %s8, 4
    %s15 = sphi 0, %s27
    %s16 = sphi 0, %s23
    %s17 = sphi 0, %s15
    %s18 = sphi 0, %s16
    %s19 = sphi 0, %s17
    %s20 = sphi 0, %s18
    %s30 = sphi 0, %s32
    %s33 = sphi 0, %s30
    %s34 = sphi 0, %s33
    %s50 = sphi 0, %s34
    %s56 = sphi 0, %s58
    %s59 = sphi 0, %s56
    %s60 = sphi 0, %s59
    %s76 = sphi 0, %s60
    %s84 = sphi 0, %s86
    %s87 = sphi 0, %s84
    %s88 = sphi 0, %s87
    %s104 = sphi 0, %s88
  $region4: #{_lambda_.7} parent=0 // loop_header_branch
    %11 = sbr.rel (%p9) target = $region8
  $region5: #{_lambda_.7} parent=0 // loop_body
    %s13 = ssub.s32 %s8, 1
    %s14 = ssub.s32 %s8, 2
    %s21 = sadd.s32 1, %s16
    %p22 = scmp.ge.s32.totalorder %s21, 1
    %s23 = scalar_select %p22, 0, %s21
    %s24 = sadd.s32 1, %s15
    %s25 = scalar_select %p22, %s24, %s15
    %p26 = scmp.ge.s32.totalorder %s25, 2
    %s27 = scalar_select %p26, 0, %s25
    %s28 = ssub.s32 %s15, %s27
    %p29 = scmp.eq.s32.totalorder %s28, 0
    %s31 = sadd.s32 %s30, 1
    %s32 = scalar_select %p29, %s30, %s31
    %p35 = pneg %p29
    %p36 = scmp.eq.s32.totalorder %s8, 1
    %p37 = por %p35, %p36
    %p38 = scmp.ne.s32.totalorder %s30, %s33
    %p39 = scmp.eq.s32.totalorder %s8, 0
    %p40 = por %p38, %p39
    %p41 = scmp.ne.s32.totalorder %s30, %s33
    %p42 = scmp.eq.s32.totalorder %s13, 1
    %p43 = por %p41, %p42
    %p44 = scmp.ne.s32.totalorder %s33, %s34
    %p45 = scmp.eq.s32.totalorder %s13, 0
    %p46 = por %p44, %p45
    %p47 = scmp.ne.s32.totalorder %s33, %s34
    %p48 = scmp.eq.s32.totalorder %s14, 1
    %p49 = por %p47, %p48
    %p51 = scmp.ne.s32.totalorder %s34, %s50
    %p52 = scmp.eq.s32.totalorder %s14, 0
    %p53 = por %p51, %p52
    %s54 = ssub.s32 %s16, %s23
    %p55 = scmp.eq.s32.totalorder %s54, 0
    %s57 = sadd.s32 %s56, 1
    %s58 = scalar_select %p55, %s56, %s57
    %p61 = pneg %p55
    %p62 = scmp.eq.s32.totalorder %s8, 1
    %p63 = por %p61, %p62
    %p64 = scmp.ne.s32.totalorder %s56, %s59
    %p65 = scmp.eq.s32.totalorder %s8, 0
    %p66 = por %p64, %p65
    %p67 = scmp.ne.s32.totalorder %s56, %s59
    %p68 = scmp.eq.s32.totalorder %s13, 1
    %p69 = por %p67, %p68
    %p70 = scmp.ne.s32.totalorder %s59, %s60
    %p71 = scmp.eq.s32.totalorder %s13, 0
    %p72 = por %p70, %p71
    %p73 = scmp.ne.s32.totalorder %s59, %s60
    %p74 = scmp.eq.s32.totalorder %s14, 1
    %p75 = por %p73, %p74
    %p77 = scmp.ne.s32.totalorder %s60, %s76
    %p78 = scmp.eq.s32.totalorder %s14, 0
    %p79 = por %p77, %p78
    %s80 = ssub.s32 %s15, %s27
    %s81 = ssub.s32 %s16, %s23
    %s82 = sor.u32 %s80, %s81
    %p83 = scmp.eq.s32.totalorder %s82, 0
    %s85 = sadd.s32 %s84, 1
    %s86 = scalar_select %p83, %s84, %s85
    %p89 = pneg %p83
    %p90 = scmp.eq.s32.totalorder %s8, 1
    %p91 = por %p89, %p90
    %p92 = scmp.ne.s32.totalorder %s84, %s87
    %p93 = scmp.eq.s32.totalorder %s8, 0
    %p94 = por %p92, %p93
    %p95 = scmp.ne.s32.totalorder %s84, %s87
    %p96 = scmp.eq.s32.totalorder %s13, 1
    %p97 = por %p95, %p96
    %p98 = scmp.ne.s32.totalorder %s87, %s88
    %p99 = scmp.eq.s32.totalorder %s13, 0
    %p100 = por %p98, %p99
    %p101 = scmp.ne.s32.totalorder %s87, %s88
    %p102 = scmp.eq.s32.totalorder %s14, 1
    %p103 = por %p101, %p102
    %p105 = scmp.ne.s32.totalorder %s88, %s104
    %p106 = scmp.eq.s32.totalorder %s14, 0
    %p107 = por %p105, %p106
    %p108 = scmp.le.s32.totalorder 1, %s8
    %p109 = scmp.lt.s32.totalorder %s8, 3
    %p110 = pnand %p108, %p109
    %p111 = pneg %p110
    // Predicated region
    $region9: #{_lambda_.7} parent=5 // pred_check
      _
    $region10: #{_lambda_.7} parent=5 // pred_check_branch
      %113 = sbr.rel (%p110) target = $region12
    $region11: #{_lambda_.7} parent=5 // pred_region
      %s114 = ssub.s32 %s8, 1
      // Predicated region
      $region13: #{_lambda_.7} parent=11 // pred_check
        %p115 = pneg %p72
      $region14: #{_lambda_.7} parent=11 // pred_check_branch
        %117 = sbr.rel (%p115) target = $region16
      $region15: #{_lambda_.7} parent=11 // pred_region
        %p118 = scmp.lt.s32.totalorder %s18, 0
        %s119 = scalar_select %p118, %s18, 0
        %s120 = smul.addr %s119, 4
        %s121 = scalar_lea.vmem %s1, %s120
      $region16: #{_lambda_.7} parent=11 // pred_fallthru
        _
    $region12: #{_lambda_.7} parent=5 // pred_fallthru
      _
    %p122 = scmp.lt.s32.totalorder %s8, 2
    // Predicated region
    $region17: #{_lambda_.7} parent=5 // pred_check
      %p123 = pneg %p122
    $region18: #{_lambda_.7} parent=5 // pred_check_branch
      %125 = sbr.rel (%p123) target = $region20
    $region19: #{_lambda_.7} parent=5 // pred_region
      // Predicated region
      $region21: #{_lambda_.7} parent=19 // pred_check
        %p126 = pneg %p40
      $region22: #{_lambda_.7} parent=19 // pred_check_branch
        %128 = sbr.rel (%p126) target = $region24
      $region23: #{_lambda_.7} parent=19 // pred_region
        %p129 = scmp.lt.s32.totalorder %s15, 1
        %s130 = scalar_select %p129, %s15, 1
        %s131 = smul.addr %s130, 4
        %s132 = smul.addr %s131, 4
        %s133 = scalar_lea.vmem %s0, %s132
      $region24: #{_lambda_.7} parent=19 // pred_fallthru
        _
    $region20: #{_lambda_.7} parent=5 // pred_fallthru
      _
    %p134 = scmp.le.s32.totalorder 1, %s8
    %p135 = scmp.lt.s32.totalorder %s8, 3
    %p136 = pnand %p134, %p135
    %p137 = pneg %p136
    // Predicated region
    $region25: #{_lambda_.7} parent=5 // pred_check
      _
    $region26: #{_lambda_.7} parent=5 // pred_check_branch
      %139 = sbr.rel (%p136) target = $region28
    $region27: #{_lambda_.7} parent=5 // pred_region
      %s140 = ssub.s32 %s8, 1
      %p141 = scmp.lt.s32.totalorder %s17, 1
      %s142 = scalar_select %p141, %s17, 1
      %s143 = smul.addr %s142, 4
      %s144 = smul.addr %s143, 4
      %s145 = scalar_lea.vmem %s0, %s144
      %p146 = pneg %p46
      %p147 = pneg %p43
      %p148 = scmp.lt.s32.totalorder %s18, 0
      %s149 = scalar_select %p148, %s18, 0
      %s150 = smul.addr %s149, 4
      %s151 = scalar_lea.vmem %s1, %s150
      %p152 = pneg %p72
      %p153 = pneg %p69
      %p154 = pneg %p100
      %p155 = pneg %p97
      %p156 = scmp.lt.s32.totalorder %s17, 1
      %s157 = scalar_select %p156, %s17, 1
      %p158 = scmp.lt.s32.totalorder %s18, 0
      %s159 = scalar_select %p158, %s18, 0
      %s160 = smul.addr %s157, 3
      %s161 = sadd.s32 %s159, %s160
      %s162 = smul.addr %s161, 4
      %s163 = scalar_lea.vmem %s2, %s162
      %p164 = scmp.lt.s32.totalorder %s17, 1
      %s165 = scalar_select %p164, %s17, 1
      %s166 = smul.addr %s165, 4
      %s167 = smul.addr %s166, 4
      %s168 = scalar_lea.vmem %s0, %s167
      %p169 = scmp.lt.s32.totalorder %s18, 0
      %s170 = scalar_select %p169, %s18, 0
      %s171 = smul.addr %s170, 4
      %s172 = scalar_lea.vmem %s1, %s171
      %p173 = scmp.lt.s32.totalorder %s17, 1
      %s174 = scalar_select %p173, %s17, 1
      %p175 = scmp.lt.s32.totalorder %s18, 0
      %s176 = scalar_select %p175, %s18, 0
      %s177 = smul.addr %s174, 3
      %s178 = sadd.s32 %s176, %s177
      %s179 = smul.addr %s178, 4
      %s180 = scalar_lea.vmem %s2, %s179
      %v182 = vld [vmem:[%s168] sm:$0xf]
      %v183 = vld [vmem:[%s168 + $0x4] sm:$0xf]
      %v184 = vld [vmem:[%s168 + $0x8] sm:$0x3]
      %v185 = vld [vmem:[%s172] sm:$0xf]
      %v186 = vld [vmem:[%s172 + $0x4] sm:$0xf]
      %v187 = vld [vmem:[%s172 + $0x8] sm:$0xf]
      %v188 = vld [vmem:[%s172 + $0xc] sm:$0xf]
      %v189 = vld [vmem:[%s172 + $0x10] sm:$0xf]
      %v190 = vld [vmem:[%s172 + $0x14] sm:$0xf]
      %v191 = vld [vmem:[%s172 + $0x18] sm:$0xf]
      %v192 = vld [vmem:[%s172 + $0x1c] sm:$0xf]
      %v193 = vld [vmem:[%s168 + $0x8] sm:$0x7]
      %s194 = scalar_lea.vmem %s172, 32
      %v195 = vld [vmem:[%s194] sm:$0xf]
      %v196 = vld [vmem:[%s194 + $0x4] sm:$0xf]
      %v197 = vld [vmem:[%s194 + $0x8] sm:$0xf]
      %v198 = vld [vmem:[%s194 + $0xc] sm:$0xf]
      %v199 = vld [vmem:[%s194 + $0x10] sm:$0xf]
      %v200 = vld [vmem:[%s194 + $0x14] sm:$0xf]
      %v201 = vld [vmem:[%s194 + $0x18] sm:$0xf]
      %v202 = vld [vmem:[%s194 + $0x1c] sm:$0xf]
      %v206 = vunpack.c.l.b16 %v182
      %v207 = vunpack.c.l.b16 %v183
      %v208 = vunpack.c.l.b16 %v193
      %v209 = vpack.c.b16 %v207, %v206
      %v210 = vpack.c.b16 %v208, %v208
      %vm211 = vsmask.f32 7424
      %v213 = vshrl.u32 %v209, 16
      %v215 = vshll.u32 %v209, 16
      %v217 = vrot.slane %v215, 1
      %v218 = vor.u32 %v213, %v217
      %v220 = vshll.u32 %v210, 16
      %v222 = vrot.slane %v220, 1
      %v223 = vsel %vm211, %v218, %v222
      %v224 = vshrl.u32 %v210, 16
      %v226 = vor.u32 %v224, %v222
      %v235 = vunpack.c.l.b16 %v195
      %v236 = vunpack.c.l.b16 %v196
      %v237 = vunpack.c.l.b16 %v197
      %v238 = vunpack.c.l.b16 %v198
      %v239 = vunpack.c.l.b16 %v199
      %v240 = vunpack.c.l.b16 %v200
      %v241 = vunpack.c.l.b16 %v201
      %v242 = vunpack.c.l.b16 %v202
      %v243 = vpack.c.b16 %v236, %v235
      %v244 = vpack.c.b16 %v238, %v237
      %v245 = vpack.c.b16 %v240, %v239
      %v246 = vpack.c.b16 %v242, %v241
      %vm251 = vcmask 523264
      %v253 = vsel %vm251, %v223, 0
      %v256 = vsel %vm251, %v226, 0
      %258 = vmatprep.subr.bf16.mxu0 0
      %259 = vmatpush1.bf16.msra.mxu0 %v243
      %260 = vmatprep.subr.bf16.mxu0 0
      %261 = vmatpush1.bf16.msra.mxu0 %v244
      %262 = vmatprep.subr.bf16.mxu0 0
      %263 = vmatpush1.bf16.msra.mxu0 %v245
      %264 = vmatprep.subr.bf16.mxu0 0
      %265 = vmatpush1.bf16.msra.mxu0 %v246
      %266 = vmatprep.subr.bf16.mxu0 0
      %267 = vmatpush1.bf16.msra.mxu0 0
      %268 = vmatprep.subr.bf16.mxu0 0
      %269 = vmatpush1.bf16.msra.mxu0 0
      %270 = vmatprep.subr.bf16.mxu0 0
      %271 = vmatpush1.bf16.msra.mxu0 0
      %272 = vmatprep.subr.bf16.mxu0 0
      %273 = vmatpush1.bf16.msra.mxu0 0
      %274 = vmatprep.subr.bf16.mxu0 0
      %275 = vmatpush1.bf16.msra.mxu0 0
      %276 = vmatprep.subr.bf16.mxu0 0
      %277 = vmatpush1.bf16.msra.mxu0 0
      %278 = vmatprep.subr.bf16.mxu0 0
      %279 = vmatpush1.bf16.msra.mxu0 0
      %280 = vmatprep.subr.bf16.mxu0 0
      %281 = vmatpush1.bf16.msra.mxu0 0
      %282 = vmatprep.subr.bf16.mxu0 0
      %283 = vmatpush1.bf16.msra.mxu0 0
      %284 = vmatprep.subr.bf16.mxu0 0
      %285 = vmatpush1.bf16.msra.mxu0 0
      %286 = vmatprep.subr.bf16.mxu0 0
      %287 = vmatpush1.bf16.msra.mxu0 0
      %288 = vmatprep.subr.bf16.mxu0 0
      %289 = vmatpush1.bf16.msra.mxu0 0
      %290 = vmatprep.mubr.bf16.mxu0 0
      %291 = vmatmul.mubr.bf16.gmra.mrb[0].mxu0 %v253
      %v292 = vpop.f32.mrb[0].mxu0
      %v293 = vadd.f32 0.0, %v292
      %v294 = vpop.f32.mrb[0].mxu0
      %v295 = vpop.f32.mrb[0].mxu0
      %v296 = vadd.f32 0.0, %v295
      %v297 = vpop.f32.mrb[0].mxu0
      %298 = vmatprep.mubr.bf16.mxu0 0
      %299 = vmatmul.mubr.bf16.gmra.mrb[0].mxu0 %v256
      %v300 = vpop.f32.mrb[0].mxu0
      %v301 = vadd.f32 0.0, %v300
      %v302 = vpop.f32.mrb[0].mxu0
      %v303 = vpop.f32.mrb[0].mxu0
      %v304 = vpop.f32.mrb[0].mxu0
      %305 = vdwg.mxu0
      %v307 = vunpack.c.l.b16 %v184
      %v308 = vpack.c.b16 %v307, %v307
      %v317 = vunpack.c.l.b16 %v185
      %v318 = vunpack.c.l.b16 %v186
      %v319 = vunpack.c.l.b16 %v187
      %v320 = vunpack.c.l.b16 %v188
      %v321 = vunpack.c.l.b16 %v189
      %v322 = vunpack.c.l.b16 %v190
      %v323 = vunpack.c.l.b16 %v191
      %v324 = vunpack.c.l.b16 %v192
      %v325 = vpack.c.b16 %v318, %v317
      %v326 = vpack.c.b16 %v320, %v319
      %v327 = vpack.c.b16 %v322, %v321
      %v328 = vpack.c.b16 %v324, %v323
      %v333 = vsel %vm251, %v209, 0
      %v336 = vsel %vm251, %v308, 0
      %338 = vmatprep.subr.bf16.mxu0 0
      %339 = vmatpush1.bf16.msra.mxu0 %v325
      %340 = vmatprep.subr.bf16.mxu0 0
      %341 = vmatpush1.bf16.msra.mxu0 %v326
      %342 = vmatprep.subr.bf16.mxu0 0
      %343 = vmatpush1.bf16.msra.mxu0 %v327
      %344 = vmatprep.subr.bf16.mxu0 0
      %345 = vmatpush1.bf16.msra.mxu0 %v328
      %346 = vmatprep.subr.bf16.mxu0 0
      %347 = vmatpush1.bf16.msra.mxu0 0
      %348 = vmatprep.subr.bf16.mxu0 0
      %349 = vmatpush1.bf16.msra.mxu0 0
      %350 = vmatprep.subr.bf16.mxu0 0
      %351 = vmatpush1.bf16.msra.mxu0 0
      %352 = vmatprep.subr.bf16.mxu0 0
      %353 = vmatpush1.bf16.msra.mxu0 0
      %354 = vmatprep.subr.bf16.mxu0 0
      %355 = vmatpush1.bf16.msra.mxu0 0
      %356 = vmatprep.subr.bf16.mxu0 0
      %357 = vmatpush1.bf16.msra.mxu0 0
      %358 = vmatprep.subr.bf16.mxu0 0
      %359 = vmatpush1.bf16.msra.mxu0 0
      %360 = vmatprep.subr.bf16.mxu0 0
      %361 = vmatpush1.bf16.msra.mxu0 0
      %362 = vmatprep.subr.bf16.mxu0 0
      %363 = vmatpush1.bf16.msra.mxu0 0
      %364 = vmatprep.subr.bf16.mxu0 0
      %365 = vmatpush1.bf16.msra.mxu0 0
      %366 = vmatprep.subr.bf16.mxu0 0
      %367 = vmatpush1.bf16.msra.mxu0 0
      %368 = vmatprep.subr.bf16.mxu0 0
      %369 = vmatpush1.bf16.msra.mxu0 0
      %370 = vmatprep.mubr.bf16.mxu0 0
      %371 = vmatmul.mubr.bf16.gmra.mrb[0].mxu0 %v333
      %v372 = vpop.f32.mrb[0].mxu0
      %v373 = vadd.f32 %v293, %v372
      %v374 = vpop.f32.mrb[0].mxu0
      %v375 = vpop.f32.mrb[0].mxu0
      %v376 = vadd.f32 %v296, %v375
      %v377 = vpop.f32.mrb[0].mxu0
      %378 = vmatprep.mubr.bf16.mxu0 0
      %379 = vmatmul.mubr.bf16.gmra.mrb[0].mxu0 %v336
      %v380 = vpop.f32.mrb[0].mxu0
      %v381 = vadd.f32 %v301, %v380
      %v382 = vpop.f32.mrb[0].mxu0
      %v383 = vpop.f32.mrb[0].mxu0
      %v384 = vpop.f32.mrb[0].mxu0
      %385 = vdwg.mxu0
      %v386 = vld [vmem:[%s168] sm:$0xc]
      %v387 = vld [vmem:[%s168 + $0x4] sm:$0xf]
      %v388 = vld [vmem:[%s168 + $0x8] sm:$0xf]
      %v389 = vld [vmem:[%s168 + $0xc] sm:$0x1]
      %s390 = scalar_lea.vmem %s172, 64
      %v391 = vld [vmem:[%s390] sm:$0xf]
      %v392 = vld [vmem:[%s390 + $0x4] sm:$0xf]
      %v393 = vld [vmem:[%s390 + $0x8] sm:$0xf]
      %v394 = vld [vmem:[%s390 + $0xc] sm:$0xf]
      %v395 = vld [vmem:[%s390 + $0x10] sm:$0xf]
      %v396 = vld [vmem:[%s390 + $0x14] sm:$0xf]
      %v397 = vld [vmem:[%s390 + $0x18] sm:$0xf]
      %v398 = vld [vmem:[%s390 + $0x1c] sm:$0xf]
      %v403 = vunpack.c.l.b16 %v386
      %v404 = vunpack.c.l.b16 %v387
      %v405 = vunpack.c.l.b16 %v388
      %v406 = vunpack.c.l.b16 %v389
      %v407 = vpack.c.b16 %v404, %v403
      %v408 = vpack.c.b16 %v406, %v405
      %vm409 = vsmask.f32 5376
      %v411 = vshrl.u32 %v407, 16
      %v413 = vrot.slane %v411, 2
      %v414 = vshll.u32 %v407, 16
      %v416 = vrot.slane %v414, 3
      %v417 = vor.u32 %v413, %v416
      %v419 = vshrl.u32 %v408, 16
      %v421 = vrot.slane %v419, 2
      %v422 = vshll.u32 %v408, 16
      %v424 = vrot.slane %v422, 3
      %v425 = vor.u32 %v421, %v424
      %v426 = vsel %vm409, %v417, %v425
      %v435 = vunpack.c.l.b16 %v391
      %v436 = vunpack.c.l.b16 %v392
      %v437 = vunpack.c.l.b16 %v393
      %v438 = vunpack.c.l.b16 %v394
      %v439 = vunpack.c.l.b16 %v395
      %v440 = vunpack.c.l.b16 %v396
      %v441 = vunpack.c.l.b16 %v397
      %v442 = vunpack.c.l.b16 %v398
      %v443 = vpack.c.b16 %v436, %v435
      %v444 = vpack.c.b16 %v438, %v437
      %v445 = vpack.c.b16 %v440, %v439
      %v446 = vpack.c.b16 %v442, %v441
      %v452 = vsel %vm251, %v426, 0
      %v455 = vsel %vm251, %v425, 0
      %457 = vmatprep.subr.bf16.mxu0 0
      %458 = vmatpush1.bf16.msra.mxu0 %v443
      %459 = vmatprep.subr.bf16.mxu0 0
      %460 = vmatpush1.bf16.msra.mxu0 %v444
      %461 = vmatprep.subr.bf16.mxu0 0
      %462 = vmatpush1.bf16.msra.mxu0 %v445
      %463 = vmatprep.subr.bf16.mxu0 0
      %464 = vmatpush1.bf16.msra.mxu0 %v446
      %465 = vmatprep.subr.bf16.mxu0 0
      %466 = vmatpush1.bf16.msra.mxu0 0
      %467 = vmatprep.subr.bf16.mxu0 0
      %468 = vmatpush1.bf16.msra.mxu0 0
      %469 = vmatprep.subr.bf16.mxu0 0
      %470 = vmatpush1.bf16.msra.mxu0 0
      %471 = vmatprep.subr.bf16.mxu0 0
      %472 = vmatpush1.bf16.msra.mxu0 0
      %473 = vmatprep.subr.bf16.mxu0 0
      %474 = vmatpush1.bf16.msra.mxu0 0
      %475 = vmatprep.subr.bf16.mxu0 0
      %476 = vmatpush1.bf16.msra.mxu0 0
      %477 = vmatprep.subr.bf16.mxu0 0
      %478 = vmatpush1.bf16.msra.mxu0 0
      %479 = vmatprep.subr.bf16.mxu0 0
      %480 = vmatpush1.bf16.msra.mxu0 0
      %481 = vmatprep.subr.bf16.mxu0 0
      %482 = vmatpush1.bf16.msra.mxu0 0
      %483 = vmatprep.subr.bf16.mxu0 0
      %484 = vmatpush1.bf16.msra.mxu0 0
      %485 = vmatprep.subr.bf16.mxu0 0
      %486 = vmatpush1.bf16.msra.mxu0 0
      %487 = vmatprep.subr.bf16.mxu0 0
      %488 = vmatpush1.bf16.msra.mxu0 0
      %489 = vmatprep.mubr.bf16.mxu0 0
      %490 = vmatmul.mubr.bf16.gmra.mrb[0].mxu0 %v452
      %v491 = vpop.f32.mrb[0].mxu0
      %v492 = vadd.f32 0.0, %v491
      %v493 = vpop.f32.mrb[0].mxu0
      %v494 = vpop.f32.mrb[0].mxu0
      %v495 = vadd.f32 0.0, %v494
      %v496 = vpop.f32.mrb[0].mxu0
      %497 = vmatprep.mubr.bf16.mxu0 0
      %498 = vmatmul.mubr.bf16.gmra.mrb[0].mxu0 %v455
      %v499 = vpop.f32.mrb[0].mxu0
      %v500 = vadd.f32 0.0, %v499
      %v501 = vpop.f32.mrb[0].mxu0
      %v502 = vpop.f32.mrb[0].mxu0
      %v503 = vpop.f32.mrb[0].mxu0
      %504 = vdwg.mxu0
      %v505 = vadd.f32 %v373, %v492
      %v506 = vadd.f32 %v376, %v495
      %v507 = vadd.f32 %v381, %v500
      %v508 = vld [vmem:[%s168] sm:$0x8]
      %s509 = scalar_lea.vmem %s172, 96
      %v510 = vld [vmem:[%s509] sm:$0xf]
      %v511 = vld [vmem:[%s509 + $0x4] sm:$0xf]
      %v512 = vld [vmem:[%s509 + $0x8] sm:$0xf]
      %v513 = vld [vmem:[%s509 + $0xc] sm:$0xf]
      %v514 = vld [vmem:[%s509 + $0x10] sm:$0xf]
      %v515 = vld [vmem:[%s509 + $0x14] sm:$0xf]
      %v516 = vld [vmem:[%s509 + $0x18] sm:$0xf]
      %v517 = vld [vmem:[%s509 + $0x1c] sm:$0xf]
      %v519 = vunpack.c.l.b16 %v508
      %v520 = vpack.c.b16 %v404, %v519
      %vm521 = vcmask 1044480
      %v522 = vrot.slane %v520, 3
      %v523 = vrot.slane %v408, 3
      %v524 = vsel %vm521, %v522, %v523
      %v533 = vunpack.c.l.b16 %v510
      %v534 = vunpack.c.l.b16 %v511
      %v535 = vunpack.c.l.b16 %v512
      %v536 = vunpack.c.l.b16 %v513
      %v537 = vunpack.c.l.b16 %v514
      %v538 = vunpack.c.l.b16 %v515
      %v539 = vunpack.c.l.b16 %v516
      %v540 = vunpack.c.l.b16 %v517
      %v541 = vpack.c.b16 %v534, %v533
      %v542 = vpack.c.b16 %v536, %v535
      %v543 = vpack.c.b16 %v538, %v537
      %v544 = vpack.c.b16 %v540, %v539
      %v550 = vsel %vm251, %v524, 0
      %v553 = vsel %vm251, %v523, 0
      %555 = vmatprep.subr.bf16.mxu0 0
      %556 = vmatpush1.bf16.msra.mxu0 %v541
      %557 = vmatprep.subr.bf16.mxu0 0
      %558 = vmatpush1.bf16.msra.mxu0 %v542
      %559 = vmatprep.subr.bf16.mxu0 0
      %560 = vmatpush1.bf16.msra.mxu0 %v543
      %561 = vmatprep.subr.bf16.mxu0 0
      %562 = vmatpush1.bf16.msra.mxu0 %v544
      %563 = vmatprep.subr.bf16.mxu0 0
      %564 = vmatpush1.bf16.msra.mxu0 0
      %565 = vmatprep.subr.bf16.mxu0 0
      %566 = vmatpush1.bf16.msra.mxu0 0
      %567 = vmatprep.subr.bf16.mxu0 0
      %568 = vmatpush1.bf16.msra.mxu0 0
      %569 = vmatprep.subr.bf16.mxu0 0
      %570 = vmatpush1.bf16.msra.mxu0 0
      %571 = vmatprep.subr.bf16.mxu0 0
      %572 = vmatpush1.bf16.msra.mxu0 0
      %573 = vmatprep.subr.bf16.mxu0 0
      %574 = vmatpush1.bf16.msra.mxu0 0
      %575 = vmatprep.subr.bf16.mxu0 0
      %576 = vmatpush1.bf16.msra.mxu0 0
      %577 = vmatprep.subr.bf16.mxu0 0
      %578 = vmatpush1.bf16.msra.mxu0 0
      %579 = vmatprep.subr.bf16.mxu0 0
      %580 = vmatpush1.bf16.msra.mxu0 0
      %581 = vmatprep.subr.bf16.mxu0 0
      %582 = vmatpush1.bf16.msra.mxu0 0
      %583 = vmatprep.subr.bf16.mxu0 0
      %584 = vmatpush1.bf16.msra.mxu0 0
      %585 = vmatprep.subr.bf16.mxu0 0
      %586 = vmatpush1.bf16.msra.mxu0 0
      %587 = vmatprep.mubr.bf16.mxu0 0
      %588 = vmatmul.mubr.bf16.gmra.mrb[0].mxu0 %v550
      %v589 = vpop.f32.mrb[0].mxu0
      %v590 = vadd.f32 0.0, %v589
      %v591 = vpop.f32.mrb[0].mxu0
      %v592 = vpop.f32.mrb[0].mxu0
      %v593 = vadd.f32 0.0, %v592
      %v594 = vpop.f32.mrb[0].mxu0
      %595 = vmatprep.mubr.bf16.mxu0 0
      %596 = vmatmul.mubr.bf16.gmra.mrb[0].mxu0 %v553
      %v597 = vpop.f32.mrb[0].mxu0
      %v598 = vadd.f32 0.0, %v597
      %v599 = vpop.f32.mrb[0].mxu0
      %v600 = vpop.f32.mrb[0].mxu0
      %v601 = vpop.f32.mrb[0].mxu0
      %602 = vdwg.mxu0
      %v603 = vadd.f32 %v505, %v590
      %v604 = vadd.f32 %v506, %v593
      %v605 = vadd.f32 %v507, %v598
      %v606 = vlaneseq
      %v607 = vshrl.u32 %v606, 7
      %v608 = vadd.s32 %v607, 8
      %v609 = vadd.s32 %v607, 16
      %vm610 = vcmp.lt.s32.totalorder %v607, 0
      %v611 = vsub.s32 0, %v607
      %v612 = vsel %vm610, %v611, %v607
      %v613 = vmul.u32.u64.compose %v612, 3435973837
      %v614 = vextract.low.u32 %v613
      %v615 = vextract.high.u32 %v613
      %v616 = vshrl.u32 %v615, 2
      %v617 = vmul.u32 %v616, 5
      %v618 = vsub.s32 %v612, %v617
      %v619 = vsub.s32 0, %v618
      %v620 = vsel %vm610, %v619, %v618
      %vm621 = vcmp.lt.s32.totalorder %v608, 0
      %v622 = vsub.s32 0, %v608
      %v623 = vsel %vm621, %v622, %v608
      %v624 = vmul.u32.u64.compose %v623, 3435973837
      %v625 = vextract.low.u32 %v624
      %v626 = vextract.high.u32 %v624
      %v627 = vshrl.u32 %v626, 2
      %v628 = vmul.u32 %v627, 5
      %v629 = vsub.s32 %v623, %v628
      %v630 = vsub.s32 0, %v629
      %v631 = vsel %vm621, %v630, %v629
      %vm632 = vcmp.lt.s32.totalorder %v609, 0
      %v633 = vsub.s32 0, %v609
      %v634 = vsel %vm632, %v633, %v609
      %v635 = vmul.u32.u64.compose %v634, 3435973837
      %v636 = vextract.low.u32 %v635
      %v637 = vextract.high.u32 %v635
      %v638 = vshrl.u32 %v637, 2
      %v639 = vmul.u32 %v638, 5
      %v640 = vsub.s32 %v634, %v639
      %v641 = vsub.s32 0, %v640
      %v642 = vsel %vm632, %v641, %v640
      %vm643 = vcmp.ne.s32.totalorder %v620, 0
      %vm644 = vcmp.ne.s32.totalorder %v631, 0
      %vm645 = vcmp.ne.s32.totalorder %v642, 0
      %vm646 = vcmp.lt.s32.totalorder %v620, 0
      %vm647 = vcmp.lt.s32.totalorder %v631, 0
      %vm648 = vcmp.lt.s32.totalorder %v642, 0
      %vm649 = vmand %vm646, %vm643
      %vm650 = vmand %vm647, %vm644
      %vm651 = vmand %vm648, %vm645
      %v652 = vadd.s32 %v620, 5
      %v653 = vadd.s32 %v631, 5
      %v654 = vadd.s32 %v642, 5
      %v655 = vsel %vm649, %v652, %v620
      %v656 = vsel %vm650, %v653, %v631
      %v657 = vsel %vm651, %v654, %v642
      %vm658 = vcmp.lt.s32.totalorder %v655, 4
      %vm659 = vcmp.lt.s32.totalorder %v656, 4
      %vm660 = vcmp.lt.s32.totalorder %v657, 4
      %v661 = vsel %vm658, 1, 0
      %v662 = vsel %vm659, 1, 0
      %v663 = vsel %vm660, 1, 0
      %vm664 = vcmp.eq.s32.totalorder %v661, 1
      %vm665 = vcmp.eq.s32.totalorder %v662, 1
      %vm666 = vcmp.eq.s32.totalorder %v663, 1
      %v667 = vsel %vm664, %v603, 0.0
      %v668 = vsel %vm665, %v604, 0.0
      %v669 = vsel %vm666, %v605, 0.0
      %vm670 = vcmask 261120
      %v671 = vsel %vm670, %v667, 0.0
      %v672 = vsel %vm670, %v668, 0.0
      %v673 = vadd.f32 %v671, %v672
      %vm674 = vcmask 257024
      %v675 = vsel %vm674, %v669, 0.0
      %v676 = vadd.f32 %v673, %v675
      %v677 = vrot.slane %v676, 4
      %v678 = vadd.f32 %v676, %v677
      %v679 = vrot.slane %v678, 2
      %v680 = vadd.f32 %v678, %v679
      %v681 = vrot.slane %v680, 1
      %v682 = vadd.f32 %v680, %v681
      %v683 = vmul.f32 %v682, 0.0625
      %v684 = vsub.f32 %v603, %v683
      %v685 = vsub.f32 %v604, %v683
      %v686 = vsub.f32 %v605, %v683
      %v687 = vsel %vm664, %v684, 0.0
      %v688 = vsel %vm665, %v685, 0.0
      %v689 = vsel %vm666, %v686, 0.0
      %v690 = vmul.f32 %v687, %v687
      %v691 = vmul.f32 %v688, %v688
      %v692 = vmul.f32 %v689, %v689
      %v693 = vsel %vm670, %v690, 0.0
      %v694 = vsel %vm670, %v691, 0.0
      %v695 = vadd.f32 %v693, %v694
      %v696 = vsel %vm674, %v692, 0.0
      %v697 = vadd.f32 %v695, %v696
      %v698 = vrot.slane %v697, 4
      %v699 = vadd.f32 %v697, %v698
      %v700 = vrot.slane %v699, 2
      %v701 = vadd.f32 %v699, %v700
      %v702 = vrot.slane %v701, 1
      %v703 = vadd.f32 %v701, %v702
      %v704 = vmul.f32 %v703, 0.0625
      %v705 = vadd.f32 %v704, 1e-05
      %v706 = vrsqrt.pop %v705
      %v707 = vmul.f32 %v684, %v706
      %v708 = vmul.f32 %v685, %v706
      %v709 = vmul.f32 %v686, %v706
      %vm710 = vcmp.ge.f32.partialorder %v707, 0.0
      %vm711 = vcmp.ge.f32.partialorder %v708, 0.0
      %vm712 = vcmp.ge.f32.partialorder %v709, 0.0
      %v713 = vmul.f32 %v707, 0.2
      %v714 = vmul.f32 %v708, 0.2
      %v715 = vmul.f32 %v709, 0.2
      %v716 = vsel %vm710, %v707, %v713
      %v717 = vsel %vm711, %v708, %v714
      %v718 = vsel %vm712, %v709, %v715
      %v719 = vpack.c.bf16 %v717, %v716
      %v720 = vpack.c.bf16 %v718, %v718
      %v723 = vunpack.c.l.b16 %v719
      %v724 = vunpack.c.h.b16 %v719
      %v725 = vunpack.c.l.b16 %v720
      %v726 = vpack.c.b16 %v723, %v723
      %v727 = vpack.c.b16 %v724, %v724
      %v728 = vpack.c.b16 %v725, %v725
      %732 = vst.msk [vmem:[%s180] sm:$0xf] %vm674, %v726
      %733 = vst.msk [vmem:[%s180 + $0x4] sm:$0xf] %vm674, %v727
      %vm734 = vcmask 254976
      %735 = vst.msk [vmem:[%s180 + $0x8] sm:$0x3] %vm734, %v728
      %p736 = scmp.lt.s32.totalorder %s17, 1
      %s737 = scalar_select %p736, %s17, 1
      %p738 = scmp.lt.s32.totalorder %s18, 0
      %s739 = scalar_select %p738, %s18, 0
      %s740 = smul.addr %s737, 3
      %s741 = sadd.s32 %s739, %s740
      %s742 = smul.addr %s741, 4
      %s743 = scalar_lea.vmem %s2, %s742
      // Predicated region
      $region29: #{_lambda_.7} parent=27 // pred_check
        %p744 = pneg %p97
      $region30: #{_lambda_.7} parent=27 // pred_check_branch
        %746 = sbr.rel (%p744) target = $region32
      $region31: #{_lambda_.7} parent=27 // pred_region
        _
      $region32: #{_lambda_.7} parent=27 // pred_fallthru
        _
    $region28: #{_lambda_.7} parent=5 // pred_fallthru
      _
    %p747 = scmp.le.s32.totalorder 2, %s8
    // Predicated region
    $region33: #{_lambda_.7} parent=5 // pred_check
      %p748 = pneg %p747
    $region34: #{_lambda_.7} parent=5 // pred_check_branch
      %750 = sbr.rel (%p748) target = $region36
    $region35: #{_lambda_.7} parent=5 // pred_region
      %s751 = ssub.s32 %s8, 2
      // Predicated region
      $region37: #{_lambda_.7} parent=35 // pred_check
        %p752 = pneg %p103
      $region38: #{_lambda_.7} parent=35 // pred_check_branch
        %754 = sbr.rel (%p752) target = $region40
      $region39: #{_lambda_.7} parent=35 // pred_region
        %p755 = scmp.lt.s32.totalorder %s19, 1
        %s756 = scalar_select %p755, %s19, 1
        %p757 = scmp.lt.s32.totalorder %s20, 0
        %s758 = scalar_select %p757, %s20, 0
        %s759 = smul.addr %s756, 3
        %s760 = sadd.s32 %s758, %s759
        %s761 = smul.addr %s760, 4
        %s762 = scalar_lea.vmem %s2, %s761
      $region40: #{_lambda_.7} parent=35 // pred_fallthru
        _
    $region36: #{_lambda_.7} parent=5 // pred_fallthru
      _
  $region6: #{_lambda_.7} parent=0 // loop_footer
    %s12 = sadd.s32 1, %s8
  $region7: #{_lambda_.7} parent=0 // loop_footer_branch
    %7 = sbr.rel target = $region3
  $region8: #{_lambda_.7} parent=0 // loop_exit
    _

// kernel: _lambda_.8
$region0: #{_lambda_.8}
  #allocation0 [shape = 'u32[]', space=smem, size = 0x4, offset = 0x4, fixed_abs, tag = 'smem constant byte address 0x4 - core index']
  #allocation1 [shape = 'u32[144,128]{1,0:T(1,128)}', space=vmem, size = 0x12000, scoped, tag = 'internal scratch']
  %s0 = inlined_call_operand.vmem [shape: bf16[2,42,32], index: 0, kind: input, shape index: {}]
  %s1 = inlined_call_operand.vmem [shape: bf16[16,32,64], index: 1, kind: input, shape index: {}]
  %s2 = inlined_call_operand.vmem [shape: bf16[2,18,64], index: 2, kind: output, shape index: {}]
  %s3 = sld [smem:[#allocation0]]
  $region41: #{_lambda_.8} parent=0
    _
  %s5 = ssub.s32 1, %s3
  %s6 = scalar_select 0, %s5, %s3
  loop: start=0, step=1, limit=4
  $region2: #{_lambda_.8} parent=0 // loop_pre_header
    _
  $region3: #{_lambda_.8} parent=0 // loop_header
    %s8 = sphi 0, %s12
    %p9 = scmp.ge.s32.totalorder %s8, 4
    %s15 = sphi 0, %s27
    %s16 = sphi 0, %s23
    %s17 = sphi 0, %s15
    %s18 = sphi 0, %s16
    %s19 = sphi 0, %s17
    %s20 = sphi 0, %s18
    %s30 = sphi 0, %s32
    %s33 = sphi 0, %s30
    %s34 = sphi 0, %s33
    %s50 = sphi 0, %s34
    %s56 = sphi 0, %s58
    %s59 = sphi 0, %s56
    %s60 = sphi 0, %s59
    %s76 = sphi 0, %s60
    %s84 = sphi 0, %s86
    %s87 = sphi 0, %s84
    %s88 = sphi 0, %s87
    %s104 = sphi 0, %s88
  $region4: #{_lambda_.8} parent=0 // loop_header_branch
    %11 = sbr.rel (%p9) target = $region8
  $region5: #{_lambda_.8} parent=0 // loop_body
    %s13 = ssub.s32 %s8, 1
    %s14 = ssub.s32 %s8, 2
    %s21 = sadd.s32 1, %s16
    %p22 = scmp.ge.s32.totalorder %s21, 1
    %s23 = scalar_select %p22, 0, %s21
    %s24 = sadd.s32 1, %s15
    %s25 = scalar_select %p22, %s24, %s15
    %p26 = scmp.ge.s32.totalorder %s25, 2
    %s27 = scalar_select %p26, 0, %s25
    %s28 = ssub.s32 %s15, %s27
    %p29 = scmp.eq.s32.totalorder %s28, 0
    %s31 = sadd.s32 %s30, 1
    %s32 = scalar_select %p29, %s30, %s31
    %p35 = pneg %p29
    %p36 = scmp.eq.s32.totalorder %s8, 1
    %p37 = por %p35, %p36
    %p38 = scmp.ne.s32.totalorder %s30, %s33
    %p39 = scmp.eq.s32.totalorder %s8, 0
    %p40 = por %p38, %p39
    %p41 = scmp.ne.s32.totalorder %s30, %s33
    %p42 = scmp.eq.s32.totalorder %s13, 1
    %p43 = por %p41, %p42
    %p44 = scmp.ne.s32.totalorder %s33, %s34
    %p45 = scmp.eq.s32.totalorder %s13, 0
    %p46 = por %p44, %p45
    %p47 = scmp.ne.s32.totalorder %s33, %s34
    %p48 = scmp.eq.s32.totalorder %s14, 1
    %p49 = por %p47, %p48
    %p51 = scmp.ne.s32.totalorder %s34, %s50
    %p52 = scmp.eq.s32.totalorder %s14, 0
    %p53 = por %p51, %p52
    %s54 = ssub.s32 %s16, %s23
    %p55 = scmp.eq.s32.totalorder %s54, 0
    %s57 = sadd.s32 %s56, 1
    %s58 = scalar_select %p55, %s56, %s57
    %p61 = pneg %p55
    %p62 = scmp.eq.s32.totalorder %s8, 1
    %p63 = por %p61, %p62
    %p64 = scmp.ne.s32.totalorder %s56, %s59
    %p65 = scmp.eq.s32.totalorder %s8, 0
    %p66 = por %p64, %p65
    %p67 = scmp.ne.s32.totalorder %s56, %s59
    %p68 = scmp.eq.s32.totalorder %s13, 1
    %p69 = por %p67, %p68
    %p70 = scmp.ne.s32.totalorder %s59, %s60
    %p71 = scmp.eq.s32.totalorder %s13, 0
    %p72 = por %p70, %p71
    %p73 = scmp.ne.s32.totalorder %s59, %s60
    %p74 = scmp.eq.s32.totalorder %s14, 1
    %p75 = por %p73, %p74
    %p77 = scmp.ne.s32.totalorder %s60, %s76
    %p78 = scmp.eq.s32.totalorder %s14, 0
    %p79 = por %p77, %p78
    %s80 = ssub.s32 %s15, %s27
    %s81 = ssub.s32 %s16, %s23
    %s82 = sor.u32 %s80, %s81
    %p83 = scmp.eq.s32.totalorder %s82, 0
    %s85 = sadd.s32 %s84, 1
    %s86 = scalar_select %p83, %s84, %s85
    %p89 = pneg %p83
    %p90 = scmp.eq.s32.totalorder %s8, 1
    %p91 = por %p89, %p90
    %p92 = scmp.ne.s32.totalorder %s84, %s87
    %p93 = scmp.eq.s32.totalorder %s8, 0
    %p94 = por %p92, %p93
    %p95 = scmp.ne.s32.totalorder %s84, %s87
    %p96 = scmp.eq.s32.totalorder %s13, 1
    %p97 = por %p95, %p96
    %p98 = scmp.ne.s32.totalorder %s87, %s88
    %p99 = scmp.eq.s32.totalorder %s13, 0
    %p100 = por %p98, %p99
    %p101 = scmp.ne.s32.totalorder %s87, %s88
    %p102 = scmp.eq.s32.totalorder %s14, 1
    %p103 = por %p101, %p102
    %p105 = scmp.ne.s32.totalorder %s88, %s104
    %p106 = scmp.eq.s32.totalorder %s14, 0
    %p107 = por %p105, %p106
    %p108 = scmp.le.s32.totalorder 1, %s8
    %p109 = scmp.lt.s32.totalorder %s8, 3
    %p110 = pnand %p108, %p109
    %p111 = pneg %p110
    // Predicated region
    $region9: #{_lambda_.8} parent=5 // pred_check
      _
    $region10: #{_lambda_.8} parent=5 // pred_check_branch
      %113 = sbr.rel (%p110) target = $region12
    $region11: #{_lambda_.8} parent=5 // pred_region
      %s114 = ssub.s32 %s8, 1
      // Predicated region
      $region13: #{_lambda_.8} parent=11 // pred_check
        %p115 = pneg %p72
      $region14: #{_lambda_.8} parent=11 // pred_check_branch
        %117 = sbr.rel (%p115) target = $region16
      $region15: #{_lambda_.8} parent=11 // pred_region
        %p118 = scmp.lt.s32.totalorder %s18, 0
        %s119 = scalar_select %p118, %s18, 0
        %s120 = smul.addr %s119, 4
        %s121 = scalar_lea.vmem %s1, %s120
      $region16: #{_lambda_.8} parent=11 // pred_fallthru
        _
    $region12: #{_lambda_.8} parent=5 // pred_fallthru
      _
    %p122 = scmp.lt.s32.totalorder %s8, 2
    // Predicated region
    $region17: #{_lambda_.8} parent=5 // pred_check
      %p123 = pneg %p122
    $region18: #{_lambda_.8} parent=5 // pred_check_branch
      %125 = sbr.rel (%p123) target = $region20
    $region19: #{_lambda_.8} parent=5 // pred_region
      // Predicated region
      $region21: #{_lambda_.8} parent=19 // pred_check
        %p126 = pneg %p40
      $region22: #{_lambda_.8} parent=19 // pred_check_branch
        %128 = sbr.rel (%p126) target = $region24
      $region23: #{_lambda_.8} parent=19 // pred_region
        %p129 = scmp.lt.s32.totalorder %s15, 1
        %s130 = scalar_select %p129, %s15, 1
        %s131 = smul.addr %s130, 6
        %s132 = smul.addr %s131, 4
        %s133 = scalar_lea.vmem %s0, %s132
      $region24: #{_lambda_.8} parent=19 // pred_fallthru
        _
    $region20: #{_lambda_.8} parent=5 // pred_fallthru
      _
    %p134 = scmp.le.s32.totalorder 1, %s8
    %p135 = scmp.lt.s32.totalorder %s8, 3
    %p136 = pnand %p134, %p135
    %p137 = pneg %p136
    // Predicated region
    $region25: #{_lambda_.8} parent=5 // pred_check
      _
    $region26: #{_lambda_.8} parent=5 // pred_check_branch
      %139 = sbr.rel (%p136) target = $region28
    $region27: #{_lambda_.8} parent=5 // pred_region
      %s140 = ssub.s32 %s8, 1
      %p141 = scmp.lt.s32.totalorder %s17, 1
      %s142 = scalar_select %p141, %s17, 1
      %s143 = smul.addr %s142, 6
      %s144 = smul.addr %s143, 4
      %s145 = scalar_lea.vmem %s0, %s144
      %p146 = pneg %p46
      %p147 = pneg %p43
      %p148 = scmp.lt.s32.totalorder %s18, 0
      %s149 = scalar_select %p148, %s18, 0
      %s150 = smul.addr %s149, 4
      %s151 = scalar_lea.vmem %s1, %s150
      %p152 = pneg %p72
      %p153 = pneg %p69
      %p154 = pneg %p100
      %p155 = pneg %p97
      %p156 = scmp.lt.s32.totalorder %s17, 1
      %s157 = scalar_select %p156, %s17, 1
      %p158 = scmp.lt.s32.totalorder %s18, 0
      %s159 = scalar_select %p158, %s18, 0
      %s160 = smul.addr %s157, 3
      %s161 = sadd.s32 %s159, %s160
      %s162 = smul.addr %s161, 4
      %s163 = scalar_lea.vmem %s2, %s162
      %p164 = scmp.lt.s32.totalorder %s17, 1
      %s165 = scalar_select %p164, %s17, 1
      %s166 = smul.addr %s165, 6
      %s167 = smul.addr %s166, 4
      %s168 = scalar_lea.vmem %s0, %s167
      %p169 = scmp.lt.s32.totalorder %s18, 0
      %s170 = scalar_select %p169, %s18, 0
      %s171 = smul.addr %s170, 4
      %s172 = scalar_lea.vmem %s1, %s171
      %p173 = scmp.lt.s32.totalorder %s17, 1
      %s174 = scalar_select %p173, %s17, 1
      %p175 = scmp.lt.s32.totalorder %s18, 0
      %s176 = scalar_select %p175, %s18, 0
      %s177 = smul.addr %s174, 3
      %s178 = sadd.s32 %s176, %s177
      %s179 = smul.addr %s178, 4
      %s180 = scalar_lea.vmem %s2, %s179
      %v182 = vld [vmem:[%s168] sm:$0xf]
      %v183 = vld [vmem:[%s168 + $0x4] sm:$0xf]
      %v184 = vld [vmem:[%s168 + $0x8] sm:$0x1]
      %v185 = vld [vmem:[%s172] sm:$0xf]
      %v186 = vld [vmem:[%s172 + $0x4] sm:$0xf]
      %v187 = vld [vmem:[%s172 + $0x8] sm:$0xf]
      %v188 = vld [vmem:[%s172 + $0xc] sm:$0xf]
      %v189 = vld [vmem:[%s168 + $0x8] sm:$0x3]
      %s190 = scalar_lea.vmem %s172, 16
      %v191 = vld [vmem:[%s190] sm:$0xf]
      %v192 = vld [vmem:[%s190 + $0x4] sm:$0xf]
      %v193 = vld [vmem:[%s190 + $0x8] sm:$0xf]
      %v194 = vld [vmem:[%s190 + $0xc] sm:$0xf]
      %v198 = vunpack.c.l.b16 %v182
      %v199 = vunpack.c.l.b16 %v183
      %v200 = vunpack.c.l.b16 %v189
      %v201 = vpack.c.b16 %v199, %v198
      %v202 = vpack.c.b16 %v200, %v200
      %vm203 = vsmask.f32 7424
      %v205 = vshrl.u32 %v201, 16
      %v207 = vshll.u32 %v201, 16
      %v209 = vrot.slane %v207, 1
      %v210 = vor.u32 %v205, %v209
      %v212 = vshll.u32 %v202, 16
      %v214 = vrot.slane %v212, 1
      %v215 = vsel %vm203, %v210, %v214
      %v216 = vshrl.u32 %v202, 16
      %v218 = vor.u32 %v216, %v214
      %v223 = vunpack.c.l.b16 %v191
      %v224 = vunpack.c.l.b16 %v192
      %v225 = vunpack.c.l.b16 %v193
      %v226 = vunpack.c.l.b16 %v194
      %v227 = vpack.c.b16 %v224, %v223
      %v228 = vpack.c.b16 %v226, %v225
      %vm231 = vcmask 261120
      %v233 = vsel %vm231, %v215, 0
      %v236 = vsel %vm231, %v218, 0
      %238 = vmatprep.subr.bf16.mxu0 0
      %239 = vmatpush1.bf16.msra.mxu0 %v227
      %240 = vmatprep.subr.bf16.mxu0 0
      %241 = vmatpush1.bf16.msra.mxu0 %v228
      %242 = vmatprep.subr.bf16.mxu0 0
      %243 = vmatpush1.bf16.msra.mxu0 0
      %244 = vmatprep.subr.bf16.mxu0 0
      %245 = vmatpush1.bf16.msra.mxu0 0
      %246 = vmatprep.subr.bf16.mxu0 0
      %247 = vmatpush1.bf16.msra.mxu0 0
      %248 = vmatprep.subr.bf16.mxu0 0
      %249 = vmatpush1.bf16.msra.mxu0 0
      %250 = vmatprep.subr.bf16.mxu0 0
      %251 = vmatpush1.bf16.msra.mxu0 0
      %252 = vmatprep.subr.bf16.mxu0 0
      %253 = vmatpush1.bf16.msra.mxu0 0
      %254 = vmatprep.subr.bf16.mxu0 0
      %255 = vmatpush1.bf16.msra.mxu0 0
      %256 = vmatprep.subr.bf16.mxu0 0
      %257 = vmatpush1.bf16.msra.mxu0 0
      %258 = vmatprep.subr.bf16.mxu0 0
      %259 = vmatpush1.bf16.msra.mxu0 0
      %260 = vmatprep.subr.bf16.mxu0 0
      %261 = vmatpush1.bf16.msra.mxu0 0
      %262 = vmatprep.subr.bf16.mxu0 0
      %263 = vmatpush1.bf16.msra.mxu0 0
      %264 = vmatprep.subr.bf16.mxu0 0
      %265 = vmatpush1.bf16.msra.mxu0 0
      %266 = vmatprep.subr.bf16.mxu0 0
      %267 = vmatpush1.bf16.msra.mxu0 0
      %268 = vmatprep.subr.bf16.mxu0 0
      %269 = vmatpush1.bf16.msra.mxu0 0
      %270 = vmatprep.mubr.bf16.mxu0 0
      %271 = vmatmul.mubr.bf16.gmra.mrb[0].mxu0 %v233
      %v272 = vpop.f32.mrb[0].mxu0
      %v273 = vadd.f32 0.0, %v272
      %v274 = vpop.f32.mrb[0].mxu0
      %v275 = vpop.f32.mrb[0].mxu0
      %v276 = vadd.f32 0.0, %v275
      %v277 = vpop.f32.mrb[0].mxu0
      %278 = vmatprep.mubr.bf16.mxu0 0
      %279 = vmatmul.mubr.bf16.gmra.mrb[0].mxu0 %v236
      %v280 = vpop.f32.mrb[0].mxu0
      %v281 = vadd.f32 0.0, %v280
      %v282 = vpop.f32.mrb[0].mxu0
      %v283 = vpop.f32.mrb[0].mxu0
      %v284 = vpop.f32.mrb[0].mxu0
      %285 = vdwg.mxu0
      %v287 = vunpack.c.l.b16 %v184
      %v288 = vpack.c.b16 %v287, %v287
      %v293 = vunpack.c.l.b16 %v185
      %v294 = vunpack.c.l.b16 %v186
      %v295 = vunpack.c.l.b16 %v187
      %v296 = vunpack.c.l.b16 %v188
      %v297 = vpack.c.b16 %v294, %v293
      %v298 = vpack.c.b16 %v296, %v295
      %v301 = vsel %vm231, %v201, 0
      %v304 = vsel %vm231, %v288, 0
      %306 = vmatprep.subr.bf16.mxu0 0
      %307 = vmatpush1.bf16.msra.mxu0 %v297
      %308 = vmatprep.subr.bf16.mxu0 0
      %309 = vmatpush1.bf16.msra.mxu0 %v298
      %310 = vmatprep.subr.bf16.mxu0 0
      %311 = vmatpush1.bf16.msra.mxu0 0
      %312 = vmatprep.subr.bf16.mxu0 0
      %313 = vmatpush1.bf16.msra.mxu0 0
      %314 = vmatprep.subr.bf16.mxu0 0
      %315 = vmatpush1.bf16.msra.mxu0 0
      %316 = vmatprep.subr.bf16.mxu0 0
      %317 = vmatpush1.bf16.msra.mxu0 0
      %318 = vmatprep.subr.bf16.mxu0 0
      %319 = vmatpush1.bf16.msra.mxu0 0
      %320 = vmatprep.subr.bf16.mxu0 0
      %321 = vmatpush1.bf16.msra.mxu0 0
      %322 = vmatprep.subr.bf16.mxu0 0
      %323 = vmatpush1.bf16.msra.mxu0 0
      %324 = vmatprep.subr.bf16.mxu0 0
      %325 = vmatpush1.bf16.msra.mxu0 0
      %326 = vmatprep.subr.bf16.mxu0 0
      %327 = vmatpush1.bf16.msra.mxu0 0
      %328 = vmatprep.subr.bf16.mxu0 0
      %329 = vmatpush1.bf16.msra.mxu0 0
      %330 = vmatprep.subr.bf16.mxu0 0
      %331 = vmatpush1.bf16.msra.mxu0 0
      %332 = vmatprep.subr.bf16.mxu0 0
      %333 = vmatpush1.bf16.msra.mxu0 0
      %334 = vmatprep.subr.bf16.mxu0 0
      %335 = vmatpush1.bf16.msra.mxu0 0
      %336 = vmatprep.subr.bf16.mxu0 0
      %337 = vmatpush1.bf16.msra.mxu0 0
      %338 = vmatprep.mubr.bf16.mxu0 0
      %339 = vmatmul.mubr.bf16.gmra.mrb[0].mxu0 %v301
      %v340 = vpop.f32.mrb[0].mxu0
      %v341 = vadd.f32 %v273, %v340
      %v342 = vpop.f32.mrb[0].mxu0
      %v343 = vpop.f32.mrb[0].mxu0
      %v344 = vadd.f32 %v276, %v343
      %v345 = vpop.f32.mrb[0].mxu0
      %346 = vmatprep.mubr.bf16.mxu0 0
      %347 = vmatmul.mubr.bf16.gmra.mrb[0].mxu0 %v304
      %v348 = vpop.f32.mrb[0].mxu0
      %v349 = vadd.f32 %v281, %v348
      %v350 = vpop.f32.mrb[0].mxu0
      %v351 = vpop.f32.mrb[0].mxu0
      %v352 = vpop.f32.mrb[0].mxu0
      %353 = vdwg.mxu0
      %v354 = vld [vmem:[%s168] sm:$0xe]
      %s355 = scalar_lea.vmem %s172, 32
      %v356 = vld [vmem:[%s355] sm:$0xf]
      %v357 = vld [vmem:[%s355 + $0x4] sm:$0xf]
      %v358 = vld [vmem:[%s355 + $0x8] sm:$0xf]
      %v359 = vld [vmem:[%s355 + $0xc] sm:$0xf]
      %v361 = vunpack.c.l.b16 %v354
      %v362 = vpack.c.b16 %v199, %v361
      %vm363 = vcmask 1046528
      %v364 = vrot.slane %v362, 1
      %v365 = vrot.slane %v202, 1
      %v366 = vsel %vm363, %v364, %v365
      %v371 = vunpack.c.l.b16 %v356
      %v372 = vunpack.c.l.b16 %v357
      %v373 = vunpack.c.l.b16 %v358
      %v374 = vunpack.c.l.b16 %v359
      %v375 = vpack.c.b16 %v372, %v371
      %v376 = vpack.c.b16 %v374, %v373
      %v380 = vsel %vm231, %v366, 0
      %v383 = vsel %vm231, %v365, 0
      %385 = vmatprep.subr.bf16.mxu0 0
      %386 = vmatpush1.bf16.msra.mxu0 %v375
      %387 = vmatprep.subr.bf16.mxu0 0
      %388 = vmatpush1.bf16.msra.mxu0 %v376
      %389 = vmatprep.subr.bf16.mxu0 0
      %390 = vmatpush1.bf16.msra.mxu0 0
      %391 = vmatprep.subr.bf16.mxu0 0
      %392 = vmatpush1.bf16.msra.mxu0 0
      %393 = vmatprep.subr.bf16.mxu0 0
      %394 = vmatpush1.bf16.msra.mxu0 0
      %395 = vmatprep.subr.bf16.mxu0 0
      %396 = vmatpush1.bf16.msra.mxu0 0
      %397 = vmatprep.subr.bf16.mxu0 0
      %398 = vmatpush1.bf16.msra.mxu0 0
      %399 = vmatprep.subr.bf16.mxu0 0
      %400 = vmatpush1.bf16.msra.mxu0 0
      %401 = vmatprep.subr.bf16.mxu0 0
      %402 = vmatpush1.bf16.msra.mxu0 0
      %403 = vmatprep.subr.bf16.mxu0 0
      %404 = vmatpush1.bf16.msra.mxu0 0
      %405 = vmatprep.subr.bf16.mxu0 0
      %406 = vmatpush1.bf16.msra.mxu0 0
      %407 = vmatprep.subr.bf16.mxu0 0
      %408 = vmatpush1.bf16.msra.mxu0 0
      %409 = vmatprep.subr.bf16.mxu0 0
      %410 = vmatpush1.bf16.msra.mxu0 0
      %411 = vmatprep.subr.bf16.mxu0 0
      %412 = vmatpush1.bf16.msra.mxu0 0
      %413 = vmatprep.subr.bf16.mxu0 0
      %414 = vmatpush1.bf16.msra.mxu0 0
      %415 = vmatprep.subr.bf16.mxu0 0
      %416 = vmatpush1.bf16.msra.mxu0 0
      %417 = vmatprep.mubr.bf16.mxu0 0
      %418 = vmatmul.mubr.bf16.gmra.mrb[0].mxu0 %v380
      %v419 = vpop.f32.mrb[0].mxu0
      %v420 = vadd.f32 0.0, %v419
      %v421 = vpop.f32.mrb[0].mxu0
      %v422 = vpop.f32.mrb[0].mxu0
      %v423 = vadd.f32 0.0, %v422
      %v424 = vpop.f32.mrb[0].mxu0
      %425 = vmatprep.mubr.bf16.mxu0 0
      %426 = vmatmul.mubr.bf16.gmra.mrb[0].mxu0 %v383
      %v427 = vpop.f32.mrb[0].mxu0
      %v428 = vadd.f32 0.0, %v427
      %v429 = vpop.f32.mrb[0].mxu0
      %v430 = vpop.f32.mrb[0].mxu0
      %v431 = vpop.f32.mrb[0].mxu0
      %432 = vdwg.mxu0
      %v433 = vadd.f32 %v341, %v420
      %v434 = vadd.f32 %v344, %v423
      %v435 = vadd.f32 %v349, %v428
      %v436 = vld [vmem:[%s168 + $0x8] sm:$0x7]
      %s437 = scalar_lea.vmem %s172, 48
      %v438 = vld [vmem:[%s437] sm:$0xf]
      %v439 = vld [vmem:[%s437 + $0x4] sm:$0xf]
      %v440 = vld [vmem:[%s437 + $0x8] sm:$0xf]
      %v441 = vld [vmem:[%s437 + $0xc] sm:$0xf]
      %v443 = vunpack.c.l.b16 %v436
      %v444 = vpack.c.b16 %v443, %v443
      %vm445 = vsmask.f32 6400
      %v447 = vshrl.u32 %v362, 16
      %v449 = vrot.slane %v447, 1
      %v450 = vshll.u32 %v362, 16
      %v452 = vrot.slane %v450, 2
      %v453 = vor.u32 %v449, %v452
      %v455 = vshrl.u32 %v444, 16
      %v457 = vrot.slane %v455, 1
      %v458 = vshll.u32 %v444, 16
      %v460 = vrot.slane %v458, 2
      %v461 = vor.u32 %v457, %v460
      %v462 = vsel %vm445, %v453, %v461
      %v467 = vunpack.c.l.b16 %v438
      %v468 = vunpack.c.l.b16 %v439
      %v469 = vunpack.c.l.b16 %v440
      %v470 = vunpack.c.l.b16 %v441
      %v471 = vpack.c.b16 %v468, %v467
      %v472 = vpack.c.b16 %v470, %v469
      %v476 = vsel %vm231, %v462, 0
      %v479 = vsel %vm231, %v461, 0
      %481 = vmatprep.subr.bf16.mxu0 0
      %482 = vmatpush1.bf16.msra.mxu0 %v471
      %483 = vmatprep.subr.bf16.mxu0 0
      %484 = vmatpush1.bf16.msra.mxu0 %v472
      %485 = vmatprep.subr.bf16.mxu0 0
      %486 = vmatpush1.bf16.msra.mxu0 0
      %487 = vmatprep.subr.bf16.mxu0 0
      %488 = vmatpush1.bf16.msra.mxu0 0
      %489 = vmatprep.subr.bf16.mxu0 0
      %490 = vmatpush1.bf16.msra.mxu0 0
      %491 = vmatprep.subr.bf16.mxu0 0
      %492 = vmatpush1.bf16.msra.mxu0 0
      %493 = vmatprep.subr.bf16.mxu0 0
      %494 = vmatpush1.bf16.msra.mxu0 0
      %495 = vmatprep.subr.bf16.mxu0 0
      %496 = vmatpush1.bf16.msra.mxu0 0
      %497 = vmatprep.subr.bf16.mxu0 0
      %498 = vmatpush1.bf16.msra.mxu0 0
      %499 = vmatprep.subr.bf16.mxu0 0
      %500 = vmatpush1.bf16.msra.mxu0 0
      %501 = vmatprep.subr.bf16.mxu0 0
      %502 = vmatpush1.bf16.msra.mxu0 0
      %503 = vmatprep.subr.bf16.mxu0 0
      %504 = vmatpush1.bf16.msra.mxu0 0
      %505 = vmatprep.subr.bf16.mxu0 0
      %506 = vmatpush1.bf16.msra.mxu0 0
      %507 = vmatprep.subr.bf16.mxu0 0
      %508 = vmatpush1.bf16.msra.mxu0 0
      %509 = vmatprep.subr.bf16.mxu0 0
      %510 = vmatpush1.bf16.msra.mxu0 0
      %511 = vmatprep.subr.bf16.mxu0 0
      %512 = vmatpush1.bf16.msra.mxu0 0
      %513 = vmatprep.mubr.bf16.mxu0 0
      %514 = vmatmul.mubr.bf16.gmra.mrb[0].mxu0 %v476
      %v515 = vpop.f32.mrb[0].mxu0
      %v516 = vadd.f32 0.0, %v515
      %v517 = vpop.f32.mrb[0].mxu0
      %v518 = vpop.f32.mrb[0].mxu0
      %v519 = vadd.f32 0.0, %v518
      %v520 = vpop.f32.mrb[0].mxu0
      %521 = vmatprep.mubr.bf16.mxu0 0
      %522 = vmatmul.mubr.bf16.gmra.mrb[0].mxu0 %v479
      %v523 = vpop.f32.mrb[0].mxu0
      %v524 = vadd.f32 0.0, %v523
      %v525 = vpop.f32.mrb[0].mxu0
      %v526 = vpop.f32.mrb[0].mxu0
      %v527 = vpop.f32.mrb[0].mxu0
      %528 = vdwg.mxu0
      %v529 = vadd.f32 %v433, %v516
      %v530 = vadd.f32 %v434, %v519
      %v531 = vadd.f32 %v435, %v524
      %v532 = vld [vmem:[%s168] sm:$0x8]
      %v533 = vld [vmem:[%s168 + $0x8] sm:$0xf]
      %s534 = scalar_lea.vmem %s172, 64
      %v535 = vld [vmem:[%s534] sm:$0xf]
      %v536 = vld [vmem:[%s534 + $0x4] sm:$0xf]
      %v537 = vld [vmem:[%s534 + $0x8] sm:$0xf]
      %v538 = vld [vmem:[%s534 + $0xc] sm:$0xf]
      %v541 = vunpack.c.l.b16 %v532
      %v542 = vunpack.c.l.b16 %v533
      %v543 = vpack.c.b16 %v199, %v541
      %v544 = vpack.c.b16 %v542, %v542
      %vm545 = vcmask 1044480
      %v546 = vrot.slane %v543, 3
      %v547 = vrot.slane %v544, 3
      %v548 = vsel %vm545, %v546, %v547
      %v553 = vunpack.c.l.b16 %v535
      %v554 = vunpack.c.l.b16 %v536
      %v555 = vunpack.c.l.b16 %v537
      %v556 = vunpack.c.l.b16 %v538
      %v557 = vpack.c.b16 %v554, %v553
      %v558 = vpack.c.b16 %v556, %v555
      %v562 = vsel %vm231, %v548, 0
      %v565 = vsel %vm231, %v547, 0
      %567 = vmatprep.subr.bf16.mxu0 0
      %568 = vmatpush1.bf16.msra.mxu0 %v557
      %569 = vmatprep.subr.bf16.mxu0 0
      %570 = vmatpush1.bf16.msra.mxu0 %v558
      %571 = vmatprep.subr.bf16.mxu0 0
      %572 = vmatpush1.bf16.msra.mxu0 0
      %573 = vmatprep.subr.bf16.mxu0 0
      %574 = vmatpush1.bf16.msra.mxu0 0
      %575 = vmatprep.subr.bf16.mxu0 0
      %576 = vmatpush1.bf16.msra.mxu0 0
      %577 = vmatprep.subr.bf16.mxu0 0
      %578 = vmatpush1.bf16.msra.mxu0 0
      %579 = vmatprep.subr.bf16.mxu0 0
      %580 = vmatpush1.bf16.msra.mxu0 0
      %581 = vmatprep.subr.bf16.mxu0 0
      %582 = vmatpush1.bf16.msra.mxu0 0
      %583 = vmatprep.subr.bf16.mxu0 0
      %584 = vmatpush1.bf16.msra.mxu0 0
      %585 = vmatprep.subr.bf16.mxu0 0
      %586 = vmatpush1.bf16.msra.mxu0 0
      %587 = vmatprep.subr.bf16.mxu0 0
      %588 = vmatpush1.bf16.msra.mxu0 0
      %589 = vmatprep.subr.bf16.mxu0 0
      %590 = vmatpush1.bf16.msra.mxu0 0
      %591 = vmatprep.subr.bf16.mxu0 0
      %592 = vmatpush1.bf16.msra.mxu0 0
      %593 = vmatprep.subr.bf16.mxu0 0
      %594 = vmatpush1.bf16.msra.mxu0 0
      %595 = vmatprep.subr.bf16.mxu0 0
      %596 = vmatpush1.bf16.msra.mxu0 0
      %597 = vmatprep.subr.bf16.mxu0 0
      %598 = vmatpush1.bf16.msra.mxu0 0
      %599 = vmatprep.mubr.bf16.mxu0 0
      %600 = vmatmul.mubr.bf16.gmra.mrb[0].mxu0 %v562
      %v601 = vpop.f32.mrb[0].mxu0
      %v602 = vadd.f32 0.0, %v601
      %v603 = vpop.f32.mrb[0].mxu0
      %v604 = vpop.f32.mrb[0].mxu0
      %v605 = vadd.f32 0.0, %v604
      %v606 = vpop.f32.mrb[0].mxu0
      %607 = vmatprep.mubr.bf16.mxu0 0
      %608 = vmatmul.mubr.bf16.gmra.mrb[0].mxu0 %v565
      %v609 = vpop.f32.mrb[0].mxu0
      %v610 = vadd.f32 0.0, %v609
      %v611 = vpop.f32.mrb[0].mxu0
      %v612 = vpop.f32.mrb[0].mxu0
      %v613 = vpop.f32.mrb[0].mxu0
      %614 = vdwg.mxu0
      %v615 = vadd.f32 %v529, %v602
      %v616 = vadd.f32 %v530, %v605
      %v617 = vadd.f32 %v531, %v610
      %v618 = vld [vmem:[%s168] sm:$0x8]
      %v619 = vld [vmem:[%s168 + $0x4] sm:$0xf]
      %v620 = vld [vmem:[%s168 + $0x8] sm:$0xf]
      %v621 = vld [vmem:[%s168 + $0xc] sm:$0x1]
      %s622 = scalar_lea.vmem %s172, 80
      %v623 = vld [vmem:[%s622] sm:$0xf]
      %v624 = vld [vmem:[%s622 + $0x4] sm:$0xf]
      %v625 = vld [vmem:[%s622 + $0x8] sm:$0xf]
      %v626 = vld [vmem:[%s622 + $0xc] sm:$0xf]
      %v631 = vunpack.c.l.b16 %v618
      %v632 = vunpack.c.l.b16 %v619
      %v633 = vunpack.c.l.b16 %v620
      %v634 = vunpack.c.l.b16 %v621
      %v635 = vpack.c.b16 %v632, %v631
      %v636 = vpack.c.b16 %v634, %v633
      %vm637 = vsmask.f32 4352
      %v639 = vshrl.u32 %v635, 16
      %v641 = vrot.slane %v639, 3
      %v642 = vshll.u32 %v635, 16
      %v644 = vrot.slane %v642, 4
      %v645 = vor.u32 %v641, %v644
      %v647 = vshrl.u32 %v636, 16
      %v649 = vrot.slane %v647, 3
      %v650 = vshll.u32 %v636, 16
      %v652 = vrot.slane %v650, 4
      %v653 = vor.u32 %v649, %v652
      %v654 = vsel %vm637, %v645, %v653
      %v659 = vunpack.c.l.b16 %v623
      %v660 = vunpack.c.l.b16 %v624
      %v661 = vunpack.c.l.b16 %v625
      %v662 = vunpack.c.l.b16 %v626
      %v663 = vpack.c.b16 %v660, %v659
      %v664 = vpack.c.b16 %v662, %v661
      %v668 = vsel %vm231, %v654, 0
      %v671 = vsel %vm231, %v653, 0
      %673 = vmatprep.subr.bf16.mxu0 0
      %674 = vmatpush1.bf16.msra.mxu0 %v663
      %675 = vmatprep.subr.bf16.mxu0 0
      %676 = vmatpush1.bf16.msra.mxu0 %v664
      %677 = vmatprep.subr.bf16.mxu0 0
      %678 = vmatpush1.bf16.msra.mxu0 0
      %679 = vmatprep.subr.bf16.mxu0 0
      %680 = vmatpush1.bf16.msra.mxu0 0
      %681 = vmatprep.subr.bf16.mxu0 0
      %682 = vmatpush1.bf16.msra.mxu0 0
      %683 = vmatprep.subr.bf16.mxu0 0
      %684 = vmatpush1.bf16.msra.mxu0 0
      %685 = vmatprep.subr.bf16.mxu0 0
      %686 = vmatpush1.bf16.msra.mxu0 0
      %687 = vmatprep.subr.bf16.mxu0 0
      %688 = vmatpush1.bf16.msra.mxu0 0
      %689 = vmatprep.subr.bf16.mxu0 0
      %690 = vmatpush1.bf16.msra.mxu0 0
      %691 = vmatprep.subr.bf16.mxu0 0
      %692 = vmatpush1.bf16.msra.mxu0 0
      %693 = vmatprep.subr.bf16.mxu0 0
      %694 = vmatpush1.bf16.msra.mxu0 0
      %695 = vmatprep.subr.bf16.mxu0 0
      %696 = vmatpush1.bf16.msra.mxu0 0
      %697 = vmatprep.subr.bf16.mxu0 0
      %698 = vmatpush1.bf16.msra.mxu0 0
      %699 = vmatprep.subr.bf16.mxu0 0
      %700 = vmatpush1.bf16.msra.mxu0 0
      %701 = vmatprep.subr.bf16.mxu0 0
      %702 = vmatpush1.bf16.msra.mxu0 0
      %703 = vmatprep.subr.bf16.mxu0 0
      %704 = vmatpush1.bf16.msra.mxu0 0
      %705 = vmatprep.mubr.bf16.mxu0 0
      %706 = vmatmul.mubr.bf16.gmra.mrb[0].mxu0 %v668
      %v707 = vpop.f32.mrb[0].mxu0
      %v708 = vadd.f32 0.0, %v707
      %v709 = vpop.f32.mrb[0].mxu0
      %v710 = vpop.f32.mrb[0].mxu0
      %v711 = vadd.f32 0.0, %v710
      %v712 = vpop.f32.mrb[0].mxu0
      %713 = vmatprep.mubr.bf16.mxu0 0
      %714 = vmatmul.mubr.bf16.gmra.mrb[0].mxu0 %v671
      %v715 = vpop.f32.mrb[0].mxu0
      %v716 = vadd.f32 0.0, %v715
      %v717 = vpop.f32.mrb[0].mxu0
      %v718 = vpop.f32.mrb[0].mxu0
      %v719 = vpop.f32.mrb[0].mxu0
      %720 = vdwg.mxu0
      %v721 = vadd.f32 %v615, %v708
      %v722 = vadd.f32 %v616, %v711
      %v723 = vadd.f32 %v617, %v716
      %s724 = scalar_lea.vmem %s172, 96
      %v725 = vld [vmem:[%s724] sm:$0xf]
      %v726 = vld [vmem:[%s724 + $0x4] sm:$0xf]
      %v727 = vld [vmem:[%s724 + $0x8] sm:$0xf]
      %v728 = vld [vmem:[%s724 + $0xc] sm:$0xf]
      %v729 = vpack.c.b16 %v633, %v632
      %v730 = vpack.c.b16 %v634, %v634
      %v735 = vunpack.c.l.b16 %v725
      %v736 = vunpack.c.l.b16 %v726
      %v737 = vunpack.c.l.b16 %v727
      %v738 = vunpack.c.l.b16 %v728
      %v739 = vpack.c.b16 %v736, %v735
      %v740 = vpack.c.b16 %v738, %v737
      %v744 = vsel %vm231, %v729, 0
      %v747 = vsel %vm231, %v730, 0
      %749 = vmatprep.subr.bf16.mxu0 0
      %750 = vmatpush1.bf16.msra.mxu0 %v739
      %751 = vmatprep.subr.bf16.mxu0 0
      %752 = vmatpush1.bf16.msra.mxu0 %v740
      %753 = vmatprep.subr.bf16.mxu0 0
      %754 = vmatpush1.bf16.msra.mxu0 0
      %755 = vmatprep.subr.bf16.mxu0 0
      %756 = vmatpush1.bf16.msra.mxu0 0
      %757 = vmatprep.subr.bf16.mxu0 0
      %758 = vmatpush1.bf16.msra.mxu0 0
      %759 = vmatprep.subr.bf16.mxu0 0
      %760 = vmatpush1.bf16.msra.mxu0 0
      %761 = vmatprep.subr.bf16.mxu0 0
      %762 = vmatpush1.bf16.msra.mxu0 0
      %763 = vmatprep.subr.bf16.mxu0 0
      %764 = vmatpush1.bf16.msra.mxu0 0
      %765 = vmatprep.subr.bf16.mxu0 0
      %766 = vmatpush1.bf16.msra.mxu0 0
      %767 = vmatprep.subr.bf16.mxu0 0
      %768 = vmatpush1.bf16.msra.mxu0 0
      %769 = vmatprep.subr.bf16.mxu0 0
      %770 = vmatpush1.bf16.msra.mxu0 0
      %771 = vmatprep.subr.bf16.mxu0 0
      %772 = vmatpush1.bf16.msra.mxu0 0
      %773 = vmatprep.subr.bf16.mxu0 0
      %774 = vmatpush1.bf16.msra.mxu0 0
      %775 = vmatprep.subr.bf16.mxu0 0
      %776 = vmatpush1.bf16.msra.mxu0 0
      %777 = vmatprep.subr.bf16.mxu0 0
      %778 = vmatpush1.bf16.msra.mxu0 0
      %779 = vmatprep.subr.bf16.mxu0 0
      %780 = vmatpush1.bf16.msra.mxu0 0
      %781 = vmatprep.mubr.bf16.mxu0 0
      %782 = vmatmul.mubr.bf16.gmra.mrb[0].mxu0 %v744
      %v783 = vpop.f32.mrb[0].mxu0
      %v784 = vadd.f32 0.0, %v783
      %v785 = vpop.f32.mrb[0].mxu0
      %v786 = vpop.f32.mrb[0].mxu0
      %v787 = vadd.f32 0.0, %v786
      %v788 = vpop.f32.mrb[0].mxu0
      %789 = vmatprep.mubr.bf16.mxu0 0
      %790 = vmatmul.mubr.bf16.gmra.mrb[0].mxu0 %v747
      %v791 = vpop.f32.mrb[0].mxu0
      %v792 = vadd.f32 0.0, %v791
      %v793 = vpop.f32.mrb[0].mxu0
      %v794 = vpop.f32.mrb[0].mxu0
      %v795 = vpop.f32.mrb[0].mxu0
      %796 = vdwg.mxu0
      %v797 = vadd.f32 %v721, %v784
      %v798 = vadd.f32 %v722, %v787
      %v799 = vadd.f32 %v723, %v792
      %v800 = vld [vmem:[%s168 + $0xc] sm:$0x3]
      %s801 = scalar_lea.vmem %s172, 112
      %v802 = vld [vmem:[%s801] sm:$0xf]
      %v803 = vld [vmem:[%s801 + $0x4] sm:$0xf]
      %v804 = vld [vmem:[%s801 + $0x8] sm:$0xf]
      %v805 = vld [vmem:[%s801 + $0xc] sm:$0xf]
      %v807 = vunpack.c.l.b16 %v800
      %v808 = vpack.c.b16 %v807, %v807
      %v809 = vshrl.u32 %v729, 16
      %v811 = vshll.u32 %v729, 16
      %v813 = vrot.slane %v811, 1
      %v814 = vor.u32 %v809, %v813
      %v816 = vshll.u32 %v808, 16
      %v818 = vrot.slane %v816, 1
      %v819 = vsel %vm203, %v814, %v818
      %v820 = vshrl.u32 %v808, 16
      %v822 = vor.u32 %v820, %v818
      %v827 = vunpack.c.l.b16 %v802
      %v828 = vunpack.c.l.b16 %v803
      %v829 = vunpack.c.l.b16 %v804
      %v830 = vunpack.c.l.b16 %v805
      %v831 = vpack.c.b16 %v828, %v827
      %v832 = vpack.c.b16 %v830, %v829
      %v836 = vsel %vm231, %v819, 0
      %v839 = vsel %vm231, %v822, 0
      %841 = vmatprep.subr.bf16.mxu0 0
      %842 = vmatpush1.bf16.msra.mxu0 %v831
      %843 = vmatprep.subr.bf16.mxu0 0
      %844 = vmatpush1.bf16.msra.mxu0 %v832
      %845 = vmatprep.subr.bf16.mxu0 0
      %846 = vmatpush1.bf16.msra.mxu0 0
      %847 = vmatprep.subr.bf16.mxu0 0
      %848 = vmatpush1.bf16.msra.mxu0 0
      %849 = vmatprep.subr.bf16.mxu0 0
      %850 = vmatpush1.bf16.msra.mxu0 0
      %851 = vmatprep.subr.bf16.mxu0 0
      %852 = vmatpush1.bf16.msra.mxu0 0
      %853 = vmatprep.subr.bf16.mxu0 0
      %854 = vmatpush1.bf16.msra.mxu0 0
      %855 = vmatprep.subr.bf16.mxu0 0
      %856 = vmatpush1.bf16.msra.mxu0 0
      %857 = vmatprep.subr.bf16.mxu0 0
      %858 = vmatpush1.bf16.msra.mxu0 0
      %859 = vmatprep.subr.bf16.mxu0 0
      %860 = vmatpush1.bf16.msra.mxu0 0
      %861 = vmatprep.subr.bf16.mxu0 0
      %862 = vmatpush1.bf16.msra.mxu0 0
      %863 = vmatprep.subr.bf16.mxu0 0
      %864 = vmatpush1.bf16.msra.mxu0 0
      %865 = vmatprep.subr.bf16.mxu0 0
      %866 = vmatpush1.bf16.msra.mxu0 0
      %867 = vmatprep.subr.bf16.mxu0 0
      %868 = vmatpush1.bf16.msra.mxu0 0
      %869 = vmatprep.subr.bf16.mxu0 0
      %870 = vmatpush1.bf16.msra.mxu0 0
      %871 = vmatprep.subr.bf16.mxu0 0
      %872 = vmatpush1.bf16.msra.mxu0 0
      %873 = vmatprep.mubr.bf16.mxu0 0
      %874 = vmatmul.mubr.bf16.gmra.mrb[0].mxu0 %v836
      %v875 = vpop.f32.mrb[0].mxu0
      %v876 = vadd.f32 0.0, %v875
      %v877 = vpop.f32.mrb[0].mxu0
      %v878 = vpop.f32.mrb[0].mxu0
      %v879 = vadd.f32 0.0, %v878
      %v880 = vpop.f32.mrb[0].mxu0
      %881 = vmatprep.mubr.bf16.mxu0 0
      %882 = vmatmul.mubr.bf16.gmra.mrb[0].mxu0 %v839
      %v883 = vpop.f32.mrb[0].mxu0
      %v884 = vadd.f32 0.0, %v883
      %v885 = vpop.f32.mrb[0].mxu0
      %v886 = vpop.f32.mrb[0].mxu0
      %v887 = vpop.f32.mrb[0].mxu0
      %888 = vdwg.mxu0
      %v889 = vadd.f32 %v797, %v876
      %v890 = vadd.f32 %v798, %v879
      %v891 = vadd.f32 %v799, %v884
      %v892 = vld [vmem:[%s168 + $0x4] sm:$0xc]
      %v893 = vld [vmem:[%s168 + $0xc] sm:$0x7]
      %s894 = scalar_lea.vmem %s172, 128
      %v895 = vld [vmem:[%s894] sm:$0xf]
      %v896 = vld [vmem:[%s894 + $0x4] sm:$0xf]
      %v897 = vld [vmem:[%s894 + $0x8] sm:$0xf]
      %v898 = vld [vmem:[%s894 + $0xc] sm:$0xf]
      %v901 = vunpack.c.l.b16 %v892
      %v902 = vunpack.c.l.b16 %v893
      %v903 = vpack.c.b16 %v633, %v901
      %v904 = vpack.c.b16 %v902, %v902
      %vm905 = vcmask 1045504
      %v906 = vrot.slane %v903, 2
      %v907 = vrot.slane %v904, 2
      %v908 = vsel %vm905, %v906, %v907
      %v913 = vunpack.c.l.b16 %v895
      %v914 = vunpack.c.l.b16 %v896
      %v915 = vunpack.c.l.b16 %v897
      %v916 = vunpack.c.l.b16 %v898
      %v917 = vpack.c.b16 %v914, %v913
      %v918 = vpack.c.b16 %v916, %v915
      %v922 = vsel %vm231, %v908, 0
      %v925 = vsel %vm231, %v907, 0
      %927 = vmatprep.subr.bf16.mxu0 0
      %928 = vmatpush1.bf16.msra.mxu0 %v917
      %929 = vmatprep.subr.bf16.mxu0 0
      %930 = vmatpush1.bf16.msra.mxu0 %v918
      %931 = vmatprep.subr.bf16.mxu0 0
      %932 = vmatpush1.bf16.msra.mxu0 0
      %933 = vmatprep.subr.bf16.mxu0 0
      %934 = vmatpush1.bf16.msra.mxu0 0
      %935 = vmatprep.subr.bf16.mxu0 0
      %936 = vmatpush1.bf16.msra.mxu0 0
      %937 = vmatprep.subr.bf16.mxu0 0
      %938 = vmatpush1.bf16.msra.mxu0 0
      %939 = vmatprep.subr.bf16.mxu0 0
      %940 = vmatpush1.bf16.msra.mxu0 0
      %941 = vmatprep.subr.bf16.mxu0 0
      %942 = vmatpush1.bf16.msra.mxu0 0
      %943 = vmatprep.subr.bf16.mxu0 0
      %944 = vmatpush1.bf16.msra.mxu0 0
      %945 = vmatprep.subr.bf16.mxu0 0
      %946 = vmatpush1.bf16.msra.mxu0 0
      %947 = vmatprep.subr.bf16.mxu0 0
      %948 = vmatpush1.bf16.msra.mxu0 0
      %949 = vmatprep.subr.bf16.mxu0 0
      %950 = vmatpush1.bf16.msra.mxu0 0
      %951 = vmatprep.subr.bf16.mxu0 0
      %952 = vmatpush1.bf16.msra.mxu0 0
      %953 = vmatprep.subr.bf16.mxu0 0
      %954 = vmatpush1.bf16.msra.mxu0 0
      %955 = vmatprep.subr.bf16.mxu0 0
      %956 = vmatpush1.bf16.msra.mxu0 0
      %957 = vmatprep.subr.bf16.mxu0 0
      %958 = vmatpush1.bf16.msra.mxu0 0
      %959 = vmatprep.mubr.bf16.mxu0 0
      %960 = vmatmul.mubr.bf16.gmra.mrb[0].mxu0 %v922
      %v961 = vpop.f32.mrb[0].mxu0
      %v962 = vadd.f32 0.0, %v961
      %v963 = vpop.f32.mrb[0].mxu0
      %v964 = vpop.f32.mrb[0].mxu0
      %v965 = vadd.f32 0.0, %v964
      %v966 = vpop.f32.mrb[0].mxu0
      %967 = vmatprep.mubr.bf16.mxu0 0
      %968 = vmatmul.mubr.bf16.gmra.mrb[0].mxu0 %v925
      %v969 = vpop.f32.mrb[0].mxu0
      %v970 = vadd.f32 0.0, %v969
      %v971 = vpop.f32.mrb[0].mxu0
      %v972 = vpop.f32.mrb[0].mxu0
      %v973 = vpop.f32.mrb[0].mxu0
      %974 = vdwg.mxu0
      %v975 = vadd.f32 %v889, %v962
      %v976 = vadd.f32 %v890, %v965
      %v977 = vadd.f32 %v891, %v970
      %v978 = vld [vmem:[%s168 + $0xc] sm:$0xf]
      %s979 = scalar_lea.vmem %s172, 144
      %v980 = vld [vmem:[%s979] sm:$0xf]
      %v981 = vld [vmem:[%s979 + $0x4] sm:$0xf]
      %v982 = vld [vmem:[%s979 + $0x8] sm:$0xf]
      %v983 = vld [vmem:[%s979 + $0xc] sm:$0xf]
      %v985 = vunpack.c.l.b16 %v978
      %v986 = vpack.c.b16 %v985, %v985
      %vm987 = vsmask.f32 5376
      %v989 = vshrl.u32 %v903, 16
      %v991 = vrot.slane %v989, 2
      %v992 = vshll.u32 %v903, 16
      %v994 = vrot.slane %v992, 3
      %v995 = vor.u32 %v991, %v994
      %v997 = vshrl.u32 %v986, 16
      %v999 = vrot.slane %v997, 2
      %v1000 = vshll.u32 %v986, 16
      %v1002 = vrot.slane %v1000, 3
      %v1003 = vor.u32 %v999, %v1002
      %v1004 = vsel %vm987, %v995, %v1003
      %v1009 = vunpack.c.l.b16 %v980
      %v1010 = vunpack.c.l.b16 %v981
      %v1011 = vunpack.c.l.b16 %v982
      %v1012 = vunpack.c.l.b16 %v983
      %v1013 = vpack.c.b16 %v1010, %v1009
      %v1014 = vpack.c.b16 %v1012, %v1011
      %v1018 = vsel %vm231, %v1004, 0
      %v1021 = vsel %vm231, %v1003, 0
      %1023 = vmatprep.subr.bf16.mxu0 0
      %1024 = vmatpush1.bf16.msra.mxu0 %v1013
      %1025 = vmatprep.subr.bf16.mxu0 0
      %1026 = vmatpush1.bf16.msra.mxu0 %v1014
      %1027 = vmatprep.subr.bf16.mxu0 0
      %1028 = vmatpush1.bf16.msra.mxu0 0
      %1029 = vmatprep.subr.bf16.mxu0 0
      %1030 = vmatpush1.bf16.msra.mxu0 0
      %1031 = vmatprep.subr.bf16.mxu0 0
      %1032 = vmatpush1.bf16.msra.mxu0 0
      %1033 = vmatprep.subr.bf16.mxu0 0
      %1034 = vmatpush1.bf16.msra.mxu0 0
      %1035 = vmatprep.subr.bf16.mxu0 0
      %1036 = vmatpush1.bf16.msra.mxu0 0
      %1037 = vmatprep.subr.bf16.mxu0 0
      %1038 = vmatpush1.bf16.msra.mxu0 0
      %1039 = vmatprep.subr.bf16.mxu0 0
      %1040 = vmatpush1.bf16.msra.mxu0 0
      %1041 = vmatprep.subr.bf16.mxu0 0
      %1042 = vmatpush1.bf16.msra.mxu0 0
      %1043 = vmatprep.subr.bf16.mxu0 0
      %1044 = vmatpush1.bf16.msra.mxu0 0
      %1045 = vmatprep.subr.bf16.mxu0 0
      %1046 = vmatpush1.bf16.msra.mxu0 0
      %1047 = vmatprep.subr.bf16.mxu0 0
      %1048 = vmatpush1.bf16.msra.mxu0 0
      %1049 = vmatprep.subr.bf16.mxu0 0
      %1050 = vmatpush1.bf16.msra.mxu0 0
      %1051 = vmatprep.subr.bf16.mxu0 0
      %1052 = vmatpush1.bf16.msra.mxu0 0
      %1053 = vmatprep.subr.bf16.mxu0 0
      %1054 = vmatpush1.bf16.msra.mxu0 0
      %1055 = vmatprep.mubr.bf16.mxu0 0
      %1056 = vmatmul.mubr.bf16.gmra.mrb[0].mxu0 %v1018
      %v1057 = vpop.f32.mrb[0].mxu0
      %v1058 = vadd.f32 0.0, %v1057
      %v1059 = vpop.f32.mrb[0].mxu0
      %v1060 = vpop.f32.mrb[0].mxu0
      %v1061 = vadd.f32 0.0, %v1060
      %v1062 = vpop.f32.mrb[0].mxu0
      %1063 = vmatprep.mubr.bf16.mxu0 0
      %1064 = vmatmul.mubr.bf16.gmra.mrb[0].mxu0 %v1021
      %v1065 = vpop.f32.mrb[0].mxu0
      %v1066 = vadd.f32 0.0, %v1065
      %v1067 = vpop.f32.mrb[0].mxu0
      %v1068 = vpop.f32.mrb[0].mxu0
      %v1069 = vpop.f32.mrb[0].mxu0
      %1070 = vdwg.mxu0
      %v1071 = vadd.f32 %v975, %v1058
      %v1072 = vadd.f32 %v976, %v1061
      %v1073 = vadd.f32 %v977, %v1066
      %v1074 = vld [vmem:[%s168 + $0x4] sm:$0x8]
      %s1075 = scalar_lea.vmem %s172, 160
      %v1076 = vld [vmem:[%s1075] sm:$0xf]
      %v1077 = vld [vmem:[%s1075 + $0x4] sm:$0xf]
      %v1078 = vld [vmem:[%s1075 + $0x8] sm:$0xf]
      %v1079 = vld [vmem:[%s1075 + $0xc] sm:$0xf]
      %v1081 = vunpack.c.l.b16 %v1074
      %v1082 = vpack.c.b16 %v633, %v1081
      %v1083 = vrot.slane %v1082, 3
      %v1084 = vrot.slane %v986, 3
      %v1085 = vsel %vm545, %v1083, %v1084
      %v1090 = vunpack.c.l.b16 %v1076
      %v1091 = vunpack.c.l.b16 %v1077
      %v1092 = vunpack.c.l.b16 %v1078
      %v1093 = vunpack.c.l.b16 %v1079
      %v1094 = vpack.c.b16 %v1091, %v1090
      %v1095 = vpack.c.b16 %v1093, %v1092
      %v1099 = vsel %vm231, %v1085, 0
      %v1102 = vsel %vm231, %v1084, 0
      %1104 = vmatprep.subr.bf16.mxu0 0
      %1105 = vmatpush1.bf16.msra.mxu0 %v1094
      %1106 = vmatprep.subr.bf16.mxu0 0
      %1107 = vmatpush1.bf16.msra.mxu0 %v1095
      %1108 = vmatprep.subr.bf16.mxu0 0
      %1109 = vmatpush1.bf16.msra.mxu0 0
      %1110 = vmatprep.subr.bf16.mxu0 0
      %1111 = vmatpush1.bf16.msra.mxu0 0
      %1112 = vmatprep.subr.bf16.mxu0 0
      %1113 = vmatpush1.bf16.msra.mxu0 0
      %1114 = vmatprep.subr.bf16.mxu0 0
      %1115 = vmatpush1.bf16.msra.mxu0 0
      %1116 = vmatprep.subr.bf16.mxu0 0
      %1117 = vmatpush1.bf16.msra.mxu0 0
      %1118 = vmatprep.subr.bf16.mxu0 0
      %1119 = vmatpush1.bf16.msra.mxu0 0
      %1120 = vmatprep.subr.bf16.mxu0 0
      %1121 = vmatpush1.bf16.msra.mxu0 0
      %1122 = vmatprep.subr.bf16.mxu0 0
      %1123 = vmatpush1.bf16.msra.mxu0 0
      %1124 = vmatprep.subr.bf16.mxu0 0
      %1125 = vmatpush1.bf16.msra.mxu0 0
      %1126 = vmatprep.subr.bf16.mxu0 0
      %1127 = vmatpush1.bf16.msra.mxu0 0
      %1128 = vmatprep.subr.bf16.mxu0 0
      %1129 = vmatpush1.bf16.msra.mxu0 0
      %1130 = vmatprep.subr.bf16.mxu0 0
      %1131 = vmatpush1.bf16.msra.mxu0 0
      %1132 = vmatprep.subr.bf16.mxu0 0
      %1133 = vmatpush1.bf16.msra.mxu0 0
      %1134 = vmatprep.subr.bf16.mxu0 0
      %1135 = vmatpush1.bf16.msra.mxu0 0
      %1136 = vmatprep.mubr.bf16.mxu0 0
      %1137 = vmatmul.mubr.bf16.gmra.mrb[0].mxu0 %v1099
      %v1138 = vpop.f32.mrb[0].mxu0
      %v1139 = vadd.f32 0.0, %v1138
      %v1140 = vpop.f32.mrb[0].mxu0
      %v1141 = vpop.f32.mrb[0].mxu0
      %v1142 = vadd.f32 0.0, %v1141
      %v1143 = vpop.f32.mrb[0].mxu0
      %1144 = vmatprep.mubr.bf16.mxu0 0
      %1145 = vmatmul.mubr.bf16.gmra.mrb[0].mxu0 %v1102
      %v1146 = vpop.f32.mrb[0].mxu0
      %v1147 = vadd.f32 0.0, %v1146
      %v1148 = vpop.f32.mrb[0].mxu0
      %v1149 = vpop.f32.mrb[0].mxu0
      %v1150 = vpop.f32.mrb[0].mxu0
      %1151 = vdwg.mxu0
      %v1152 = vadd.f32 %v1071, %v1139
      %v1153 = vadd.f32 %v1072, %v1142
      %v1154 = vadd.f32 %v1073, %v1147
      %v1155 = vld [vmem:[%s168 + $0x4] sm:$0x8]
      %v1156 = vld [vmem:[%s168 + $0x8] sm:$0xf]
      %v1157 = vld [vmem:[%s168 + $0xc] sm:$0xf]
      %v1158 = vld [vmem:[%s168 + $0x10] sm:$0x1]
      %s1159 = scalar_lea.vmem %s172, 176
      %v1160 = vld [vmem:[%s1159] sm:$0xf]
      %v1161 = vld [vmem:[%s1159 + $0x4] sm:$0xf]
      %v1162 = vld [vmem:[%s1159 + $0x8] sm:$0xf]
      %v1163 = vld [vmem:[%s1159 + $0xc] sm:$0xf]
      %v1168 = vunpack.c.l.b16 %v1155
      %v1169 = vunpack.c.l.b16 %v1156
      %v1170 = vunpack.c.l.b16 %v1157
      %v1171 = vunpack.c.l.b16 %v1158
      %v1172 = vpack.c.b16 %v1169, %v1168
      %v1173 = vpack.c.b16 %v1171, %v1170
      %v1175 = vshrl.u32 %v1172, 16
      %v1177 = vrot.slane %v1175, 3
      %v1178 = vshll.u32 %v1172, 16
      %v1180 = vrot.slane %v1178, 4
      %v1181 = vor.u32 %v1177, %v1180
      %v1183 = vshrl.u32 %v1173, 16
      %v1185 = vrot.slane %v1183, 3
      %v1186 = vshll.u32 %v1173, 16
      %v1188 = vrot.slane %v1186, 4
      %v1189 = vor.u32 %v1185, %v1188
      %v1190 = vsel %vm637, %v1181, %v1189
      %v1195 = vunpack.c.l.b16 %v1160
      %v1196 = vunpack.c.l.b16 %v1161
      %v1197 = vunpack.c.l.b16 %v1162
      %v1198 = vunpack.c.l.b16 %v1163
      %v1199 = vpack.c.b16 %v1196, %v1195
      %v1200 = vpack.c.b16 %v1198, %v1197
      %v1204 = vsel %vm231, %v1190, 0
      %v1207 = vsel %vm231, %v1189, 0
      %1209 = vmatprep.subr.bf16.mxu0 0
      %1210 = vmatpush1.bf16.msra.mxu0 %v1199
      %1211 = vmatprep.subr.bf16.mxu0 0
      %1212 = vmatpush1.bf16.msra.mxu0 %v1200
      %1213 = vmatprep.subr.bf16.mxu0 0
      %1214 = vmatpush1.bf16.msra.mxu0 0
      %1215 = vmatprep.subr.bf16.mxu0 0
      %1216 = vmatpush1.bf16.msra.mxu0 0
      %1217 = vmatprep.subr.bf16.mxu0 0
      %1218 = vmatpush1.bf16.msra.mxu0 0
      %1219 = vmatprep.subr.bf16.mxu0 0
      %1220 = vmatpush1.bf16.msra.mxu0 0
      %1221 = vmatprep.subr.bf16.mxu0 0
      %1222 = vmatpush1.bf16.msra.mxu0 0
      %1223 = vmatprep.subr.bf16.mxu0 0
      %1224 = vmatpush1.bf16.msra.mxu0 0
      %1225 = vmatprep.subr.bf16.mxu0 0
      %1226 = vmatpush1.bf16.msra.mxu0 0
      %1227 = vmatprep.subr.bf16.mxu0 0
      %1228 = vmatpush1.bf16.msra.mxu0 0
      %1229 = vmatprep.subr.bf16.mxu0 0
      %1230 = vmatpush1.bf16.msra.mxu0 0
      %1231 = vmatprep.subr.bf16.mxu0 0
      %1232 = vmatpush1.bf16.msra.mxu0 0
      %1233 = vmatprep.subr.bf16.mxu0 0
      %1234 = vmatpush1.bf16.msra.mxu0 0
      %1235 = vmatprep.subr.bf16.mxu0 0
      %1236 = vmatpush1.bf16.msra.mxu0 0
      %1237 = vmatprep.subr.bf16.mxu0 0
      %1238 = vmatpush1.bf16.msra.mxu0 0
      %1239 = vmatprep.subr.bf16.mxu0 0
      %1240 = vmatpush1.bf16.msra.mxu0 0
      %1241 = vmatprep.mubr.bf16.mxu0 0
      %1242 = vmatmul.mubr.bf16.gmra.mrb[0].mxu0 %v1204
      %v1243 = vpop.f32.mrb[0].mxu0
      %v1244 = vadd.f32 0.0, %v1243
      %v1245 = vpop.f32.mrb[0].mxu0
      %v1246 = vpop.f32.mrb[0].mxu0
      %v1247 = vadd.f32 0.0, %v1246
      %v1248 = vpop.f32.mrb[0].mxu0
      %1249 = vmatprep.mubr.bf16.mxu0 0
      %1250 = vmatmul.mubr.bf16.gmra.mrb[0].mxu0 %v1207
      %v1251 = vpop.f32.mrb[0].mxu0
      %v1252 = vadd.f32 0.0, %v1251
      %v1253 = vpop.f32.mrb[0].mxu0
      %v1254 = vpop.f32.mrb[0].mxu0
      %v1255 = vpop.f32.mrb[0].mxu0
      %1256 = vdwg.mxu0
      %v1257 = vadd.f32 %v1152, %v1244
      %v1258 = vadd.f32 %v1153, %v1247
      %v1259 = vadd.f32 %v1154, %v1252
      %v1260 = vld [vmem:[%s168 + $0x8] sm:$0xe]
      %v1261 = vld [vmem:[%s168 + $0x10] sm:$0x3]
      %s1262 = scalar_lea.vmem %s172, 192
      %v1263 = vld [vmem:[%s1262] sm:$0xf]
      %v1264 = vld [vmem:[%s1262 + $0x4] sm:$0xf]
      %v1265 = vld [vmem:[%s1262 + $0x8] sm:$0xf]
      %v1266 = vld [vmem:[%s1262 + $0xc] sm:$0xf]
      %v1269 = vunpack.c.l.b16 %v1260
      %v1270 = vunpack.c.l.b16 %v1261
      %v1271 = vpack.c.b16 %v1170, %v1269
      %v1272 = vpack.c.b16 %v1270, %v1270
      %v1273 = vrot.slane %v1271, 1
      %v1274 = vrot.slane %v1272, 1
      %v1275 = vsel %vm363, %v1273, %v1274
      %v1280 = vunpack.c.l.b16 %v1263
      %v1281 = vunpack.c.l.b16 %v1264
      %v1282 = vunpack.c.l.b16 %v1265
      %v1283 = vunpack.c.l.b16 %v1266
      %v1284 = vpack.c.b16 %v1281, %v1280
      %v1285 = vpack.c.b16 %v1283, %v1282
      %v1289 = vsel %vm231, %v1275, 0
      %v1292 = vsel %vm231, %v1274, 0
      %1294 = vmatprep.subr.bf16.mxu0 0
      %1295 = vmatpush1.bf16.msra.mxu0 %v1284
      %1296 = vmatprep.subr.bf16.mxu0 0
      %1297 = vmatpush1.bf16.msra.mxu0 %v1285
      %1298 = vmatprep.subr.bf16.mxu0 0
      %1299 = vmatpush1.bf16.msra.mxu0 0
      %1300 = vmatprep.subr.bf16.mxu0 0
      %1301 = vmatpush1.bf16.msra.mxu0 0
      %1302 = vmatprep.subr.bf16.mxu0 0
      %1303 = vmatpush1.bf16.msra.mxu0 0
      %1304 = vmatprep.subr.bf16.mxu0 0
      %1305 = vmatpush1.bf16.msra.mxu0 0
      %1306 = vmatprep.subr.bf16.mxu0 0
      %1307 = vmatpush1.bf16.msra.mxu0 0
      %1308 = vmatprep.subr.bf16.mxu0 0
      %1309 = vmatpush1.bf16.msra.mxu0 0
      %1310 = vmatprep.subr.bf16.mxu0 0
      %1311 = vmatpush1.bf16.msra.mxu0 0
      %1312 = vmatprep.subr.bf16.mxu0 0
      %1313 = vmatpush1.bf16.msra.mxu0 0
      %1314 = vmatprep.subr.bf16.mxu0 0
      %1315 = vmatpush1.bf16.msra.mxu0 0
      %1316 = vmatprep.subr.bf16.mxu0 0
      %1317 = vmatpush1.bf16.msra.mxu0 0
      %1318 = vmatprep.subr.bf16.mxu0 0
      %1319 = vmatpush1.bf16.msra.mxu0 0
      %1320 = vmatprep.subr.bf16.mxu0 0
      %1321 = vmatpush1.bf16.msra.mxu0 0
      %1322 = vmatprep.subr.bf16.mxu0 0
      %1323 = vmatpush1.bf16.msra.mxu0 0
      %1324 = vmatprep.subr.bf16.mxu0 0
      %1325 = vmatpush1.bf16.msra.mxu0 0
      %1326 = vmatprep.mubr.bf16.mxu0 0
      %1327 = vmatmul.mubr.bf16.gmra.mrb[0].mxu0 %v1289
      %v1328 = vpop.f32.mrb[0].mxu0
      %v1329 = vadd.f32 0.0, %v1328
      %v1330 = vpop.f32.mrb[0].mxu0
      %v1331 = vpop.f32.mrb[0].mxu0
      %v1332 = vadd.f32 0.0, %v1331
      %v1333 = vpop.f32.mrb[0].mxu0
      %1334 = vmatprep.mubr.bf16.mxu0 0
      %1335 = vmatmul.mubr.bf16.gmra.mrb[0].mxu0 %v1292
      %v1336 = vpop.f32.mrb[0].mxu0
      %v1337 = vadd.f32 0.0, %v1336
      %v1338 = vpop.f32.mrb[0].mxu0
      %v1339 = vpop.f32.mrb[0].mxu0
      %v1340 = vpop.f32.mrb[0].mxu0
      %1341 = vdwg.mxu0
      %v1342 = vadd.f32 %v1257, %v1329
      %v1343 = vadd.f32 %v1258, %v1332
      %v1344 = vadd.f32 %v1259, %v1337
      %v1345 = vld [vmem:[%s168 + $0x10] sm:$0x7]
      %s1346 = scalar_lea.vmem %s172, 208
      %v1347 = vld [vmem:[%s1346] sm:$0xf]
      %v1348 = vld [vmem:[%s1346 + $0x4] sm:$0xf]
      %v1349 = vld [vmem:[%s1346 + $0x8] sm:$0xf]
      %v1350 = vld [vmem:[%s1346 + $0xc] sm:$0xf]
      %v1352 = vunpack.c.l.b16 %v1345
      %v1353 = vpack.c.b16 %v1352, %v1352
      %v1355 = vshrl.u32 %v1271, 16
      %v1357 = vrot.slane %v1355, 1
      %v1358 = vshll.u32 %v1271, 16
      %v1360 = vrot.slane %v1358, 2
      %v1361 = vor.u32 %v1357, %v1360
      %v1363 = vshrl.u32 %v1353, 16
      %v1365 = vrot.slane %v1363, 1
      %v1366 = vshll.u32 %v1353, 16
      %v1368 = vrot.slane %v1366, 2
      %v1369 = vor.u32 %v1365, %v1368
      %v1370 = vsel %vm445, %v1361, %v1369
      %v1375 = vunpack.c.l.b16 %v1347
      %v1376 = vunpack.c.l.b16 %v1348
      %v1377 = vunpack.c.l.b16 %v1349
      %v1378 = vunpack.c.l.b16 %v1350
      %v1379 = vpack.c.b16 %v1376, %v1375
      %v1380 = vpack.c.b16 %v1378, %v1377
      %v1384 = vsel %vm231, %v1370, 0
      %v1387 = vsel %vm231, %v1369, 0
      %1389 = vmatprep.subr.bf16.mxu0 0
      %1390 = vmatpush1.bf16.msra.mxu0 %v1379
      %1391 = vmatprep.subr.bf16.mxu0 0
      %1392 = vmatpush1.bf16.msra.mxu0 %v1380
      %1393 = vmatprep.subr.bf16.mxu0 0
      %1394 = vmatpush1.bf16.msra.mxu0 0
      %1395 = vmatprep.subr.bf16.mxu0 0
      %1396 = vmatpush1.bf16.msra.mxu0 0
      %1397 = vmatprep.subr.bf16.mxu0 0
      %1398 = vmatpush1.bf16.msra.mxu0 0
      %1399 = vmatprep.subr.bf16.mxu0 0
      %1400 = vmatpush1.bf16.msra.mxu0 0
      %1401 = vmatprep.subr.bf16.mxu0 0
      %1402 = vmatpush1.bf16.msra.mxu0 0
      %1403 = vmatprep.subr.bf16.mxu0 0
      %1404 = vmatpush1.bf16.msra.mxu0 0
      %1405 = vmatprep.subr.bf16.mxu0 0
      %1406 = vmatpush1.bf16.msra.mxu0 0
      %1407 = vmatprep.subr.bf16.mxu0 0
      %1408 = vmatpush1.bf16.msra.mxu0 0
      %1409 = vmatprep.subr.bf16.mxu0 0
      %1410 = vmatpush1.bf16.msra.mxu0 0
      %1411 = vmatprep.subr.bf16.mxu0 0
      %1412 = vmatpush1.bf16.msra.mxu0 0
      %1413 = vmatprep.subr.bf16.mxu0 0
      %1414 = vmatpush1.bf16.msra.mxu0 0
      %1415 = vmatprep.subr.bf16.mxu0 0
      %1416 = vmatpush1.bf16.msra.mxu0 0
      %1417 = vmatprep.subr.bf16.mxu0 0
      %1418 = vmatpush1.bf16.msra.mxu0 0
      %1419 = vmatprep.subr.bf16.mxu0 0
      %1420 = vmatpush1.bf16.msra.mxu0 0
      %1421 = vmatprep.mubr.bf16.mxu0 0
      %1422 = vmatmul.mubr.bf16.gmra.mrb[0].mxu0 %v1384
      %v1423 = vpop.f32.mrb[0].mxu0
      %v1424 = vadd.f32 0.0, %v1423
      %v1425 = vpop.f32.mrb[0].mxu0
      %v1426 = vpop.f32.mrb[0].mxu0
      %v1427 = vadd.f32 0.0, %v1426
      %v1428 = vpop.f32.mrb[0].mxu0
      %1429 = vmatprep.mubr.bf16.mxu0 0
      %1430 = vmatmul.mubr.bf16.gmra.mrb[0].mxu0 %v1387
      %v1431 = vpop.f32.mrb[0].mxu0
      %v1432 = vadd.f32 0.0, %v1431
      %v1433 = vpop.f32.mrb[0].mxu0
      %v1434 = vpop.f32.mrb[0].mxu0
      %v1435 = vpop.f32.mrb[0].mxu0
      %1436 = vdwg.mxu0
      %v1437 = vadd.f32 %v1342, %v1424
      %v1438 = vadd.f32 %v1343, %v1427
      %v1439 = vadd.f32 %v1344, %v1432
      %v1440 = vld [vmem:[%s168 + $0x8] sm:$0xc]
      %s1441 = scalar_lea.vmem %s172, 224
      %v1442 = vld [vmem:[%s1441] sm:$0xf]
      %v1443 = vld [vmem:[%s1441 + $0x4] sm:$0xf]
      %v1444 = vld [vmem:[%s1441 + $0x8] sm:$0xf]
      %v1445 = vld [vmem:[%s1441 + $0xc] sm:$0xf]
      %v1447 = vunpack.c.l.b16 %v1440
      %v1448 = vpack.c.b16 %v1170, %v1447
      %v1449 = vrot.slane %v1448, 2
      %v1450 = vrot.slane %v1353, 2
      %v1451 = vsel %vm905, %v1449, %v1450
      %v1456 = vunpack.c.l.b16 %v1442
      %v1457 = vunpack.c.l.b16 %v1443
      %v1458 = vunpack.c.l.b16 %v1444
      %v1459 = vunpack.c.l.b16 %v1445
      %v1460 = vpack.c.b16 %v1457, %v1456
      %v1461 = vpack.c.b16 %v1459, %v1458
      %v1465 = vsel %vm231, %v1451, 0
      %v1468 = vsel %vm231, %v1450, 0
      %1470 = vmatprep.subr.bf16.mxu0 0
      %1471 = vmatpush1.bf16.msra.mxu0 %v1460
      %1472 = vmatprep.subr.bf16.mxu0 0
      %1473 = vmatpush1.bf16.msra.mxu0 %v1461
      %1474 = vmatprep.subr.bf16.mxu0 0
      %1475 = vmatpush1.bf16.msra.mxu0 0
      %1476 = vmatprep.subr.bf16.mxu0 0
      %1477 = vmatpush1.bf16.msra.mxu0 0
      %1478 = vmatprep.subr.bf16.mxu0 0
      %1479 = vmatpush1.bf16.msra.mxu0 0
      %1480 = vmatprep.subr.bf16.mxu0 0
      %1481 = vmatpush1.bf16.msra.mxu0 0
      %1482 = vmatprep.subr.bf16.mxu0 0
      %1483 = vmatpush1.bf16.msra.mxu0 0
      %1484 = vmatprep.subr.bf16.mxu0 0
      %1485 = vmatpush1.bf16.msra.mxu0 0
      %1486 = vmatprep.subr.bf16.mxu0 0
      %1487 = vmatpush1.bf16.msra.mxu0 0
      %1488 = vmatprep.subr.bf16.mxu0 0
      %1489 = vmatpush1.bf16.msra.mxu0 0
      %1490 = vmatprep.subr.bf16.mxu0 0
      %1491 = vmatpush1.bf16.msra.mxu0 0
      %1492 = vmatprep.subr.bf16.mxu0 0
      %1493 = vmatpush1.bf16.msra.mxu0 0
      %1494 = vmatprep.subr.bf16.mxu0 0
      %1495 = vmatpush1.bf16.msra.mxu0 0
      %1496 = vmatprep.subr.bf16.mxu0 0
      %1497 = vmatpush1.bf16.msra.mxu0 0
      %1498 = vmatprep.subr.bf16.mxu0 0
      %1499 = vmatpush1.bf16.msra.mxu0 0
      %1500 = vmatprep.subr.bf16.mxu0 0
      %1501 = vmatpush1.bf16.msra.mxu0 0
      %1502 = vmatprep.mubr.bf16.mxu0 0
      %1503 = vmatmul.mubr.bf16.gmra.mrb[0].mxu0 %v1465
      %v1504 = vpop.f32.mrb[0].mxu0
      %v1505 = vadd.f32 0.0, %v1504
      %v1506 = vpop.f32.mrb[0].mxu0
      %v1507 = vpop.f32.mrb[0].mxu0
      %v1508 = vadd.f32 0.0, %v1507
      %v1509 = vpop.f32.mrb[0].mxu0
      %1510 = vmatprep.mubr.bf16.mxu0 0
      %1511 = vmatmul.mubr.bf16.gmra.mrb[0].mxu0 %v1468
      %v1512 = vpop.f32.mrb[0].mxu0
      %v1513 = vadd.f32 0.0, %v1512
      %v1514 = vpop.f32.mrb[0].mxu0
      %v1515 = vpop.f32.mrb[0].mxu0
      %v1516 = vpop.f32.mrb[0].mxu0
      %1517 = vdwg.mxu0
      %v1518 = vadd.f32 %v1437, %v1505
      %v1519 = vadd.f32 %v1438, %v1508
      %v1520 = vadd.f32 %v1439, %v1513
      %v1521 = vld [vmem:[%s168 + $0x10] sm:$0xf]
      %s1522 = scalar_lea.vmem %s172, 240
      %v1523 = vld [vmem:[%s1522] sm:$0xf]
      %v1524 = vld [vmem:[%s1522 + $0x4] sm:$0xf]
      %v1525 = vld [vmem:[%s1522 + $0x8] sm:$0xf]
      %v1526 = vld [vmem:[%s1522 + $0xc] sm:$0xf]
      %v1528 = vunpack.c.l.b16 %v1521
      %v1529 = vpack.c.b16 %v1528, %v1528
      %v1531 = vshrl.u32 %v1448, 16
      %v1533 = vrot.slane %v1531, 2
      %v1534 = vshll.u32 %v1448, 16
      %v1536 = vrot.slane %v1534, 3
      %v1537 = vor.u32 %v1533, %v1536
      %v1539 = vshrl.u32 %v1529, 16
      %v1541 = vrot.slane %v1539, 2
      %v1542 = vshll.u32 %v1529, 16
      %v1544 = vrot.slane %v1542, 3
      %v1545 = vor.u32 %v1541, %v1544
      %v1546 = vsel %vm987, %v1537, %v1545
      %v1551 = vunpack.c.l.b16 %v1523
      %v1552 = vunpack.c.l.b16 %v1524
      %v1553 = vunpack.c.l.b16 %v1525
      %v1554 = vunpack.c.l.b16 %v1526
      %v1555 = vpack.c.b16 %v1552, %v1551
      %v1556 = vpack.c.b16 %v1554, %v1553
      %v1560 = vsel %vm231, %v1546, 0
      %v1563 = vsel %vm231, %v1545, 0
      %1565 = vmatprep.subr.bf16.mxu0 0
      %1566 = vmatpush1.bf16.msra.mxu0 %v1555
      %1567 = vmatprep.subr.bf16.mxu0 0
      %1568 = vmatpush1.bf16.msra.mxu0 %v1556
      %1569 = vmatprep.subr.bf16.mxu0 0
      %1570 = vmatpush1.bf16.msra.mxu0 0
      %1571 = vmatprep.subr.bf16.mxu0 0
      %1572 = vmatpush1.bf16.msra.mxu0 0
      %1573 = vmatprep.subr.bf16.mxu0 0
      %1574 = vmatpush1.bf16.msra.mxu0 0
      %1575 = vmatprep.subr.bf16.mxu0 0
      %1576 = vmatpush1.bf16.msra.mxu0 0
      %1577 = vmatprep.subr.bf16.mxu0 0
      %1578 = vmatpush1.bf16.msra.mxu0 0
      %1579 = vmatprep.subr.bf16.mxu0 0
      %1580 = vmatpush1.bf16.msra.mxu0 0
      %1581 = vmatprep.subr.bf16.mxu0 0
      %1582 = vmatpush1.bf16.msra.mxu0 0
      %1583 = vmatprep.subr.bf16.mxu0 0
      %1584 = vmatpush1.bf16.msra.mxu0 0
      %1585 = vmatprep.subr.bf16.mxu0 0
      %1586 = vmatpush1.bf16.msra.mxu0 0
      %1587 = vmatprep.subr.bf16.mxu0 0
      %1588 = vmatpush1.bf16.msra.mxu0 0
      %1589 = vmatprep.subr.bf16.mxu0 0
      %1590 = vmatpush1.bf16.msra.mxu0 0
      %1591 = vmatprep.subr.bf16.mxu0 0
      %1592 = vmatpush1.bf16.msra.mxu0 0
      %1593 = vmatprep.subr.bf16.mxu0 0
      %1594 = vmatpush1.bf16.msra.mxu0 0
      %1595 = vmatprep.subr.bf16.mxu0 0
      %1596 = vmatpush1.bf16.msra.mxu0 0
      %1597 = vmatprep.mubr.bf16.mxu0 0
      %1598 = vmatmul.mubr.bf16.gmra.mrb[0].mxu0 %v1560
      %v1599 = vpop.f32.mrb[0].mxu0
      %v1600 = vadd.f32 0.0, %v1599
      %v1601 = vpop.f32.mrb[0].mxu0
      %v1602 = vpop.f32.mrb[0].mxu0
      %v1603 = vadd.f32 0.0, %v1602
      %v1604 = vpop.f32.mrb[0].mxu0
      %1605 = vmatprep.mubr.bf16.mxu0 0
      %1606 = vmatmul.mubr.bf16.gmra.mrb[0].mxu0 %v1563
      %v1607 = vpop.f32.mrb[0].mxu0
      %v1608 = vadd.f32 0.0, %v1607
      %v1609 = vpop.f32.mrb[0].mxu0
      %v1610 = vpop.f32.mrb[0].mxu0
      %v1611 = vpop.f32.mrb[0].mxu0
      %1612 = vdwg.mxu0
      %v1613 = vadd.f32 %v1518, %v1600
      %v1614 = vadd.f32 %v1519, %v1603
      %v1615 = vadd.f32 %v1520, %v1608
      %v1616 = vlaneseq
      %v1617 = vshrl.u32 %v1616, 7
      %v1618 = vadd.s32 %v1617, 8
      %v1619 = vadd.s32 %v1617, 16
      %vm1620 = vcmp.lt.s32.totalorder %v1617, 0
      %v1621 = vsub.s32 0, %v1617
      %v1622 = vsel %vm1620, %v1621, %v1617
      %v1623 = vmul.u32.u64.compose %v1622, 2863311531
      %v1624 = vextract.low.u32 %v1623
      %v1625 = vextract.high.u32 %v1623
      %v1626 = vshrl.u32 %v1625, 2
      %v1627 = vmul.u32 %v1626, 6
      %v1628 = vsub.s32 %v1622, %v1627
      %v1629 = vsub.s32 0, %v1628
      %v1630 = vsel %vm1620, %v1629, %v1628
      %vm1631 = vcmp.lt.s32.totalorder %v1618, 0
      %v1632 = vsub.s32 0, %v1618
      %v1633 = vsel %vm1631, %v1632, %v1618
      %v1634 = vmul.u32.u64.compose %v1633, 2863311531
      %v1635 = vextract.low.u32 %v1634
      %v1636 = vextract.high.u32 %v1634
      %v1637 = vshrl.u32 %v1636, 2
      %v1638 = vmul.u32 %v1637, 6
      %v1639 = vsub.s32 %v1633, %v1638
      %v1640 = vsub.s32 0, %v1639
      %v1641 = vsel %vm1631, %v1640, %v1639
      %vm1642 = vcmp.lt.s32.totalorder %v1619, 0
      %v1643 = vsub.s32 0, %v1619
      %v1644 = vsel %vm1642, %v1643, %v1619
      %v1645 = vmul.u32.u64.compose %v1644, 2863311531
      %v1646 = vextract.low.u32 %v1645
      %v1647 = vextract.high.u32 %v1645
      %v1648 = vshrl.u32 %v1647, 2
      %v1649 = vmul.u32 %v1648, 6
      %v1650 = vsub.s32 %v1644, %v1649
      %v1651 = vsub.s32 0, %v1650
      %v1652 = vsel %vm1642, %v1651, %v1650
      %vm1653 = vcmp.ne.s32.totalorder %v1630, 0
      %vm1654 = vcmp.ne.s32.totalorder %v1641, 0
      %vm1655 = vcmp.ne.s32.totalorder %v1652, 0
      %vm1656 = vcmp.lt.s32.totalorder %v1630, 0
      %vm1657 = vcmp.lt.s32.totalorder %v1641, 0
      %vm1658 = vcmp.lt.s32.totalorder %v1652, 0
      %vm1659 = vmand %vm1656, %vm1653
      %vm1660 = vmand %vm1657, %vm1654
      %vm1661 = vmand %vm1658, %vm1655
      %v1662 = vadd.s32 %v1630, 6
      %v1663 = vadd.s32 %v1641, 6
      %v1664 = vadd.s32 %v1652, 6
      %v1665 = vsel %vm1659, %v1662, %v1630
      %v1666 = vsel %vm1660, %v1663, %v1641
      %v1667 = vsel %vm1661, %v1664, %v1652
      %vm1668 = vcmp.lt.s32.totalorder %v1665, 3
      %vm1669 = vcmp.lt.s32.totalorder %v1666, 3
      %vm1670 = vcmp.lt.s32.totalorder %v1667, 3
      %v1671 = vsel %vm1668, 1, 0
      %v1672 = vsel %vm1669, 1, 0
      %v1673 = vsel %vm1670, 1, 0
      %vm1674 = vcmp.eq.s32.totalorder %v1671, 1
      %vm1675 = vcmp.eq.s32.totalorder %v1672, 1
      %vm1676 = vcmp.eq.s32.totalorder %v1673, 1
      %v1677 = vsel %vm1674, %v1613, 0.0
      %v1678 = vsel %vm1675, %v1614, 0.0
      %v1679 = vsel %vm1676, %v1615, 0.0
      %vm1680 = vcmask 523264
      %v1681 = vsel %vm1680, %v1677, 0.0
      %v1682 = vsel %vm1680, %v1678, 0.0
      %v1683 = vadd.f32 %v1681, %v1682
      %vm1684 = vcmask 517120
      %v1685 = vsel %vm1684, %v1679, 0.0
      %v1686 = vadd.f32 %v1683, %v1685
      %v1687 = vrot.slane %v1686, 4
      %v1688 = vadd.f32 %v1686, %v1687
      %v1689 = vrot.slane %v1688, 2
      %v1690 = vadd.f32 %v1688, %v1689
      %v1691 = vrot.slane %v1690, 1
      %v1692 = vadd.f32 %v1690, %v1691
      %v1693 = vmul.f32 %v1692, 0.11111111
      %v1694 = vsub.f32 %v1613, %v1693
      %v1695 = vsub.f32 %v1614, %v1693
      %v1696 = vsub.f32 %v1615, %v1693
      %v1697 = vsel %vm1674, %v1694, 0.0
      %v1698 = vsel %vm1675, %v1695, 0.0
      %v1699 = vsel %vm1676, %v1696, 0.0
      %v1700 = vmul.f32 %v1697, %v1697
      %v1701 = vmul.f32 %v1698, %v1698
      %v1702 = vmul.f32 %v1699, %v1699
      %v1703 = vsel %vm1680, %v1700, 0.0
      %v1704 = vsel %vm1680, %v1701, 0.0
      %v1705 = vadd.f32 %v1703, %v1704
      %v1706 = vsel %vm1684, %v1702, 0.0
      %v1707 = vadd.f32 %v1705, %v1706
      %v1708 = vrot.slane %v1707, 4
      %v1709 = vadd.f32 %v1707, %v1708
      %v1710 = vrot.slane %v1709, 2
      %v1711 = vadd.f32 %v1709, %v1710
      %v1712 = vrot.slane %v1711, 1
      %v1713 = vadd.f32 %v1711, %v1712
      %v1714 = vmul.f32 %v1713, 0.11111111
      %v1715 = vadd.f32 %v1714, 1e-05
      %v1716 = vrsqrt.pop %v1715
      %v1717 = vmul.f32 %v1694, %v1716
      %v1718 = vmul.f32 %v1695, %v1716
      %v1719 = vmul.f32 %v1696, %v1716
      %vm1720 = vcmp.ge.f32.partialorder %v1717, 0.0
      %vm1721 = vcmp.ge.f32.partialorder %v1718, 0.0
      %vm1722 = vcmp.ge.f32.partialorder %v1719, 0.0
      %v1723 = vmul.f32 %v1717, 0.2
      %v1724 = vmul.f32 %v1718, 0.2
      %v1725 = vmul.f32 %v1719, 0.2
      %v1726 = vsel %vm1720, %v1717, %v1723
      %v1727 = vsel %vm1721, %v1718, %v1724
      %v1728 = vsel %vm1722, %v1719, %v1725
      %v1729 = vpack.c.bf16 %v1727, %v1726
      %v1730 = vpack.c.bf16 %v1728, %v1728
      %v1733 = vunpack.c.l.b16 %v1729
      %v1734 = vunpack.c.h.b16 %v1729
      %v1735 = vunpack.c.l.b16 %v1730
      %v1736 = vpack.c.b16 %v1733, %v1733
      %v1737 = vpack.c.b16 %v1734, %v1734
      %v1738 = vpack.c.b16 %v1735, %v1735
      %vm1742 = vcmask 519168
      %1743 = vst.msk [vmem:[%s180] sm:$0xf] %vm1742, %v1736
      %1744 = vst.msk [vmem:[%s180 + $0x4] sm:$0xf] %vm1742, %v1737
      %vm1745 = vcmask 516096
      %1746 = vst.msk [vmem:[%s180 + $0x8] sm:$0x1] %vm1745, %v1738
      %p1747 = scmp.lt.s32.totalorder %s17, 1
      %s1748 = scalar_select %p1747, %s17, 1
      %p1749 = scmp.lt.s32.totalorder %s18, 0
      %s1750 = scalar_select %p1749, %s18, 0
      %s1751 = smul.addr %s1748, 3
      %s1752 = sadd.s32 %s1750, %s1751
      %s1753 = smul.addr %s1752, 4
      %s1754 = scalar_lea.vmem %s2, %s1753
      // Predicated region
      $region29: #{_lambda_.8} parent=27 // pred_check
        %p1755 = pneg %p97
      $region30: #{_lambda_.8} parent=27 // pred_check_branch
        %1757 = sbr.rel (%p1755) target = $region32
      $region31: #{_lambda_.8} parent=27 // pred_region
        _
      $region32: #{_lambda_.8} parent=27 // pred_fallthru
        _
    $region28: #{_lambda_.8} parent=5 // pred_fallthru
      _
    %p1758 = scmp.le.s32.totalorder 2, %s8
    // Predicated region
    $region33: #{_lambda_.8} parent=5 // pred_check
      %p1759 = pneg %p1758
    $region34: #{_lambda_.8} parent=5 // pred_check_branch
      %1761 = sbr.rel (%p1759) target = $region36
    $region35: #{_lambda_.8} parent=5 // pred_region
      %s1762 = ssub.s32 %s8, 2
      // Predicated region
      $region37: #{_lambda_.8} parent=35 // pred_check
        %p1763 = pneg %p103
      $region38: #{_lambda_.8} parent=35 // pred_check_branch
        %1765 = sbr.rel (%p1763) target = $region40
      $region39: #{_lambda_.8} parent=35 // pred_region
        %p1766 = scmp.lt.s32.totalorder %s19, 1
        %s1767 = scalar_select %p1766, %s19, 1
        %p1768 = scmp.lt.s32.totalorder %s20, 0
        %s1769 = scalar_select %p1768, %s20, 0
        %s1770 = smul.addr %s1767, 3
        %s1771 = sadd.s32 %s1769, %s1770
        %s1772 = smul.addr %s1771, 4
        %s1773 = scalar_lea.vmem %s2, %s1772
      $region40: #{_lambda_.8} parent=35 // pred_fallthru
        _
    $region36: #{_lambda_.8} parent=5 // pred_fallthru
      _
  $region6: #{_lambda_.8} parent=0 // loop_footer
    %s12 = sadd.s32 1, %s8
  $region7: #{_lambda_.8} parent=0 // loop_footer_branch
    %7 = sbr.rel target = $region3
  $region8: #{_lambda_.8} parent=0 // loop_exit
    _

// kernel: _lambda_.9
$region0: #{_lambda_.9}
  #allocation0 [shape = 'u32[]', space=smem, size = 0x4, offset = 0x4, fixed_abs, tag = 'smem constant byte address 0x4 - core index']
  #allocation1 [shape = 'u32[144,128]{1,0:T(1,128)}', space=vmem, size = 0x12000, scoped, tag = 'internal scratch']
  #allocation2 [shape = 'f32[1,1]{1,0:T(1,128)S(1)}', space=vmem, size = 0x200, scoped, tag = 'scoped memory for _lambda_.9']
  %s0 = inlined_call_operand.vmem [shape: bf16[2,30,64], index: 0, kind: input, shape index: {}]
  %s1 = inlined_call_operand.vmem [shape: bf16[16,64,1], index: 1, kind: input, shape index: {}]
  %s2 = inlined_call_operand.<no memory space> [shape: f32[1,1], index: 2, kind: input, shape index: {}]
  %s3 = inlined_call_operand.vmem [shape: f32[2,10,1], index: 3, kind: output, shape index: {}]
  %s4 = sld [smem:[#allocation0]]
  $region45: #{_lambda_.9} parent=0
    _
  %s6 = ssub.s32 1, %s4
  %s7 = scalar_select 0, %s6, %s4
  %v8 = vstv %s2
  %9 = vst [vmem:[#allocation2] sm:$0x1] %v8
  loop: start=0, step=1, limit=4
  $region2: #{_lambda_.9} parent=0 // loop_pre_header
    _
  $region3: #{_lambda_.9} parent=0 // loop_header
    %s11 = sphi 0, %s15
    %p12 = scmp.ge.s32.totalorder %s11, 4
    %s18 = sphi 0, %s30
    %s19 = sphi 0, %s26
    %s20 = sphi 0, %s18
    %s21 = sphi 0, %s19
    %s22 = sphi 0, %s20
    %s23 = sphi 0, %s21
    %s33 = sphi 0, %s35
    %s36 = sphi 0, %s33
    %s37 = sphi 0, %s36
    %s53 = sphi 0, %s37
    %s59 = sphi 0, %s61
    %s62 = sphi 0, %s59
    %s63 = sphi 0, %s62
    %s79 = sphi 0, %s63
    %s85 = sphi 0, %s87
    %s88 = sphi 0, %s85
    %s89 = sphi 0, %s88
    %s105 = sphi 0, %s89
    %s113 = sphi 0, %s115
    %s116 = sphi 0, %s113
    %s117 = sphi 0, %s116
    %s133 = sphi 0, %s117
  $region4: #{_lambda_.9} parent=0 // loop_header_branch
    %14 = sbr.rel (%p12) target = $region8
  $region5: #{_lambda_.9} parent=0 // loop_body
    %s16 = ssub.s32 %s11, 1
    %s17 = ssub.s32 %s11, 2
    %s24 = sadd.s32 1, %s19
    %p25 = scmp.ge.s32.totalorder %s24, 1
    %s26 = scalar_select %p25, 0, %s24
    %s27 = sadd.s32 1, %s18
    %s28 = scalar_select %p25, %s27, %s18
    %p29 = scmp.ge.s32.totalorder %s28, 2
    %s30 = scalar_select %p29, 0, %s28
    %s31 = ssub.s32 %s18, %s30
    %p32 = scmp.eq.s32.totalorder %s31, 0
    %s34 = sadd.s32 %s33, 1
    %s35 = scalar_select %p32, %s33, %s34
    %p38 = pneg %p32
    %p39 = scmp.eq.s32.totalorder %s11, 1
    %p40 = por %p38, %p39
    %p41 = scmp.ne.s32.totalorder %s33, %s36
    %p42 = scmp.eq.s32.totalorder %s11, 0
    %p43 = por %p41, %p42
    %p44 = scmp.ne.s32.totalorder %s33, %s36
    %p45 = scmp.eq.s32.totalorder %s16, 1
    %p46 = por %p44, %p45
    %p47 = scmp.ne.s32.totalorder %s36, %s37
    %p48 = scmp.eq.s32.totalorder %s16, 0
    %p49 = por %p47, %p48
    %p50 = scmp.ne.s32.totalorder %s36, %s37
    %p51 = scmp.eq.s32.totalorder %s17, 1
    %p52 = por %p50, %p51
    %p54 = scmp.ne.s32.totalorder %s37, %s53
    %p55 = scmp.eq.s32.totalorder %s17, 0
    %p56 = por %p54, %p55
    %s57 = ssub.s32 %s19, %s26
    %p58 = scmp.eq.s32.totalorder %s57, 0
    %s60 = sadd.s32 %s59, 1
    %s61 = scalar_select %p58, %s59, %s60
    %p64 = pneg %p58
    %p65 = scmp.eq.s32.totalorder %s11, 1
    %p66 = por %p64, %p65
    %p67 = scmp.ne.s32.totalorder %s59, %s62
    %p68 = scmp.eq.s32.totalorder %s11, 0
    %p69 = por %p67, %p68
    %p70 = scmp.ne.s32.totalorder %s59, %s62
    %p71 = scmp.eq.s32.totalorder %s16, 1
    %p72 = por %p70, %p71
    %p73 = scmp.ne.s32.totalorder %s62, %s63
    %p74 = scmp.eq.s32.totalorder %s16, 0
    %p75 = por %p73, %p74
    %p76 = scmp.ne.s32.totalorder %s62, %s63
    %p77 = scmp.eq.s32.totalorder %s17, 1
    %p78 = por %p76, %p77
    %p80 = scmp.ne.s32.totalorder %s63, %s79
    %p81 = scmp.eq.s32.totalorder %s17, 0
    %p82 = por %p80, %p81
    %s83 = ssub.s32 %s19, %s26
    %p84 = scmp.eq.s32.totalorder %s83, 0
    %s86 = sadd.s32 %s85, 1
    %s87 = scalar_select %p84, %s85, %s86
    %p90 = pneg %p84
    %p91 = scmp.eq.s32.totalorder %s11, 1
    %p92 = por %p90, %p91
    %p93 = scmp.ne.s32.totalorder %s85, %s88
    %p94 = scmp.eq.s32.totalorder %s11, 0
    %p95 = por %p93, %p94
    %p96 = scmp.ne.s32.totalorder %s85, %s88
    %p97 = scmp.eq.s32.totalorder %s16, 1
    %p98 = por %p96, %p97
    %p99 = scmp.ne.s32.totalorder %s88, %s89
    %p100 = scmp.eq.s32.totalorder %s16, 0
    %p101 = por %p99, %p100
    %p102 = scmp.ne.s32.totalorder %s88, %s89
    %p103 = scmp.eq.s32.totalorder %s17, 1
    %p104 = por %p102, %p103
    %p106 = scmp.ne.s32.totalorder %s89, %s105
    %p107 = scmp.eq.s32.totalorder %s17, 0
    %p108 = por %p106, %p107
    %s109 = ssub.s32 %s18, %s30
    %s110 = ssub.s32 %s19, %s26
    %s111 = sor.u32 %s109, %s110
    %p112 = scmp.eq.s32.totalorder %s111, 0
    %s114 = sadd.s32 %s113, 1
    %s115 = scalar_select %p112, %s113, %s114
    %p118 = pneg %p112
    %p119 = scmp.eq.s32.totalorder %s11, 1
    %p120 = por %p118, %p119
    %p121 = scmp.ne.s32.totalorder %s113, %s116
    %p122 = scmp.eq.s32.totalorder %s11, 0
    %p123 = por %p121, %p122
    %p124 = scmp.ne.s32.totalorder %s113, %s116
    %p125 = scmp.eq.s32.totalorder %s16, 1
    %p126 = por %p124, %p125
    %p127 = scmp.ne.s32.totalorder %s116, %s117
    %p128 = scmp.eq.s32.totalorder %s16, 0
    %p129 = por %p127, %p128
    %p130 = scmp.ne.s32.totalorder %s116, %s117
    %p131 = scmp.eq.s32.totalorder %s17, 1
    %p132 = por %p130, %p131
    %p134 = scmp.ne.s32.totalorder %s117, %s133
    %p135 = scmp.eq.s32.totalorder %s17, 0
    %p136 = por %p134, %p135
    %p137 = scmp.le.s32.totalorder 1, %s11
    %p138 = scmp.lt.s32.totalorder %s11, 3
    %p139 = pnand %p137, %p138
    %p140 = pneg %p139
    // Predicated region
    $region9: #{_lambda_.9} parent=5 // pred_check
      _
    $region10: #{_lambda_.9} parent=5 // pred_check_branch
      %142 = sbr.rel (%p139) target = $region12
    $region11: #{_lambda_.9} parent=5 // pred_region
      %s143 = ssub.s32 %s11, 1
      // Predicated region
      $region13: #{_lambda_.9} parent=11 // pred_check
        %p144 = pneg %p75
      $region14: #{_lambda_.9} parent=11 // pred_check_branch
        %146 = sbr.rel (%p144) target = $region16
      $region15: #{_lambda_.9} parent=11 // pred_region
        %p147 = scmp.lt.s32.totalorder %s21, 0
        %s148 = scalar_select %p147, %s21, 0
        %s149 = smul.addr %s148, 4
        %s150 = scalar_lea.vmem %s1, %s149
      $region16: #{_lambda_.9} parent=11 // pred_fallthru
        _
      // Predicated region
      $region17: #{_lambda_.9} parent=11 // pred_check
        %p151 = pneg %p101
      $region18: #{_lambda_.9} parent=11 // pred_check_branch
        %153 = sbr.rel (%p151) target = $region20
      $region19: #{_lambda_.9} parent=11 // pred_region
        %p154 = scmp.lt.s32.totalorder %s21, 0
        %s155 = scalar_select %p154, %s21, 0
        %s156 = scalar_lea.vmem [#allocation2], %s155
      $region20: #{_lambda_.9} parent=11 // pred_fallthru
        _
    $region12: #{_lambda_.9} parent=5 // pred_fallthru
      _
    %p157 = scmp.lt.s32.totalorder %s11, 2
    // Predicated region
    $region21: #{_lambda_.9} parent=5 // pred_check
      %p158 = pneg %p157
    $region22: #{_lambda_.9} parent=5 // pred_check_branch
      %160 = sbr.rel (%p158) target = $region24
    $region23: #{_lambda_.9} parent=5 // pred_region
      // Predicated region
      $region25: #{_lambda_.9} parent=23 // pred_check
        %p161 = pneg %p43
      $region26: #{_lambda_.9} parent=23 // pred_check_branch
        %163 = sbr.rel (%p161) target = $region28
      $region27: #{_lambda_.9} parent=23 // pred_region
        %p164 = scmp.lt.s32.totalorder %s18, 1
        %s165 = scalar_select %p164, %s18, 1
        %s166 = smul.addr %s165, 4
        %s167 = smul.addr %s166, 4
        %s168 = scalar_lea.vmem %s0, %s167
      $region28: #{_lambda_.9} parent=23 // pred_fallthru
        _
    $region24: #{_lambda_.9} parent=5 // pred_fallthru
      _
    %p169 = scmp.le.s32.totalorder 1, %s11
    %p170 = scmp.lt.s32.totalorder %s11, 3
    %p171 = pnand %p169, %p170
    %p172 = pneg %p171
    // Predicated region
    $region29: #{_lambda_.9} parent=5 // pred_check
      _
    $region30: #{_lambda_.9} parent=5 // pred_check_branch
      %174 = sbr.rel (%p171) target = $region32
    $region31: #{_lambda_.9} parent=5 // pred_region
      %s175 = ssub.s32 %s11, 1
      %p176 = scmp.lt.s32.totalorder %s20, 1
      %s177 = scalar_select %p176, %s20, 1
      %s178 = smul.addr %s177, 4
      %s179 = smul.addr %s178, 4
      %s180 = scalar_lea.vmem %s0, %s179
      %p181 = pneg %p49
      %p182 = pneg %p46
      %p183 = scmp.lt.s32.totalorder %s21, 0
      %s184 = scalar_select %p183, %s21, 0
      %s185 = smul.addr %s184, 4
      %s186 = scalar_lea.vmem %s1, %s185
      %p187 = pneg %p75
      %p188 = pneg %p72
      %p189 = scmp.lt.s32.totalorder %s21, 0
      %s190 = scalar_select %p189, %s21, 0
      %s191 = scalar_lea.vmem [#allocation2], %s190
      %p192 = pneg %p101
      %p193 = pneg %p98
      %p194 = pneg %p129
      %p195 = pneg %p126
      %p196 = scmp.lt.s32.totalorder %s20, 1
      %s197 = scalar_select %p196, %s20, 1
      %p198 = scmp.lt.s32.totalorder %s21, 0
      %s199 = scalar_select %p198, %s21, 0
      %s200 = smul.addr %s197, 2
      %s201 = sadd.s32 %s199, %s200
      %s202 = smul.addr %s201, 8
      %s203 = scalar_lea.vmem %s3, %s202
      %p204 = scmp.lt.s32.totalorder %s20, 1
      %s205 = scalar_select %p204, %s20, 1
      %s206 = smul.addr %s205, 4
      %s207 = smul.addr %s206, 4
      %s208 = scalar_lea.vmem %s0, %s207
      %p209 = scmp.lt.s32.totalorder %s21, 0
      %s210 = scalar_select %p209, %s21, 0
      %s211 = smul.addr %s210, 4
      %s212 = scalar_lea.vmem %s1, %s211
      %p213 = scmp.lt.s32.totalorder %s21, 0
      %s214 = scalar_select %p213, %s21, 0
      %s215 = scalar_lea.vmem [#allocation2], %s214
      %p216 = scmp.lt.s32.totalorder %s20, 1
      %s217 = scalar_select %p216, %s20, 1
      %p218 = scmp.lt.s32.totalorder %s21, 0
      %s219 = scalar_select %p218, %s21, 0
      %s220 = smul.addr %s217, 2
      %s221 = sadd.s32 %s219, %s220
      %s222 = smul.addr %s221, 8
      %s223 = scalar_lea.vmem %s3, %s222
      %v225 = vld [vmem:[%s208] sm:$0xf]
      %v226 = vld [vmem:[%s208 + $0x4] sm:$0x1]
      %v227 = vld [vmem:[%s212] sm:$0xf]
      %v228 = vld [vmem:[%s212 + $0x4] sm:$0xf]
      %v229 = vld [vmem:[%s212 + $0x8] sm:$0xf]
      %v230 = vld [vmem:[%s212 + $0xc] sm:$0xf]
      %v231 = vld [vmem:[%s212 + $0x10] sm:$0xf]
      %v232 = vld [vmem:[%s212 + $0x14] sm:$0xf]
      %v233 = vld [vmem:[%s212 + $0x18] sm:$0xf]
      %v234 = vld [vmem:[%s212 + $0x1c] sm:$0xf]
      %v235 = vld [vmem:[%s208 + $0x4] sm:$0x3]
      %s236 = scalar_lea.vmem %s212, 32
      %v237 = vld [vmem:[%s236] sm:$0xf]
      %v238 = vld [vmem:[%s236 + $0x4] sm:$0xf]
      %v239 = vld [vmem:[%s236 + $0x8] sm:$0xf]
      %v240 = vld [vmem:[%s236 + $0xc] sm:$0xf]
      %v241 = vld [vmem:[%s236 + $0x10] sm:$0xf]
      %v242 = vld [vmem:[%s236 + $0x14] sm:$0xf]
      %v243 = vld [vmem:[%s236 + $0x18] sm:$0xf]
      %v244 = vld [vmem:[%s236 + $0x1c] sm:$0xf]
      %v247 = vunpack.c.l.b16 %v225
      %v248 = vunpack.c.l.b16 %v235
      %v249 = vpack.c.b16 %v248, %v247
      %v251 = vshrl.u32 %v249, 16
      %v253 = vshll.u32 %v249, 16
      %v255 = vrot.slane %v253, 1
      %v256 = vor.u32 %v251, %v255
      %v265 = vunpack.c.l.b16 %v237
      %v266 = vunpack.c.l.b16 %v238
      %v267 = vunpack.c.l.b16 %v239
      %v268 = vunpack.c.l.b16 %v240
      %v269 = vunpack.c.l.b16 %v241
      %v270 = vunpack.c.l.b16 %v242
      %v271 = vunpack.c.l.b16 %v243
      %v272 = vunpack.c.l.b16 %v244
      %v273 = vpack.c.b16 %v266, %v265
      %v274 = vpack.c.b16 %v268, %v267
      %v275 = vpack.c.b16 %v270, %v269
      %v276 = vpack.c.b16 %v272, %v271
      %vm281 = vcmask 523264
      %v283 = vsel %vm281, %v256, 0
      %285 = vmatprep.subr.bf16.mxu0 0
      %286 = vmatpush1.bf16.msra.mxu0 %v273
      %287 = vmatprep.subr.bf16.mxu0 0
      %288 = vmatpush1.bf16.msra.mxu0 %v274
      %289 = vmatprep.subr.bf16.mxu0 0
      %290 = vmatpush1.bf16.msra.mxu0 %v275
      %291 = vmatprep.subr.bf16.mxu0 0
      %292 = vmatpush1.bf16.msra.mxu0 %v276
      %293 = vmatprep.subr.bf16.mxu0 0
      %294 = vmatpush1.bf16.msra.mxu0 0
      %295 = vmatprep.subr.bf16.mxu0 0
      %296 = vmatpush1.bf16.msra.mxu0 0
      %297 = vmatprep.subr.bf16.mxu0 0
      %298 = vmatpush1.bf16.msra.mxu0 0
      %299 = vmatprep.subr.bf16.mxu0 0
      %300 = vmatpush1.bf16.msra.mxu0 0
      %301 = vmatprep.subr.bf16.mxu0 0
      %302 = vmatpush1.bf16.msra.mxu0 0
      %303 = vmatprep.subr.bf16.mxu0 0
      %304 = vmatpush1.bf16.msra.mxu0 0
      %305 = vmatprep.subr.bf16.mxu0 0
      %306 = vmatpush1.bf16.msra.mxu0 0
      %307 = vmatprep.subr.bf16.mxu0 0
      %308 = vmatpush1.bf16.msra.mxu0 0
      %309 = vmatprep.subr.bf16.mxu0 0
      %310 = vmatpush1.bf16.msra.mxu0 0
      %311 = vmatprep.subr.bf16.mxu0 0
      %312 = vmatpush1.bf16.msra.mxu0 0
      %313 = vmatprep.subr.bf16.mxu0 0
      %314 = vmatpush1.bf16.msra.mxu0 0
      %315 = vmatprep.subr.bf16.mxu0 0
      %316 = vmatpush1.bf16.msra.mxu0 0
      %317 = vmatprep.mubr.bf16.mxu0 0
      %318 = vmatmul.mubr.bf16.gmra.mrb[0].mxu0 %v283
      %v319 = vpop.f32.mrb[0].mxu0
      %v320 = vadd.f32 0.0, %v319
      %v321 = vpop.f32.mrb[0].mxu0
      %v322 = vpop.f32.mrb[0].mxu0
      %v323 = vadd.f32 0.0, %v322
      %v324 = vpop.f32.mrb[0].mxu0
      %325 = vdwg.mxu0
      %v327 = vunpack.c.l.b16 %v226
      %v328 = vpack.c.b16 %v327, %v247
      %v337 = vunpack.c.l.b16 %v227
      %v338 = vunpack.c.l.b16 %v228
      %v339 = vunpack.c.l.b16 %v229
      %v340 = vunpack.c.l.b16 %v230
      %v341 = vunpack.c.l.b16 %v231
      %v342 = vunpack.c.l.b16 %v232
      %v343 = vunpack.c.l.b16 %v233
      %v344 = vunpack.c.l.b16 %v234
      %v345 = vpack.c.b16 %v338, %v337
      %v346 = vpack.c.b16 %v340, %v339
      %v347 = vpack.c.b16 %v342, %v341
      %v348 = vpack.c.b16 %v344, %v343
      %v354 = vsel %vm281, %v328, 0
      %356 = vmatprep.subr.bf16.mxu0 0
      %357 = vmatpush1.bf16.msra.mxu0 %v345
      %358 = vmatprep.subr.bf16.mxu0 0
      %359 = vmatpush1.bf16.msra.mxu0 %v346
      %360 = vmatprep.subr.bf16.mxu0 0
      %361 = vmatpush1.bf16.msra.mxu0 %v347
      %362 = vmatprep.subr.bf16.mxu0 0
      %363 = vmatpush1.bf16.msra.mxu0 %v348
      %364 = vmatprep.subr.bf16.mxu0 0
      %365 = vmatpush1.bf16.msra.mxu0 0
      %366 = vmatprep.subr.bf16.mxu0 0
      %367 = vmatpush1.bf16.msra.mxu0 0
      %368 = vmatprep.subr.bf16.mxu0 0
      %369 = vmatpush1.bf16.msra.mxu0 0
      %370 = vmatprep.subr.bf16.mxu0 0
      %371 = vmatpush1.bf16.msra.mxu0 0
      %372 = vmatprep.subr.bf16.mxu0 0
      %373 = vmatpush1.bf16.msra.mxu0 0
      %374 = vmatprep.subr.bf16.mxu0 0
      %375 = vmatpush1.bf16.msra.mxu0 0
      %376 = vmatprep.subr.bf16.mxu0 0
      %377 = vmatpush1.bf16.msra.mxu0 0
      %378 = vmatprep.subr.bf16.mxu0 0
      %379 = vmatpush1.bf16.msra.mxu0 0
      %380 = vmatprep.subr.bf16.mxu0 0
      %381 = vmatpush1.bf16.msra.mxu0 0
      %382 = vmatprep.subr.bf16.mxu0 0
      %383 = vmatpush1.bf16.msra.mxu0 0
      %384 = vmatprep.subr.bf16.mxu0 0
      %385 = vmatpush1.bf16.msra.mxu0 0
      %386 = vmatprep.subr.bf16.mxu0 0
      %387 = vmatpush1.bf16.msra.mxu0 0
      %388 = vmatprep.mubr.bf16.mxu0 0
      %389 = vmatmul.mubr.bf16.gmra.mrb[0].mxu0 %v354
      %v390 = vpop.f32.mrb[0].mxu0
      %v391 = vadd.f32 %v320, %v390
      %v392 = vpop.f32.mrb[0].mxu0
      %v393 = vpop.f32.mrb[0].mxu0
      %v394 = vadd.f32 %v323, %v393
      %v395 = vpop.f32.mrb[0].mxu0
      %396 = vdwg.mxu0
      %v397 = vld [vmem:[%s208] sm:$0xe]
      %s398 = scalar_lea.vmem %s212, 64
      %v399 = vld [vmem:[%s398] sm:$0xf]
      %v400 = vld [vmem:[%s398 + $0x4] sm:$0xf]
      %v401 = vld [vmem:[%s398 + $0x8] sm:$0xf]
      %v402 = vld [vmem:[%s398 + $0xc] sm:$0xf]
      %v403 = vld [vmem:[%s398 + $0x10] sm:$0xf]
      %v404 = vld [vmem:[%s398 + $0x14] sm:$0xf]
      %v405 = vld [vmem:[%s398 + $0x18] sm:$0xf]
      %v406 = vld [vmem:[%s398 + $0x1c] sm:$0xf]
      %v408 = vunpack.c.l.b16 %v397
      %v409 = vpack.c.b16 %v248, %v408
      %v410 = vrot.slane %v409, 1
      %v419 = vunpack.c.l.b16 %v399
      %v420 = vunpack.c.l.b16 %v400
      %v421 = vunpack.c.l.b16 %v401
      %v422 = vunpack.c.l.b16 %v402
      %v423 = vunpack.c.l.b16 %v403
      %v424 = vunpack.c.l.b16 %v404
      %v425 = vunpack.c.l.b16 %v405
      %v426 = vunpack.c.l.b16 %v406
      %v427 = vpack.c.b16 %v420, %v419
      %v428 = vpack.c.b16 %v422, %v421
      %v429 = vpack.c.b16 %v424, %v423
      %v430 = vpack.c.b16 %v426, %v425
      %v436 = vsel %vm281, %v410, 0
      %438 = vmatprep.subr.bf16.mxu0 0
      %439 = vmatpush1.bf16.msra.mxu0 %v427
      %440 = vmatprep.subr.bf16.mxu0 0
      %441 = vmatpush1.bf16.msra.mxu0 %v428
      %442 = vmatprep.subr.bf16.mxu0 0
      %443 = vmatpush1.bf16.msra.mxu0 %v429
      %444 = vmatprep.subr.bf16.mxu0 0
      %445 = vmatpush1.bf16.msra.mxu0 %v430
      %446 = vmatprep.subr.bf16.mxu0 0
      %447 = vmatpush1.bf16.msra.mxu0 0
      %448 = vmatprep.subr.bf16.mxu0 0
      %449 = vmatpush1.bf16.msra.mxu0 0
      %450 = vmatprep.subr.bf16.mxu0 0
      %451 = vmatpush1.bf16.msra.mxu0 0
      %452 = vmatprep.subr.bf16.mxu0 0
      %453 = vmatpush1.bf16.msra.mxu0 0
      %454 = vmatprep.subr.bf16.mxu0 0
      %455 = vmatpush1.bf16.msra.mxu0 0
      %456 = vmatprep.subr.bf16.mxu0 0
      %457 = vmatpush1.bf16.msra.mxu0 0
      %458 = vmatprep.subr.bf16.mxu0 0
      %459 = vmatpush1.bf16.msra.mxu0 0
      %460 = vmatprep.subr.bf16.mxu0 0
      %461 = vmatpush1.bf16.msra.mxu0 0
      %462 = vmatprep.subr.bf16.mxu0 0
      %463 = vmatpush1.bf16.msra.mxu0 0
      %464 = vmatprep.subr.bf16.mxu0 0
      %465 = vmatpush1.bf16.msra.mxu0 0
      %466 = vmatprep.subr.bf16.mxu0 0
      %467 = vmatpush1.bf16.msra.mxu0 0
      %468 = vmatprep.subr.bf16.mxu0 0
      %469 = vmatpush1.bf16.msra.mxu0 0
      %470 = vmatprep.mubr.bf16.mxu0 0
      %471 = vmatmul.mubr.bf16.gmra.mrb[0].mxu0 %v436
      %v472 = vpop.f32.mrb[0].mxu0
      %v473 = vadd.f32 0.0, %v472
      %v474 = vpop.f32.mrb[0].mxu0
      %v475 = vpop.f32.mrb[0].mxu0
      %v476 = vadd.f32 0.0, %v475
      %v477 = vpop.f32.mrb[0].mxu0
      %478 = vdwg.mxu0
      %v479 = vadd.f32 %v391, %v473
      %v480 = vadd.f32 %v394, %v476
      %v481 = vld [vmem:[%s208 + $0x4] sm:$0x7]
      %s482 = scalar_lea.vmem %s212, 96
      %v483 = vld [vmem:[%s482] sm:$0xf]
      %v484 = vld [vmem:[%s482 + $0x4] sm:$0xf]
      %v485 = vld [vmem:[%s482 + $0x8] sm:$0xf]
      %v486 = vld [vmem:[%s482 + $0xc] sm:$0xf]
      %v487 = vld [vmem:[%s482 + $0x10] sm:$0xf]
      %v488 = vld [vmem:[%s482 + $0x14] sm:$0xf]
      %v489 = vld [vmem:[%s482 + $0x18] sm:$0xf]
      %v490 = vld [vmem:[%s482 + $0x1c] sm:$0xf]
      %v492 = vunpack.c.l.b16 %v481
      %v493 = vpack.c.b16 %v492, %v408
      %v495 = vshrl.u32 %v493, 16
      %v497 = vrot.slane %v495, 1
      %v498 = vshll.u32 %v493, 16
      %v500 = vrot.slane %v498, 2
      %v501 = vor.u32 %v497, %v500
      %v510 = vunpack.c.l.b16 %v483
      %v511 = vunpack.c.l.b16 %v484
      %v512 = vunpack.c.l.b16 %v485
      %v513 = vunpack.c.l.b16 %v486
      %v514 = vunpack.c.l.b16 %v487
      %v515 = vunpack.c.l.b16 %v488
      %v516 = vunpack.c.l.b16 %v489
      %v517 = vunpack.c.l.b16 %v490
      %v518 = vpack.c.b16 %v511, %v510
      %v519 = vpack.c.b16 %v513, %v512
      %v520 = vpack.c.b16 %v515, %v514
      %v521 = vpack.c.b16 %v517, %v516
      %v527 = vsel %vm281, %v501, 0
      %529 = vmatprep.subr.bf16.mxu0 0
      %530 = vmatpush1.bf16.msra.mxu0 %v518
      %531 = vmatprep.subr.bf16.mxu0 0
      %532 = vmatpush1.bf16.msra.mxu0 %v519
      %533 = vmatprep.subr.bf16.mxu0 0
      %534 = vmatpush1.bf16.msra.mxu0 %v520
      %535 = vmatprep.subr.bf16.mxu0 0
      %536 = vmatpush1.bf16.msra.mxu0 %v521
      %537 = vmatprep.subr.bf16.mxu0 0
      %538 = vmatpush1.bf16.msra.mxu0 0
      %539 = vmatprep.subr.bf16.mxu0 0
      %540 = vmatpush1.bf16.msra.mxu0 0
      %541 = vmatprep.subr.bf16.mxu0 0
      %542 = vmatpush1.bf16.msra.mxu0 0
      %543 = vmatprep.subr.bf16.mxu0 0
      %544 = vmatpush1.bf16.msra.mxu0 0
      %545 = vmatprep.subr.bf16.mxu0 0
      %546 = vmatpush1.bf16.msra.mxu0 0
      %547 = vmatprep.subr.bf16.mxu0 0
      %548 = vmatpush1.bf16.msra.mxu0 0
      %549 = vmatprep.subr.bf16.mxu0 0
      %550 = vmatpush1.bf16.msra.mxu0 0
      %551 = vmatprep.subr.bf16.mxu0 0
      %552 = vmatpush1.bf16.msra.mxu0 0
      %553 = vmatprep.subr.bf16.mxu0 0
      %554 = vmatpush1.bf16.msra.mxu0 0
      %555 = vmatprep.subr.bf16.mxu0 0
      %556 = vmatpush1.bf16.msra.mxu0 0
      %557 = vmatprep.subr.bf16.mxu0 0
      %558 = vmatpush1.bf16.msra.mxu0 0
      %559 = vmatprep.subr.bf16.mxu0 0
      %560 = vmatpush1.bf16.msra.mxu0 0
      %561 = vmatprep.mubr.bf16.mxu0 0
      %562 = vmatmul.mubr.bf16.gmra.mrb[0].mxu0 %v527
      %v563 = vpop.f32.mrb[0].mxu0
      %v564 = vadd.f32 0.0, %v563
      %v565 = vpop.f32.mrb[0].mxu0
      %v566 = vpop.f32.mrb[0].mxu0
      %v567 = vadd.f32 0.0, %v566
      %v568 = vpop.f32.mrb[0].mxu0
      %569 = vdwg.mxu0
      %v570 = vadd.f32 %v479, %v564
      %v571 = vadd.f32 %v480, %v567
      %v572 = vld [vmem:[%s208] sm:$0xc]
      %v573 = vld [vmem:[%s208 + $0x4] sm:$0xf]
      %s574 = scalar_lea.vmem %s212, 128
      %v575 = vld [vmem:[%s574] sm:$0xf]
      %v576 = vld [vmem:[%s574 + $0x4] sm:$0xf]
      %v577 = vld [vmem:[%s574 + $0x8] sm:$0xf]
      %v578 = vld [vmem:[%s574 + $0xc] sm:$0xf]
      %v579 = vld [vmem:[%s574 + $0x10] sm:$0xf]
      %v580 = vld [vmem:[%s574 + $0x14] sm:$0xf]
      %v581 = vld [vmem:[%s574 + $0x18] sm:$0xf]
      %v582 = vld [vmem:[%s574 + $0x1c] sm:$0xf]
      %v585 = vunpack.c.l.b16 %v572
      %v586 = vunpack.c.l.b16 %v573
      %v587 = vpack.c.b16 %v586, %v585
      %v589 = vshrl.u32 %v587, 16
      %v591 = vrot.slane %v589, 2
      %v592 = vshll.u32 %v587, 16
      %v594 = vrot.slane %v592, 3
      %v595 = vor.u32 %v591, %v594
      %v604 = vunpack.c.l.b16 %v575
      %v605 = vunpack.c.l.b16 %v576
      %v606 = vunpack.c.l.b16 %v577
      %v607 = vunpack.c.l.b16 %v578
      %v608 = vunpack.c.l.b16 %v579
      %v609 = vunpack.c.l.b16 %v580
      %v610 = vunpack.c.l.b16 %v581
      %v611 = vunpack.c.l.b16 %v582
      %v612 = vpack.c.b16 %v605, %v604
      %v613 = vpack.c.b16 %v607, %v606
      %v614 = vpack.c.b16 %v609, %v608
      %v615 = vpack.c.b16 %v611, %v610
      %v621 = vsel %vm281, %v595, 0
      %623 = vmatprep.subr.bf16.mxu0 0
      %624 = vmatpush1.bf16.msra.mxu0 %v612
      %625 = vmatprep.subr.bf16.mxu0 0
      %626 = vmatpush1.bf16.msra.mxu0 %v613
      %627 = vmatprep.subr.bf16.mxu0 0
      %628 = vmatpush1.bf16.msra.mxu0 %v614
      %629 = vmatprep.subr.bf16.mxu0 0
      %630 = vmatpush1.bf16.msra.mxu0 %v615
      %631 = vmatprep.subr.bf16.mxu0 0
      %632 = vmatpush1.bf16.msra.mxu0 0
      %633 = vmatprep.subr.bf16.mxu0 0
      %634 = vmatpush1.bf16.msra.mxu0 0
      %635 = vmatprep.subr.bf16.mxu0 0
      %636 = vmatpush1.bf16.msra.mxu0 0
      %637 = vmatprep.subr.bf16.mxu0 0
      %638 = vmatpush1.bf16.msra.mxu0 0
      %639 = vmatprep.subr.bf16.mxu0 0
      %640 = vmatpush1.bf16.msra.mxu0 0
      %641 = vmatprep.subr.bf16.mxu0 0
      %642 = vmatpush1.bf16.msra.mxu0 0
      %643 = vmatprep.subr.bf16.mxu0 0
      %644 = vmatpush1.bf16.msra.mxu0 0
      %645 = vmatprep.subr.bf16.mxu0 0
      %646 = vmatpush1.bf16.msra.mxu0 0
      %647 = vmatprep.subr.bf16.mxu0 0
      %648 = vmatpush1.bf16.msra.mxu0 0
      %649 = vmatprep.subr.bf16.mxu0 0
      %650 = vmatpush1.bf16.msra.mxu0 0
      %651 = vmatprep.subr.bf16.mxu0 0
      %652 = vmatpush1.bf16.msra.mxu0 0
      %653 = vmatprep.subr.bf16.mxu0 0
      %654 = vmatpush1.bf16.msra.mxu0 0
      %655 = vmatprep.mubr.bf16.mxu0 0
      %656 = vmatmul.mubr.bf16.gmra.mrb[0].mxu0 %v621
      %v657 = vpop.f32.mrb[0].mxu0
      %v658 = vadd.f32 0.0, %v657
      %v659 = vpop.f32.mrb[0].mxu0
      %v660 = vpop.f32.mrb[0].mxu0
      %v661 = vadd.f32 0.0, %v660
      %v662 = vpop.f32.mrb[0].mxu0
      %663 = vdwg.mxu0
      %v664 = vadd.f32 %v570, %v658
      %v665 = vadd.f32 %v571, %v661
      %v666 = vld [vmem:[%s208] sm:$0x8]
      %s667 = scalar_lea.vmem %s212, 160
      %v668 = vld [vmem:[%s667] sm:$0xf]
      %v669 = vld [vmem:[%s667 + $0x4] sm:$0xf]
      %v670 = vld [vmem:[%s667 + $0x8] sm:$0xf]
      %v671 = vld [vmem:[%s667 + $0xc] sm:$0xf]
      %v672 = vld [vmem:[%s667 + $0x10] sm:$0xf]
      %v673 = vld [vmem:[%s667 + $0x14] sm:$0xf]
      %v674 = vld [vmem:[%s667 + $0x18] sm:$0xf]
      %v675 = vld [vmem:[%s667 + $0x1c] sm:$0xf]
      %v677 = vunpack.c.l.b16 %v666
      %v678 = vpack.c.b16 %v586, %v677
      %v679 = vrot.slane %v678, 3
      %v688 = vunpack.c.l.b16 %v668
      %v689 = vunpack.c.l.b16 %v669
      %v690 = vunpack.c.l.b16 %v670
      %v691 = vunpack.c.l.b16 %v671
      %v692 = vunpack.c.l.b16 %v672
      %v693 = vunpack.c.l.b16 %v673
      %v694 = vunpack.c.l.b16 %v674
      %v695 = vunpack.c.l.b16 %v675
      %v696 = vpack.c.b16 %v689, %v688
      %v697 = vpack.c.b16 %v691, %v690
      %v698 = vpack.c.b16 %v693, %v692
      %v699 = vpack.c.b16 %v695, %v694
      %v705 = vsel %vm281, %v679, 0
      %707 = vmatprep.subr.bf16.mxu0 0
      %708 = vmatpush1.bf16.msra.mxu0 %v696
      %709 = vmatprep.subr.bf16.mxu0 0
      %710 = vmatpush1.bf16.msra.mxu0 %v697
      %711 = vmatprep.subr.bf16.mxu0 0
      %712 = vmatpush1.bf16.msra.mxu0 %v698
      %713 = vmatprep.subr.bf16.mxu0 0
      %714 = vmatpush1.bf16.msra.mxu0 %v699
      %715 = vmatprep.subr.bf16.mxu0 0
      %716 = vmatpush1.bf16.msra.mxu0 0
      %717 = vmatprep.subr.bf16.mxu0 0
      %718 = vmatpush1.bf16.msra.mxu0 0
      %719 = vmatprep.subr.bf16.mxu0 0
      %720 = vmatpush1.bf16.msra.mxu0 0
      %721 = vmatprep.subr.bf16.mxu0 0
      %722 = vmatpush1.bf16.msra.mxu0 0
      %723 = vmatprep.subr.bf16.mxu0 0
      %724 = vmatpush1.bf16.msra.mxu0 0
      %725 = vmatprep.subr.bf16.mxu0 0
      %726 = vmatpush1.bf16.msra.mxu0 0
      %727 = vmatprep.subr.bf16.mxu0 0
      %728 = vmatpush1.bf16.msra.mxu0 0
      %729 = vmatprep.subr.bf16.mxu0 0
      %730 = vmatpush1.bf16.msra.mxu0 0
      %731 = vmatprep.subr.bf16.mxu0 0
      %732 = vmatpush1.bf16.msra.mxu0 0
      %733 = vmatprep.subr.bf16.mxu0 0
      %734 = vmatpush1.bf16.msra.mxu0 0
      %735 = vmatprep.subr.bf16.mxu0 0
      %736 = vmatpush1.bf16.msra.mxu0 0
      %737 = vmatprep.subr.bf16.mxu0 0
      %738 = vmatpush1.bf16.msra.mxu0 0
      %739 = vmatprep.mubr.bf16.mxu0 0
      %740 = vmatmul.mubr.bf16.gmra.mrb[0].mxu0 %v705
      %v741 = vpop.f32.mrb[0].mxu0
      %v742 = vadd.f32 0.0, %v741
      %v743 = vpop.f32.mrb[0].mxu0
      %v744 = vpop.f32.mrb[0].mxu0
      %v745 = vadd.f32 0.0, %v744
      %v746 = vpop.f32.mrb[0].mxu0
      %747 = vdwg.mxu0
      %v748 = vadd.f32 %v664, %v742
      %v749 = vadd.f32 %v665, %v745
      %v750 = vld [vmem:[%s208] sm:$0x8]
      %v751 = vld [vmem:[%s208 + $0x4] sm:$0xf]
      %v752 = vld [vmem:[%s208 + $0x8] sm:$0x1]
      %s753 = scalar_lea.vmem %s212, 192
      %v754 = vld [vmem:[%s753] sm:$0xf]
      %v755 = vld [vmem:[%s753 + $0x4] sm:$0xf]
      %v756 = vld [vmem:[%s753 + $0x8] sm:$0xf]
      %v757 = vld [vmem:[%s753 + $0xc] sm:$0xf]
      %v758 = vld [vmem:[%s753 + $0x10] sm:$0xf]
      %v759 = vld [vmem:[%s753 + $0x14] sm:$0xf]
      %v760 = vld [vmem:[%s753 + $0x18] sm:$0xf]
      %v761 = vld [vmem:[%s753 + $0x1c] sm:$0xf]
      %v765 = vunpack.c.l.b16 %v750
      %v766 = vunpack.c.l.b16 %v751
      %v767 = vunpack.c.l.b16 %v752
      %v768 = vpack.c.b16 %v766, %v765
      %v769 = vpack.c.b16 %v767, %v767
      %vm770 = vsmask.f32 4352
      %v772 = vshrl.u32 %v768, 16
      %v774 = vrot.slane %v772, 3
      %v775 = vshll.u32 %v768, 16
      %v777 = vrot.slane %v775, 4
      %v778 = vor.u32 %v774, %v777
      %v780 = vshll.u32 %v769, 16
      %v782 = vrot.slane %v780, 4
      %v783 = vsel %vm770, %v778, %v782
      %v792 = vunpack.c.l.b16 %v754
      %v793 = vunpack.c.l.b16 %v755
      %v794 = vunpack.c.l.b16 %v756
      %v795 = vunpack.c.l.b16 %v757
      %v796 = vunpack.c.l.b16 %v758
      %v797 = vunpack.c.l.b16 %v759
      %v798 = vunpack.c.l.b16 %v760
      %v799 = vunpack.c.l.b16 %v761
      %v800 = vpack.c.b16 %v793, %v792
      %v801 = vpack.c.b16 %v795, %v794
      %v802 = vpack.c.b16 %v797, %v796
      %v803 = vpack.c.b16 %v799, %v798
      %v809 = vsel %vm281, %v783, 0
      %811 = vmatprep.subr.bf16.mxu0 0
      %812 = vmatpush1.bf16.msra.mxu0 %v800
      %813 = vmatprep.subr.bf16.mxu0 0
      %814 = vmatpush1.bf16.msra.mxu0 %v801
      %815 = vmatprep.subr.bf16.mxu0 0
      %816 = vmatpush1.bf16.msra.mxu0 %v802
      %817 = vmatprep.subr.bf16.mxu0 0
      %818 = vmatpush1.bf16.msra.mxu0 %v803
      %819 = vmatprep.subr.bf16.mxu0 0
      %820 = vmatpush1.bf16.msra.mxu0 0
      %821 = vmatprep.subr.bf16.mxu0 0
      %822 = vmatpush1.bf16.msra.mxu0 0
      %823 = vmatprep.subr.bf16.mxu0 0
      %824 = vmatpush1.bf16.msra.mxu0 0
      %825 = vmatprep.subr.bf16.mxu0 0
      %826 = vmatpush1.bf16.msra.mxu0 0
      %827 = vmatprep.subr.bf16.mxu0 0
      %828 = vmatpush1.bf16.msra.mxu0 0
      %829 = vmatprep.subr.bf16.mxu0 0
      %830 = vmatpush1.bf16.msra.mxu0 0
      %831 = vmatprep.subr.bf16.mxu0 0
      %832 = vmatpush1.bf16.msra.mxu0 0
      %833 = vmatprep.subr.bf16.mxu0 0
      %834 = vmatpush1.bf16.msra.mxu0 0
      %835 = vmatprep.subr.bf16.mxu0 0
      %836 = vmatpush1.bf16.msra.mxu0 0
      %837 = vmatprep.subr.bf16.mxu0 0
      %838 = vmatpush1.bf16.msra.mxu0 0
      %839 = vmatprep.subr.bf16.mxu0 0
      %840 = vmatpush1.bf16.msra.mxu0 0
      %841 = vmatprep.subr.bf16.mxu0 0
      %842 = vmatpush1.bf16.msra.mxu0 0
      %843 = vmatprep.mubr.bf16.mxu0 0
      %844 = vmatmul.mubr.bf16.gmra.mrb[0].mxu0 %v809
      %v845 = vpop.f32.mrb[0].mxu0
      %v846 = vadd.f32 0.0, %v845
      %v847 = vpop.f32.mrb[0].mxu0
      %v848 = vpop.f32.mrb[0].mxu0
      %v849 = vadd.f32 0.0, %v848
      %v850 = vpop.f32.mrb[0].mxu0
      %851 = vdwg.mxu0
      %v852 = vadd.f32 %v748, %v846
      %v853 = vadd.f32 %v749, %v849
      %s854 = scalar_lea.vmem %s212, 224
      %v855 = vld [vmem:[%s854] sm:$0xf]
      %v856 = vld [vmem:[%s854 + $0x4] sm:$0xf]
      %v857 = vld [vmem:[%s854 + $0x8] sm:$0xf]
      %v858 = vld [vmem:[%s854 + $0xc] sm:$0xf]
      %v859 = vld [vmem:[%s854 + $0x10] sm:$0xf]
      %v860 = vld [vmem:[%s854 + $0x14] sm:$0xf]
      %v861 = vld [vmem:[%s854 + $0x18] sm:$0xf]
      %v862 = vld [vmem:[%s854 + $0x1c] sm:$0xf]
      %v863 = vpack.c.b16 %v767, %v766
      %v872 = vunpack.c.l.b16 %v855
      %v873 = vunpack.c.l.b16 %v856
      %v874 = vunpack.c.l.b16 %v857
      %v875 = vunpack.c.l.b16 %v858
      %v876 = vunpack.c.l.b16 %v859
      %v877 = vunpack.c.l.b16 %v860
      %v878 = vunpack.c.l.b16 %v861
      %v879 = vunpack.c.l.b16 %v862
      %v880 = vpack.c.b16 %v873, %v872
      %v881 = vpack.c.b16 %v875, %v874
      %v882 = vpack.c.b16 %v877, %v876
      %v883 = vpack.c.b16 %v879, %v878
      %v889 = vsel %vm281, %v863, 0
      %891 = vmatprep.subr.bf16.mxu0 0
      %892 = vmatpush1.bf16.msra.mxu0 %v880
      %893 = vmatprep.subr.bf16.mxu0 0
      %894 = vmatpush1.bf16.msra.mxu0 %v881
      %895 = vmatprep.subr.bf16.mxu0 0
      %896 = vmatpush1.bf16.msra.mxu0 %v882
      %897 = vmatprep.subr.bf16.mxu0 0
      %898 = vmatpush1.bf16.msra.mxu0 %v883
      %899 = vmatprep.subr.bf16.mxu0 0
      %900 = vmatpush1.bf16.msra.mxu0 0
      %901 = vmatprep.subr.bf16.mxu0 0
      %902 = vmatpush1.bf16.msra.mxu0 0
      %903 = vmatprep.subr.bf16.mxu0 0
      %904 = vmatpush1.bf16.msra.mxu0 0
      %905 = vmatprep.subr.bf16.mxu0 0
      %906 = vmatpush1.bf16.msra.mxu0 0
      %907 = vmatprep.subr.bf16.mxu0 0
      %908 = vmatpush1.bf16.msra.mxu0 0
      %909 = vmatprep.subr.bf16.mxu0 0
      %910 = vmatpush1.bf16.msra.mxu0 0
      %911 = vmatprep.subr.bf16.mxu0 0
      %912 = vmatpush1.bf16.msra.mxu0 0
      %913 = vmatprep.subr.bf16.mxu0 0
      %914 = vmatpush1.bf16.msra.mxu0 0
      %915 = vmatprep.subr.bf16.mxu0 0
      %916 = vmatpush1.bf16.msra.mxu0 0
      %917 = vmatprep.subr.bf16.mxu0 0
      %918 = vmatpush1.bf16.msra.mxu0 0
      %919 = vmatprep.subr.bf16.mxu0 0
      %920 = vmatpush1.bf16.msra.mxu0 0
      %921 = vmatprep.subr.bf16.mxu0 0
      %922 = vmatpush1.bf16.msra.mxu0 0
      %923 = vmatprep.mubr.bf16.mxu0 0
      %924 = vmatmul.mubr.bf16.gmra.mrb[0].mxu0 %v889
      %v925 = vpop.f32.mrb[0].mxu0
      %v926 = vadd.f32 0.0, %v925
      %v927 = vpop.f32.mrb[0].mxu0
      %v928 = vpop.f32.mrb[0].mxu0
      %v929 = vadd.f32 0.0, %v928
      %v930 = vpop.f32.mrb[0].mxu0
      %931 = vdwg.mxu0
      %v932 = vadd.f32 %v852, %v926
      %v933 = vadd.f32 %v853, %v929
      %v934 = vld [vmem:[%s208 + $0x4] sm:$0xe]
      %v935 = vld [vmem:[%s208 + $0x8] sm:$0x3]
      %s936 = scalar_lea.vmem %s212, 256
      %v937 = vld [vmem:[%s936] sm:$0xf]
      %v938 = vld [vmem:[%s936 + $0x4] sm:$0xf]
      %v939 = vld [vmem:[%s936 + $0x8] sm:$0xf]
      %v940 = vld [vmem:[%s936 + $0xc] sm:$0xf]
      %v941 = vld [vmem:[%s936 + $0x10] sm:$0xf]
      %v942 = vld [vmem:[%s936 + $0x14] sm:$0xf]
      %v943 = vld [vmem:[%s936 + $0x18] sm:$0xf]
      %v944 = vld [vmem:[%s936 + $0x1c] sm:$0xf]
      %v947 = vunpack.c.l.b16 %v934
      %v948 = vunpack.c.l.b16 %v935
      %v949 = vpack.c.b16 %v948, %v947
      %v950 = vrot.slane %v949, 1
      %v959 = vunpack.c.l.b16 %v937
      %v960 = vunpack.c.l.b16 %v938
      %v961 = vunpack.c.l.b16 %v939
      %v962 = vunpack.c.l.b16 %v940
      %v963 = vunpack.c.l.b16 %v941
      %v964 = vunpack.c.l.b16 %v942
      %v965 = vunpack.c.l.b16 %v943
      %v966 = vunpack.c.l.b16 %v944
      %v967 = vpack.c.b16 %v960, %v959
      %v968 = vpack.c.b16 %v962, %v961
      %v969 = vpack.c.b16 %v964, %v963
      %v970 = vpack.c.b16 %v966, %v965
      %v976 = vsel %vm281, %v950, 0
      %978 = vmatprep.subr.bf16.mxu0 0
      %979 = vmatpush1.bf16.msra.mxu0 %v967
      %980 = vmatprep.subr.bf16.mxu0 0
      %981 = vmatpush1.bf16.msra.mxu0 %v968
      %982 = vmatprep.subr.bf16.mxu0 0
      %983 = vmatpush1.bf16.msra.mxu0 %v969
      %984 = vmatprep.subr.bf16.mxu0 0
      %985 = vmatpush1.bf16.msra.mxu0 %v970
      %986 = vmatprep.subr.bf16.mxu0 0
      %987 = vmatpush1.bf16.msra.mxu0 0
      %988 = vmatprep.subr.bf16.mxu0 0
      %989 = vmatpush1.bf16.msra.mxu0 0
      %990 = vmatprep.subr.bf16.mxu0 0
      %991 = vmatpush1.bf16.msra.mxu0 0
      %992 = vmatprep.subr.bf16.mxu0 0
      %993 = vmatpush1.bf16.msra.mxu0 0
      %994 = vmatprep.subr.bf16.mxu0 0
      %995 = vmatpush1.bf16.msra.mxu0 0
      %996 = vmatprep.subr.bf16.mxu0 0
      %997 = vmatpush1.bf16.msra.mxu0 0
      %998 = vmatprep.subr.bf16.mxu0 0
      %999 = vmatpush1.bf16.msra.mxu0 0
      %1000 = vmatprep.subr.bf16.mxu0 0
      %1001 = vmatpush1.bf16.msra.mxu0 0
      %1002 = vmatprep.subr.bf16.mxu0 0
      %1003 = vmatpush1.bf16.msra.mxu0 0
      %1004 = vmatprep.subr.bf16.mxu0 0
      %1005 = vmatpush1.bf16.msra.mxu0 0
      %1006 = vmatprep.subr.bf16.mxu0 0
      %1007 = vmatpush1.bf16.msra.mxu0 0
      %1008 = vmatprep.subr.bf16.mxu0 0
      %1009 = vmatpush1.bf16.msra.mxu0 0
      %1010 = vmatprep.mubr.bf16.mxu0 0
      %1011 = vmatmul.mubr.bf16.gmra.mrb[0].mxu0 %v976
      %v1012 = vpop.f32.mrb[0].mxu0
      %v1013 = vadd.f32 0.0, %v1012
      %v1014 = vpop.f32.mrb[0].mxu0
      %v1015 = vpop.f32.mrb[0].mxu0
      %v1016 = vadd.f32 0.0, %v1015
      %v1017 = vpop.f32.mrb[0].mxu0
      %1018 = vdwg.mxu0
      %v1019 = vadd.f32 %v932, %v1013
      %v1020 = vadd.f32 %v933, %v1016
      %v1021 = vld [vmem:[%s208 + $0x8] sm:$0x7]
      %s1022 = scalar_lea.vmem %s212, 288
      %v1023 = vld [vmem:[%s1022] sm:$0xf]
      %v1024 = vld [vmem:[%s1022 + $0x4] sm:$0xf]
      %v1025 = vld [vmem:[%s1022 + $0x8] sm:$0xf]
      %v1026 = vld [vmem:[%s1022 + $0xc] sm:$0xf]
      %v1027 = vld [vmem:[%s1022 + $0x10] sm:$0xf]
      %v1028 = vld [vmem:[%s1022 + $0x14] sm:$0xf]
      %v1029 = vld [vmem:[%s1022 + $0x18] sm:$0xf]
      %v1030 = vld [vmem:[%s1022 + $0x1c] sm:$0xf]
      %v1032 = vunpack.c.l.b16 %v1021
      %v1033 = vpack.c.b16 %v1032, %v947
      %v1035 = vshrl.u32 %v1033, 16
      %v1037 = vrot.slane %v1035, 1
      %v1038 = vshll.u32 %v1033, 16
      %v1040 = vrot.slane %v1038, 2
      %v1041 = vor.u32 %v1037, %v1040
      %v1050 = vunpack.c.l.b16 %v1023
      %v1051 = vunpack.c.l.b16 %v1024
      %v1052 = vunpack.c.l.b16 %v1025
      %v1053 = vunpack.c.l.b16 %v1026
      %v1054 = vunpack.c.l.b16 %v1027
      %v1055 = vunpack.c.l.b16 %v1028
      %v1056 = vunpack.c.l.b16 %v1029
      %v1057 = vunpack.c.l.b16 %v1030
      %v1058 = vpack.c.b16 %v1051, %v1050
      %v1059 = vpack.c.b16 %v1053, %v1052
      %v1060 = vpack.c.b16 %v1055, %v1054
      %v1061 = vpack.c.b16 %v1057, %v1056
      %v1067 = vsel %vm281, %v1041, 0
      %1069 = vmatprep.subr.bf16.mxu0 0
      %1070 = vmatpush1.bf16.msra.mxu0 %v1058
      %1071 = vmatprep.subr.bf16.mxu0 0
      %1072 = vmatpush1.bf16.msra.mxu0 %v1059
      %1073 = vmatprep.subr.bf16.mxu0 0
      %1074 = vmatpush1.bf16.msra.mxu0 %v1060
      %1075 = vmatprep.subr.bf16.mxu0 0
      %1076 = vmatpush1.bf16.msra.mxu0 %v1061
      %1077 = vmatprep.subr.bf16.mxu0 0
      %1078 = vmatpush1.bf16.msra.mxu0 0
      %1079 = vmatprep.subr.bf16.mxu0 0
      %1080 = vmatpush1.bf16.msra.mxu0 0
      %1081 = vmatprep.subr.bf16.mxu0 0
      %1082 = vmatpush1.bf16.msra.mxu0 0
      %1083 = vmatprep.subr.bf16.mxu0 0
      %1084 = vmatpush1.bf16.msra.mxu0 0
      %1085 = vmatprep.subr.bf16.mxu0 0
      %1086 = vmatpush1.bf16.msra.mxu0 0
      %1087 = vmatprep.subr.bf16.mxu0 0
      %1088 = vmatpush1.bf16.msra.mxu0 0
      %1089 = vmatprep.subr.bf16.mxu0 0
      %1090 = vmatpush1.bf16.msra.mxu0 0
      %1091 = vmatprep.subr.bf16.mxu0 0
      %1092 = vmatpush1.bf16.msra.mxu0 0
      %1093 = vmatprep.subr.bf16.mxu0 0
      %1094 = vmatpush1.bf16.msra.mxu0 0
      %1095 = vmatprep.subr.bf16.mxu0 0
      %1096 = vmatpush1.bf16.msra.mxu0 0
      %1097 = vmatprep.subr.bf16.mxu0 0
      %1098 = vmatpush1.bf16.msra.mxu0 0
      %1099 = vmatprep.subr.bf16.mxu0 0
      %1100 = vmatpush1.bf16.msra.mxu0 0
      %1101 = vmatprep.mubr.bf16.mxu0 0
      %1102 = vmatmul.mubr.bf16.gmra.mrb[0].mxu0 %v1067
      %v1103 = vpop.f32.mrb[0].mxu0
      %v1104 = vadd.f32 0.0, %v1103
      %v1105 = vpop.f32.mrb[0].mxu0
      %v1106 = vpop.f32.mrb[0].mxu0
      %v1107 = vadd.f32 0.0, %v1106
      %v1108 = vpop.f32.mrb[0].mxu0
      %1109 = vdwg.mxu0
      %v1110 = vadd.f32 %v1019, %v1104
      %v1111 = vadd.f32 %v1020, %v1107
      %v1112 = vld [vmem:[%s208 + $0x4] sm:$0xc]
      %s1113 = scalar_lea.vmem %s212, 320
      %v1114 = vld [vmem:[%s1113] sm:$0xf]
      %v1115 = vld [vmem:[%s1113 + $0x4] sm:$0xf]
      %v1116 = vld [vmem:[%s1113 + $0x8] sm:$0xf]
      %v1117 = vld [vmem:[%s1113 + $0xc] sm:$0xf]
      %v1118 = vld [vmem:[%s1113 + $0x10] sm:$0xf]
      %v1119 = vld [vmem:[%s1113 + $0x14] sm:$0xf]
      %v1120 = vld [vmem:[%s1113 + $0x18] sm:$0xf]
      %v1121 = vld [vmem:[%s1113 + $0x1c] sm:$0xf]
      %v1123 = vunpack.c.l.b16 %v1112
      %v1124 = vpack.c.b16 %v1032, %v1123
      %v1125 = vrot.slane %v1124, 2
      %v1134 = vunpack.c.l.b16 %v1114
      %v1135 = vunpack.c.l.b16 %v1115
      %v1136 = vunpack.c.l.b16 %v1116
      %v1137 = vunpack.c.l.b16 %v1117
      %v1138 = vunpack.c.l.b16 %v1118
      %v1139 = vunpack.c.l.b16 %v1119
      %v1140 = vunpack.c.l.b16 %v1120
      %v1141 = vunpack.c.l.b16 %v1121
      %v1142 = vpack.c.b16 %v1135, %v1134
      %v1143 = vpack.c.b16 %v1137, %v1136
      %v1144 = vpack.c.b16 %v1139, %v1138
      %v1145 = vpack.c.b16 %v1141, %v1140
      %v1151 = vsel %vm281, %v1125, 0
      %1153 = vmatprep.subr.bf16.mxu0 0
      %1154 = vmatpush1.bf16.msra.mxu0 %v1142
      %1155 = vmatprep.subr.bf16.mxu0 0
      %1156 = vmatpush1.bf16.msra.mxu0 %v1143
      %1157 = vmatprep.subr.bf16.mxu0 0
      %1158 = vmatpush1.bf16.msra.mxu0 %v1144
      %1159 = vmatprep.subr.bf16.mxu0 0
      %1160 = vmatpush1.bf16.msra.mxu0 %v1145
      %1161 = vmatprep.subr.bf16.mxu0 0
      %1162 = vmatpush1.bf16.msra.mxu0 0
      %1163 = vmatprep.subr.bf16.mxu0 0
      %1164 = vmatpush1.bf16.msra.mxu0 0
      %1165 = vmatprep.subr.bf16.mxu0 0
      %1166 = vmatpush1.bf16.msra.mxu0 0
      %1167 = vmatprep.subr.bf16.mxu0 0
      %1168 = vmatpush1.bf16.msra.mxu0 0
      %1169 = vmatprep.subr.bf16.mxu0 0
      %1170 = vmatpush1.bf16.msra.mxu0 0
      %1171 = vmatprep.subr.bf16.mxu0 0
      %1172 = vmatpush1.bf16.msra.mxu0 0
      %1173 = vmatprep.subr.bf16.mxu0 0
      %1174 = vmatpush1.bf16.msra.mxu0 0
      %1175 = vmatprep.subr.bf16.mxu0 0
      %1176 = vmatpush1.bf16.msra.mxu0 0
      %1177 = vmatprep.subr.bf16.mxu0 0
      %1178 = vmatpush1.bf16.msra.mxu0 0
      %1179 = vmatprep.subr.bf16.mxu0 0
      %1180 = vmatpush1.bf16.msra.mxu0 0
      %1181 = vmatprep.subr.bf16.mxu0 0
      %1182 = vmatpush1.bf16.msra.mxu0 0
      %1183 = vmatprep.subr.bf16.mxu0 0
      %1184 = vmatpush1.bf16.msra.mxu0 0
      %1185 = vmatprep.mubr.bf16.mxu0 0
      %1186 = vmatmul.mubr.bf16.gmra.mrb[0].mxu0 %v1151
      %v1187 = vpop.f32.mrb[0].mxu0
      %v1188 = vadd.f32 0.0, %v1187
      %v1189 = vpop.f32.mrb[0].mxu0
      %v1190 = vpop.f32.mrb[0].mxu0
      %v1191 = vadd.f32 0.0, %v1190
      %v1192 = vpop.f32.mrb[0].mxu0
      %1193 = vdwg.mxu0
      %v1194 = vadd.f32 %v1110, %v1188
      %v1195 = vadd.f32 %v1111, %v1191
      %v1196 = vld [vmem:[%s208 + $0x8] sm:$0xf]
      %s1197 = scalar_lea.vmem %s212, 352
      %v1198 = vld [vmem:[%s1197] sm:$0xf]
      %v1199 = vld [vmem:[%s1197 + $0x4] sm:$0xf]
      %v1200 = vld [vmem:[%s1197 + $0x8] sm:$0xf]
      %v1201 = vld [vmem:[%s1197 + $0xc] sm:$0xf]
      %v1202 = vld [vmem:[%s1197 + $0x10] sm:$0xf]
      %v1203 = vld [vmem:[%s1197 + $0x14] sm:$0xf]
      %v1204 = vld [vmem:[%s1197 + $0x18] sm:$0xf]
      %v1205 = vld [vmem:[%s1197 + $0x1c] sm:$0xf]
      %v1207 = vunpack.c.l.b16 %v1196
      %v1208 = vpack.c.b16 %v1207, %v1123
      %v1210 = vshrl.u32 %v1208, 16
      %v1212 = vrot.slane %v1210, 2
      %v1213 = vshll.u32 %v1208, 16
      %v1215 = vrot.slane %v1213, 3
      %v1216 = vor.u32 %v1212, %v1215
      %v1225 = vunpack.c.l.b16 %v1198
      %v1226 = vunpack.c.l.b16 %v1199
      %v1227 = vunpack.c.l.b16 %v1200
      %v1228 = vunpack.c.l.b16 %v1201
      %v1229 = vunpack.c.l.b16 %v1202
      %v1230 = vunpack.c.l.b16 %v1203
      %v1231 = vunpack.c.l.b16 %v1204
      %v1232 = vunpack.c.l.b16 %v1205
      %v1233 = vpack.c.b16 %v1226, %v1225
      %v1234 = vpack.c.b16 %v1228, %v1227
      %v1235 = vpack.c.b16 %v1230, %v1229
      %v1236 = vpack.c.b16 %v1232, %v1231
      %v1242 = vsel %vm281, %v1216, 0
      %1244 = vmatprep.subr.bf16.mxu0 0
      %1245 = vmatpush1.bf16.msra.mxu0 %v1233
      %1246 = vmatprep.subr.bf16.mxu0 0
      %1247 = vmatpush1.bf16.msra.mxu0 %v1234
      %1248 = vmatprep.subr.bf16.mxu0 0
      %1249 = vmatpush1.bf16.msra.mxu0 %v1235
      %1250 = vmatprep.subr.bf16.mxu0 0
      %1251 = vmatpush1.bf16.msra.mxu0 %v1236
      %1252 = vmatprep.subr.bf16.mxu0 0
      %1253 = vmatpush1.bf16.msra.mxu0 0
      %1254 = vmatprep.subr.bf16.mxu0 0
      %1255 = vmatpush1.bf16.msra.mxu0 0
      %1256 = vmatprep.subr.bf16.mxu0 0
      %1257 = vmatpush1.bf16.msra.mxu0 0
      %1258 = vmatprep.subr.bf16.mxu0 0
      %1259 = vmatpush1.bf16.msra.mxu0 0
      %1260 = vmatprep.subr.bf16.mxu0 0
      %1261 = vmatpush1.bf16.msra.mxu0 0
      %1262 = vmatprep.subr.bf16.mxu0 0
      %1263 = vmatpush1.bf16.msra.mxu0 0
      %1264 = vmatprep.subr.bf16.mxu0 0
      %1265 = vmatpush1.bf16.msra.mxu0 0
      %1266 = vmatprep.subr.bf16.mxu0 0
      %1267 = vmatpush1.bf16.msra.mxu0 0
      %1268 = vmatprep.subr.bf16.mxu0 0
      %1269 = vmatpush1.bf16.msra.mxu0 0
      %1270 = vmatprep.subr.bf16.mxu0 0
      %1271 = vmatpush1.bf16.msra.mxu0 0
      %1272 = vmatprep.subr.bf16.mxu0 0
      %1273 = vmatpush1.bf16.msra.mxu0 0
      %1274 = vmatprep.subr.bf16.mxu0 0
      %1275 = vmatpush1.bf16.msra.mxu0 0
      %1276 = vmatprep.mubr.bf16.mxu0 0
      %1277 = vmatmul.mubr.bf16.gmra.mrb[0].mxu0 %v1242
      %v1278 = vpop.f32.mrb[0].mxu0
      %v1279 = vadd.f32 0.0, %v1278
      %v1280 = vpop.f32.mrb[0].mxu0
      %v1281 = vpop.f32.mrb[0].mxu0
      %v1282 = vadd.f32 0.0, %v1281
      %v1283 = vpop.f32.mrb[0].mxu0
      %1284 = vdwg.mxu0
      %v1285 = vadd.f32 %v1194, %v1279
      %v1286 = vadd.f32 %v1195, %v1282
      %v1287 = vld [vmem:[%s208 + $0x4] sm:$0x8]
      %v1288 = vld [vmem:[%s208 + $0x8] sm:$0xf]
      %v1289 = vld [vmem:[%s208 + $0xc] sm:$0x1]
      %s1290 = scalar_lea.vmem %s212, 384
      %v1291 = vld [vmem:[%s1290] sm:$0xf]
      %v1292 = vld [vmem:[%s1290 + $0x4] sm:$0xf]
      %v1293 = vld [vmem:[%s1290 + $0x8] sm:$0xf]
      %v1294 = vld [vmem:[%s1290 + $0xc] sm:$0xf]
      %v1295 = vld [vmem:[%s1290 + $0x10] sm:$0xf]
      %v1296 = vld [vmem:[%s1290 + $0x14] sm:$0xf]
      %v1297 = vld [vmem:[%s1290 + $0x18] sm:$0xf]
      %v1298 = vld [vmem:[%s1290 + $0x1c] sm:$0xf]
      %v1302 = vunpack.c.l.b16 %v1287
      %v1303 = vunpack.c.l.b16 %v1288
      %v1304 = vunpack.c.l.b16 %v1289
      %v1305 = vpack.c.b16 %v1303, %v1302
      %v1306 = vpack.c.b16 %v1304, %v1304
      %v1308 = vshrl.u32 %v1305, 16
      %v1310 = vrot.slane %v1308, 3
      %v1311 = vshll.u32 %v1305, 16
      %v1313 = vrot.slane %v1311, 4
      %v1314 = vor.u32 %v1310, %v1313
      %v1316 = vshll.u32 %v1306, 16
      %v1318 = vrot.slane %v1316, 4
      %v1319 = vsel %vm770, %v1314, %v1318
      %v1328 = vunpack.c.l.b16 %v1291
      %v1329 = vunpack.c.l.b16 %v1292
      %v1330 = vunpack.c.l.b16 %v1293
      %v1331 = vunpack.c.l.b16 %v1294
      %v1332 = vunpack.c.l.b16 %v1295
      %v1333 = vunpack.c.l.b16 %v1296
      %v1334 = vunpack.c.l.b16 %v1297
      %v1335 = vunpack.c.l.b16 %v1298
      %v1336 = vpack.c.b16 %v1329, %v1328
      %v1337 = vpack.c.b16 %v1331, %v1330
      %v1338 = vpack.c.b16 %v1333, %v1332
      %v1339 = vpack.c.b16 %v1335, %v1334
      %v1345 = vsel %vm281, %v1319, 0
      %1347 = vmatprep.subr.bf16.mxu0 0
      %1348 = vmatpush1.bf16.msra.mxu0 %v1336
      %1349 = vmatprep.subr.bf16.mxu0 0
      %1350 = vmatpush1.bf16.msra.mxu0 %v1337
      %1351 = vmatprep.subr.bf16.mxu0 0
      %1352 = vmatpush1.bf16.msra.mxu0 %v1338
      %1353 = vmatprep.subr.bf16.mxu0 0
      %1354 = vmatpush1.bf16.msra.mxu0 %v1339
      %1355 = vmatprep.subr.bf16.mxu0 0
      %1356 = vmatpush1.bf16.msra.mxu0 0
      %1357 = vmatprep.subr.bf16.mxu0 0
      %1358 = vmatpush1.bf16.msra.mxu0 0
      %1359 = vmatprep.subr.bf16.mxu0 0
      %1360 = vmatpush1.bf16.msra.mxu0 0
      %1361 = vmatprep.subr.bf16.mxu0 0
      %1362 = vmatpush1.bf16.msra.mxu0 0
      %1363 = vmatprep.subr.bf16.mxu0 0
      %1364 = vmatpush1.bf16.msra.mxu0 0
      %1365 = vmatprep.subr.bf16.mxu0 0
      %1366 = vmatpush1.bf16.msra.mxu0 0
      %1367 = vmatprep.subr.bf16.mxu0 0
      %1368 = vmatpush1.bf16.msra.mxu0 0
      %1369 = vmatprep.subr.bf16.mxu0 0
      %1370 = vmatpush1.bf16.msra.mxu0 0
      %1371 = vmatprep.subr.bf16.mxu0 0
      %1372 = vmatpush1.bf16.msra.mxu0 0
      %1373 = vmatprep.subr.bf16.mxu0 0
      %1374 = vmatpush1.bf16.msra.mxu0 0
      %1375 = vmatprep.subr.bf16.mxu0 0
      %1376 = vmatpush1.bf16.msra.mxu0 0
      %1377 = vmatprep.subr.bf16.mxu0 0
      %1378 = vmatpush1.bf16.msra.mxu0 0
      %1379 = vmatprep.mubr.bf16.mxu0 0
      %1380 = vmatmul.mubr.bf16.gmra.mrb[0].mxu0 %v1345
      %v1381 = vpop.f32.mrb[0].mxu0
      %v1382 = vadd.f32 0.0, %v1381
      %v1383 = vpop.f32.mrb[0].mxu0
      %v1384 = vpop.f32.mrb[0].mxu0
      %v1385 = vadd.f32 0.0, %v1384
      %v1386 = vpop.f32.mrb[0].mxu0
      %1387 = vdwg.mxu0
      %v1388 = vadd.f32 %v1285, %v1382
      %v1389 = vadd.f32 %v1286, %v1385
      %s1390 = scalar_lea.vmem %s212, 416
      %v1391 = vld [vmem:[%s1390] sm:$0xf]
      %v1392 = vld [vmem:[%s1390 + $0x4] sm:$0xf]
      %v1393 = vld [vmem:[%s1390 + $0x8] sm:$0xf]
      %v1394 = vld [vmem:[%s1390 + $0xc] sm:$0xf]
      %v1395 = vld [vmem:[%s1390 + $0x10] sm:$0xf]
      %v1396 = vld [vmem:[%s1390 + $0x14] sm:$0xf]
      %v1397 = vld [vmem:[%s1390 + $0x18] sm:$0xf]
      %v1398 = vld [vmem:[%s1390 + $0x1c] sm:$0xf]
      %v1399 = vpack.c.b16 %v1304, %v1303
      %v1408 = vunpack.c.l.b16 %v1391
      %v1409 = vunpack.c.l.b16 %v1392
      %v1410 = vunpack.c.l.b16 %v1393
      %v1411 = vunpack.c.l.b16 %v1394
      %v1412 = vunpack.c.l.b16 %v1395
      %v1413 = vunpack.c.l.b16 %v1396
      %v1414 = vunpack.c.l.b16 %v1397
      %v1415 = vunpack.c.l.b16 %v1398
      %v1416 = vpack.c.b16 %v1409, %v1408
      %v1417 = vpack.c.b16 %v1411, %v1410
      %v1418 = vpack.c.b16 %v1413, %v1412
      %v1419 = vpack.c.b16 %v1415, %v1414
      %v1425 = vsel %vm281, %v1399, 0
      %1427 = vmatprep.subr.bf16.mxu0 0
      %1428 = vmatpush1.bf16.msra.mxu0 %v1416
      %1429 = vmatprep.subr.bf16.mxu0 0
      %1430 = vmatpush1.bf16.msra.mxu0 %v1417
      %1431 = vmatprep.subr.bf16.mxu0 0
      %1432 = vmatpush1.bf16.msra.mxu0 %v1418
      %1433 = vmatprep.subr.bf16.mxu0 0
      %1434 = vmatpush1.bf16.msra.mxu0 %v1419
      %1435 = vmatprep.subr.bf16.mxu0 0
      %1436 = vmatpush1.bf16.msra.mxu0 0
      %1437 = vmatprep.subr.bf16.mxu0 0
      %1438 = vmatpush1.bf16.msra.mxu0 0
      %1439 = vmatprep.subr.bf16.mxu0 0
      %1440 = vmatpush1.bf16.msra.mxu0 0
      %1441 = vmatprep.subr.bf16.mxu0 0
      %1442 = vmatpush1.bf16.msra.mxu0 0
      %1443 = vmatprep.subr.bf16.mxu0 0
      %1444 = vmatpush1.bf16.msra.mxu0 0
      %1445 = vmatprep.subr.bf16.mxu0 0
      %1446 = vmatpush1.bf16.msra.mxu0 0
      %1447 = vmatprep.subr.bf16.mxu0 0
      %1448 = vmatpush1.bf16.msra.mxu0 0
      %1449 = vmatprep.subr.bf16.mxu0 0
      %1450 = vmatpush1.bf16.msra.mxu0 0
      %1451 = vmatprep.subr.bf16.mxu0 0
      %1452 = vmatpush1.bf16.msra.mxu0 0
      %1453 = vmatprep.subr.bf16.mxu0 0
      %1454 = vmatpush1.bf16.msra.mxu0 0
      %1455 = vmatprep.subr.bf16.mxu0 0
      %1456 = vmatpush1.bf16.msra.mxu0 0
      %1457 = vmatprep.subr.bf16.mxu0 0
      %1458 = vmatpush1.bf16.msra.mxu0 0
      %1459 = vmatprep.mubr.bf16.mxu0 0
      %1460 = vmatmul.mubr.bf16.gmra.mrb[0].mxu0 %v1425
      %v1461 = vpop.f32.mrb[0].mxu0
      %v1462 = vadd.f32 0.0, %v1461
      %v1463 = vpop.f32.mrb[0].mxu0
      %v1464 = vpop.f32.mrb[0].mxu0
      %v1465 = vadd.f32 0.0, %v1464
      %v1466 = vpop.f32.mrb[0].mxu0
      %1467 = vdwg.mxu0
      %v1468 = vadd.f32 %v1388, %v1462
      %v1469 = vadd.f32 %v1389, %v1465
      %v1470 = vld [vmem:[%s208 + $0xc] sm:$0x3]
      %s1471 = scalar_lea.vmem %s212, 448
      %v1472 = vld [vmem:[%s1471] sm:$0xf]
      %v1473 = vld [vmem:[%s1471 + $0x4] sm:$0xf]
      %v1474 = vld [vmem:[%s1471 + $0x8] sm:$0xf]
      %v1475 = vld [vmem:[%s1471 + $0xc] sm:$0xf]
      %v1476 = vld [vmem:[%s1471 + $0x10] sm:$0xf]
      %v1477 = vld [vmem:[%s1471 + $0x14] sm:$0xf]
      %v1478 = vld [vmem:[%s1471 + $0x18] sm:$0xf]
      %v1479 = vld [vmem:[%s1471 + $0x1c] sm:$0xf]
      %v1481 = vunpack.c.l.b16 %v1470
      %v1482 = vpack.c.b16 %v1481, %v1303
      %v1484 = vshrl.u32 %v1482, 16
      %v1486 = vshll.u32 %v1482, 16
      %v1488 = vrot.slane %v1486, 1
      %v1489 = vor.u32 %v1484, %v1488
      %v1498 = vunpack.c.l.b16 %v1472
      %v1499 = vunpack.c.l.b16 %v1473
      %v1500 = vunpack.c.l.b16 %v1474
      %v1501 = vunpack.c.l.b16 %v1475
      %v1502 = vunpack.c.l.b16 %v1476
      %v1503 = vunpack.c.l.b16 %v1477
      %v1504 = vunpack.c.l.b16 %v1478
      %v1505 = vunpack.c.l.b16 %v1479
      %v1506 = vpack.c.b16 %v1499, %v1498
      %v1507 = vpack.c.b16 %v1501, %v1500
      %v1508 = vpack.c.b16 %v1503, %v1502
      %v1509 = vpack.c.b16 %v1505, %v1504
      %v1515 = vsel %vm281, %v1489, 0
      %1517 = vmatprep.subr.bf16.mxu0 0
      %1518 = vmatpush1.bf16.msra.mxu0 %v1506
      %1519 = vmatprep.subr.bf16.mxu0 0
      %1520 = vmatpush1.bf16.msra.mxu0 %v1507
      %1521 = vmatprep.subr.bf16.mxu0 0
      %1522 = vmatpush1.bf16.msra.mxu0 %v1508
      %1523 = vmatprep.subr.bf16.mxu0 0
      %1524 = vmatpush1.bf16.msra.mxu0 %v1509
      %1525 = vmatprep.subr.bf16.mxu0 0
      %1526 = vmatpush1.bf16.msra.mxu0 0
      %1527 = vmatprep.subr.bf16.mxu0 0
      %1528 = vmatpush1.bf16.msra.mxu0 0
      %1529 = vmatprep.subr.bf16.mxu0 0
      %1530 = vmatpush1.bf16.msra.mxu0 0
      %1531 = vmatprep.subr.bf16.mxu0 0
      %1532 = vmatpush1.bf16.msra.mxu0 0
      %1533 = vmatprep.subr.bf16.mxu0 0
      %1534 = vmatpush1.bf16.msra.mxu0 0
      %1535 = vmatprep.subr.bf16.mxu0 0
      %1536 = vmatpush1.bf16.msra.mxu0 0
      %1537 = vmatprep.subr.bf16.mxu0 0
      %1538 = vmatpush1.bf16.msra.mxu0 0
      %1539 = vmatprep.subr.bf16.mxu0 0
      %1540 = vmatpush1.bf16.msra.mxu0 0
      %1541 = vmatprep.subr.bf16.mxu0 0
      %1542 = vmatpush1.bf16.msra.mxu0 0
      %1543 = vmatprep.subr.bf16.mxu0 0
      %1544 = vmatpush1.bf16.msra.mxu0 0
      %1545 = vmatprep.subr.bf16.mxu0 0
      %1546 = vmatpush1.bf16.msra.mxu0 0
      %1547 = vmatprep.subr.bf16.mxu0 0
      %1548 = vmatpush1.bf16.msra.mxu0 0
      %1549 = vmatprep.mubr.bf16.mxu0 0
      %1550 = vmatmul.mubr.bf16.gmra.mrb[0].mxu0 %v1515
      %v1551 = vpop.f32.mrb[0].mxu0
      %v1552 = vadd.f32 0.0, %v1551
      %v1553 = vpop.f32.mrb[0].mxu0
      %v1554 = vpop.f32.mrb[0].mxu0
      %v1555 = vadd.f32 0.0, %v1554
      %v1556 = vpop.f32.mrb[0].mxu0
      %1557 = vdwg.mxu0
      %v1558 = vadd.f32 %v1468, %v1552
      %v1559 = vadd.f32 %v1469, %v1555
      %v1560 = vld [vmem:[%s208 + $0x8] sm:$0xe]
      %s1561 = scalar_lea.vmem %s212, 480
      %v1562 = vld [vmem:[%s1561] sm:$0xf]
      %v1563 = vld [vmem:[%s1561 + $0x4] sm:$0xf]
      %v1564 = vld [vmem:[%s1561 + $0x8] sm:$0xf]
      %v1565 = vld [vmem:[%s1561 + $0xc] sm:$0xf]
      %v1566 = vld [vmem:[%s1561 + $0x10] sm:$0xf]
      %v1567 = vld [vmem:[%s1561 + $0x14] sm:$0xf]
      %v1568 = vld [vmem:[%s1561 + $0x18] sm:$0xf]
      %v1569 = vld [vmem:[%s1561 + $0x1c] sm:$0xf]
      %v1571 = vunpack.c.l.b16 %v1560
      %v1572 = vpack.c.b16 %v1481, %v1571
      %v1573 = vrot.slane %v1572, 1
      %v1582 = vunpack.c.l.b16 %v1562
      %v1583 = vunpack.c.l.b16 %v1563
      %v1584 = vunpack.c.l.b16 %v1564
      %v1585 = vunpack.c.l.b16 %v1565
      %v1586 = vunpack.c.l.b16 %v1566
      %v1587 = vunpack.c.l.b16 %v1567
      %v1588 = vunpack.c.l.b16 %v1568
      %v1589 = vunpack.c.l.b16 %v1569
      %v1590 = vpack.c.b16 %v1583, %v1582
      %v1591 = vpack.c.b16 %v1585, %v1584
      %v1592 = vpack.c.b16 %v1587, %v1586
      %v1593 = vpack.c.b16 %v1589, %v1588
      %v1599 = vsel %vm281, %v1573, 0
      %1601 = vmatprep.subr.bf16.mxu0 0
      %1602 = vmatpush1.bf16.msra.mxu0 %v1590
      %1603 = vmatprep.subr.bf16.mxu0 0
      %1604 = vmatpush1.bf16.msra.mxu0 %v1591
      %1605 = vmatprep.subr.bf16.mxu0 0
      %1606 = vmatpush1.bf16.msra.mxu0 %v1592
      %1607 = vmatprep.subr.bf16.mxu0 0
      %1608 = vmatpush1.bf16.msra.mxu0 %v1593
      %1609 = vmatprep.subr.bf16.mxu0 0
      %1610 = vmatpush1.bf16.msra.mxu0 0
      %1611 = vmatprep.subr.bf16.mxu0 0
      %1612 = vmatpush1.bf16.msra.mxu0 0
      %1613 = vmatprep.subr.bf16.mxu0 0
      %1614 = vmatpush1.bf16.msra.mxu0 0
      %1615 = vmatprep.subr.bf16.mxu0 0
      %1616 = vmatpush1.bf16.msra.mxu0 0
      %1617 = vmatprep.subr.bf16.mxu0 0
      %1618 = vmatpush1.bf16.msra.mxu0 0
      %1619 = vmatprep.subr.bf16.mxu0 0
      %1620 = vmatpush1.bf16.msra.mxu0 0
      %1621 = vmatprep.subr.bf16.mxu0 0
      %1622 = vmatpush1.bf16.msra.mxu0 0
      %1623 = vmatprep.subr.bf16.mxu0 0
      %1624 = vmatpush1.bf16.msra.mxu0 0
      %1625 = vmatprep.subr.bf16.mxu0 0
      %1626 = vmatpush1.bf16.msra.mxu0 0
      %1627 = vmatprep.subr.bf16.mxu0 0
      %1628 = vmatpush1.bf16.msra.mxu0 0
      %1629 = vmatprep.subr.bf16.mxu0 0
      %1630 = vmatpush1.bf16.msra.mxu0 0
      %1631 = vmatprep.subr.bf16.mxu0 0
      %1632 = vmatpush1.bf16.msra.mxu0 0
      %1633 = vmatprep.mubr.bf16.mxu0 0
      %1634 = vmatmul.mubr.bf16.gmra.mrb[0].mxu0 %v1599
      %v1635 = vpop.f32.mrb[0].mxu0
      %v1636 = vadd.f32 0.0, %v1635
      %v1637 = vpop.f32.mrb[0].mxu0
      %v1638 = vpop.f32.mrb[0].mxu0
      %v1639 = vadd.f32 0.0, %v1638
      %v1640 = vpop.f32.mrb[0].mxu0
      %1641 = vdwg.mxu0
      %v1642 = vadd.f32 %v1558, %v1636
      %v1643 = vadd.f32 %v1559, %v1639
      %v1644 = vld [vmem:[%s215] sm:$0x1]
      %v1646 = vlaneseq
      %v1647 = vshrl.u32 %v1646, 7
      %v1648 = vsub.s32 0, %v1647
      %v1649 = vrot.slane %v1644, %v1648
      %v1651 = vadd.f32 %v1642, %v1649
      %v1652 = vadd.f32 %v1643, %v1649
      %vm1653 = vcmask 7168
      %1654 = vst.msk [vmem:[%s223] sm:$0xff] %vm1653, %v1651
      %vm1655 = vcmask 1024
      %1656 = vst.msk [vmem:[%s223 + $0x8] sm:$0x3] %vm1655, %v1652
      %p1657 = scmp.lt.s32.totalorder %s20, 1
      %s1658 = scalar_select %p1657, %s20, 1
      %p1659 = scmp.lt.s32.totalorder %s21, 0
      %s1660 = scalar_select %p1659, %s21, 0
      %s1661 = smul.addr %s1658, 2
      %s1662 = sadd.s32 %s1660, %s1661
      %s1663 = smul.addr %s1662, 8
      %s1664 = scalar_lea.vmem %s3, %s1663
      // Predicated region
      $region33: #{_lambda_.9} parent=31 // pred_check
        %p1665 = pneg %p126
      $region34: #{_lambda_.9} parent=31 // pred_check_branch
        %1667 = sbr.rel (%p1665) target = $region36
      $region35: #{_lambda_.9} parent=31 // pred_region
        _
      $region36: #{_lambda_.9} parent=31 // pred_fallthru
        _
    $region32: #{_lambda_.9} parent=5 // pred_fallthru
      _
    %p1668 = scmp.le.s32.totalorder 2, %s11
    // Predicated region
    $region37: #{_lambda_.9} parent=5 // pred_check
      %p1669 = pneg %p1668
    $region38: #{_lambda_.9} parent=5 // pred_check_branch
      %1671 = sbr.rel (%p1669) target = $region40
    $region39: #{_lambda_.9} parent=5 // pred_region
      %s1672 = ssub.s32 %s11, 2
      // Predicated region
      $region41: #{_lambda_.9} parent=39 // pred_check
        %p1673 = pneg %p132
      $region42: #{_lambda_.9} parent=39 // pred_check_branch
        %1675 = sbr.rel (%p1673) target = $region44
      $region43: #{_lambda_.9} parent=39 // pred_region
        %p1676 = scmp.lt.s32.totalorder %s22, 1
        %s1677 = scalar_select %p1676, %s22, 1
        %p1678 = scmp.lt.s32.totalorder %s23, 0
        %s1679 = scalar_select %p1678, %s23, 0
        %s1680 = smul.addr %s1677, 2
        %s1681 = sadd.s32 %s1679, %s1680
        %s1682 = smul.addr %s1681, 8
        %s1683 = scalar_lea.vmem %s3, %s1682
      $region44: #{_lambda_.9} parent=39 // pred_fallthru
        _
    $region40: #{_lambda_.9} parent=5 // pred_fallthru
      _
  $region6: #{_lambda_.9} parent=0 // loop_footer
    %s15 = sadd.s32 1, %s11
  $region7: #{_lambda_.9} parent=0 // loop_footer_branch
    %10 = sbr.rel target = $region3
  $region8: #{_lambda_.9} parent=0 // loop_exit
    _

</llo_original>
